<compile_context>
chip_gen: v7x
topology: tpu7x:2x2x1
jax: 0.10.0
libtpu: 0.0.40
codegen_flags: <defaults>
</compile_context>

<pallas_src>
import functools
import math

import jax
import jax.numpy as jnp
from jax import lax
from jax.experimental import pallas as pl
from jax.experimental.pallas import tpu as pltpu

LANES = 128
BN_EPS = 1e-5

# 3x3 tap order used by the im2col slabs and the packed weights.  The centre
# tap comes first so a ResBlock's residual input is simply the first C lanes
# of its (un-ReLU'd) cols slab -- no extra skip operand, no lane shuffles.
_TAPS = ((1, 1), (0, 0), (0, 1), (0, 2), (1, 0), (1, 2), (2, 0), (2, 1), (2, 2))


def _detect_final_row_tiles():
    # v7x has two TensorCores per chip: give the largest layer a parallel row
    # split there.  Single full-M block on single-TC chips (v5e/v6e).
    try:
        kind = jax.devices()[0].device_kind.lower()
    except Exception:  # pragma: no cover - defensive
        return 1
    return 2 if "v7" in kind else 1


_FINAL_ROW_TILES = _detect_final_row_tiles()


# ----------------------------------------------------------------------------
# Pallas kernels (each is a single grid step; all moments computed in one pass)
# ----------------------------------------------------------------------------

def _resblock_kernel(cols_ref, w1_ref, g1_ref, b1_ref, w2_ref, g2_ref, b2_ref,
                     o_ref, *, c, inv_m, eps):
    """Fused ResBlock: ReLU -> 3x3 conv -> BN -> ReLU -> 1x1 conv -> BN -> +x."""
    a = cols_ref[...]                                   # (M,128) f32, pre-ReLU
    ar = jnp.maximum(a, 0.0)                            # prologue ReLU in f32
    y1 = jnp.dot(ar.astype(jnp.bfloat16), w1_ref[...],
                 preferred_element_type=jnp.float32)
    s1 = jnp.sum(y1, axis=0, keepdims=True) * inv_m
    v1 = jnp.maximum(
        jnp.sum(y1 * y1, axis=0, keepdims=True) * inv_m - s1 * s1, 0.0)
    sc1 = g1_ref[...] * lax.rsqrt(v1 + eps)
    sh1 = b1_ref[...] - s1 * sc1
    h = jnp.maximum(y1 * sc1 + sh1, 0.0)

    y2 = jnp.dot(h.astype(jnp.bfloat16), w2_ref[...],
                 preferred_element_type=jnp.float32)
    s2 = jnp.sum(y2, axis=0, keepdims=True) * inv_m
    v2 = jnp.maximum(
        jnp.sum(y2 * y2, axis=0, keepdims=True) * inv_m - s2 * s2, 0.0)
    sc2 = g2_ref[...] * lax.rsqrt(v2 + eps)
    sh2 = b2_ref[...] - s2 * sc2

    # Residual: centre tap of the un-ReLU'd cols slab == x (lanes 0..c-1).
    lane = lax.broadcasted_iota(jnp.int32, a.shape, 1)
    skip = jnp.where(lane < c, a, 0.0)
    o_ref[...] = y2 * sc2 + sh2 + skip


def _deconv_bn_relu_kernel(cols_ref, w_ref, g_ref, b_ref, o_ref, *,
                           inv_count, eps):
    """Subpixel deconv (4 phase matmuls) + fused training-mode BN + ReLU."""
    a = cols_ref[...]                                   # (M,128) bf16
    ys = []
    s = jnp.zeros((1, LANES), jnp.float32)
    q = jnp.zeros((1, LANES), jnp.float32)
    for g in range(4):                                  # one MXU push per phase
        y = jnp.dot(a, w_ref[g], preferred_element_type=jnp.float32)
        ys.append(y)
        s = s + jnp.sum(y, axis=0, keepdims=True)
        q = q + jnp.sum(y * y, axis=0, keepdims=True)
    mean = s * inv_count
    var = jnp.maximum(q * inv_count - mean * mean, 0.0)  # clamp: padded lanes / fp error
    scale = g_ref[...] * lax.rsqrt(var + eps)
    shift = b_ref[...] - mean * scale
    for g in range(4):
        o_ref[g] = jnp.maximum(ys[g] * scale + shift, 0.0).astype(o_ref.dtype)


def _deconv_tanh_kernel(cols_ref, w_ref, t_ref, o_ref):
    """Final subpixel deconv (phase-banded weight) + bias + tanh."""
    y = jnp.dot(cols_ref[...], w_ref[...], preferred_element_type=jnp.float32)
    o_ref[...] = jnp.tanh(y + t_ref[...])


# ----------------------------------------------------------------------------
# pallas_call wrappers
# ----------------------------------------------------------------------------

_VEC_SPEC = pl.BlockSpec((1, LANES), lambda i: (0, 0))
_W_SPEC = pl.BlockSpec((LANES, LANES), lambda i: (0, 0))


def _resblock_call(cols, rp, c):
    m = cols.shape[0]
    kern = functools.partial(_resblock_kernel, c=c, inv_m=1.0 / float(m),
                             eps=BN_EPS)
    return pl.pallas_call(
        kern,
        out_shape=jax.ShapeDtypeStruct((m, LANES), jnp.float32),
        grid=(1,),
        in_specs=[pl.BlockSpec((m, LANES), lambda i: (0, 0)),
                  _W_SPEC, _VEC_SPEC, _VEC_SPEC,
                  _W_SPEC, _VEC_SPEC, _VEC_SPEC],
        out_specs=pl.BlockSpec((m, LANES), lambda i: (0, 0)),
        compiler_params=pltpu.CompilerParams(
            dimension_semantics=("arbitrary",)),
    )(cols, rp["w1"], rp["g1"], rp["b1"], rp["w2"], rp["g2"], rp["b2"])


def _deconv_bn_relu_call(cols, dp):
    m = cols.shape[0]
    kern = functools.partial(_deconv_bn_relu_kernel,
                             inv_count=1.0 / (4.0 * float(m)), eps=BN_EPS)
    return pl.pallas_call(
        kern,
        out_shape=jax.ShapeDtypeStruct((4, m, LANES), jnp.bfloat16),
        grid=(1,),
        in_specs=[pl.BlockSpec((m, LANES), lambda i: (0, 0)),
                  pl.BlockSpec((4, LANES, LANES), lambda i: (0, 0, 0)),
                  _VEC_SPEC, _VEC_SPEC],
        out_specs=pl.BlockSpec((4, m, LANES), lambda i: (0, 0, 0)),
        compiler_params=pltpu.CompilerParams(
            dimension_semantics=("arbitrary",)),
    )(cols, dp["w"], dp["g"], dp["b"])


def _deconv_tanh_call(cols, dp):
    m = cols.shape[0]
    nt = _FINAL_ROW_TILES if (m % (8 * _FINAL_ROW_TILES) == 0) else 1
    tm = m // nt
    return pl.pallas_call(
        _deconv_tanh_kernel,
        out_shape=jax.ShapeDtypeStruct((m, LANES), jnp.float32),
        grid=(nt,),
        in_specs=[pl.BlockSpec((tm, LANES), lambda i: (i, 0)),
                  _W_SPEC, _VEC_SPEC],
        out_specs=pl.BlockSpec((tm, LANES), lambda i: (i, 0)),
        compiler_params=pltpu.CompilerParams(
            dimension_semantics=("parallel",)),
    )(cols, dp["w"], dp["t"])


# ----------------------------------------------------------------------------
# XLA glue between calls (im2col slabs, subpixel shuffles)
# ----------------------------------------------------------------------------

def _im2col_taps(x):
    """(N,H,W,C) -> (N*H*W, 128): 3x3 im2col over a pad-1 input, K padded to 128."""
    n, h, w, c = x.shape
    xp = jnp.pad(x, ((0, 0), (1, 1), (1, 1), (0, 0)))
    taps = [xp[:, i:i + h, j:j + w, :] for (i, j) in _TAPS]
    cols = jnp.concatenate(taps, axis=-1).reshape(n * h * w, 9 * c)
    return jnp.pad(cols, ((0, 0), (0, LANES - 9 * c)))


def _unshuffle4(y4, n, h, w, c):
    """(4, N*H*W, 128) per-phase slabs -> (N, 2H, 2W, C)."""
    t = y4[:, :, :c].reshape(2, 2, n, h, w, c)
    return t.transpose(2, 3, 0, 4, 1, 5).reshape(n, 2 * h, 2 * w, c)


def _banded_shuffle(y, n, h, w, c):
    """(N*H*W, 128) with 4 phase bands of width c -> (N, 2H, 2W, C)."""
    t = y[:, :4 * c].reshape(n, h, w, 2, 2, c)
    return t.transpose(0, 1, 3, 2, 4, 5).reshape(n, 2 * h, 2 * w, c)


# ----------------------------------------------------------------------------
# One-time weight packing (hoisted out of the per-forward jit)
# ----------------------------------------------------------------------------

def _deconv_phase_block(w_iohw, ry, rx):
    """ConvTranspose2d(k=4,s=2,p=1) weight -> (9*Cin, Cout) block for one phase."""
    cin, cout = w_iohw.shape[0], w_iohw.shape[1]
    tap2k = ({0: 3, 1: 1}, {1: 2, 2: 0})   # phase bit -> {tap index: kernel index}
    blocks = []
    for (ty, tx) in _TAPS:
        if ty in tap2k[ry] and tx in tap2k[rx]:
            blocks.append(w_iohw[:, :, tap2k[ry][ty], tap2k[rx][tx]])
        else:
            blocks.append(jnp.zeros((cin, cout), w_iohw.dtype))
    return jnp.concatenate(blocks, axis=0)


def prepare_params(p):
    """Pack PyTorch-layout weights into MXU-ready bf16 operands (done once)."""
    def vec(v):
        return jnp.pad(v.astype(jnp.float32),
                       (0, LANES - v.shape[0])).reshape(1, LANES)

    def pad_w(w2d):
        k, n = w2d.shape
        return jnp.pad(w2d, ((0, LANES - k), (0, LANES - n))).astype(jnp.bfloat16)

    def conv3x3(w_oihw):
        blocks = [w_oihw[:, :, i, j].T for (i, j) in _TAPS]    # (Cin, Cout) each
        return pad_w(jnp.concatenate(blocks, axis=0))

    def conv1x1(w_oihw):
        return pad_w(w_oihw[:, :, 0, 0].T)

    def res(rp):
        # Conv biases feeding BatchNorm cancel exactly and are dropped.
        return dict(w1=conv3x3(rp["c1_w"]), g1=vec(rp["bn1_g"]), b1=vec(rp["bn1_b"]),
                    w2=conv1x1(rp["c2_w"]), g2=vec(rp["bn2_g"]), b2=vec(rp["bn2_b"]))

    pk = {"r1": res(p["r1"]), "r2": res(p["r2"])}
    for i in (1, 2, 3):
        w = jnp.stack([pad_w(_deconv_phase_block(p[f"d{i}_w"], ry, rx))
                       for ry in range(2) for rx in range(2)], axis=0)  # (4,128,128)
        pk[f"d{i}"] = dict(w=w, g=vec(p[f"bn{i}_g"]), b=vec(p[f"bn{i}_b"]))

    cout = p["d4_w"].shape[1]
    w4 = pad_w(jnp.concatenate([_deconv_phase_block(p["d4_w"], ry, rx)
                                for ry in range(2) for rx in range(2)], axis=1))
    t4 = jnp.pad(jnp.tile(p["d4_b"].astype(jnp.float32), 4),
                 (0, LANES - 4 * cout)).reshape(1, LANES)
    pk["d4"] = dict(w=w4, t=t4)
    return pk


# ----------------------------------------------------------------------------
# Forward pass (Pallas path)
# ----------------------------------------------------------------------------

def decoder_forward_pallas(x_nchw, pk):
    x = jnp.transpose(x_nchw, (0, 2, 3, 1)).astype(jnp.float32)   # NCHW -> NHWC
    n, h, w, c = x.shape

    for r in ("r1", "r2"):                         # fused ResBlocks (f32 path)
        y = _resblock_call(_im2col_taps(x), pk[r], c)
        x = y[:, :c].reshape(n, h, w, c)

    x = x.astype(jnp.bfloat16)                     # bf16 inter-stage activations
    for i in (1, 2, 3):                            # deconv + BN + ReLU stages
        y4 = _deconv_bn_relu_call(_im2col_taps(x), pk[f"d{i}"])
        x = _unshuffle4(y4, n, h, w, c)
        h, w = 2 * h, 2 * w

    y = _deconv_tanh_call(_im2col_taps(x), pk["d4"])   # final deconv + tanh
    img = _banded_shuffle(y, n, h, w, 3)
    return jnp.transpose(img, (0, 3, 1, 2))            # NHWC -> NCHW


# ----------------------------------------------------------------------------
# Pure-jnp reference (PyTorch-faithful: zero-insertion deconv, conv bias kept
# before BN -- it cancels exactly, which the check also validates).
# ----------------------------------------------------------------------------

def _matmul_ref(a, w):
    return jnp.dot(a.astype(jnp.bfloat16), w.astype(jnp.bfloat16),
                   preferred_element_type=jnp.float32)


def _bn_ref(y2d, gamma, beta, eps=BN_EPS):
    mean = jnp.mean(y2d, axis=0)
    var = jnp.mean(jnp.square(y2d - mean[None, :]), axis=0)
    return (y2d - mean[None, :]) * (gamma / jnp.sqrt(var + eps))[None, :] + beta[None, :]


def _im2col_ref(xp, kh, kw, hout, wout):
    cols = []
    for i in range(kh):
        for j in range(kw):
            cols.append(xp[:, i:i + hout, j:j + wout, :])
    return jnp.concatenate(cols, axis=-1)


def conv2d_ref(x, w_oihw, b, padding):
    n, h, w, cin = x.shape
    cout, _, kh, kw = w_oihw.shape
    xp = jnp.pad(x, ((0, 0), (padding, padding), (padding, padding), (0, 0)))
    cols = _im2col_ref(xp, kh, kw, h, w).reshape(n * h * w, kh * kw * cin)
    wm = jnp.transpose(w_oihw, (2, 3, 1, 0)).reshape(kh * kw * cin, cout)
    return (_matmul_ref(cols, wm) + b[None, :]).reshape(n, h, w, cout)


def deconv_ref(x, w_iohw, b, stride=2, padding=1):
    n, h, w, cin = x.shape
    cout, k = w_iohw.shape[1], w_iohw.shape[2]
    ho = (h - 1) * stride - 2 * padding + k
    wo = (w - 1) * stride - 2 * padding + k
    xz = jnp.zeros((n, (h - 1) * stride + 1, (w - 1) * stride + 1, cin), x.dtype)
    xz = xz.at[:, ::stride, ::stride, :].set(x)
    pad = k - 1 - padding
    xp = jnp.pad(xz, ((0, 0), (pad, pad), (pad, pad), (0, 0)))
    wc = jnp.transpose(jnp.flip(w_iohw, axis=(2, 3)), (2, 3, 0, 1)).reshape(k * k * cin, cout)
    cols = _im2col_ref(xp, k, k, ho, wo).reshape(n * ho * wo, k * k * cin)
    return (_matmul_ref(cols, wc) + b[None, :]).reshape(n, ho, wo, cout)


def resblock_ref(x, p):
    n, h, w, c = x.shape
    hr = jnp.maximum(x, 0.0)
    y1 = conv2d_ref(hr, p["c1_w"], p["c1_b"], 1)
    y1 = jnp.maximum(_bn_ref(y1.reshape(-1, c), p["bn1_g"], p["bn1_b"]), 0.0)
    y1 = y1.reshape(n, h, w, c)
    y2 = conv2d_ref(y1, p["c2_w"], p["c2_b"], 0)
    y2 = _bn_ref(y2.reshape(-1, c), p["bn2_g"], p["bn2_b"]).reshape(n, h, w, c)
    return x + y2


def decoder_forward_ref(x_nchw, params):
    x = jnp.transpose(x_nchw, (0, 2, 3, 1)).astype(jnp.float32)
    x = resblock_ref(x, params["r1"])
    x = resblock_ref(x, params["r2"])
    for i in (1, 2, 3):
        y = deconv_ref(x, params[f"d{i}_w"], params[f"d{i}_b"])
        n, ho, wo, c = y.shape
        y = jnp.maximum(_bn_ref(y.reshape(-1, c),
                                params[f"bn{i}_g"], params[f"bn{i}_b"]), 0.0)
        x = y.reshape(n, ho, wo, c)
    x = jnp.tanh(deconv_ref(x, params["d4_w"], params["d4_b"]))
    return jnp.transpose(x, (0, 3, 1, 2))


# ----------------------------------------------------------------------------
# Deterministic parameter init
# ----------------------------------------------------------------------------

def init_params(key, input_dim, embedding_dim):
    it = iter(jax.random.split(key, 64))

    def nrm(shape, scale):
        return scale * jax.random.normal(next(it), shape, jnp.float32)

    def res(dim):
        return {
            "c1_w": nrm((dim, dim, 3, 3), 1.0 / math.sqrt(dim * 9)),
            "c1_b": nrm((dim,), 0.05),
            "c2_w": nrm((dim, dim, 1, 1), 1.0 / math.sqrt(dim)),
            "c2_b": nrm((dim,), 0.05),
            "bn1_g": 1.0 + nrm((dim,), 0.1),
            "bn1_b": nrm((dim,), 0.1),
            "bn2_g": 1.0 + nrm((dim,), 0.1),
            "bn2_b": nrm((dim,), 0.1),
        }

    e, d = embedding_dim, input_dim
    p = {"r1": res(e), "r2": res(e)}
    for i, cout in zip((1, 2, 3, 4), (e, e, e, d)):
        p[f"d{i}_w"] = nrm((e, cout, 4, 4), 1.0 / math.sqrt(e * 16))  # (Cin,Cout,4,4)
        p[f"d{i}_b"] = nrm((cout,), 0.05)
    for i in (1, 2, 3):
        p[f"bn{i}_g"] = 1.0 + nrm((e,), 0.1)
        p[f"bn{i}_b"] = nrm((e,), 0.1)
    return p


if __name__ == "__main__":
    input_dim, embedding_dim = 3, 8
    key = jax.random.PRNGKey(0)
    k_params, k_x = jax.random.split(key)
    params = init_params(k_params, input_dim, embedding_dim)
    packed = prepare_params(params)        # one-time weight packing (not per-forward)

    # Latent input, PyTorch NCHW convention: (N, embedding_dim, 4, 4)
    x = jax.random.normal(k_x, (2, embedding_dim, 4, 4), jnp.float32)

    fwd = jax.jit(decoder_forward_pallas)
    out = jax.block_until_ready(fwd(x, packed))
    assert out.shape == (2, input_dim, 64, 64), out.shape

    ref = jax.block_until_ready(jax.jit(decoder_forward_ref)(x, params))
    max_err = float(jnp.max(jnp.abs(out - ref)))
    assert max_err < 5e-2, max_err

    print("KERNEL_OK")
</pallas_src>

<mosaic_0001>
module attributes {stable_mosaic.version = 11 : i64} {
  func.func @_resblock_kernel(%arg0: i32, %arg1: memref<32x128xf32, #tpu.memory_space<vmem>>, %arg2: memref<128x128xbf16, #tpu.memory_space<vmem>>, %arg3: memref<1x128xf32, #tpu.memory_space<vmem>>, %arg4: memref<1x128xf32, #tpu.memory_space<vmem>>, %arg5: memref<128x128xbf16, #tpu.memory_space<vmem>>, %arg6: memref<1x128xf32, #tpu.memory_space<vmem>>, %arg7: memref<1x128xf32, #tpu.memory_space<vmem>>, %arg8: memref<32x128xf32, #tpu.memory_space<vmem>>) attributes {dimension_semantics = [#tpu.dimension_semantics<arbitrary>], iteration_bounds = array<i64: 1>, scalar_prefetch = 0 : i64, scratch_operands = 0 : i64, tpu.core_type = #tpu.core_type<tc>, window_params = [{pipeline_mode = #tpu.pipeline_mode<synchronous>, transform_indices = @transform_0, window_bounds = array<i64: 32, 128>}, {pipeline_mode = #tpu.pipeline_mode<synchronous>, transform_indices = @transform_1, window_bounds = array<i64: 128, 128>}, {pipeline_mode = #tpu.pipeline_mode<synchronous>, transform_indices = @transform_2, window_bounds = array<i64: 1, 128>}, {pipeline_mode = #tpu.pipeline_mode<synchronous>, transform_indices = @transform_3, window_bounds = array<i64: 1, 128>}, {pipeline_mode = #tpu.pipeline_mode<synchronous>, transform_indices = @transform_4, window_bounds = array<i64: 128, 128>}, {pipeline_mode = #tpu.pipeline_mode<synchronous>, transform_indices = @transform_5, window_bounds = array<i64: 1, 128>}, {pipeline_mode = #tpu.pipeline_mode<synchronous>, transform_indices = @transform_6, window_bounds = array<i64: 1, 128>}, {pipeline_mode = #tpu.pipeline_mode<synchronous>, transform_indices = @transform_7, window_bounds = array<i64: 32, 128>}]} {
    %c0 = arith.constant 0 : index
    %c0_0 = arith.constant 0 : index
    %0 = vector.load %arg1[%c0, %c0_0] : memref<32x128xf32, #tpu.memory_space<vmem>>, vector<32x128xf32>
    %cst = arith.constant 0.000000e+00 : f32
    %1 = vector.broadcast %cst : f32 to vector<32x128xf32>
    %2 = arith.maximumf %0, %1 : vector<32x128xf32>
    %3 = arith.truncf %2 : vector<32x128xf32> to vector<32x128xbf16>
    %c0_1 = arith.constant 0 : index
    %c0_2 = arith.constant 0 : index
    %4 = vector.load %arg2[%c0_1, %c0_2] : memref<128x128xbf16, #tpu.memory_space<vmem>>, vector<128x128xbf16>
    %cst_3 = arith.constant dense<0.000000e+00> : vector<32x128xf32>
    %5 = tpu.matmul %3, %4, %cst_3 {dimension_numbers = #tpu.dot_dimension_numbers<[1], [0], [0], [1], [0, 0, 1, 1], [], []>} : vector<32x128xbf16>, vector<128x128xbf16>, vector<32x128xf32> -> vector<32x128xf32>
    %cst_4 = arith.constant dense<0.000000e+00> : vector<128xf32>
    %6 = vector.multi_reduction <add>, %5, %cst_4 [0] : vector<32x128xf32> to vector<128xf32>
    %7 = vector.shape_cast %6 : vector<128xf32> to vector<1x128xf32>
    %cst_5 = arith.constant 3.125000e-02 : f32
    %8 = vector.broadcast %cst_5 : f32 to vector<1x128xf32>
    %9 = arith.mulf %7, %8 : vector<1x128xf32>
    %10 = arith.mulf %5, %5 : vector<32x128xf32>
    %cst_6 = arith.constant dense<0.000000e+00> : vector<128xf32>
    %11 = vector.multi_reduction <add>, %10, %cst_6 [0] : vector<32x128xf32> to vector<128xf32>
    %12 = vector.shape_cast %11 : vector<128xf32> to vector<1x128xf32>
    %cst_7 = arith.constant 3.125000e-02 : f32
    %13 = vector.broadcast %cst_7 : f32 to vector<1x128xf32>
    %14 = arith.mulf %12, %13 : vector<1x128xf32>
    %15 = arith.mulf %9, %9 : vector<1x128xf32>
    %16 = arith.subf %14, %15 : vector<1x128xf32>
    %cst_8 = arith.constant 0.000000e+00 : f32
    %17 = vector.broadcast %cst_8 : f32 to vector<1x128xf32>
    %18 = arith.maximumf %16, %17 : vector<1x128xf32>
    %c0_9 = arith.constant 0 : index
    %c0_10 = arith.constant 0 : index
    %19 = vector.load %arg3[%c0_9, %c0_10] : memref<1x128xf32, #tpu.memory_space<vmem>>, vector<1x128xf32>
    %cst_11 = arith.constant 9.99999974E-6 : f32
    %20 = vector.broadcast %cst_11 : f32 to vector<1x128xf32>
    %21 = arith.addf %18, %20 : vector<1x128xf32>
    %22 = math.rsqrt %21 : vector<1x128xf32>
    %23 = arith.mulf %19, %22 : vector<1x128xf32>
    %c0_12 = arith.constant 0 : index
    %c0_13 = arith.constant 0 : index
    %24 = vector.load %arg4[%c0_12, %c0_13] : memref<1x128xf32, #tpu.memory_space<vmem>>, vector<1x128xf32>
    %25 = arith.mulf %9, %23 : vector<1x128xf32>
    %26 = arith.subf %24, %25 : vector<1x128xf32>
    %27 = vector.broadcast %23 : vector<1x128xf32> to vector<32x128xf32>
    %28 = arith.mulf %5, %27 : vector<32x128xf32>
    %29 = vector.broadcast %26 : vector<1x128xf32> to vector<32x128xf32>
    %30 = arith.addf %28, %29 : vector<32x128xf32>
    %cst_14 = arith.constant 0.000000e+00 : f32
    %31 = vector.broadcast %cst_14 : f32 to vector<32x128xf32>
    %32 = arith.maximumf %30, %31 : vector<32x128xf32>
    %33 = arith.truncf %32 : vector<32x128xf32> to vector<32x128xbf16>
    %c0_15 = arith.constant 0 : index
    %c0_16 = arith.constant 0 : index
    %34 = vector.load %arg5[%c0_15, %c0_16] : memref<128x128xbf16, #tpu.memory_space<vmem>>, vector<128x128xbf16>
    %cst_17 = arith.constant dense<0.000000e+00> : vector<32x128xf32>
    %35 = tpu.matmul %33, %34, %cst_17 {dimension_numbers = #tpu.dot_dimension_numbers<[1], [0], [0], [1], [0, 0, 1, 1], [], []>} : vector<32x128xbf16>, vector<128x128xbf16>, vector<32x128xf32> -> vector<32x128xf32>
    %cst_18 = arith.constant dense<0.000000e+00> : vector<128xf32>
    %36 = vector.multi_reduction <add>, %35, %cst_18 [0] : vector<32x128xf32> to vector<128xf32>
    %37 = vector.shape_cast %36 : vector<128xf32> to vector<1x128xf32>
    %cst_19 = arith.constant 3.125000e-02 : f32
    %38 = vector.broadcast %cst_19 : f32 to vector<1x128xf32>
    %39 = arith.mulf %37, %38 : vector<1x128xf32>
    %40 = arith.mulf %35, %35 : vector<32x128xf32>
    %cst_20 = arith.constant dense<0.000000e+00> : vector<128xf32>
    %41 = vector.multi_reduction <add>, %40, %cst_20 [0] : vector<32x128xf32> to vector<128xf32>
    %42 = vector.shape_cast %41 : vector<128xf32> to vector<1x128xf32>
    %cst_21 = arith.constant 3.125000e-02 : f32
    %43 = vector.broadcast %cst_21 : f32 to vector<1x128xf32>
    %44 = arith.mulf %42, %43 : vector<1x128xf32>
    %45 = arith.mulf %39, %39 : vector<1x128xf32>
    %46 = arith.subf %44, %45 : vector<1x128xf32>
    %cst_22 = arith.constant 0.000000e+00 : f32
    %47 = vector.broadcast %cst_22 : f32 to vector<1x128xf32>
    %48 = arith.maximumf %46, %47 : vector<1x128xf32>
    %c0_23 = arith.constant 0 : index
    %c0_24 = arith.constant 0 : index
    %49 = vector.load %arg6[%c0_23, %c0_24] : memref<1x128xf32, #tpu.memory_space<vmem>>, vector<1x128xf32>
    %cst_25 = arith.constant 9.99999974E-6 : f32
    %50 = vector.broadcast %cst_25 : f32 to vector<1x128xf32>
    %51 = arith.addf %48, %50 : vector<1x128xf32>
    %52 = math.rsqrt %51 : vector<1x128xf32>
    %53 = arith.mulf %49, %52 : vector<1x128xf32>
    %c0_26 = arith.constant 0 : index
    %c0_27 = arith.constant 0 : index
    %54 = vector.load %arg7[%c0_26, %c0_27] : memref<1x128xf32, #tpu.memory_space<vmem>>, vector<1x128xf32>
    %55 = arith.mulf %39, %53 : vector<1x128xf32>
    %56 = arith.subf %54, %55 : vector<1x128xf32>
    %57 = tpu.iota {dimensions = array<i32: 1>} : vector<32x128xi32>
    %c8_i32 = arith.constant 8 : i32
    %58 = vector.broadcast %c8_i32 : i32 to vector<32x128xi32>
    %59 = arith.cmpi slt, %57, %58 : vector<32x128xi32>
    %cst_28 = arith.constant 0.000000e+00 : f32
    %60 = vector.broadcast %cst_28 : f32 to vector<32x128xf32>
    %61 = arith.select %59, %0, %60 : vector<32x128xi1>, vector<32x128xf32>
    %62 = vector.broadcast %53 : vector<1x128xf32> to vector<32x128xf32>
    %63 = arith.mulf %35, %62 : vector<32x128xf32>
    %64 = vector.broadcast %56 : vector<1x128xf32> to vector<32x128xf32>
    %65 = arith.addf %63, %64 : vector<32x128xf32>
    %66 = arith.addf %65, %61 : vector<32x128xf32>
    %c0_29 = arith.constant 0 : index
    %c0_30 = arith.constant 0 : index
    %67 = vector.load %arg8[%c0_29, %c0_30] : memref<32x128xf32, #tpu.memory_space<vmem>>, vector<32x128xf32>
    tpu.vector_store %arg8[%c0_29, %c0_30], %66 {strides = array<i32>} : memref<32x128xf32, #tpu.memory_space<vmem>>, vector<32x128xf32>,
    return
  }
  func.func @transform_0(%arg0: i32) -> (i32, i32) {
    %c0_i32 = arith.constant 0 : i32
    %c0_i32_0 = arith.constant 0 : i32
    %c0_i32_1 = arith.constant 0 : i32
    return %c0_i32, %c0_i32_0 : i32, i32
  }
  func.func @transform_1(%arg0: i32) -> (i32, i32) {
    %c0_i32 = arith.constant 0 : i32
    %c0_i32_0 = arith.constant 0 : i32
    %c0_i32_1 = arith.constant 0 : i32
    return %c0_i32, %c0_i32_0 : i32, i32
  }
  func.func @transform_2(%arg0: i32) -> (i32, i32) {
    %c0_i32 = arith.constant 0 : i32
    %c0_i32_0 = arith.constant 0 : i32
    %c0_i32_1 = arith.constant 0 : i32
    return %c0_i32, %c0_i32_0 : i32, i32
  }
  func.func @transform_3(%arg0: i32) -> (i32, i32) {
    %c0_i32 = arith.constant 0 : i32
    %c0_i32_0 = arith.constant 0 : i32
    %c0_i32_1 = arith.constant 0 : i32
    return %c0_i32, %c0_i32_0 : i32, i32
  }
  func.func @transform_4(%arg0: i32) -> (i32, i32) {
    %c0_i32 = arith.constant 0 : i32
    %c0_i32_0 = arith.constant 0 : i32
    %c0_i32_1 = arith.constant 0 : i32
    return %c0_i32, %c0_i32_0 : i32, i32
  }
  func.func @transform_5(%arg0: i32) -> (i32, i32) {
    %c0_i32 = arith.constant 0 : i32
    %c0_i32_0 = arith.constant 0 : i32
    %c0_i32_1 = arith.constant 0 : i32
    return %c0_i32, %c0_i32_0 : i32, i32
  }
  func.func @transform_6(%arg0: i32) -> (i32, i32) {
    %c0_i32 = arith.constant 0 : i32
    %c0_i32_0 = arith.constant 0 : i32
    %c0_i32_1 = arith.constant 0 : i32
    return %c0_i32, %c0_i32_0 : i32, i32
  }
  func.func @transform_7(%arg0: i32) -> (i32, i32) {
    %c0_i32 = arith.constant 0 : i32
    %c0_i32_0 = arith.constant 0 : i32
    %c0_i32_1 = arith.constant 0 : i32
    return %c0_i32, %c0_i32_0 : i32, i32
  }
}

module attributes {stable_mosaic.version = 11 : i64} {
  func.func @_deconv_bn_relu_kernel(%arg0: i32, %arg1: memref<32x128xbf16, #tpu.memory_space<vmem>>, %arg2: memref<4x128x128xbf16, #tpu.memory_space<vmem>>, %arg3: memref<1x128xf32, #tpu.memory_space<vmem>>, %arg4: memref<1x128xf32, #tpu.memory_space<vmem>>, %arg5: memref<4x32x128xbf16, #tpu.memory_space<vmem>>) attributes {dimension_semantics = [#tpu.dimension_semantics<arbitrary>], iteration_bounds = array<i64: 1>, scalar_prefetch = 0 : i64, scratch_operands = 0 : i64, tpu.core_type = #tpu.core_type<tc>, window_params = [{pipeline_mode = #tpu.pipeline_mode<synchronous>, transform_indices = @transform_0, window_bounds = array<i64: 32, 128>}, {pipeline_mode = #tpu.pipeline_mode<synchronous>, transform_indices = @transform_1, window_bounds = array<i64: 4, 128, 128>}, {pipeline_mode = #tpu.pipeline_mode<synchronous>, transform_indices = @transform_2, window_bounds = array<i64: 1, 128>}, {pipeline_mode = #tpu.pipeline_mode<synchronous>, transform_indices = @transform_3, window_bounds = array<i64: 1, 128>}, {pipeline_mode = #tpu.pipeline_mode<synchronous>, transform_indices = @transform_4, window_bounds = array<i64: 4, 32, 128>}]} {
    %c0 = arith.constant 0 : index
    %c0_0 = arith.constant 0 : index
    %0 = vector.load %arg1[%c0, %c0_0] : memref<32x128xbf16, #tpu.memory_space<vmem>>, vector<32x128xbf16>
    %cst = arith.constant 0.000000e+00 : f32
    %1 = vector.broadcast %cst : f32 to vector<1x128xf32>
    %cst_1 = arith.constant 0.000000e+00 : f32
    %2 = vector.broadcast %cst_1 : f32 to vector<1x128xf32>
    %c0_2 = arith.constant 0 : index
    %c0_3 = arith.constant 0 : index
    %c0_4 = arith.constant 0 : index
    %3 = vector.load %arg2[%c0_2, %c0_3, %c0_4] : memref<4x128x128xbf16, #tpu.memory_space<vmem>>, vector<1x128x128xbf16>
    %4 = vector.shape_cast %3 : vector<1x128x128xbf16> to vector<128x128xbf16>
    %cst_5 = arith.constant dense<0.000000e+00> : vector<32x128xf32>
    %5 = tpu.matmul %0, %4, %cst_5 {dimension_numbers = #tpu.dot_dimension_numbers<[1], [0], [0], [1], [0, 0, 1, 1], [], []>} : vector<32x128xbf16>, vector<128x128xbf16>, vector<32x128xf32> -> vector<32x128xf32>
    %cst_6 = arith.constant dense<0.000000e+00> : vector<128xf32>
    %6 = vector.multi_reduction <add>, %5, %cst_6 [0] : vector<32x128xf32> to vector<128xf32>
    %7 = vector.shape_cast %6 : vector<128xf32> to vector<1x128xf32>
    %8 = arith.addf %1, %7 : vector<1x128xf32>
    %9 = arith.mulf %5, %5 : vector<32x128xf32>
    %cst_7 = arith.constant dense<0.000000e+00> : vector<128xf32>
    %10 = vector.multi_reduction <add>, %9, %cst_7 [0] : vector<32x128xf32> to vector<128xf32>
    %11 = vector.shape_cast %10 : vector<128xf32> to vector<1x128xf32>
    %12 = arith.addf %2, %11 : vector<1x128xf32>
    %c1 = arith.constant 1 : index
    %c0_8 = arith.constant 0 : index
    %c0_9 = arith.constant 0 : index
    %13 = vector.load %arg2[%c1, %c0_8, %c0_9] : memref<4x128x128xbf16, #tpu.memory_space<vmem>>, vector<1x128x128xbf16>
    %14 = vector.shape_cast %13 : vector<1x128x128xbf16> to vector<128x128xbf16>
    %cst_10 = arith.constant dense<0.000000e+00> : vector<32x128xf32>
    %15 = tpu.matmul %0, %14, %cst_10 {dimension_numbers = #tpu.dot_dimension_numbers<[1], [0], [0], [1], [0, 0, 1, 1], [], []>} : vector<32x128xbf16>, vector<128x128xbf16>, vector<32x128xf32> -> vector<32x128xf32>
    %cst_11 = arith.constant dense<0.000000e+00> : vector<128xf32>
    %16 = vector.multi_reduction <add>, %15, %cst_11 [0] : vector<32x128xf32> to vector<128xf32>
    %17 = vector.shape_cast %16 : vector<128xf32> to vector<1x128xf32>
    %18 = arith.addf %8, %17 : vector<1x128xf32>
    %19 = arith.mulf %15, %15 : vector<32x128xf32>
    %cst_12 = arith.constant dense<0.000000e+00> : vector<128xf32>
    %20 = vector.multi_reduction <add>, %19, %cst_12 [0] : vector<32x128xf32> to vector<128xf32>
    %21 = vector.shape_cast %20 : vector<128xf32> to vector<1x128xf32>
    %22 = arith.addf %12, %21 : vector<1x128xf32>
    %c2 = arith.constant 2 : index
    %c0_13 = arith.constant 0 : index
    %c0_14 = arith.constant 0 : index
    %23 = vector.load %arg2[%c2, %c0_13, %c0_14] : memref<4x128x128xbf16, #tpu.memory_space<vmem>>, vector<1x128x128xbf16>
    %24 = vector.shape_cast %23 : vector<1x128x128xbf16> to vector<128x128xbf16>
    %cst_15 = arith.constant dense<0.000000e+00> : vector<32x128xf32>
    %25 = tpu.matmul %0, %24, %cst_15 {dimension_numbers = #tpu.dot_dimension_numbers<[1], [0], [0], [1], [0, 0, 1, 1], [], []>} : vector<32x128xbf16>, vector<128x128xbf16>, vector<32x128xf32> -> vector<32x128xf32>
    %cst_16 = arith.constant dense<0.000000e+00> : vector<128xf32>
    %26 = vector.multi_reduction <add>, %25, %cst_16 [0] : vector<32x128xf32> to vector<128xf32>
    %27 = vector.shape_cast %26 : vector<128xf32> to vector<1x128xf32>
    %28 = arith.addf %18, %27 : vector<1x128xf32>
    %29 = arith.mulf %25, %25 : vector<32x128xf32>
    %cst_17 = arith.constant dense<0.000000e+00> : vector<128xf32>
    %30 = vector.multi_reduction <add>, %29, %cst_17 [0] : vector<32x128xf32> to vector<128xf32>
    %31 = vector.shape_cast %30 : vector<128xf32> to vector<1x128xf32>
    %32 = arith.addf %22, %31 : vector<1x128xf32>
    %c3 = arith.constant 3 : index
    %c0_18 = arith.constant 0 : index
    %c0_19 = arith.constant 0 : index
    %33 = vector.load %arg2[%c3, %c0_18, %c0_19] : memref<4x128x128xbf16, #tpu.memory_space<vmem>>, vector<1x128x128xbf16>
    %34 = vector.shape_cast %33 : vector<1x128x128xbf16> to vector<128x128xbf16>
    %cst_20 = arith.constant dense<0.000000e+00> : vector<32x128xf32>
    %35 = tpu.matmul %0, %34, %cst_20 {dimension_numbers = #tpu.dot_dimension_numbers<[1], [0], [0], [1], [0, 0, 1, 1], [], []>} : vector<32x128xbf16>, vector<128x128xbf16>, vector<32x128xf32> -> vector<32x128xf32>
    %cst_21 = arith.constant dense<0.000000e+00> : vector<128xf32>
    %36 = vector.multi_reduction <add>, %35, %cst_21 [0] : vector<32x128xf32> to vector<128xf32>
    %37 = vector.shape_cast %36 : vector<128xf32> to vector<1x128xf32>
    %38 = arith.addf %28, %37 : vector<1x128xf32>
    %39 = arith.mulf %35, %35 : vector<32x128xf32>
    %cst_22 = arith.constant dense<0.000000e+00> : vector<128xf32>
    %40 = vector.multi_reduction <add>, %39, %cst_22 [0] : vector<32x128xf32> to vector<128xf32>
    %41 = vector.shape_cast %40 : vector<128xf32> to vector<1x128xf32>
    %42 = arith.addf %32, %41 : vector<1x128xf32>
    %cst_23 = arith.constant 7.812500e-03 : f32
    %43 = vector.broadcast %cst_23 : f32 to vector<1x128xf32>
    %44 = arith.mulf %38, %43 : vector<1x128xf32>
    %cst_24 = arith.constant 7.812500e-03 : f32
    %45 = vector.broadcast %cst_24 : f32 to vector<1x128xf32>
    %46 = arith.mulf %42, %45 : vector<1x128xf32>
    %47 = arith.mulf %44, %44 : vector<1x128xf32>
    %48 = arith.subf %46, %47 : vector<1x128xf32>
    %cst_25 = arith.constant 0.000000e+00 : f32
    %49 = vector.broadcast %cst_25 : f32 to vector<1x128xf32>
    %50 = arith.maximumf %48, %49 : vector<1x128xf32>
    %c0_26 = arith.constant 0 : index
    %c0_27 = arith.constant 0 : index
    %51 = vector.load %arg3[%c0_26, %c0_27] : memref<1x128xf32, #tpu.memory_space<vmem>>, vector<1x128xf32>
    %cst_28 = arith.constant 9.99999974E-6 : f32
    %52 = vector.broadcast %cst_28 : f32 to vector<1x128xf32>
    %53 = arith.addf %50, %52 : vector<1x128xf32>
    %54 = math.rsqrt %53 : vector<1x128xf32>
    %55 = arith.mulf %51, %54 : vector<1x128xf32>
    %c0_29 = arith.constant 0 : index
    %c0_30 = arith.constant 0 : index
    %56 = vector.load %arg4[%c0_29, %c0_30] : memref<1x128xf32, #tpu.memory_space<vmem>>, vector<1x128xf32>
    %57 = arith.mulf %44, %55 : vector<1x128xf32>
    %58 = arith.subf %56, %57 : vector<1x128xf32>
    %59 = vector.broadcast %55 : vector<1x128xf32> to vector<32x128xf32>
    %60 = arith.mulf %5, %59 : vector<32x128xf32>
    %61 = vector.broadcast %58 : vector<1x128xf32> to vector<32x128xf32>
    %62 = arith.addf %60, %61 : vector<32x128xf32>
    %cst_31 = arith.constant 0.000000e+00 : f32
    %63 = vector.broadcast %cst_31 : f32 to vector<32x128xf32>
    %64 = arith.maximumf %62, %63 : vector<32x128xf32>
    %65 = arith.truncf %64 : vector<32x128xf32> to vector<32x128xbf16>
    %c0_32 = arith.constant 0 : index
    %c0_33 = arith.constant 0 : index
    %c0_34 = arith.constant 0 : index
    %66 = vector.load %arg5[%c0_32, %c0_33, %c0_34] : memref<4x32x128xbf16, #tpu.memory_space<vmem>>, vector<1x32x128xbf16>
    %67 = vector.shape_cast %66 : vector<1x32x128xbf16> to vector<32x128xbf16>
    %68 = vector.shape_cast %65 : vector<32x128xbf16> to vector<1x32x128xbf16>
    tpu.vector_store %arg5[%c0_32, %c0_33, %c0_34], %68 {strides = array<i32>} : memref<4x32x128xbf16, #tpu.memory_space<vmem>>, vector<1x32x128xbf16>,
    %69 = vector.broadcast %55 : vector<1x128xf32> to vector<32x128xf32>
    %70 = arith.mulf %15, %69 : vector<32x128xf32>
    %71 = vector.broadcast %58 : vector<1x128xf32> to vector<32x128xf32>
    %72 = arith.addf %70, %71 : vector<32x128xf32>
    %cst_35 = arith.constant 0.000000e+00 : f32
    %73 = vector.broadcast %cst_35 : f32 to vector<32x128xf32>
    %74 = arith.maximumf %72, %73 : vector<32x128xf32>
    %75 = arith.truncf %74 : vector<32x128xf32> to vector<32x128xbf16>
    %c1_36 = arith.constant 1 : index
    %c0_37 = arith.constant 0 : index
    %c0_38 = arith.constant 0 : index
    %76 = vector.load %arg5[%c1_36, %c0_37, %c0_38] : memref<4x32x128xbf16, #tpu.memory_space<vmem>>, vector<1x32x128xbf16>
    %77 = vector.shape_cast %76 : vector<1x32x128xbf16> to vector<32x128xbf16>
    %78 = vector.shape_cast %75 : vector<32x128xbf16> to vector<1x32x128xbf16>
    tpu.vector_store %arg5[%c1_36, %c0_37, %c0_38], %78 {strides = array<i32>} : memref<4x32x128xbf16, #tpu.memory_space<vmem>>, vector<1x32x128xbf16>,
    %79 = vector.broadcast %55 : vector<1x128xf32> to vector<32x128xf32>
    %80 = arith.mulf %25, %79 : vector<32x128xf32>
    %81 = vector.broadcast %58 : vector<1x128xf32> to vector<32x128xf32>
    %82 = arith.addf %80, %81 : vector<32x128xf32>
    %cst_39 = arith.constant 0.000000e+00 : f32
    %83 = vector.broadcast %cst_39 : f32 to vector<32x128xf32>
    %84 = arith.maximumf %82, %83 : vector<32x128xf32>
    %85 = arith.truncf %84 : vector<32x128xf32> to vector<32x128xbf16>
    %c2_40 = arith.constant 2 : index
    %c0_41 = arith.constant 0 : index
    %c0_42 = arith.constant 0 : index
    %86 = vector.load %arg5[%c2_40, %c0_41, %c0_42] : memref<4x32x128xbf16, #tpu.memory_space<vmem>>, vector<1x32x128xbf16>
    %87 = vector.shape_cast %86 : vector<1x32x128xbf16> to vector<32x128xbf16>
    %88 = vector.shape_cast %85 : vector<32x128xbf16> to vector<1x32x128xbf16>
    tpu.vector_store %arg5[%c2_40, %c0_41, %c0_42], %88 {strides = array<i32>} : memref<4x32x128xbf16, #tpu.memory_space<vmem>>, vector<1x32x128xbf16>,
    %89 = vector.broadcast %55 : vector<1x128xf32> to vector<32x128xf32>
    %90 = arith.mulf %35, %89 : vector<32x128xf32>
    %91 = vector.broadcast %58 : vector<1x128xf32> to vector<32x128xf32>
    %92 = arith.addf %90, %91 : vector<32x128xf32>
    %cst_43 = arith.constant 0.000000e+00 : f32
    %93 = vector.broadcast %cst_43 : f32 to vector<32x128xf32>
    %94 = arith.maximumf %92, %93 : vector<32x128xf32>
    %95 = arith.truncf %94 : vector<32x128xf32> to vector<32x128xbf16>
    %c3_44 = arith.constant 3 : index
    %c0_45 = arith.constant 0 : index
    %c0_46 = arith.constant 0 : index
    %96 = vector.load %arg5[%c3_44, %c0_45, %c0_46] : memref<4x32x128xbf16, #tpu.memory_space<vmem>>, vector<1x32x128xbf16>
    %97 = vector.shape_cast %96 : vector<1x32x128xbf16> to vector<32x128xbf16>
    %98 = vector.shape_cast %95 : vector<32x128xbf16> to vector<1x32x128xbf16>
    tpu.vector_store %arg5[%c3_44, %c0_45, %c0_46], %98 {strides = array<i32>} : memref<4x32x128xbf16, #tpu.memory_space<vmem>>, vector<1x32x128xbf16>,
    return
  }
  func.func @transform_0(%arg0: i32) -> (i32, i32) {
    %c0_i32 = arith.constant 0 : i32
    %c0_i32_0 = arith.constant 0 : i32
    %c0_i32_1 = arith.constant 0 : i32
    return %c0_i32, %c0_i32_0 : i32, i32
  }
  func.func @transform_1(%arg0: i32) -> (i32, i32, i32) {
    %c0_i32 = arith.constant 0 : i32
    %c0_i32_0 = arith.constant 0 : i32
    %c0_i32_1 = arith.constant 0 : i32
    %c0_i32_2 = arith.constant 0 : i32
    return %c0_i32, %c0_i32_0, %c0_i32_1 : i32, i32, i32
  }
  func.func @transform_2(%arg0: i32) -> (i32, i32) {
    %c0_i32 = arith.constant 0 : i32
    %c0_i32_0 = arith.constant 0 : i32
    %c0_i32_1 = arith.constant 0 : i32
    return %c0_i32, %c0_i32_0 : i32, i32
  }
  func.func @transform_3(%arg0: i32) -> (i32, i32) {
    %c0_i32 = arith.constant 0 : i32
    %c0_i32_0 = arith.constant 0 : i32
    %c0_i32_1 = arith.constant 0 : i32
    return %c0_i32, %c0_i32_0 : i32, i32
  }
  func.func @transform_4(%arg0: i32) -> (i32, i32, i32) {
    %c0_i32 = arith.constant 0 : i32
    %c0_i32_0 = arith.constant 0 : i32
    %c0_i32_1 = arith.constant 0 : i32
    %c0_i32_2 = arith.constant 0 : i32
    return %c0_i32, %c0_i32_0, %c0_i32_1 : i32, i32, i32
  }
}

module attributes {stable_mosaic.version = 11 : i64} {
  func.func @_deconv_bn_relu_kernel(%arg0: i32, %arg1: memref<128x128xbf16, #tpu.memory_space<vmem>>, %arg2: memref<4x128x128xbf16, #tpu.memory_space<vmem>>, %arg3: memref<1x128xf32, #tpu.memory_space<vmem>>, %arg4: memref<1x128xf32, #tpu.memory_space<vmem>>, %arg5: memref<4x128x128xbf16, #tpu.memory_space<vmem>>) attributes {dimension_semantics = [#tpu.dimension_semantics<arbitrary>], iteration_bounds = array<i64: 1>, scalar_prefetch = 0 : i64, scratch_operands = 0 : i64, tpu.core_type = #tpu.core_type<tc>, window_params = [{pipeline_mode = #tpu.pipeline_mode<synchronous>, transform_indices = @transform_0, window_bounds = array<i64: 128, 128>}, {pipeline_mode = #tpu.pipeline_mode<synchronous>, transform_indices = @transform_1, window_bounds = array<i64: 4, 128, 128>}, {pipeline_mode = #tpu.pipeline_mode<synchronous>, transform_indices = @transform_2, window_bounds = array<i64: 1, 128>}, {pipeline_mode = #tpu.pipeline_mode<synchronous>, transform_indices = @transform_3, window_bounds = array<i64: 1, 128>}, {pipeline_mode = #tpu.pipeline_mode<synchronous>, transform_indices = @transform_4, window_bounds = array<i64: 4, 128, 128>}]} {
    %c0 = arith.constant 0 : index
    %c0_0 = arith.constant 0 : index
    %0 = vector.load %arg1[%c0, %c0_0] : memref<128x128xbf16, #tpu.memory_space<vmem>>, vector<128x128xbf16>
    %cst = arith.constant 0.000000e+00 : f32
    %1 = vector.broadcast %cst : f32 to vector<1x128xf32>
    %cst_1 = arith.constant 0.000000e+00 : f32
    %2 = vector.broadcast %cst_1 : f32 to vector<1x128xf32>
    %c0_2 = arith.constant 0 : index
    %c0_3 = arith.constant 0 : index
    %c0_4 = arith.constant 0 : index
    %3 = vector.load %arg2[%c0_2, %c0_3, %c0_4] : memref<4x128x128xbf16, #tpu.memory_space<vmem>>, vector<1x128x128xbf16>
    %4 = vector.shape_cast %3 : vector<1x128x128xbf16> to vector<128x128xbf16>
    %cst_5 = arith.constant dense<0.000000e+00> : vector<128x128xf32>
    %5 = tpu.matmul %0, %4, %cst_5 {dimension_numbers = #tpu.dot_dimension_numbers<[1], [0], [0], [1], [0, 0, 1, 1], [], []>} : vector<128x128xbf16>, vector<128x128xbf16>, vector<128x128xf32> -> vector<128x128xf32>
    %cst_6 = arith.constant dense<0.000000e+00> : vector<128xf32>
    %6 = vector.multi_reduction <add>, %5, %cst_6 [0] : vector<128x128xf32> to vector<128xf32>
    %7 = vector.shape_cast %6 : vector<128xf32> to vector<1x128xf32>
    %8 = arith.addf %1, %7 : vector<1x128xf32>
    %9 = arith.mulf %5, %5 : vector<128x128xf32>
    %cst_7 = arith.constant dense<0.000000e+00> : vector<128xf32>
    %10 = vector.multi_reduction <add>, %9, %cst_7 [0] : vector<128x128xf32> to vector<128xf32>
    %11 = vector.shape_cast %10 : vector<128xf32> to vector<1x128xf32>
    %12 = arith.addf %2, %11 : vector<1x128xf32>
    %c1 = arith.constant 1 : index
    %c0_8 = arith.constant 0 : index
    %c0_9 = arith.constant 0 : index
    %13 = vector.load %arg2[%c1, %c0_8, %c0_9] : memref<4x128x128xbf16, #tpu.memory_space<vmem>>, vector<1x128x128xbf16>
    %14 = vector.shape_cast %13 : vector<1x128x128xbf16> to vector<128x128xbf16>
    %cst_10 = arith.constant dense<0.000000e+00> : vector<128x128xf32>
    %15 = tpu.matmul %0, %14, %cst_10 {dimension_numbers = #tpu.dot_dimension_numbers<[1], [0], [0], [1], [0, 0, 1, 1], [], []>} : vector<128x128xbf16>, vector<128x128xbf16>, vector<128x128xf32> -> vector<128x128xf32>
    %cst_11 = arith.constant dense<0.000000e+00> : vector<128xf32>
    %16 = vector.multi_reduction <add>, %15, %cst_11 [0] : vector<128x128xf32> to vector<128xf32>
    %17 = vector.shape_cast %16 : vector<128xf32> to vector<1x128xf32>
    %18 = arith.addf %8, %17 : vector<1x128xf32>
    %19 = arith.mulf %15, %15 : vector<128x128xf32>
    %cst_12 = arith.constant dense<0.000000e+00> : vector<128xf32>
    %20 = vector.multi_reduction <add>, %19, %cst_12 [0] : vector<128x128xf32> to vector<128xf32>
    %21 = vector.shape_cast %20 : vector<128xf32> to vector<1x128xf32>
    %22 = arith.addf %12, %21 : vector<1x128xf32>
    %c2 = arith.constant 2 : index
    %c0_13 = arith.constant 0 : index
    %c0_14 = arith.constant 0 : index
    %23 = vector.load %arg2[%c2, %c0_13, %c0_14] : memref<4x128x128xbf16, #tpu.memory_space<vmem>>, vector<1x128x128xbf16>
    %24 = vector.shape_cast %23 : vector<1x128x128xbf16> to vector<128x128xbf16>
    %cst_15 = arith.constant dense<0.000000e+00> : vector<128x128xf32>
    %25 = tpu.matmul %0, %24, %cst_15 {dimension_numbers = #tpu.dot_dimension_numbers<[1], [0], [0], [1], [0, 0, 1, 1], [], []>} : vector<128x128xbf16>, vector<128x128xbf16>, vector<128x128xf32> -> vector<128x128xf32>
    %cst_16 = arith.constant dense<0.000000e+00> : vector<128xf32>
    %26 = vector.multi_reduction <add>, %25, %cst_16 [0] : vector<128x128xf32> to vector<128xf32>
    %27 = vector.shape_cast %26 : vector<128xf32> to vector<1x128xf32>
    %28 = arith.addf %18, %27 : vector<1x128xf32>
    %29 = arith.mulf %25, %25 : vector<128x128xf32>
    %cst_17 = arith.constant dense<0.000000e+00> : vector<128xf32>
    %30 = vector.multi_reduction <add>, %29, %cst_17 [0] : vector<128x128xf32> to vector<128xf32>
    %31 = vector.shape_cast %30 : vector<128xf32> to vector<1x128xf32>
    %32 = arith.addf %22, %31 : vector<1x128xf32>
    %c3 = arith.constant 3 : index
    %c0_18 = arith.constant 0 : index
    %c0_19 = arith.constant 0 : index
    %33 = vector.load %arg2[%c3, %c0_18, %c0_19] : memref<4x128x128xbf16, #tpu.memory_space<vmem>>, vector<1x128x128xbf16>
    %34 = vector.shape_cast %33 : vector<1x128x128xbf16> to vector<128x128xbf16>
    %cst_20 = arith.constant dense<0.000000e+00> : vector<128x128xf32>
    %35 = tpu.matmul %0, %34, %cst_20 {dimension_numbers = #tpu.dot_dimension_numbers<[1], [0], [0], [1], [0, 0, 1, 1], [], []>} : vector<128x128xbf16>, vector<128x128xbf16>, vector<128x128xf32> -> vector<128x128xf32>
    %cst_21 = arith.constant dense<0.000000e+00> : vector<128xf32>
    %36 = vector.multi_reduction <add>, %35, %cst_21 [0] : vector<128x128xf32> to vector<128xf32>
    %37 = vector.shape_cast %36 : vector<128xf32> to vector<1x128xf32>
    %38 = arith.addf %28, %37 : vector<1x128xf32>
    %39 = arith.mulf %35, %35 : vector<128x128xf32>
    %cst_22 = arith.constant dense<0.000000e+00> : vector<128xf32>
    %40 = vector.multi_reduction <add>, %39, %cst_22 [0] : vector<128x128xf32> to vector<128xf32>
    %41 = vector.shape_cast %40 : vector<128xf32> to vector<1x128xf32>
    %42 = arith.addf %32, %41 : vector<1x128xf32>
    %cst_23 = arith.constant 0.001953125 : f32
    %43 = vector.broadcast %cst_23 : f32 to vector<1x128xf32>
    %44 = arith.mulf %38, %43 : vector<1x128xf32>
    %cst_24 = arith.constant 0.001953125 : f32
    %45 = vector.broadcast %cst_24 : f32 to vector<1x128xf32>
    %46 = arith.mulf %42, %45 : vector<1x128xf32>
    %47 = arith.mulf %44, %44 : vector<1x128xf32>
    %48 = arith.subf %46, %47 : vector<1x128xf32>
    %cst_25 = arith.constant 0.000000e+00 : f32
    %49 = vector.broadcast %cst_25 : f32 to vector<1x128xf32>
    %50 = arith.maximumf %48, %49 : vector<1x128xf32>
    %c0_26 = arith.constant 0 : index
    %c0_27 = arith.constant 0 : index
    %51 = vector.load %arg3[%c0_26, %c0_27] : memref<1x128xf32, #tpu.memory_space<vmem>>, vector<1x128xf32>
    %cst_28 = arith.constant 9.99999974E-6 : f32
    %52 = vector.broadcast %cst_28 : f32 to vector<1x128xf32>
    %53 = arith.addf %50, %52 : vector<1x128xf32>
    %54 = math.rsqrt %53 : vector<1x128xf32>
    %55 = arith.mulf %51, %54 : vector<1x128xf32>
    %c0_29 = arith.constant 0 : index
    %c0_30 = arith.constant 0 : index
    %56 = vector.load %arg4[%c0_29, %c0_30] : memref<1x128xf32, #tpu.memory_space<vmem>>, vector<1x128xf32>
    %57 = arith.mulf %44, %55 : vector<1x128xf32>
    %58 = arith.subf %56, %57 : vector<1x128xf32>
    %59 = vector.broadcast %55 : vector<1x128xf32> to vector<128x128xf32>
    %60 = arith.mulf %5, %59 : vector<128x128xf32>
    %61 = vector.broadcast %58 : vector<1x128xf32> to vector<128x128xf32>
    %62 = arith.addf %60, %61 : vector<128x128xf32>
    %cst_31 = arith.constant 0.000000e+00 : f32
    %63 = vector.broadcast %cst_31 : f32 to vector<128x128xf32>
    %64 = arith.maximumf %62, %63 : vector<128x128xf32>
    %65 = arith.truncf %64 : vector<128x128xf32> to vector<128x128xbf16>
    %c0_32 = arith.constant 0 : index
    %c0_33 = arith.constant 0 : index
    %c0_34 = arith.constant 0 : index
    %66 = vector.load %arg5[%c0_32, %c0_33, %c0_34] : memref<4x128x128xbf16, #tpu.memory_space<vmem>>, vector<1x128x128xbf16>
    %67 = vector.shape_cast %66 : vector<1x128x128xbf16> to vector<128x128xbf16>
    %68 = vector.shape_cast %65 : vector<128x128xbf16> to vector<1x128x128xbf16>
    tpu.vector_store %arg5[%c0_32, %c0_33, %c0_34], %68 {strides = array<i32>} : memref<4x128x128xbf16, #tpu.memory_space<vmem>>, vector<1x128x128xbf16>,
    %69 = vector.broadcast %55 : vector<1x128xf32> to vector<128x128xf32>
    %70 = arith.mulf %15, %69 : vector<128x128xf32>
    %71 = vector.broadcast %58 : vector<1x128xf32> to vector<128x128xf32>
    %72 = arith.addf %70, %71 : vector<128x128xf32>
    %cst_35 = arith.constant 0.000000e+00 : f32
    %73 = vector.broadcast %cst_35 : f32 to vector<128x128xf32>
    %74 = arith.maximumf %72, %73 : vector<128x128xf32>
    %75 = arith.truncf %74 : vector<128x128xf32> to vector<128x128xbf16>
    %c1_36 = arith.constant 1 : index
    %c0_37 = arith.constant 0 : index
    %c0_38 = arith.constant 0 : index
    %76 = vector.load %arg5[%c1_36, %c0_37, %c0_38] : memref<4x128x128xbf16, #tpu.memory_space<vmem>>, vector<1x128x128xbf16>
    %77 = vector.shape_cast %76 : vector<1x128x128xbf16> to vector<128x128xbf16>
    %78 = vector.shape_cast %75 : vector<128x128xbf16> to vector<1x128x128xbf16>
    tpu.vector_store %arg5[%c1_36, %c0_37, %c0_38], %78 {strides = array<i32>} : memref<4x128x128xbf16, #tpu.memory_space<vmem>>, vector<1x128x128xbf16>,
    %79 = vector.broadcast %55 : vector<1x128xf32> to vector<128x128xf32>
    %80 = arith.mulf %25, %79 : vector<128x128xf32>
    %81 = vector.broadcast %58 : vector<1x128xf32> to vector<128x128xf32>
    %82 = arith.addf %80, %81 : vector<128x128xf32>
    %cst_39 = arith.constant 0.000000e+00 : f32
    %83 = vector.broadcast %cst_39 : f32 to vector<128x128xf32>
    %84 = arith.maximumf %82, %83 : vector<128x128xf32>
    %85 = arith.truncf %84 : vector<128x128xf32> to vector<128x128xbf16>
    %c2_40 = arith.constant 2 : index
    %c0_41 = arith.constant 0 : index
    %c0_42 = arith.constant 0 : index
    %86 = vector.load %arg5[%c2_40, %c0_41, %c0_42] : memref<4x128x128xbf16, #tpu.memory_space<vmem>>, vector<1x128x128xbf16>
    %87 = vector.shape_cast %86 : vector<1x128x128xbf16> to vector<128x128xbf16>
    %88 = vector.shape_cast %85 : vector<128x128xbf16> to vector<1x128x128xbf16>
    tpu.vector_store %arg5[%c2_40, %c0_41, %c0_42], %88 {strides = array<i32>} : memref<4x128x128xbf16, #tpu.memory_space<vmem>>, vector<1x128x128xbf16>,
    %89 = vector.broadcast %55 : vector<1x128xf32> to vector<128x128xf32>
    %90 = arith.mulf %35, %89 : vector<128x128xf32>
    %91 = vector.broadcast %58 : vector<1x128xf32> to vector<128x128xf32>
    %92 = arith.addf %90, %91 : vector<128x128xf32>
    %cst_43 = arith.constant 0.000000e+00 : f32
    %93 = vector.broadcast %cst_43 : f32 to vector<128x128xf32>
    %94 = arith.maximumf %92, %93 : vector<128x128xf32>
    %95 = arith.truncf %94 : vector<128x128xf32> to vector<128x128xbf16>
    %c3_44 = arith.constant 3 : index
    %c0_45 = arith.constant 0 : index
    %c0_46 = arith.constant 0 : index
    %96 = vector.load %arg5[%c3_44, %c0_45, %c0_46] : memref<4x128x128xbf16, #tpu.memory_space<vmem>>, vector<1x128x128xbf16>
    %97 = vector.shape_cast %96 : vector<1x128x128xbf16> to vector<128x128xbf16>
    %98 = vector.shape_cast %95 : vector<128x128xbf16> to vector<1x128x128xbf16>
    tpu.vector_store %arg5[%c3_44, %c0_45, %c0_46], %98 {strides = array<i32>} : memref<4x128x128xbf16, #tpu.memory_space<vmem>>, vector<1x128x128xbf16>,
    return
  }
  func.func @transform_0(%arg0: i32) -> (i32, i32) {
    %c0_i32 = arith.constant 0 : i32
    %c0_i32_0 = arith.constant 0 : i32
    %c0_i32_1 = arith.constant 0 : i32
    return %c0_i32, %c0_i32_0 : i32, i32
  }
  func.func @transform_1(%arg0: i32) -> (i32, i32, i32) {
    %c0_i32 = arith.constant 0 : i32
    %c0_i32_0 = arith.constant 0 : i32
    %c0_i32_1 = arith.constant 0 : i32
    %c0_i32_2 = arith.constant 0 : i32
    return %c0_i32, %c0_i32_0, %c0_i32_1 : i32, i32, i32
  }
  func.func @transform_2(%arg0: i32) -> (i32, i32) {
    %c0_i32 = arith.constant 0 : i32
    %c0_i32_0 = arith.constant 0 : i32
    %c0_i32_1 = arith.constant 0 : i32
    return %c0_i32, %c0_i32_0 : i32, i32
  }
  func.func @transform_3(%arg0: i32) -> (i32, i32) {
    %c0_i32 = arith.constant 0 : i32
    %c0_i32_0 = arith.constant 0 : i32
    %c0_i32_1 = arith.constant 0 : i32
    return %c0_i32, %c0_i32_0 : i32, i32
  }
  func.func @transform_4(%arg0: i32) -> (i32, i32, i32) {
    %c0_i32 = arith.constant 0 : i32
    %c0_i32_0 = arith.constant 0 : i32
    %c0_i32_1 = arith.constant 0 : i32
    %c0_i32_2 = arith.constant 0 : i32
    return %c0_i32, %c0_i32_0, %c0_i32_1 : i32, i32, i32
  }
}

module attributes {stable_mosaic.version = 11 : i64} {
  func.func @_deconv_bn_relu_kernel(%arg0: i32, %arg1: memref<512x128xbf16, #tpu.memory_space<vmem>>, %arg2: memref<4x128x128xbf16, #tpu.memory_space<vmem>>, %arg3: memref<1x128xf32, #tpu.memory_space<vmem>>, %arg4: memref<1x128xf32, #tpu.memory_space<vmem>>, %arg5: memref<4x512x128xbf16, #tpu.memory_space<vmem>>) attributes {dimension_semantics = [#tpu.dimension_semantics<arbitrary>], iteration_bounds = array<i64: 1>, scalar_prefetch = 0 : i64, scratch_operands = 0 : i64, tpu.core_type = #tpu.core_type<tc>, window_params = [{pipeline_mode = #tpu.pipeline_mode<synchronous>, transform_indices = @transform_0, window_bounds = array<i64: 512, 128>}, {pipeline_mode = #tpu.pipeline_mode<synchronous>, transform_indices = @transform_1, window_bounds = array<i64: 4, 128, 128>}, {pipeline_mode = #tpu.pipeline_mode<synchronous>, transform_indices = @transform_2, window_bounds = array<i64: 1, 128>}, {pipeline_mode = #tpu.pipeline_mode<synchronous>, transform_indices = @transform_3, window_bounds = array<i64: 1, 128>}, {pipeline_mode = #tpu.pipeline_mode<synchronous>, transform_indices = @transform_4, window_bounds = array<i64: 4, 512, 128>}]} {
    %c0 = arith.constant 0 : index
    %c0_0 = arith.constant 0 : index
    %0 = vector.load %arg1[%c0, %c0_0] : memref<512x128xbf16, #tpu.memory_space<vmem>>, vector<512x128xbf16>
    %cst = arith.constant 0.000000e+00 : f32
    %1 = vector.broadcast %cst : f32 to vector<1x128xf32>
    %cst_1 = arith.constant 0.000000e+00 : f32
    %2 = vector.broadcast %cst_1 : f32 to vector<1x128xf32>
    %c0_2 = arith.constant 0 : index
    %c0_3 = arith.constant 0 : index
    %c0_4 = arith.constant 0 : index
    %3 = vector.load %arg2[%c0_2, %c0_3, %c0_4] : memref<4x128x128xbf16, #tpu.memory_space<vmem>>, vector<1x128x128xbf16>
    %4 = vector.shape_cast %3 : vector<1x128x128xbf16> to vector<128x128xbf16>
    %cst_5 = arith.constant dense<0.000000e+00> : vector<512x128xf32>
    %5 = tpu.matmul %0, %4, %cst_5 {dimension_numbers = #tpu.dot_dimension_numbers<[1], [0], [0], [1], [0, 0, 1, 1], [], []>} : vector<512x128xbf16>, vector<128x128xbf16>, vector<512x128xf32> -> vector<512x128xf32>
    %cst_6 = arith.constant dense<0.000000e+00> : vector<128xf32>
    %6 = vector.multi_reduction <add>, %5, %cst_6 [0] : vector<512x128xf32> to vector<128xf32>
    %7 = vector.shape_cast %6 : vector<128xf32> to vector<1x128xf32>
    %8 = arith.addf %1, %7 : vector<1x128xf32>
    %9 = arith.mulf %5, %5 : vector<512x128xf32>
    %cst_7 = arith.constant dense<0.000000e+00> : vector<128xf32>
    %10 = vector.multi_reduction <add>, %9, %cst_7 [0] : vector<512x128xf32> to vector<128xf32>
    %11 = vector.shape_cast %10 : vector<128xf32> to vector<1x128xf32>
    %12 = arith.addf %2, %11 : vector<1x128xf32>
    %c1 = arith.constant 1 : index
    %c0_8 = arith.constant 0 : index
    %c0_9 = arith.constant 0 : index
    %13 = vector.load %arg2[%c1, %c0_8, %c0_9] : memref<4x128x128xbf16, #tpu.memory_space<vmem>>, vector<1x128x128xbf16>
    %14 = vector.shape_cast %13 : vector<1x128x128xbf16> to vector<128x128xbf16>
    %cst_10 = arith.constant dense<0.000000e+00> : vector<512x128xf32>
    %15 = tpu.matmul %0, %14, %cst_10 {dimension_numbers = #tpu.dot_dimension_numbers<[1], [0], [0], [1], [0, 0, 1, 1], [], []>} : vector<512x128xbf16>, vector<128x128xbf16>, vector<512x128xf32> -> vector<512x128xf32>
    %cst_11 = arith.constant dense<0.000000e+00> : vector<128xf32>
    %16 = vector.multi_reduction <add>, %15, %cst_11 [0] : vector<512x128xf32> to vector<128xf32>
    %17 = vector.shape_cast %16 : vector<128xf32> to vector<1x128xf32>
    %18 = arith.addf %8, %17 : vector<1x128xf32>
    %19 = arith.mulf %15, %15 : vector<512x128xf32>
    %cst_12 = arith.constant dense<0.000000e+00> : vector<128xf32>
    %20 = vector.multi_reduction <add>, %19, %cst_12 [0] : vector<512x128xf32> to vector<128xf32>
    %21 = vector.shape_cast %20 : vector<128xf32> to vector<1x128xf32>
    %22 = arith.addf %12, %21 : vector<1x128xf32>
    %c2 = arith.constant 2 : index
    %c0_13 = arith.constant 0 : index
    %c0_14 = arith.constant 0 : index
    %23 = vector.load %arg2[%c2, %c0_13, %c0_14] : memref<4x128x128xbf16, #tpu.memory_space<vmem>>, vector<1x128x128xbf16>
    %24 = vector.shape_cast %23 : vector<1x128x128xbf16> to vector<128x128xbf16>
    %cst_15 = arith.constant dense<0.000000e+00> : vector<512x128xf32>
    %25 = tpu.matmul %0, %24, %cst_15 {dimension_numbers = #tpu.dot_dimension_numbers<[1], [0], [0], [1], [0, 0, 1, 1], [], []>} : vector<512x128xbf16>, vector<128x128xbf16>, vector<512x128xf32> -> vector<512x128xf32>
    %cst_16 = arith.constant dense<0.000000e+00> : vector<128xf32>
    %26 = vector.multi_reduction <add>, %25, %cst_16 [0] : vector<512x128xf32> to vector<128xf32>
    %27 = vector.shape_cast %26 : vector<128xf32> to vector<1x128xf32>
    %28 = arith.addf %18, %27 : vector<1x128xf32>
    %29 = arith.mulf %25, %25 : vector<512x128xf32>
    %cst_17 = arith.constant dense<0.000000e+00> : vector<128xf32>
    %30 = vector.multi_reduction <add>, %29, %cst_17 [0] : vector<512x128xf32> to vector<128xf32>
    %31 = vector.shape_cast %30 : vector<128xf32> to vector<1x128xf32>
    %32 = arith.addf %22, %31 : vector<1x128xf32>
    %c3 = arith.constant 3 : index
    %c0_18 = arith.constant 0 : index
    %c0_19 = arith.constant 0 : index
    %33 = vector.load %arg2[%c3, %c0_18, %c0_19] : memref<4x128x128xbf16, #tpu.memory_space<vmem>>, vector<1x128x128xbf16>
    %34 = vector.shape_cast %33 : vector<1x128x128xbf16> to vector<128x128xbf16>
    %cst_20 = arith.constant dense<0.000000e+00> : vector<512x128xf32>
    %35 = tpu.matmul %0, %34, %cst_20 {dimension_numbers = #tpu.dot_dimension_numbers<[1], [0], [0], [1], [0, 0, 1, 1], [], []>} : vector<512x128xbf16>, vector<128x128xbf16>, vector<512x128xf32> -> vector<512x128xf32>
    %cst_21 = arith.constant dense<0.000000e+00> : vector<128xf32>
    %36 = vector.multi_reduction <add>, %35, %cst_21 [0] : vector<512x128xf32> to vector<128xf32>
    %37 = vector.shape_cast %36 : vector<128xf32> to vector<1x128xf32>
    %38 = arith.addf %28, %37 : vector<1x128xf32>
    %39 = arith.mulf %35, %35 : vector<512x128xf32>
    %cst_22 = arith.constant dense<0.000000e+00> : vector<128xf32>
    %40 = vector.multi_reduction <add>, %39, %cst_22 [0] : vector<512x128xf32> to vector<128xf32>
    %41 = vector.shape_cast %40 : vector<128xf32> to vector<1x128xf32>
    %42 = arith.addf %32, %41 : vector<1x128xf32>
    %cst_23 = arith.constant 4.8828125E-4 : f32
    %43 = vector.broadcast %cst_23 : f32 to vector<1x128xf32>
    %44 = arith.mulf %38, %43 : vector<1x128xf32>
    %cst_24 = arith.constant 4.8828125E-4 : f32
    %45 = vector.broadcast %cst_24 : f32 to vector<1x128xf32>
    %46 = arith.mulf %42, %45 : vector<1x128xf32>
    %47 = arith.mulf %44, %44 : vector<1x128xf32>
    %48 = arith.subf %46, %47 : vector<1x128xf32>
    %cst_25 = arith.constant 0.000000e+00 : f32
    %49 = vector.broadcast %cst_25 : f32 to vector<1x128xf32>
    %50 = arith.maximumf %48, %49 : vector<1x128xf32>
    %c0_26 = arith.constant 0 : index
    %c0_27 = arith.constant 0 : index
    %51 = vector.load %arg3[%c0_26, %c0_27] : memref<1x128xf32, #tpu.memory_space<vmem>>, vector<1x128xf32>
    %cst_28 = arith.constant 9.99999974E-6 : f32
    %52 = vector.broadcast %cst_28 : f32 to vector<1x128xf32>
    %53 = arith.addf %50, %52 : vector<1x128xf32>
    %54 = math.rsqrt %53 : vector<1x128xf32>
    %55 = arith.mulf %51, %54 : vector<1x128xf32>
    %c0_29 = arith.constant 0 : index
    %c0_30 = arith.constant 0 : index
    %56 = vector.load %arg4[%c0_29, %c0_30] : memref<1x128xf32, #tpu.memory_space<vmem>>, vector<1x128xf32>
    %57 = arith.mulf %44, %55 : vector<1x128xf32>
    %58 = arith.subf %56, %57 : vector<1x128xf32>
    %59 = vector.broadcast %55 : vector<1x128xf32> to vector<512x128xf32>
    %60 = arith.mulf %5, %59 : vector<512x128xf32>
    %61 = vector.broadcast %58 : vector<1x128xf32> to vector<512x128xf32>
    %62 = arith.addf %60, %61 : vector<512x128xf32>
    %cst_31 = arith.constant 0.000000e+00 : f32
    %63 = vector.broadcast %cst_31 : f32 to vector<512x128xf32>
    %64 = arith.maximumf %62, %63 : vector<512x128xf32>
    %65 = arith.truncf %64 : vector<512x128xf32> to vector<512x128xbf16>
    %c0_32 = arith.constant 0 : index
    %c0_33 = arith.constant 0 : index
    %c0_34 = arith.constant 0 : index
    %66 = vector.load %arg5[%c0_32, %c0_33, %c0_34] : memref<4x512x128xbf16, #tpu.memory_space<vmem>>, vector<1x512x128xbf16>
    %67 = vector.shape_cast %66 : vector<1x512x128xbf16> to vector<512x128xbf16>
    %68 = vector.shape_cast %65 : vector<512x128xbf16> to vector<1x512x128xbf16>
    tpu.vector_store %arg5[%c0_32, %c0_33, %c0_34], %68 {strides = array<i32>} : memref<4x512x128xbf16, #tpu.memory_space<vmem>>, vector<1x512x128xbf16>,
    %69 = vector.broadcast %55 : vector<1x128xf32> to vector<512x128xf32>
    %70 = arith.mulf %15, %69 : vector<512x128xf32>
    %71 = vector.broadcast %58 : vector<1x128xf32> to vector<512x128xf32>
    %72 = arith.addf %70, %71 : vector<512x128xf32>
    %cst_35 = arith.constant 0.000000e+00 : f32
    %73 = vector.broadcast %cst_35 : f32 to vector<512x128xf32>
    %74 = arith.maximumf %72, %73 : vector<512x128xf32>
    %75 = arith.truncf %74 : vector<512x128xf32> to vector<512x128xbf16>
    %c1_36 = arith.constant 1 : index
    %c0_37 = arith.constant 0 : index
    %c0_38 = arith.constant 0 : index
    %76 = vector.load %arg5[%c1_36, %c0_37, %c0_38] : memref<4x512x128xbf16, #tpu.memory_space<vmem>>, vector<1x512x128xbf16>
    %77 = vector.shape_cast %76 : vector<1x512x128xbf16> to vector<512x128xbf16>
    %78 = vector.shape_cast %75 : vector<512x128xbf16> to vector<1x512x128xbf16>
    tpu.vector_store %arg5[%c1_36, %c0_37, %c0_38], %78 {strides = array<i32>} : memref<4x512x128xbf16, #tpu.memory_space<vmem>>, vector<1x512x128xbf16>,
    %79 = vector.broadcast %55 : vector<1x128xf32> to vector<512x128xf32>
    %80 = arith.mulf %25, %79 : vector<512x128xf32>
    %81 = vector.broadcast %58 : vector<1x128xf32> to vector<512x128xf32>
    %82 = arith.addf %80, %81 : vector<512x128xf32>
    %cst_39 = arith.constant 0.000000e+00 : f32
    %83 = vector.broadcast %cst_39 : f32 to vector<512x128xf32>
    %84 = arith.maximumf %82, %83 : vector<512x128xf32>
    %85 = arith.truncf %84 : vector<512x128xf32> to vector<512x128xbf16>
    %c2_40 = arith.constant 2 : index
    %c0_41 = arith.constant 0 : index
    %c0_42 = arith.constant 0 : index
    %86 = vector.load %arg5[%c2_40, %c0_41, %c0_42] : memref<4x512x128xbf16, #tpu.memory_space<vmem>>, vector<1x512x128xbf16>
    %87 = vector.shape_cast %86 : vector<1x512x128xbf16> to vector<512x128xbf16>
    %88 = vector.shape_cast %85 : vector<512x128xbf16> to vector<1x512x128xbf16>
    tpu.vector_store %arg5[%c2_40, %c0_41, %c0_42], %88 {strides = array<i32>} : memref<4x512x128xbf16, #tpu.memory_space<vmem>>, vector<1x512x128xbf16>,
    %89 = vector.broadcast %55 : vector<1x128xf32> to vector<512x128xf32>
    %90 = arith.mulf %35, %89 : vector<512x128xf32>
    %91 = vector.broadcast %58 : vector<1x128xf32> to vector<512x128xf32>
    %92 = arith.addf %90, %91 : vector<512x128xf32>
    %cst_43 = arith.constant 0.000000e+00 : f32
    %93 = vector.broadcast %cst_43 : f32 to vector<512x128xf32>
    %94 = arith.maximumf %92, %93 : vector<512x128xf32>
    %95 = arith.truncf %94 : vector<512x128xf32> to vector<512x128xbf16>
    %c3_44 = arith.constant 3 : index
    %c0_45 = arith.constant 0 : index
    %c0_46 = arith.constant 0 : index
    %96 = vector.load %arg5[%c3_44, %c0_45, %c0_46] : memref<4x512x128xbf16, #tpu.memory_space<vmem>>, vector<1x512x128xbf16>
    %97 = vector.shape_cast %96 : vector<1x512x128xbf16> to vector<512x128xbf16>
    %98 = vector.shape_cast %95 : vector<512x128xbf16> to vector<1x512x128xbf16>
    tpu.vector_store %arg5[%c3_44, %c0_45, %c0_46], %98 {strides = array<i32>} : memref<4x512x128xbf16, #tpu.memory_space<vmem>>, vector<1x512x128xbf16>,
    return
  }
  func.func @transform_0(%arg0: i32) -> (i32, i32) {
    %c0_i32 = arith.constant 0 : i32
    %c0_i32_0 = arith.constant 0 : i32
    %c0_i32_1 = arith.constant 0 : i32
    return %c0_i32, %c0_i32_0 : i32, i32
  }
  func.func @transform_1(%arg0: i32) -> (i32, i32, i32) {
    %c0_i32 = arith.constant 0 : i32
    %c0_i32_0 = arith.constant 0 : i32
    %c0_i32_1 = arith.constant 0 : i32
    %c0_i32_2 = arith.constant 0 : i32
    return %c0_i32, %c0_i32_0, %c0_i32_1 : i32, i32, i32
  }
  func.func @transform_2(%arg0: i32) -> (i32, i32) {
    %c0_i32 = arith.constant 0 : i32
    %c0_i32_0 = arith.constant 0 : i32
    %c0_i32_1 = arith.constant 0 : i32
    return %c0_i32, %c0_i32_0 : i32, i32
  }
  func.func @transform_3(%arg0: i32) -> (i32, i32) {
    %c0_i32 = arith.constant 0 : i32
    %c0_i32_0 = arith.constant 0 : i32
    %c0_i32_1 = arith.constant 0 : i32
    return %c0_i32, %c0_i32_0 : i32, i32
  }
  func.func @transform_4(%arg0: i32) -> (i32, i32, i32) {
    %c0_i32 = arith.constant 0 : i32
    %c0_i32_0 = arith.constant 0 : i32
    %c0_i32_1 = arith.constant 0 : i32
    %c0_i32_2 = arith.constant 0 : i32
    return %c0_i32, %c0_i32_0, %c0_i32_1 : i32, i32, i32
  }
}

module attributes {stable_mosaic.version = 11 : i64} {
  func.func @_deconv_tanh_kernel(%arg0: i32, %arg1: memref<2048x128xbf16, #tpu.memory_space<vmem>>, %arg2: memref<128x128xbf16, #tpu.memory_space<vmem>>, %arg3: memref<1x128xf32, #tpu.memory_space<vmem>>, %arg4: memref<2048x128xf32, #tpu.memory_space<vmem>>) attributes {dimension_semantics = [#tpu.dimension_semantics<parallel>], iteration_bounds = array<i64: 1>, scalar_prefetch = 0 : i64, scratch_operands = 0 : i64, tpu.core_type = #tpu.core_type<tc>, window_params = [{transform_indices = @transform_0, window_bounds = array<i64: 2048, 128>}, {pipeline_mode = #tpu.pipeline_mode<synchronous>, transform_indices = @transform_1, window_bounds = array<i64: 128, 128>}, {pipeline_mode = #tpu.pipeline_mode<synchronous>, transform_indices = @transform_2, window_bounds = array<i64: 1, 128>}, {transform_indices = @transform_3, window_bounds = array<i64: 2048, 128>}]} {
    %c0 = arith.constant 0 : index
    %c0_0 = arith.constant 0 : index
    %0 = vector.load %arg1[%c0, %c0_0] : memref<2048x128xbf16, #tpu.memory_space<vmem>>, vector<2048x128xbf16>
    %c0_1 = arith.constant 0 : index
    %c0_2 = arith.constant 0 : index
    %1 = vector.load %arg2[%c0_1, %c0_2] : memref<128x128xbf16, #tpu.memory_space<vmem>>, vector<128x128xbf16>
    %cst = arith.constant dense<0.000000e+00> : vector<2048x128xf32>
    %2 = tpu.matmul %0, %1, %cst {dimension_numbers = #tpu.dot_dimension_numbers<[1], [0], [0], [1], [0, 0, 1, 1], [], []>} : vector<2048x128xbf16>, vector<128x128xbf16>, vector<2048x128xf32> -> vector<2048x128xf32>
    %c0_3 = arith.constant 0 : index
    %c0_4 = arith.constant 0 : index
    %3 = vector.load %arg3[%c0_3, %c0_4] : memref<1x128xf32, #tpu.memory_space<vmem>>, vector<1x128xf32>
    %4 = vector.broadcast %3 : vector<1x128xf32> to vector<2048x128xf32>
    %5 = arith.addf %2, %4 : vector<2048x128xf32>
    %6 = math.tanh %5 : vector<2048x128xf32>
    %c0_5 = arith.constant 0 : index
    %c0_6 = arith.constant 0 : index
    %7 = vector.load %arg4[%c0_5, %c0_6] : memref<2048x128xf32, #tpu.memory_space<vmem>>, vector<2048x128xf32>
    tpu.vector_store %arg4[%c0_5, %c0_6], %6 {strides = array<i32>} : memref<2048x128xf32, #tpu.memory_space<vmem>>, vector<2048x128xf32>,
    return
  }
  func.func @transform_0(%arg0: i32) -> (i32, i32) {
    %c0_i32 = arith.constant 0 : i32
    %c0_i32_0 = arith.constant 0 : i32
    return %arg0, %c0_i32 : i32, i32
  }
  func.func @transform_1(%arg0: i32) -> (i32, i32) {
    %c0_i32 = arith.constant 0 : i32
    %c0_i32_0 = arith.constant 0 : i32
    %c0_i32_1 = arith.constant 0 : i32
    return %c0_i32, %c0_i32_0 : i32, i32
  }
  func.func @transform_2(%arg0: i32) -> (i32, i32) {
    %c0_i32 = arith.constant 0 : i32
    %c0_i32_0 = arith.constant 0 : i32
    %c0_i32_1 = arith.constant 0 : i32
    return %c0_i32, %c0_i32_0 : i32, i32
  }
  func.func @transform_3(%arg0: i32) -> (i32, i32) {
    %c0_i32 = arith.constant 0 : i32
    %c0_i32_0 = arith.constant 0 : i32
    return %arg0, %c0_i32 : i32, i32
  }
}

</mosaic_0001>

<llo_original>
// kernel: decoder_forward_pallas.6
$region0: #{decoder_forward_pallas.6}
  #allocation0 [shape = 'u32[]', space=smem, size = 0x4, offset = 0x4, fixed_abs, tag = 'smem constant byte address 0x4 - core index']
  #allocation1 [shape = 'u32[144,128]{1,0:T(1,128)}', space=vmem, size = 0x12000, scoped, tag = 'internal scratch']
  %s0 = inlined_call_operand.vmem [shape: f32[32,128], index: 0, kind: input, shape index: {}]
  %s1 = inlined_call_operand.hbm [shape: bf16[128,128], index: 1, kind: input, shape index: {}]
  %s2 = inlined_call_operand.hbm [shape: f32[1,128], index: 2, kind: input, shape index: {}]
  %s3 = inlined_call_operand.hbm [shape: f32[1,128], index: 3, kind: input, shape index: {}]
  %s4 = inlined_call_operand.hbm [shape: bf16[128,128], index: 4, kind: input, shape index: {}]
  %s5 = inlined_call_operand.hbm [shape: f32[1,128], index: 5, kind: input, shape index: {}]
  %s6 = inlined_call_operand.hbm [shape: f32[1,128], index: 6, kind: input, shape index: {}]
  %s7 = inlined_call_operand.vmem [shape: f32[32,128], index: 7, kind: output, shape index: {}]
  %s8 = sld [smem:[#allocation0]]
  $region62: #{decoder_forward_pallas.6} parent=0
    _
  %s10 = ssub.s32 1, %s8
  %s11 = scalar_select 0, %s10, %s8
  $region1: #{decoder_forward_pallas.6} parent=0
    #allocation2 [shape = 'u8[32768]{0}', space=vmem, size = 0x8000, scoped, tag = 'input window, operand 1, single buffered']
    #allocation3 [shape = 's32[1]{0}', space=sflag, size = 0x4, scoped, tag = 'scoped memory for decoder_forward_pallas.6']
    #allocation4 [shape = 'u8[512]{0}', space=vmem, size = 0x400, scoped, tag = 'input window, operand 2, single buffered']
    #allocation5 [shape = 's32[1]{0}', space=sflag, size = 0x4, scoped, tag = 'scoped memory for decoder_forward_pallas.6']
    #allocation6 [shape = 'u8[512]{0}', space=vmem, size = 0x400, scoped, tag = 'input window, operand 3, single buffered']
    #allocation7 [shape = 'u8[32768]{0}', space=vmem, size = 0x8000, scoped, tag = 'input window, operand 4, single buffered']
    #allocation8 [shape = 's32[1]{0}', space=sflag, size = 0x4, scoped, tag = 'scoped memory for decoder_forward_pallas.6']
    #allocation9 [shape = 'u8[512]{0}', space=vmem, size = 0x400, scoped, tag = 'input window, operand 5, single buffered']
    #allocation10 [shape = 'u8[512]{0}', space=vmem, size = 0x400, scoped, tag = 'input window, operand 6, single buffered']
    #allocation11 [shape = 's32[1]{0}', space=sflag, size = 0x4, scoped, tag = 'scoped memory for decoder_forward_pallas.6']
    %12 = vsyncpa [#allocation3], 0
    %13 = vsyncpa [#allocation5], 0
    %14 = vsyncpa [#allocation8], 0
    %15 = vsyncpa [#allocation11], 0
    // Predicated region
    $region2: #{decoder_forward_pallas.6} parent=1 // pred_check
      _
    $region3: #{decoder_forward_pallas.6} parent=1 // pred_check_branch
      %17 = sbr.rel (0) target = $region5
    $region4: #{decoder_forward_pallas.6} parent=1 // pred_region
      _
    $region5: #{decoder_forward_pallas.6} parent=1 // pred_fallthru
      _
    // Predicated region
    $region6: #{decoder_forward_pallas.6} parent=1 // pred_check
      _
    $region7: #{decoder_forward_pallas.6} parent=1 // pred_check_branch
      %19 = sbr.rel (0) target = $region9
    $region8: #{decoder_forward_pallas.6} parent=1 // pred_region
      %s21 = ssub.s32 1024, 1024
      %22 = vsyncadd [#allocation3], %s21
      %s23 = sshll.u32 [#allocation2], 4
      %s24 = int_to_ptr.vmem [resolvable:$true] %s23
      %29 = dma.hbm_to_vmem [thread:$0]  %s1, 1024, %s24, [#allocation3], 64, 64, 4
    $region9: #{decoder_forward_pallas.6} parent=1 // pred_fallthru
      _
    // Predicated region
    $region10: #{decoder_forward_pallas.6} parent=1 // pred_check
      _
    $region11: #{decoder_forward_pallas.6} parent=1 // pred_check_branch
      %31 = sbr.rel (0) target = $region13
    $region12: #{decoder_forward_pallas.6} parent=1 // pred_region
      %s33 = ssub.s32 16, 16
      %34 = vsyncadd [#allocation5], %s33
      %s36 = sshll.u32 [#allocation4], 4
      %s37 = int_to_ptr.vmem [resolvable:$true] %s36
      %39 = dma.hbm_to_vmem [thread:$0]  %s2, 16, %s37, [#allocation5]
    $region13: #{decoder_forward_pallas.6} parent=1 // pred_fallthru
      _
    // Predicated region
    $region14: #{decoder_forward_pallas.6} parent=1 // pred_check
      _
    $region15: #{decoder_forward_pallas.6} parent=1 // pred_check_branch
      %41 = sbr.rel (0) target = $region17
    $region16: #{decoder_forward_pallas.6} parent=1 // pred_region
      %s43 = ssub.s32 16, 16
      %44 = vsyncadd [#allocation5], %s43
      %s46 = sshll.u32 [#allocation6], 4
      %s47 = int_to_ptr.vmem [resolvable:$true] %s46
      %49 = dma.hbm_to_vmem [thread:$0]  %s3, 16, %s47, [#allocation5]
    $region17: #{decoder_forward_pallas.6} parent=1 // pred_fallthru
      _
    // Predicated region
    $region18: #{decoder_forward_pallas.6} parent=1 // pred_check
      _
    $region19: #{decoder_forward_pallas.6} parent=1 // pred_check_branch
      %51 = sbr.rel (0) target = $region21
    $region20: #{decoder_forward_pallas.6} parent=1 // pred_region
      %s53 = ssub.s32 1024, 1024
      %54 = vsyncadd [#allocation8], %s53
      %s55 = sshll.u32 [#allocation7], 4
      %s56 = int_to_ptr.vmem [resolvable:$true] %s55
      %61 = dma.hbm_to_vmem [thread:$0]  %s4, 1024, %s56, [#allocation8], 64, 64, 4
    $region21: #{decoder_forward_pallas.6} parent=1 // pred_fallthru
      _
    // Predicated region
    $region22: #{decoder_forward_pallas.6} parent=1 // pred_check
      _
    $region23: #{decoder_forward_pallas.6} parent=1 // pred_check_branch
      %63 = sbr.rel (0) target = $region25
    $region24: #{decoder_forward_pallas.6} parent=1 // pred_region
      %s65 = ssub.s32 16, 16
      %66 = vsyncadd [#allocation8], %s65
      %s68 = sshll.u32 [#allocation9], 4
      %s69 = int_to_ptr.vmem [resolvable:$true] %s68
      %71 = dma.hbm_to_vmem [thread:$0]  %s5, 16, %s69, [#allocation8]
    $region25: #{decoder_forward_pallas.6} parent=1 // pred_fallthru
      _
    // Predicated region
    $region26: #{decoder_forward_pallas.6} parent=1 // pred_check
      _
    $region27: #{decoder_forward_pallas.6} parent=1 // pred_check_branch
      %73 = sbr.rel (0) target = $region29
    $region28: #{decoder_forward_pallas.6} parent=1 // pred_region
      %s75 = ssub.s32 16, 16
      %76 = vsyncadd [#allocation11], %s75
      %s78 = sshll.u32 [#allocation10], 4
      %s79 = int_to_ptr.vmem [resolvable:$true] %s78
      %81 = dma.hbm_to_vmem [thread:$0]  %s6, 16, %s79, [#allocation11]
    $region29: #{decoder_forward_pallas.6} parent=1 // pred_fallthru
      _
    // Predicated region
    $region30: #{decoder_forward_pallas.6} parent=1 // pred_check
      _
    $region31: #{decoder_forward_pallas.6} parent=1 // pred_check_branch
      %83 = sbr.rel (0) target = $region33
    $region32: #{decoder_forward_pallas.6} parent=1 // pred_region
      %84 = dma.done [#allocation3], 1024
    $region33: #{decoder_forward_pallas.6} parent=1 // pred_fallthru
      _
    // Predicated region
    $region34: #{decoder_forward_pallas.6} parent=1 // pred_check
      _
    $region35: #{decoder_forward_pallas.6} parent=1 // pred_check_branch
      %86 = sbr.rel (0) target = $region37
    $region36: #{decoder_forward_pallas.6} parent=1 // pred_region
      %87 = dma.done [#allocation5], 16
    $region37: #{decoder_forward_pallas.6} parent=1 // pred_fallthru
      _
    // Predicated region
    $region38: #{decoder_forward_pallas.6} parent=1 // pred_check
      _
    $region39: #{decoder_forward_pallas.6} parent=1 // pred_check_branch
      %89 = sbr.rel (0) target = $region41
    $region40: #{decoder_forward_pallas.6} parent=1 // pred_region
      %90 = dma.done [#allocation5], 16
    $region41: #{decoder_forward_pallas.6} parent=1 // pred_fallthru
      _
    // Predicated region
    $region42: #{decoder_forward_pallas.6} parent=1 // pred_check
      _
    $region43: #{decoder_forward_pallas.6} parent=1 // pred_check_branch
      %92 = sbr.rel (0) target = $region45
    $region44: #{decoder_forward_pallas.6} parent=1 // pred_region
      %93 = dma.done [#allocation8], 1024
    $region45: #{decoder_forward_pallas.6} parent=1 // pred_fallthru
      _
    // Predicated region
    $region46: #{decoder_forward_pallas.6} parent=1 // pred_check
      _
    $region47: #{decoder_forward_pallas.6} parent=1 // pred_check_branch
      %95 = sbr.rel (0) target = $region49
    $region48: #{decoder_forward_pallas.6} parent=1 // pred_region
      %96 = dma.done [#allocation8], 16
    $region49: #{decoder_forward_pallas.6} parent=1 // pred_fallthru
      _
    // Predicated region
    $region50: #{decoder_forward_pallas.6} parent=1 // pred_check
      _
    $region51: #{decoder_forward_pallas.6} parent=1 // pred_check_branch
      %98 = sbr.rel (0) target = $region53
    $region52: #{decoder_forward_pallas.6} parent=1 // pred_region
      %99 = dma.done [#allocation11], 16
    $region53: #{decoder_forward_pallas.6} parent=1 // pred_fallthru
      _
    %v101 = vld [vmem:[%s0] sm:$0xff]
    %v102 = vld [vmem:[%s0 + $0x8] sm:$0xff]
    %v103 = vld [vmem:[%s0 + $0x10] sm:$0xff]
    %v104 = vld [vmem:[%s0 + $0x18] sm:$0xff]
    %v105 = vmax.f32 %v101, 0.0
    %v106 = vmax.f32 %v102, 0.0
    %v107 = vmax.f32 %v103, 0.0
    %v108 = vmax.f32 %v104, 0.0
    %v109 = vpack.c.bf16 %v106, %v105
    %v110 = vpack.c.bf16 %v108, %v107
    %v111 = vld [vmem:[#allocation2] sm:$0xf]
    %v112 = vld [vmem:[#allocation2 + $0x4] sm:$0xf]
    %v113 = vld [vmem:[#allocation2 + $0x8] sm:$0xf]
    %v114 = vld [vmem:[#allocation2 + $0xc] sm:$0xf]
    %v115 = vld [vmem:[#allocation2 + $0x10] sm:$0xf]
    %v116 = vld [vmem:[#allocation2 + $0x14] sm:$0xf]
    %v117 = vld [vmem:[#allocation2 + $0x18] sm:$0xf]
    %v118 = vld [vmem:[#allocation2 + $0x1c] sm:$0xf]
    %v119 = vld [vmem:[#allocation2 + $0x20] sm:$0xf]
    %v120 = vld [vmem:[#allocation2 + $0x24] sm:$0xf]
    %v121 = vld [vmem:[#allocation2 + $0x28] sm:$0xf]
    %v122 = vld [vmem:[#allocation2 + $0x2c] sm:$0xf]
    %v123 = vld [vmem:[#allocation2 + $0x30] sm:$0xf]
    %v124 = vld [vmem:[#allocation2 + $0x34] sm:$0xf]
    %v125 = vld [vmem:[#allocation2 + $0x38] sm:$0xf]
    %v126 = vld [vmem:[#allocation2 + $0x3c] sm:$0xf]
    %v143 = vunpack.c.l.b16 %v111
    %v144 = vunpack.c.l.b16 %v112
    %v145 = vunpack.c.l.b16 %v113
    %v146 = vunpack.c.l.b16 %v114
    %v147 = vunpack.c.l.b16 %v115
    %v148 = vunpack.c.l.b16 %v116
    %v149 = vunpack.c.l.b16 %v117
    %v150 = vunpack.c.l.b16 %v118
    %v151 = vunpack.c.l.b16 %v119
    %v152 = vunpack.c.l.b16 %v120
    %v153 = vunpack.c.l.b16 %v121
    %v154 = vunpack.c.l.b16 %v122
    %v155 = vunpack.c.l.b16 %v123
    %v156 = vunpack.c.l.b16 %v124
    %v157 = vunpack.c.l.b16 %v125
    %v158 = vunpack.c.l.b16 %v126
    %v159 = vpack.c.b16 %v144, %v143
    %v160 = vpack.c.b16 %v146, %v145
    %v161 = vpack.c.b16 %v148, %v147
    %v162 = vpack.c.b16 %v150, %v149
    %v163 = vpack.c.b16 %v152, %v151
    %v164 = vpack.c.b16 %v154, %v153
    %v165 = vpack.c.b16 %v156, %v155
    %v166 = vpack.c.b16 %v158, %v157
    %175 = vmatprep.subr.bf16.mxu0 0
    %176 = vmatpush1.bf16.msra.mxu0 %v159
    %177 = vmatprep.subr.bf16.mxu0 0
    %178 = vmatpush1.bf16.msra.mxu0 %v160
    %179 = vmatprep.subr.bf16.mxu0 0
    %180 = vmatpush1.bf16.msra.mxu0 %v161
    %181 = vmatprep.subr.bf16.mxu0 0
    %182 = vmatpush1.bf16.msra.mxu0 %v162
    %183 = vmatprep.subr.bf16.mxu0 0
    %184 = vmatpush1.bf16.msra.mxu0 %v163
    %185 = vmatprep.subr.bf16.mxu0 0
    %186 = vmatpush1.bf16.msra.mxu0 %v164
    %187 = vmatprep.subr.bf16.mxu0 0
    %188 = vmatpush1.bf16.msra.mxu0 %v165
    %189 = vmatprep.subr.bf16.mxu0 0
    %190 = vmatpush1.bf16.msra.mxu0 %v166
    %191 = vmatprep.subr.bf16.mxu0 0
    %192 = vmatpush1.bf16.msra.mxu0 0
    %193 = vmatprep.subr.bf16.mxu0 0
    %194 = vmatpush1.bf16.msra.mxu0 0
    %195 = vmatprep.subr.bf16.mxu0 0
    %196 = vmatpush1.bf16.msra.mxu0 0
    %197 = vmatprep.subr.bf16.mxu0 0
    %198 = vmatpush1.bf16.msra.mxu0 0
    %199 = vmatprep.subr.bf16.mxu0 0
    %200 = vmatpush1.bf16.msra.mxu0 0
    %201 = vmatprep.subr.bf16.mxu0 0
    %202 = vmatpush1.bf16.msra.mxu0 0
    %203 = vmatprep.subr.bf16.mxu0 0
    %204 = vmatpush1.bf16.msra.mxu0 0
    %205 = vmatprep.subr.bf16.mxu0 0
    %206 = vmatpush1.bf16.msra.mxu0 0
    %207 = vmatprep.mubr.bf16.mxu0 0
    %208 = vmatmul.mubr.bf16.gmra.mrb[0].mxu0 %v109
    %v209 = vpop.f32.mrb[0].mxu0
    %v210 = vadd.f32 0.0, %v209
    %v211 = vpop.f32.mrb[0].mxu0
    %v212 = vpop.f32.mrb[0].mxu0
    %v213 = vadd.f32 0.0, %v212
    %v214 = vpop.f32.mrb[0].mxu0
    %215 = vmatprep.mubr.bf16.mxu0 0
    %216 = vmatmul.mubr.bf16.gmra.mrb[0].mxu0 %v110
    %v217 = vpop.f32.mrb[0].mxu0
    %v218 = vadd.f32 0.0, %v217
    %v219 = vpop.f32.mrb[0].mxu0
    %v220 = vpop.f32.mrb[0].mxu0
    %v221 = vadd.f32 0.0, %v220
    %v222 = vpop.f32.mrb[0].mxu0
    %223 = vdwg.mxu0
    %v224 = vadd.f32 %v210, %v213
    %v225 = vadd.f32 %v224, %v218
    %v226 = vadd.f32 %v225, %v221
    %v227 = vrot.slane %v226, 4
    %v228 = vadd.f32 %v226, %v227
    %v229 = vrot.slane %v228, 2
    %v230 = vadd.f32 %v228, %v229
    %v231 = vrot.slane %v230, 1
    %v232 = vadd.f32 %v230, %v231
    %v233 = vmul.f32 %v232, 0.03125
    %v234 = vmul.f32 %v210, %v210
    %v235 = vmul.f32 %v213, %v213
    %v236 = vmul.f32 %v218, %v218
    %v237 = vmul.f32 %v221, %v221
    %v238 = vadd.f32 %v234, %v235
    %v239 = vadd.f32 %v238, %v236
    %v240 = vadd.f32 %v239, %v237
    %v241 = vrot.slane %v240, 4
    %v242 = vadd.f32 %v240, %v241
    %v243 = vrot.slane %v242, 2
    %v244 = vadd.f32 %v242, %v243
    %v245 = vrot.slane %v244, 1
    %v246 = vadd.f32 %v244, %v245
    %v247 = vmul.f32 %v246, 0.03125
    %v248 = vmul.f32 %v233, %v233
    %v249 = vsub.f32 %v247, %v248
    %v250 = vmax.f32 %v249, 0.0
    %v251 = vld [vmem:[#allocation4] sm:$0x1]
    %v252 = vadd.f32 %v250, 1e-05
    %v253 = vrsqrt.pop %v252
    %v254 = vmul.f32 %v251, %v253
    %v255 = vld [vmem:[#allocation6] sm:$0x1]
    %v256 = vmul.f32 %v233, %v254
    %v257 = vsub.f32 %v255, %v256
    %v259 = vlaneseq
    %v260 = vshrl.u32 %v259, 7
    %v261 = vsub.s32 0, %v260
    %v262 = vrot.slane %v254, %v261
    %v264 = vmul.f32 %v210, %v262
    %v265 = vmul.f32 %v213, %v262
    %v266 = vmul.f32 %v218, %v262
    %v267 = vmul.f32 %v221, %v262
    %v269 = vlaneseq
    %v270 = vshrl.u32 %v269, 7
    %v271 = vsub.s32 0, %v270
    %v272 = vrot.slane %v257, %v271
    %v274 = vadd.f32 %v264, %v272
    %v275 = vadd.f32 %v265, %v272
    %v276 = vadd.f32 %v266, %v272
    %v277 = vadd.f32 %v267, %v272
    %v278 = vmax.f32 %v274, 0.0
    %v279 = vmax.f32 %v275, 0.0
    %v280 = vmax.f32 %v276, 0.0
    %v281 = vmax.f32 %v277, 0.0
    %v282 = vpack.c.bf16 %v279, %v278
    %v283 = vpack.c.bf16 %v281, %v280
    %v284 = vld [vmem:[#allocation7] sm:$0xf]
    %v285 = vld [vmem:[#allocation7 + $0x4] sm:$0xf]
    %v286 = vld [vmem:[#allocation7 + $0x8] sm:$0xf]
    %v287 = vld [vmem:[#allocation7 + $0xc] sm:$0xf]
    %v288 = vld [vmem:[#allocation7 + $0x10] sm:$0xf]
    %v289 = vld [vmem:[#allocation7 + $0x14] sm:$0xf]
    %v290 = vld [vmem:[#allocation7 + $0x18] sm:$0xf]
    %v291 = vld [vmem:[#allocation7 + $0x1c] sm:$0xf]
    %v292 = vld [vmem:[#allocation7 + $0x20] sm:$0xf]
    %v293 = vld [vmem:[#allocation7 + $0x24] sm:$0xf]
    %v294 = vld [vmem:[#allocation7 + $0x28] sm:$0xf]
    %v295 = vld [vmem:[#allocation7 + $0x2c] sm:$0xf]
    %v296 = vld [vmem:[#allocation7 + $0x30] sm:$0xf]
    %v297 = vld [vmem:[#allocation7 + $0x34] sm:$0xf]
    %v298 = vld [vmem:[#allocation7 + $0x38] sm:$0xf]
    %v299 = vld [vmem:[#allocation7 + $0x3c] sm:$0xf]
    %v316 = vunpack.c.l.b16 %v284
    %v317 = vunpack.c.l.b16 %v285
    %v318 = vunpack.c.l.b16 %v286
    %v319 = vunpack.c.l.b16 %v287
    %v320 = vunpack.c.l.b16 %v288
    %v321 = vunpack.c.l.b16 %v289
    %v322 = vunpack.c.l.b16 %v290
    %v323 = vunpack.c.l.b16 %v291
    %v324 = vunpack.c.l.b16 %v292
    %v325 = vunpack.c.l.b16 %v293
    %v326 = vunpack.c.l.b16 %v294
    %v327 = vunpack.c.l.b16 %v295
    %v328 = vunpack.c.l.b16 %v296
    %v329 = vunpack.c.l.b16 %v297
    %v330 = vunpack.c.l.b16 %v298
    %v331 = vunpack.c.l.b16 %v299
    %v332 = vpack.c.b16 %v317, %v316
    %v333 = vpack.c.b16 %v319, %v318
    %v334 = vpack.c.b16 %v321, %v320
    %v335 = vpack.c.b16 %v323, %v322
    %v336 = vpack.c.b16 %v325, %v324
    %v337 = vpack.c.b16 %v327, %v326
    %v338 = vpack.c.b16 %v329, %v328
    %v339 = vpack.c.b16 %v331, %v330
    %348 = vmatprep.subr.bf16.mxu0 0
    %349 = vmatpush1.bf16.msra.mxu0 %v332
    %350 = vmatprep.subr.bf16.mxu0 0
    %351 = vmatpush1.bf16.msra.mxu0 %v333
    %352 = vmatprep.subr.bf16.mxu0 0
    %353 = vmatpush1.bf16.msra.mxu0 %v334
    %354 = vmatprep.subr.bf16.mxu0 0
    %355 = vmatpush1.bf16.msra.mxu0 %v335
    %356 = vmatprep.subr.bf16.mxu0 0
    %357 = vmatpush1.bf16.msra.mxu0 %v336
    %358 = vmatprep.subr.bf16.mxu0 0
    %359 = vmatpush1.bf16.msra.mxu0 %v337
    %360 = vmatprep.subr.bf16.mxu0 0
    %361 = vmatpush1.bf16.msra.mxu0 %v338
    %362 = vmatprep.subr.bf16.mxu0 0
    %363 = vmatpush1.bf16.msra.mxu0 %v339
    %364 = vmatprep.subr.bf16.mxu0 0
    %365 = vmatpush1.bf16.msra.mxu0 0
    %366 = vmatprep.subr.bf16.mxu0 0
    %367 = vmatpush1.bf16.msra.mxu0 0
    %368 = vmatprep.subr.bf16.mxu0 0
    %369 = vmatpush1.bf16.msra.mxu0 0
    %370 = vmatprep.subr.bf16.mxu0 0
    %371 = vmatpush1.bf16.msra.mxu0 0
    %372 = vmatprep.subr.bf16.mxu0 0
    %373 = vmatpush1.bf16.msra.mxu0 0
    %374 = vmatprep.subr.bf16.mxu0 0
    %375 = vmatpush1.bf16.msra.mxu0 0
    %376 = vmatprep.subr.bf16.mxu0 0
    %377 = vmatpush1.bf16.msra.mxu0 0
    %378 = vmatprep.subr.bf16.mxu0 0
    %379 = vmatpush1.bf16.msra.mxu0 0
    %380 = vmatprep.mubr.bf16.mxu0 0
    %381 = vmatmul.mubr.bf16.gmra.mrb[0].mxu0 %v282
    %v382 = vpop.f32.mrb[0].mxu0
    %v383 = vadd.f32 0.0, %v382
    %v384 = vpop.f32.mrb[0].mxu0
    %v385 = vpop.f32.mrb[0].mxu0
    %v386 = vadd.f32 0.0, %v385
    %v387 = vpop.f32.mrb[0].mxu0
    %388 = vmatprep.mubr.bf16.mxu0 0
    %389 = vmatmul.mubr.bf16.gmra.mrb[0].mxu0 %v283
    %v390 = vpop.f32.mrb[0].mxu0
    %v391 = vadd.f32 0.0, %v390
    %v392 = vpop.f32.mrb[0].mxu0
    %v393 = vpop.f32.mrb[0].mxu0
    %v394 = vadd.f32 0.0, %v393
    %v395 = vpop.f32.mrb[0].mxu0
    %396 = vdwg.mxu0
    %v397 = vadd.f32 %v383, %v386
    %v398 = vadd.f32 %v397, %v391
    %v399 = vadd.f32 %v398, %v394
    %v400 = vrot.slane %v399, 4
    %v401 = vadd.f32 %v399, %v400
    %v402 = vrot.slane %v401, 2
    %v403 = vadd.f32 %v401, %v402
    %v404 = vrot.slane %v403, 1
    %v405 = vadd.f32 %v403, %v404
    %v406 = vmul.f32 %v405, 0.03125
    %v407 = vmul.f32 %v383, %v383
    %v408 = vmul.f32 %v386, %v386
    %v409 = vmul.f32 %v391, %v391
    %v410 = vmul.f32 %v394, %v394
    %v411 = vadd.f32 %v407, %v408
    %v412 = vadd.f32 %v411, %v409
    %v413 = vadd.f32 %v412, %v410
    %v414 = vrot.slane %v413, 4
    %v415 = vadd.f32 %v413, %v414
    %v416 = vrot.slane %v415, 2
    %v417 = vadd.f32 %v415, %v416
    %v418 = vrot.slane %v417, 1
    %v419 = vadd.f32 %v417, %v418
    %v420 = vmul.f32 %v419, 0.03125
    %v421 = vmul.f32 %v406, %v406
    %v422 = vsub.f32 %v420, %v421
    %v423 = vmax.f32 %v422, 0.0
    %v424 = vld [vmem:[#allocation9] sm:$0x1]
    %v425 = vadd.f32 %v423, 1e-05
    %v426 = vrsqrt.pop %v425
    %v427 = vmul.f32 %v424, %v426
    %v428 = vld [vmem:[#allocation10] sm:$0x1]
    %v429 = vmul.f32 %v406, %v427
    %v430 = vsub.f32 %v428, %v429
    %v431 = vlaneseq
    %v432 = vand.u32 %v431, 127
    %vm433 = vcmp.lt.s32.totalorder %v432, 8
    %v434 = vsel %vm433, %v101, 0.0
    %v435 = vsel %vm433, %v102, 0.0
    %v436 = vsel %vm433, %v103, 0.0
    %v437 = vsel %vm433, %v104, 0.0
    %v439 = vlaneseq
    %v440 = vshrl.u32 %v439, 7
    %v441 = vsub.s32 0, %v440
    %v442 = vrot.slane %v427, %v441
    %v444 = vmul.f32 %v383, %v442
    %v445 = vmul.f32 %v386, %v442
    %v446 = vmul.f32 %v391, %v442
    %v447 = vmul.f32 %v394, %v442
    %v449 = vlaneseq
    %v450 = vshrl.u32 %v449, 7
    %v451 = vsub.s32 0, %v450
    %v452 = vrot.slane %v430, %v451
    %v454 = vadd.f32 %v444, %v452
    %v455 = vadd.f32 %v445, %v452
    %v456 = vadd.f32 %v446, %v452
    %v457 = vadd.f32 %v447, %v452
    %v458 = vadd.f32 %v454, %v434
    %v459 = vadd.f32 %v455, %v435
    %v460 = vadd.f32 %v456, %v436
    %v461 = vadd.f32 %v457, %v437
    %462 = vst [vmem:[%s7] sm:$0xff] %v458
    %463 = vst [vmem:[%s7 + $0x8] sm:$0xff] %v459
    %464 = vst [vmem:[%s7 + $0x10] sm:$0xff] %v460
    %465 = vst [vmem:[%s7 + $0x18] sm:$0xff] %v461
    // Predicated region
    $region54: #{decoder_forward_pallas.6} parent=1 // pred_check
      _
    $region55: #{decoder_forward_pallas.6} parent=1 // pred_check_branch
      %467 = sbr.rel (0) target = $region57
    $region56: #{decoder_forward_pallas.6} parent=1 // pred_region
      _
    $region57: #{decoder_forward_pallas.6} parent=1 // pred_fallthru
      _
    // Predicated region
    $region58: #{decoder_forward_pallas.6} parent=1 // pred_check
      _
    $region59: #{decoder_forward_pallas.6} parent=1 // pred_check_branch
      %469 = sbr.rel (0) target = $region61
    $region60: #{decoder_forward_pallas.6} parent=1 // pred_region
      _
    $region61: #{decoder_forward_pallas.6} parent=1 // pred_fallthru
      _
    %470 = vsyncpa [#allocation3], 1
    %471 = vsyncpa [#allocation5], 1
    %472 = vsyncpa [#allocation8], 1
    %473 = vsyncpa [#allocation11], 1

// kernel: decoder_forward_pallas.8
$region0: #{decoder_forward_pallas.8}
  #allocation0 [shape = 'u32[]', space=smem, size = 0x4, offset = 0x4, fixed_abs, tag = 'smem constant byte address 0x4 - core index']
  #allocation1 [shape = 'u32[144,128]{1,0:T(1,128)}', space=vmem, size = 0x12000, scoped, tag = 'internal scratch']
  %s0 = inlined_call_operand.vmem [shape: bf16[32,128], index: 0, kind: input, shape index: {}]
  %s1 = inlined_call_operand.hbm [shape: bf16[4,128,128], index: 1, kind: input, shape index: {}]
  %s2 = inlined_call_operand.hbm [shape: f32[1,128], index: 2, kind: input, shape index: {}]
  %s3 = inlined_call_operand.hbm [shape: f32[1,128], index: 3, kind: input, shape index: {}]
  %s4 = inlined_call_operand.vmem [shape: bf16[4,32,128], index: 4, kind: output, shape index: {}]
  %s5 = sld [smem:[#allocation0]]
  $region38: #{decoder_forward_pallas.8} parent=0
    _
  %s7 = ssub.s32 1, %s5
  %s8 = scalar_select 0, %s7, %s5
  $region1: #{decoder_forward_pallas.8} parent=0
    #allocation2 [shape = 'u8[131072]{0}', space=vmem, size = 0x20000, scoped, tag = 'input window, operand 1, single buffered']
    #allocation3 [shape = 's32[1]{0}', space=sflag, size = 0x4, scoped, tag = 'scoped memory for decoder_forward_pallas.8']
    #allocation4 [shape = 'u8[512]{0}', space=vmem, size = 0x400, scoped, tag = 'input window, operand 2, single buffered']
    #allocation5 [shape = 's32[1]{0}', space=sflag, size = 0x4, scoped, tag = 'scoped memory for decoder_forward_pallas.8']
    #allocation6 [shape = 'u8[512]{0}', space=vmem, size = 0x400, scoped, tag = 'input window, operand 3, single buffered']
    %9 = vsyncpa [#allocation3], 0
    %10 = vsyncpa [#allocation5], 0
    // Predicated region
    $region2: #{decoder_forward_pallas.8} parent=1 // pred_check
      _
    $region3: #{decoder_forward_pallas.8} parent=1 // pred_check_branch
      %12 = sbr.rel (0) target = $region5
    $region4: #{decoder_forward_pallas.8} parent=1 // pred_region
      _
    $region5: #{decoder_forward_pallas.8} parent=1 // pred_fallthru
      _
    // Predicated region
    $region6: #{decoder_forward_pallas.8} parent=1 // pred_check
      _
    $region7: #{decoder_forward_pallas.8} parent=1 // pred_check_branch
      %14 = sbr.rel (0) target = $region9
    $region8: #{decoder_forward_pallas.8} parent=1 // pred_region
      %s16 = ssub.s32 4096, 4096
      %17 = vsyncadd [#allocation3], %s16
      %s18 = sshll.u32 [#allocation2], 4
      %s19 = int_to_ptr.vmem [resolvable:$true] %s18
      %24 = dma.hbm_to_vmem [thread:$0]  %s1, 4096, %s19, [#allocation3], 64, 64, 4
    $region9: #{decoder_forward_pallas.8} parent=1 // pred_fallthru
      _
    // Predicated region
    $region10: #{decoder_forward_pallas.8} parent=1 // pred_check
      _
    $region11: #{decoder_forward_pallas.8} parent=1 // pred_check_branch
      %26 = sbr.rel (0) target = $region13
    $region12: #{decoder_forward_pallas.8} parent=1 // pred_region
      %s28 = ssub.s32 16, 16
      %29 = vsyncadd [#allocation5], %s28
      %s31 = sshll.u32 [#allocation4], 4
      %s32 = int_to_ptr.vmem [resolvable:$true] %s31
      %34 = dma.hbm_to_vmem [thread:$0]  %s2, 16, %s32, [#allocation5]
    $region13: #{decoder_forward_pallas.8} parent=1 // pred_fallthru
      _
    // Predicated region
    $region14: #{decoder_forward_pallas.8} parent=1 // pred_check
      _
    $region15: #{decoder_forward_pallas.8} parent=1 // pred_check_branch
      %36 = sbr.rel (0) target = $region17
    $region16: #{decoder_forward_pallas.8} parent=1 // pred_region
      %s38 = ssub.s32 16, 16
      %39 = vsyncadd [#allocation5], %s38
      %s41 = sshll.u32 [#allocation6], 4
      %s42 = int_to_ptr.vmem [resolvable:$true] %s41
      %44 = dma.hbm_to_vmem [thread:$0]  %s3, 16, %s42, [#allocation5]
    $region17: #{decoder_forward_pallas.8} parent=1 // pred_fallthru
      _
    // Predicated region
    $region18: #{decoder_forward_pallas.8} parent=1 // pred_check
      _
    $region19: #{decoder_forward_pallas.8} parent=1 // pred_check_branch
      %46 = sbr.rel (0) target = $region21
    $region20: #{decoder_forward_pallas.8} parent=1 // pred_region
      %47 = dma.done [#allocation3], 4096
    $region21: #{decoder_forward_pallas.8} parent=1 // pred_fallthru
      _
    // Predicated region
    $region22: #{decoder_forward_pallas.8} parent=1 // pred_check
      _
    $region23: #{decoder_forward_pallas.8} parent=1 // pred_check_branch
      %49 = sbr.rel (0) target = $region25
    $region24: #{decoder_forward_pallas.8} parent=1 // pred_region
      %50 = dma.done [#allocation5], 16
    $region25: #{decoder_forward_pallas.8} parent=1 // pred_fallthru
      _
    // Predicated region
    $region26: #{decoder_forward_pallas.8} parent=1 // pred_check
      _
    $region27: #{decoder_forward_pallas.8} parent=1 // pred_check_branch
      %52 = sbr.rel (0) target = $region29
    $region28: #{decoder_forward_pallas.8} parent=1 // pred_region
      %53 = dma.done [#allocation5], 16
    $region29: #{decoder_forward_pallas.8} parent=1 // pred_fallthru
      _
    %v55 = vld [vmem:[%s0] sm:$0xf]
    %v56 = vld [vmem:[%s0 + $0x4] sm:$0xf]
    %v57 = vld [vmem:[%s0 + $0x8] sm:$0xf]
    %v58 = vld [vmem:[%s0 + $0xc] sm:$0xf]
    %v59 = vld [vmem:[#allocation2] sm:$0xf]
    %v60 = vld [vmem:[#allocation2 + $0x4] sm:$0xf]
    %v61 = vld [vmem:[#allocation2 + $0x8] sm:$0xf]
    %v62 = vld [vmem:[#allocation2 + $0xc] sm:$0xf]
    %v63 = vld [vmem:[#allocation2 + $0x10] sm:$0xf]
    %v64 = vld [vmem:[#allocation2 + $0x14] sm:$0xf]
    %v65 = vld [vmem:[#allocation2 + $0x18] sm:$0xf]
    %v66 = vld [vmem:[#allocation2 + $0x1c] sm:$0xf]
    %v67 = vld [vmem:[#allocation2 + $0x20] sm:$0xf]
    %v68 = vld [vmem:[#allocation2 + $0x24] sm:$0xf]
    %v69 = vld [vmem:[#allocation2 + $0x28] sm:$0xf]
    %v70 = vld [vmem:[#allocation2 + $0x2c] sm:$0xf]
    %v71 = vld [vmem:[#allocation2 + $0x30] sm:$0xf]
    %v72 = vld [vmem:[#allocation2 + $0x34] sm:$0xf]
    %v73 = vld [vmem:[#allocation2 + $0x38] sm:$0xf]
    %v74 = vld [vmem:[#allocation2 + $0x3c] sm:$0xf]
    %v79 = vunpack.c.l.b16 %v55
    %v80 = vunpack.c.l.b16 %v56
    %v81 = vunpack.c.l.b16 %v57
    %v82 = vunpack.c.l.b16 %v58
    %v83 = vpack.c.b16 %v80, %v79
    %v84 = vpack.c.b16 %v82, %v81
    %v103 = vunpack.c.l.b16 %v59
    %v104 = vunpack.c.l.b16 %v60
    %v105 = vunpack.c.l.b16 %v61
    %v106 = vunpack.c.l.b16 %v62
    %v107 = vunpack.c.l.b16 %v63
    %v108 = vunpack.c.l.b16 %v64
    %v109 = vunpack.c.l.b16 %v65
    %v110 = vunpack.c.l.b16 %v66
    %v111 = vunpack.c.l.b16 %v67
    %v112 = vunpack.c.l.b16 %v68
    %v113 = vunpack.c.l.b16 %v69
    %v114 = vunpack.c.l.b16 %v70
    %v115 = vunpack.c.l.b16 %v71
    %v116 = vunpack.c.l.b16 %v72
    %v117 = vunpack.c.l.b16 %v73
    %v118 = vunpack.c.l.b16 %v74
    %v119 = vpack.c.b16 %v104, %v103
    %v120 = vpack.c.b16 %v106, %v105
    %v121 = vpack.c.b16 %v108, %v107
    %v122 = vpack.c.b16 %v110, %v109
    %v123 = vpack.c.b16 %v112, %v111
    %v124 = vpack.c.b16 %v114, %v113
    %v125 = vpack.c.b16 %v116, %v115
    %v126 = vpack.c.b16 %v118, %v117
    %135 = vmatprep.subr.bf16.mxu0 0
    %136 = vmatpush1.bf16.msra.mxu0 %v119
    %137 = vmatprep.subr.bf16.mxu0 0
    %138 = vmatpush1.bf16.msra.mxu0 %v120
    %139 = vmatprep.subr.bf16.mxu0 0
    %140 = vmatpush1.bf16.msra.mxu0 %v121
    %141 = vmatprep.subr.bf16.mxu0 0
    %142 = vmatpush1.bf16.msra.mxu0 %v122
    %143 = vmatprep.subr.bf16.mxu0 0
    %144 = vmatpush1.bf16.msra.mxu0 %v123
    %145 = vmatprep.subr.bf16.mxu0 0
    %146 = vmatpush1.bf16.msra.mxu0 %v124
    %147 = vmatprep.subr.bf16.mxu0 0
    %148 = vmatpush1.bf16.msra.mxu0 %v125
    %149 = vmatprep.subr.bf16.mxu0 0
    %150 = vmatpush1.bf16.msra.mxu0 %v126
    %151 = vmatprep.subr.bf16.mxu0 0
    %152 = vmatpush1.bf16.msra.mxu0 0
    %153 = vmatprep.subr.bf16.mxu0 0
    %154 = vmatpush1.bf16.msra.mxu0 0
    %155 = vmatprep.subr.bf16.mxu0 0
    %156 = vmatpush1.bf16.msra.mxu0 0
    %157 = vmatprep.subr.bf16.mxu0 0
    %158 = vmatpush1.bf16.msra.mxu0 0
    %159 = vmatprep.subr.bf16.mxu0 0
    %160 = vmatpush1.bf16.msra.mxu0 0
    %161 = vmatprep.subr.bf16.mxu0 0
    %162 = vmatpush1.bf16.msra.mxu0 0
    %163 = vmatprep.subr.bf16.mxu0 0
    %164 = vmatpush1.bf16.msra.mxu0 0
    %165 = vmatprep.subr.bf16.mxu0 0
    %166 = vmatpush1.bf16.msra.mxu0 0
    %167 = vmatprep.mubr.bf16.mxu0 0
    %168 = vmatmul.mubr.bf16.gmra.mrb[0].mxu0 %v83
    %v169 = vpop.f32.mrb[0].mxu0
    %v170 = vadd.f32 0.0, %v169
    %v171 = vpop.f32.mrb[0].mxu0
    %v172 = vpop.f32.mrb[0].mxu0
    %v173 = vadd.f32 0.0, %v172
    %v174 = vpop.f32.mrb[0].mxu0
    %175 = vmatprep.mubr.bf16.mxu0 0
    %176 = vmatmul.mubr.bf16.gmra.mrb[0].mxu0 %v84
    %v177 = vpop.f32.mrb[0].mxu0
    %v178 = vadd.f32 0.0, %v177
    %v179 = vpop.f32.mrb[0].mxu0
    %v180 = vpop.f32.mrb[0].mxu0
    %v181 = vadd.f32 0.0, %v180
    %v182 = vpop.f32.mrb[0].mxu0
    %183 = vdwg.mxu0
    %v184 = vadd.f32 %v170, %v173
    %v185 = vadd.f32 %v184, %v178
    %v186 = vadd.f32 %v185, %v181
    %v187 = vrot.slane %v186, 4
    %v188 = vadd.f32 %v186, %v187
    %v189 = vrot.slane %v188, 2
    %v190 = vadd.f32 %v188, %v189
    %v191 = vrot.slane %v190, 1
    %v192 = vadd.f32 %v190, %v191
    %v193 = vadd.f32 %v192, 0.0
    %v194 = vmul.f32 %v170, %v170
    %v195 = vmul.f32 %v173, %v173
    %v196 = vmul.f32 %v178, %v178
    %v197 = vmul.f32 %v181, %v181
    %v198 = vadd.f32 %v194, %v195
    %v199 = vadd.f32 %v198, %v196
    %v200 = vadd.f32 %v199, %v197
    %v201 = vrot.slane %v200, 4
    %v202 = vadd.f32 %v200, %v201
    %v203 = vrot.slane %v202, 2
    %v204 = vadd.f32 %v202, %v203
    %v205 = vrot.slane %v204, 1
    %v206 = vadd.f32 %v204, %v205
    %v207 = vadd.f32 %v206, 0.0
    %s208 = scalar_lea.vmem [#allocation2], 64
    %v209 = vld [vmem:[%s208] sm:$0xf]
    %v210 = vld [vmem:[%s208 + $0x4] sm:$0xf]
    %v211 = vld [vmem:[%s208 + $0x8] sm:$0xf]
    %v212 = vld [vmem:[%s208 + $0xc] sm:$0xf]
    %v213 = vld [vmem:[%s208 + $0x10] sm:$0xf]
    %v214 = vld [vmem:[%s208 + $0x14] sm:$0xf]
    %v215 = vld [vmem:[%s208 + $0x18] sm:$0xf]
    %v216 = vld [vmem:[%s208 + $0x1c] sm:$0xf]
    %v217 = vld [vmem:[%s208 + $0x20] sm:$0xf]
    %v218 = vld [vmem:[%s208 + $0x24] sm:$0xf]
    %v219 = vld [vmem:[%s208 + $0x28] sm:$0xf]
    %v220 = vld [vmem:[%s208 + $0x2c] sm:$0xf]
    %v221 = vld [vmem:[%s208 + $0x30] sm:$0xf]
    %v222 = vld [vmem:[%s208 + $0x34] sm:$0xf]
    %v223 = vld [vmem:[%s208 + $0x38] sm:$0xf]
    %v224 = vld [vmem:[%s208 + $0x3c] sm:$0xf]
    %v241 = vunpack.c.l.b16 %v209
    %v242 = vunpack.c.l.b16 %v210
    %v243 = vunpack.c.l.b16 %v211
    %v244 = vunpack.c.l.b16 %v212
    %v245 = vunpack.c.l.b16 %v213
    %v246 = vunpack.c.l.b16 %v214
    %v247 = vunpack.c.l.b16 %v215
    %v248 = vunpack.c.l.b16 %v216
    %v249 = vunpack.c.l.b16 %v217
    %v250 = vunpack.c.l.b16 %v218
    %v251 = vunpack.c.l.b16 %v219
    %v252 = vunpack.c.l.b16 %v220
    %v253 = vunpack.c.l.b16 %v221
    %v254 = vunpack.c.l.b16 %v222
    %v255 = vunpack.c.l.b16 %v223
    %v256 = vunpack.c.l.b16 %v224
    %v257 = vpack.c.b16 %v242, %v241
    %v258 = vpack.c.b16 %v244, %v243
    %v259 = vpack.c.b16 %v246, %v245
    %v260 = vpack.c.b16 %v248, %v247
    %v261 = vpack.c.b16 %v250, %v249
    %v262 = vpack.c.b16 %v252, %v251
    %v263 = vpack.c.b16 %v254, %v253
    %v264 = vpack.c.b16 %v256, %v255
    %273 = vmatprep.subr.bf16.mxu0 0
    %274 = vmatpush1.bf16.msra.mxu0 %v257
    %275 = vmatprep.subr.bf16.mxu0 0
    %276 = vmatpush1.bf16.msra.mxu0 %v258
    %277 = vmatprep.subr.bf16.mxu0 0
    %278 = vmatpush1.bf16.msra.mxu0 %v259
    %279 = vmatprep.subr.bf16.mxu0 0
    %280 = vmatpush1.bf16.msra.mxu0 %v260
    %281 = vmatprep.subr.bf16.mxu0 0
    %282 = vmatpush1.bf16.msra.mxu0 %v261
    %283 = vmatprep.subr.bf16.mxu0 0
    %284 = vmatpush1.bf16.msra.mxu0 %v262
    %285 = vmatprep.subr.bf16.mxu0 0
    %286 = vmatpush1.bf16.msra.mxu0 %v263
    %287 = vmatprep.subr.bf16.mxu0 0
    %288 = vmatpush1.bf16.msra.mxu0 %v264
    %289 = vmatprep.subr.bf16.mxu0 0
    %290 = vmatpush1.bf16.msra.mxu0 0
    %291 = vmatprep.subr.bf16.mxu0 0
    %292 = vmatpush1.bf16.msra.mxu0 0
    %293 = vmatprep.subr.bf16.mxu0 0
    %294 = vmatpush1.bf16.msra.mxu0 0
    %295 = vmatprep.subr.bf16.mxu0 0
    %296 = vmatpush1.bf16.msra.mxu0 0
    %297 = vmatprep.subr.bf16.mxu0 0
    %298 = vmatpush1.bf16.msra.mxu0 0
    %299 = vmatprep.subr.bf16.mxu0 0
    %300 = vmatpush1.bf16.msra.mxu0 0
    %301 = vmatprep.subr.bf16.mxu0 0
    %302 = vmatpush1.bf16.msra.mxu0 0
    %303 = vmatprep.subr.bf16.mxu0 0
    %304 = vmatpush1.bf16.msra.mxu0 0
    %305 = vmatprep.mubr.bf16.mxu0 0
    %306 = vmatmul.mubr.bf16.gmra.mrb[0].mxu0 %v83
    %v307 = vpop.f32.mrb[0].mxu0
    %v308 = vadd.f32 0.0, %v307
    %v309 = vpop.f32.mrb[0].mxu0
    %v310 = vpop.f32.mrb[0].mxu0
    %v311 = vadd.f32 0.0, %v310
    %v312 = vpop.f32.mrb[0].mxu0
    %313 = vmatprep.mubr.bf16.mxu0 0
    %314 = vmatmul.mubr.bf16.gmra.mrb[0].mxu0 %v84
    %v315 = vpop.f32.mrb[0].mxu0
    %v316 = vadd.f32 0.0, %v315
    %v317 = vpop.f32.mrb[0].mxu0
    %v318 = vpop.f32.mrb[0].mxu0
    %v319 = vadd.f32 0.0, %v318
    %v320 = vpop.f32.mrb[0].mxu0
    %321 = vdwg.mxu0
    %v322 = vadd.f32 %v308, %v311
    %v323 = vadd.f32 %v322, %v316
    %v324 = vadd.f32 %v323, %v319
    %v325 = vrot.slane %v324, 4
    %v326 = vadd.f32 %v324, %v325
    %v327 = vrot.slane %v326, 2
    %v328 = vadd.f32 %v326, %v327
    %v329 = vrot.slane %v328, 1
    %v330 = vadd.f32 %v328, %v329
    %v331 = vadd.f32 %v193, %v330
    %v332 = vmul.f32 %v308, %v308
    %v333 = vmul.f32 %v311, %v311
    %v334 = vmul.f32 %v316, %v316
    %v335 = vmul.f32 %v319, %v319
    %v336 = vadd.f32 %v332, %v333
    %v337 = vadd.f32 %v336, %v334
    %v338 = vadd.f32 %v337, %v335
    %v339 = vrot.slane %v338, 4
    %v340 = vadd.f32 %v338, %v339
    %v341 = vrot.slane %v340, 2
    %v342 = vadd.f32 %v340, %v341
    %v343 = vrot.slane %v342, 1
    %v344 = vadd.f32 %v342, %v343
    %v345 = vadd.f32 %v207, %v344
    %s346 = scalar_lea.vmem [#allocation2], 128
    %v347 = vld [vmem:[%s346] sm:$0xf]
    %v348 = vld [vmem:[%s346 + $0x4] sm:$0xf]
    %v349 = vld [vmem:[%s346 + $0x8] sm:$0xf]
    %v350 = vld [vmem:[%s346 + $0xc] sm:$0xf]
    %v351 = vld [vmem:[%s346 + $0x10] sm:$0xf]
    %v352 = vld [vmem:[%s346 + $0x14] sm:$0xf]
    %v353 = vld [vmem:[%s346 + $0x18] sm:$0xf]
    %v354 = vld [vmem:[%s346 + $0x1c] sm:$0xf]
    %v355 = vld [vmem:[%s346 + $0x20] sm:$0xf]
    %v356 = vld [vmem:[%s346 + $0x24] sm:$0xf]
    %v357 = vld [vmem:[%s346 + $0x28] sm:$0xf]
    %v358 = vld [vmem:[%s346 + $0x2c] sm:$0xf]
    %v359 = vld [vmem:[%s346 + $0x30] sm:$0xf]
    %v360 = vld [vmem:[%s346 + $0x34] sm:$0xf]
    %v361 = vld [vmem:[%s346 + $0x38] sm:$0xf]
    %v362 = vld [vmem:[%s346 + $0x3c] sm:$0xf]
    %v379 = vunpack.c.l.b16 %v347
    %v380 = vunpack.c.l.b16 %v348
    %v381 = vunpack.c.l.b16 %v349
    %v382 = vunpack.c.l.b16 %v350
    %v383 = vunpack.c.l.b16 %v351
    %v384 = vunpack.c.l.b16 %v352
    %v385 = vunpack.c.l.b16 %v353
    %v386 = vunpack.c.l.b16 %v354
    %v387 = vunpack.c.l.b16 %v355
    %v388 = vunpack.c.l.b16 %v356
    %v389 = vunpack.c.l.b16 %v357
    %v390 = vunpack.c.l.b16 %v358
    %v391 = vunpack.c.l.b16 %v359
    %v392 = vunpack.c.l.b16 %v360
    %v393 = vunpack.c.l.b16 %v361
    %v394 = vunpack.c.l.b16 %v362
    %v395 = vpack.c.b16 %v380, %v379
    %v396 = vpack.c.b16 %v382, %v381
    %v397 = vpack.c.b16 %v384, %v383
    %v398 = vpack.c.b16 %v386, %v385
    %v399 = vpack.c.b16 %v388, %v387
    %v400 = vpack.c.b16 %v390, %v389
    %v401 = vpack.c.b16 %v392, %v391
    %v402 = vpack.c.b16 %v394, %v393
    %411 = vmatprep.subr.bf16.mxu0 0
    %412 = vmatpush1.bf16.msra.mxu0 %v395
    %413 = vmatprep.subr.bf16.mxu0 0
    %414 = vmatpush1.bf16.msra.mxu0 %v396
    %415 = vmatprep.subr.bf16.mxu0 0
    %416 = vmatpush1.bf16.msra.mxu0 %v397
    %417 = vmatprep.subr.bf16.mxu0 0
    %418 = vmatpush1.bf16.msra.mxu0 %v398
    %419 = vmatprep.subr.bf16.mxu0 0
    %420 = vmatpush1.bf16.msra.mxu0 %v399
    %421 = vmatprep.subr.bf16.mxu0 0
    %422 = vmatpush1.bf16.msra.mxu0 %v400
    %423 = vmatprep.subr.bf16.mxu0 0
    %424 = vmatpush1.bf16.msra.mxu0 %v401
    %425 = vmatprep.subr.bf16.mxu0 0
    %426 = vmatpush1.bf16.msra.mxu0 %v402
    %427 = vmatprep.subr.bf16.mxu0 0
    %428 = vmatpush1.bf16.msra.mxu0 0
    %429 = vmatprep.subr.bf16.mxu0 0
    %430 = vmatpush1.bf16.msra.mxu0 0
    %431 = vmatprep.subr.bf16.mxu0 0
    %432 = vmatpush1.bf16.msra.mxu0 0
    %433 = vmatprep.subr.bf16.mxu0 0
    %434 = vmatpush1.bf16.msra.mxu0 0
    %435 = vmatprep.subr.bf16.mxu0 0
    %436 = vmatpush1.bf16.msra.mxu0 0
    %437 = vmatprep.subr.bf16.mxu0 0
    %438 = vmatpush1.bf16.msra.mxu0 0
    %439 = vmatprep.subr.bf16.mxu0 0
    %440 = vmatpush1.bf16.msra.mxu0 0
    %441 = vmatprep.subr.bf16.mxu0 0
    %442 = vmatpush1.bf16.msra.mxu0 0
    %443 = vmatprep.mubr.bf16.mxu0 0
    %444 = vmatmul.mubr.bf16.gmra.mrb[0].mxu0 %v83
    %v445 = vpop.f32.mrb[0].mxu0
    %v446 = vadd.f32 0.0, %v445
    %v447 = vpop.f32.mrb[0].mxu0
    %v448 = vpop.f32.mrb[0].mxu0
    %v449 = vadd.f32 0.0, %v448
    %v450 = vpop.f32.mrb[0].mxu0
    %451 = vmatprep.mubr.bf16.mxu0 0
    %452 = vmatmul.mubr.bf16.gmra.mrb[0].mxu0 %v84
    %v453 = vpop.f32.mrb[0].mxu0
    %v454 = vadd.f32 0.0, %v453
    %v455 = vpop.f32.mrb[0].mxu0
    %v456 = vpop.f32.mrb[0].mxu0
    %v457 = vadd.f32 0.0, %v456
    %v458 = vpop.f32.mrb[0].mxu0
    %459 = vdwg.mxu0
    %v460 = vadd.f32 %v446, %v449
    %v461 = vadd.f32 %v460, %v454
    %v462 = vadd.f32 %v461, %v457
    %v463 = vrot.slane %v462, 4
    %v464 = vadd.f32 %v462, %v463
    %v465 = vrot.slane %v464, 2
    %v466 = vadd.f32 %v464, %v465
    %v467 = vrot.slane %v466, 1
    %v468 = vadd.f32 %v466, %v467
    %v469 = vadd.f32 %v331, %v468
    %v470 = vmul.f32 %v446, %v446
    %v471 = vmul.f32 %v449, %v449
    %v472 = vmul.f32 %v454, %v454
    %v473 = vmul.f32 %v457, %v457
    %v474 = vadd.f32 %v470, %v471
    %v475 = vadd.f32 %v474, %v472
    %v476 = vadd.f32 %v475, %v473
    %v477 = vrot.slane %v476, 4
    %v478 = vadd.f32 %v476, %v477
    %v479 = vrot.slane %v478, 2
    %v480 = vadd.f32 %v478, %v479
    %v481 = vrot.slane %v480, 1
    %v482 = vadd.f32 %v480, %v481
    %v483 = vadd.f32 %v345, %v482
    %s484 = scalar_lea.vmem [#allocation2], 192
    %v485 = vld [vmem:[%s484] sm:$0xf]
    %v486 = vld [vmem:[%s484 + $0x4] sm:$0xf]
    %v487 = vld [vmem:[%s484 + $0x8] sm:$0xf]
    %v488 = vld [vmem:[%s484 + $0xc] sm:$0xf]
    %v489 = vld [vmem:[%s484 + $0x10] sm:$0xf]
    %v490 = vld [vmem:[%s484 + $0x14] sm:$0xf]
    %v491 = vld [vmem:[%s484 + $0x18] sm:$0xf]
    %v492 = vld [vmem:[%s484 + $0x1c] sm:$0xf]
    %v493 = vld [vmem:[%s484 + $0x20] sm:$0xf]
    %v494 = vld [vmem:[%s484 + $0x24] sm:$0xf]
    %v495 = vld [vmem:[%s484 + $0x28] sm:$0xf]
    %v496 = vld [vmem:[%s484 + $0x2c] sm:$0xf]
    %v497 = vld [vmem:[%s484 + $0x30] sm:$0xf]
    %v498 = vld [vmem:[%s484 + $0x34] sm:$0xf]
    %v499 = vld [vmem:[%s484 + $0x38] sm:$0xf]
    %v500 = vld [vmem:[%s484 + $0x3c] sm:$0xf]
    %v517 = vunpack.c.l.b16 %v485
    %v518 = vunpack.c.l.b16 %v486
    %v519 = vunpack.c.l.b16 %v487
    %v520 = vunpack.c.l.b16 %v488
    %v521 = vunpack.c.l.b16 %v489
    %v522 = vunpack.c.l.b16 %v490
    %v523 = vunpack.c.l.b16 %v491
    %v524 = vunpack.c.l.b16 %v492
    %v525 = vunpack.c.l.b16 %v493
    %v526 = vunpack.c.l.b16 %v494
    %v527 = vunpack.c.l.b16 %v495
    %v528 = vunpack.c.l.b16 %v496
    %v529 = vunpack.c.l.b16 %v497
    %v530 = vunpack.c.l.b16 %v498
    %v531 = vunpack.c.l.b16 %v499
    %v532 = vunpack.c.l.b16 %v500
    %v533 = vpack.c.b16 %v518, %v517
    %v534 = vpack.c.b16 %v520, %v519
    %v535 = vpack.c.b16 %v522, %v521
    %v536 = vpack.c.b16 %v524, %v523
    %v537 = vpack.c.b16 %v526, %v525
    %v538 = vpack.c.b16 %v528, %v527
    %v539 = vpack.c.b16 %v530, %v529
    %v540 = vpack.c.b16 %v532, %v531
    %549 = vmatprep.subr.bf16.mxu0 0
    %550 = vmatpush1.bf16.msra.mxu0 %v533
    %551 = vmatprep.subr.bf16.mxu0 0
    %552 = vmatpush1.bf16.msra.mxu0 %v534
    %553 = vmatprep.subr.bf16.mxu0 0
    %554 = vmatpush1.bf16.msra.mxu0 %v535
    %555 = vmatprep.subr.bf16.mxu0 0
    %556 = vmatpush1.bf16.msra.mxu0 %v536
    %557 = vmatprep.subr.bf16.mxu0 0
    %558 = vmatpush1.bf16.msra.mxu0 %v537
    %559 = vmatprep.subr.bf16.mxu0 0
    %560 = vmatpush1.bf16.msra.mxu0 %v538
    %561 = vmatprep.subr.bf16.mxu0 0
    %562 = vmatpush1.bf16.msra.mxu0 %v539
    %563 = vmatprep.subr.bf16.mxu0 0
    %564 = vmatpush1.bf16.msra.mxu0 %v540
    %565 = vmatprep.subr.bf16.mxu0 0
    %566 = vmatpush1.bf16.msra.mxu0 0
    %567 = vmatprep.subr.bf16.mxu0 0
    %568 = vmatpush1.bf16.msra.mxu0 0
    %569 = vmatprep.subr.bf16.mxu0 0
    %570 = vmatpush1.bf16.msra.mxu0 0
    %571 = vmatprep.subr.bf16.mxu0 0
    %572 = vmatpush1.bf16.msra.mxu0 0
    %573 = vmatprep.subr.bf16.mxu0 0
    %574 = vmatpush1.bf16.msra.mxu0 0
    %575 = vmatprep.subr.bf16.mxu0 0
    %576 = vmatpush1.bf16.msra.mxu0 0
    %577 = vmatprep.subr.bf16.mxu0 0
    %578 = vmatpush1.bf16.msra.mxu0 0
    %579 = vmatprep.subr.bf16.mxu0 0
    %580 = vmatpush1.bf16.msra.mxu0 0
    %581 = vmatprep.mubr.bf16.mxu0 0
    %582 = vmatmul.mubr.bf16.gmra.mrb[0].mxu0 %v83
    %v583 = vpop.f32.mrb[0].mxu0
    %v584 = vadd.f32 0.0, %v583
    %v585 = vpop.f32.mrb[0].mxu0
    %v586 = vpop.f32.mrb[0].mxu0
    %v587 = vadd.f32 0.0, %v586
    %v588 = vpop.f32.mrb[0].mxu0
    %589 = vmatprep.mubr.bf16.mxu0 0
    %590 = vmatmul.mubr.bf16.gmra.mrb[0].mxu0 %v84
    %v591 = vpop.f32.mrb[0].mxu0
    %v592 = vadd.f32 0.0, %v591
    %v593 = vpop.f32.mrb[0].mxu0
    %v594 = vpop.f32.mrb[0].mxu0
    %v595 = vadd.f32 0.0, %v594
    %v596 = vpop.f32.mrb[0].mxu0
    %597 = vdwg.mxu0
    %v598 = vadd.f32 %v584, %v587
    %v599 = vadd.f32 %v598, %v592
    %v600 = vadd.f32 %v599, %v595
    %v601 = vrot.slane %v600, 4
    %v602 = vadd.f32 %v600, %v601
    %v603 = vrot.slane %v602, 2
    %v604 = vadd.f32 %v602, %v603
    %v605 = vrot.slane %v604, 1
    %v606 = vadd.f32 %v604, %v605
    %v607 = vadd.f32 %v469, %v606
    %v608 = vmul.f32 %v584, %v584
    %v609 = vmul.f32 %v587, %v587
    %v610 = vmul.f32 %v592, %v592
    %v611 = vmul.f32 %v595, %v595
    %v612 = vadd.f32 %v608, %v609
    %v613 = vadd.f32 %v612, %v610
    %v614 = vadd.f32 %v613, %v611
    %v615 = vrot.slane %v614, 4
    %v616 = vadd.f32 %v614, %v615
    %v617 = vrot.slane %v616, 2
    %v618 = vadd.f32 %v616, %v617
    %v619 = vrot.slane %v618, 1
    %v620 = vadd.f32 %v618, %v619
    %v621 = vadd.f32 %v483, %v620
    %v622 = vmul.f32 %v607, 0.0078125
    %v623 = vmul.f32 %v621, 0.0078125
    %v624 = vmul.f32 %v622, %v622
    %v625 = vsub.f32 %v623, %v624
    %v626 = vmax.f32 %v625, 0.0
    %v627 = vld [vmem:[#allocation4] sm:$0x1]
    %v628 = vadd.f32 %v626, 1e-05
    %v629 = vrsqrt.pop %v628
    %v630 = vmul.f32 %v627, %v629
    %v631 = vld [vmem:[#allocation6] sm:$0x1]
    %v632 = vmul.f32 %v622, %v630
    %v633 = vsub.f32 %v631, %v632
    %v635 = vlaneseq
    %v636 = vshrl.u32 %v635, 7
    %v637 = vsub.s32 0, %v636
    %v638 = vrot.slane %v630, %v637
    %v640 = vmul.f32 %v170, %v638
    %v641 = vmul.f32 %v173, %v638
    %v642 = vmul.f32 %v178, %v638
    %v643 = vmul.f32 %v181, %v638
    %v645 = vlaneseq
    %v646 = vshrl.u32 %v645, 7
    %v647 = vsub.s32 0, %v646
    %v648 = vrot.slane %v633, %v647
    %v650 = vadd.f32 %v640, %v648
    %v651 = vadd.f32 %v641, %v648
    %v652 = vadd.f32 %v642, %v648
    %v653 = vadd.f32 %v643, %v648
    %v654 = vmax.f32 %v650, 0.0
    %v655 = vmax.f32 %v651, 0.0
    %v656 = vmax.f32 %v652, 0.0
    %v657 = vmax.f32 %v653, 0.0
    %v658 = vpack.c.bf16 %v655, %v654
    %v659 = vpack.c.bf16 %v657, %v656
    %v662 = vunpack.c.l.b16 %v658
    %v663 = vunpack.c.h.b16 %v658
    %v664 = vunpack.c.l.b16 %v659
    %v665 = vunpack.c.h.b16 %v659
    %v666 = vpack.c.b16 %v662, %v662
    %v667 = vpack.c.b16 %v663, %v663
    %v668 = vpack.c.b16 %v664, %v664
    %v669 = vpack.c.b16 %v665, %v665
    %674 = vst [vmem:[%s4] sm:$0xf] %v666
    %675 = vst [vmem:[%s4 + $0x4] sm:$0xf] %v667
    %676 = vst [vmem:[%s4 + $0x8] sm:$0xf] %v668
    %677 = vst [vmem:[%s4 + $0xc] sm:$0xf] %v669
    %v678 = vmul.f32 %v308, %v638
    %v679 = vmul.f32 %v311, %v638
    %v680 = vmul.f32 %v316, %v638
    %v681 = vmul.f32 %v319, %v638
    %v682 = vadd.f32 %v678, %v648
    %v683 = vadd.f32 %v679, %v648
    %v684 = vadd.f32 %v680, %v648
    %v685 = vadd.f32 %v681, %v648
    %v686 = vmax.f32 %v682, 0.0
    %v687 = vmax.f32 %v683, 0.0
    %v688 = vmax.f32 %v684, 0.0
    %v689 = vmax.f32 %v685, 0.0
    %v690 = vpack.c.bf16 %v687, %v686
    %v691 = vpack.c.bf16 %v689, %v688
    %v694 = vunpack.c.l.b16 %v690
    %v695 = vunpack.c.h.b16 %v690
    %v696 = vunpack.c.l.b16 %v691
    %v697 = vunpack.c.h.b16 %v691
    %v698 = vpack.c.b16 %v694, %v694
    %v699 = vpack.c.b16 %v695, %v695
    %v700 = vpack.c.b16 %v696, %v696
    %v701 = vpack.c.b16 %v697, %v697
    %s706 = scalar_lea.vmem %s4, 16
    %707 = vst [vmem:[%s706] sm:$0xf] %v698
    %708 = vst [vmem:[%s706 + $0x4] sm:$0xf] %v699
    %709 = vst [vmem:[%s706 + $0x8] sm:$0xf] %v700
    %710 = vst [vmem:[%s706 + $0xc] sm:$0xf] %v701
    %v711 = vmul.f32 %v446, %v638
    %v712 = vmul.f32 %v449, %v638
    %v713 = vmul.f32 %v454, %v638
    %v714 = vmul.f32 %v457, %v638
    %v715 = vadd.f32 %v711, %v648
    %v716 = vadd.f32 %v712, %v648
    %v717 = vadd.f32 %v713, %v648
    %v718 = vadd.f32 %v714, %v648
    %v719 = vmax.f32 %v715, 0.0
    %v720 = vmax.f32 %v716, 0.0
    %v721 = vmax.f32 %v717, 0.0
    %v722 = vmax.f32 %v718, 0.0
    %v723 = vpack.c.bf16 %v720, %v719
    %v724 = vpack.c.bf16 %v722, %v721
    %v727 = vunpack.c.l.b16 %v723
    %v728 = vunpack.c.h.b16 %v723
    %v729 = vunpack.c.l.b16 %v724
    %v730 = vunpack.c.h.b16 %v724
    %v731 = vpack.c.b16 %v727, %v727
    %v732 = vpack.c.b16 %v728, %v728
    %v733 = vpack.c.b16 %v729, %v729
    %v734 = vpack.c.b16 %v730, %v730
    %s739 = scalar_lea.vmem %s4, 32
    %740 = vst [vmem:[%s739] sm:$0xf] %v731
    %741 = vst [vmem:[%s739 + $0x4] sm:$0xf] %v732
    %742 = vst [vmem:[%s739 + $0x8] sm:$0xf] %v733
    %743 = vst [vmem:[%s739 + $0xc] sm:$0xf] %v734
    %v744 = vmul.f32 %v584, %v638
    %v745 = vmul.f32 %v587, %v638
    %v746 = vmul.f32 %v592, %v638
    %v747 = vmul.f32 %v595, %v638
    %v748 = vadd.f32 %v744, %v648
    %v749 = vadd.f32 %v745, %v648
    %v750 = vadd.f32 %v746, %v648
    %v751 = vadd.f32 %v747, %v648
    %v752 = vmax.f32 %v748, 0.0
    %v753 = vmax.f32 %v749, 0.0
    %v754 = vmax.f32 %v750, 0.0
    %v755 = vmax.f32 %v751, 0.0
    %v756 = vpack.c.bf16 %v753, %v752
    %v757 = vpack.c.bf16 %v755, %v754
    %v760 = vunpack.c.l.b16 %v756
    %v761 = vunpack.c.h.b16 %v756
    %v762 = vunpack.c.l.b16 %v757
    %v763 = vunpack.c.h.b16 %v757
    %v764 = vpack.c.b16 %v760, %v760
    %v765 = vpack.c.b16 %v761, %v761
    %v766 = vpack.c.b16 %v762, %v762
    %v767 = vpack.c.b16 %v763, %v763
    %s772 = scalar_lea.vmem %s4, 48
    %773 = vst [vmem:[%s772] sm:$0xf] %v764
    %774 = vst [vmem:[%s772 + $0x4] sm:$0xf] %v765
    %775 = vst [vmem:[%s772 + $0x8] sm:$0xf] %v766
    %776 = vst [vmem:[%s772 + $0xc] sm:$0xf] %v767
    // Predicated region
    $region30: #{decoder_forward_pallas.8} parent=1 // pred_check
      _
    $region31: #{decoder_forward_pallas.8} parent=1 // pred_check_branch
      %778 = sbr.rel (0) target = $region33
    $region32: #{decoder_forward_pallas.8} parent=1 // pred_region
      _
    $region33: #{decoder_forward_pallas.8} parent=1 // pred_fallthru
      _
    // Predicated region
    $region34: #{decoder_forward_pallas.8} parent=1 // pred_check
      _
    $region35: #{decoder_forward_pallas.8} parent=1 // pred_check_branch
      %780 = sbr.rel (0) target = $region37
    $region36: #{decoder_forward_pallas.8} parent=1 // pred_region
      _
    $region37: #{decoder_forward_pallas.8} parent=1 // pred_fallthru
      _
    %781 = vsyncpa [#allocation3], 1
    %782 = vsyncpa [#allocation5], 1

// kernel: decoder_forward_pallas.9
$region0: #{decoder_forward_pallas.9}
  #allocation0 [shape = 'u32[]', space=smem, size = 0x4, offset = 0x4, fixed_abs, tag = 'smem constant byte address 0x4 - core index']
  #allocation1 [shape = 'u32[144,128]{1,0:T(1,128)}', space=vmem, size = 0x12000, scoped, tag = 'internal scratch']
  %s0 = inlined_call_operand.vmem [shape: bf16[128,128], index: 0, kind: input, shape index: {}]
  %s1 = inlined_call_operand.hbm [shape: bf16[4,128,128], index: 1, kind: input, shape index: {}]
  %s2 = inlined_call_operand.hbm [shape: f32[1,128], index: 2, kind: input, shape index: {}]
  %s3 = inlined_call_operand.hbm [shape: f32[1,128], index: 3, kind: input, shape index: {}]
  %s4 = inlined_call_operand.vmem [shape: bf16[4,128,128], index: 4, kind: output, shape index: {}]
  %s5 = sld [smem:[#allocation0]]
  $region38: #{decoder_forward_pallas.9} parent=0
    _
  %s7 = ssub.s32 1, %s5
  %s8 = scalar_select 0, %s7, %s5
  $region1: #{decoder_forward_pallas.9} parent=0
    #allocation2 [shape = 'u8[131072]{0}', space=vmem, size = 0x20000, scoped, tag = 'input window, operand 1, single buffered']
    #allocation3 [shape = 's32[1]{0}', space=sflag, size = 0x4, scoped, tag = 'scoped memory for decoder_forward_pallas.9']
    #allocation4 [shape = 'u8[512]{0}', space=vmem, size = 0x400, scoped, tag = 'input window, operand 2, single buffered']
    #allocation5 [shape = 's32[1]{0}', space=sflag, size = 0x4, scoped, tag = 'scoped memory for decoder_forward_pallas.9']
    #allocation6 [shape = 'u8[512]{0}', space=vmem, size = 0x400, scoped, tag = 'input window, operand 3, single buffered']
    %9 = vsyncpa [#allocation3], 0
    %10 = vsyncpa [#allocation5], 0
    // Predicated region
    $region2: #{decoder_forward_pallas.9} parent=1 // pred_check
      _
    $region3: #{decoder_forward_pallas.9} parent=1 // pred_check_branch
      %12 = sbr.rel (0) target = $region5
    $region4: #{decoder_forward_pallas.9} parent=1 // pred_region
      _
    $region5: #{decoder_forward_pallas.9} parent=1 // pred_fallthru
      _
    // Predicated region
    $region6: #{decoder_forward_pallas.9} parent=1 // pred_check
      _
    $region7: #{decoder_forward_pallas.9} parent=1 // pred_check_branch
      %14 = sbr.rel (0) target = $region9
    $region8: #{decoder_forward_pallas.9} parent=1 // pred_region
      %s16 = ssub.s32 4096, 4096
      %17 = vsyncadd [#allocation3], %s16
      %s18 = sshll.u32 [#allocation2], 4
      %s19 = int_to_ptr.vmem [resolvable:$true] %s18
      %24 = dma.hbm_to_vmem [thread:$0]  %s1, 4096, %s19, [#allocation3], 64, 64, 4
    $region9: #{decoder_forward_pallas.9} parent=1 // pred_fallthru
      _
    // Predicated region
    $region10: #{decoder_forward_pallas.9} parent=1 // pred_check
      _
    $region11: #{decoder_forward_pallas.9} parent=1 // pred_check_branch
      %26 = sbr.rel (0) target = $region13
    $region12: #{decoder_forward_pallas.9} parent=1 // pred_region
      %s28 = ssub.s32 16, 16
      %29 = vsyncadd [#allocation5], %s28
      %s31 = sshll.u32 [#allocation4], 4
      %s32 = int_to_ptr.vmem [resolvable:$true] %s31
      %34 = dma.hbm_to_vmem [thread:$0]  %s2, 16, %s32, [#allocation5]
    $region13: #{decoder_forward_pallas.9} parent=1 // pred_fallthru
      _
    // Predicated region
    $region14: #{decoder_forward_pallas.9} parent=1 // pred_check
      _
    $region15: #{decoder_forward_pallas.9} parent=1 // pred_check_branch
      %36 = sbr.rel (0) target = $region17
    $region16: #{decoder_forward_pallas.9} parent=1 // pred_region
      %s38 = ssub.s32 16, 16
      %39 = vsyncadd [#allocation5], %s38
      %s41 = sshll.u32 [#allocation6], 4
      %s42 = int_to_ptr.vmem [resolvable:$true] %s41
      %44 = dma.hbm_to_vmem [thread:$0]  %s3, 16, %s42, [#allocation5]
    $region17: #{decoder_forward_pallas.9} parent=1 // pred_fallthru
      _
    // Predicated region
    $region18: #{decoder_forward_pallas.9} parent=1 // pred_check
      _
    $region19: #{decoder_forward_pallas.9} parent=1 // pred_check_branch
      %46 = sbr.rel (0) target = $region21
    $region20: #{decoder_forward_pallas.9} parent=1 // pred_region
      %47 = dma.done [#allocation3], 4096
    $region21: #{decoder_forward_pallas.9} parent=1 // pred_fallthru
      _
    // Predicated region
    $region22: #{decoder_forward_pallas.9} parent=1 // pred_check
      _
    $region23: #{decoder_forward_pallas.9} parent=1 // pred_check_branch
      %49 = sbr.rel (0) target = $region25
    $region24: #{decoder_forward_pallas.9} parent=1 // pred_region
      %50 = dma.done [#allocation5], 16
    $region25: #{decoder_forward_pallas.9} parent=1 // pred_fallthru
      _
    // Predicated region
    $region26: #{decoder_forward_pallas.9} parent=1 // pred_check
      _
    $region27: #{decoder_forward_pallas.9} parent=1 // pred_check_branch
      %52 = sbr.rel (0) target = $region29
    $region28: #{decoder_forward_pallas.9} parent=1 // pred_region
      %53 = dma.done [#allocation5], 16
    $region29: #{decoder_forward_pallas.9} parent=1 // pred_fallthru
      _
    %v55 = vld [vmem:[%s0] sm:$0xf]
    %v56 = vld [vmem:[%s0 + $0x4] sm:$0xf]
    %v57 = vld [vmem:[%s0 + $0x8] sm:$0xf]
    %v58 = vld [vmem:[%s0 + $0xc] sm:$0xf]
    %v59 = vld [vmem:[%s0 + $0x10] sm:$0xf]
    %v60 = vld [vmem:[%s0 + $0x14] sm:$0xf]
    %v61 = vld [vmem:[%s0 + $0x18] sm:$0xf]
    %v62 = vld [vmem:[%s0 + $0x1c] sm:$0xf]
    %v63 = vld [vmem:[%s0 + $0x20] sm:$0xf]
    %v64 = vld [vmem:[%s0 + $0x24] sm:$0xf]
    %v65 = vld [vmem:[%s0 + $0x28] sm:$0xf]
    %v66 = vld [vmem:[%s0 + $0x2c] sm:$0xf]
    %v67 = vld [vmem:[%s0 + $0x30] sm:$0xf]
    %v68 = vld [vmem:[%s0 + $0x34] sm:$0xf]
    %v69 = vld [vmem:[%s0 + $0x38] sm:$0xf]
    %v70 = vld [vmem:[%s0 + $0x3c] sm:$0xf]
    %v71 = vld [vmem:[#allocation2] sm:$0xf]
    %v72 = vld [vmem:[#allocation2 + $0x4] sm:$0xf]
    %v73 = vld [vmem:[#allocation2 + $0x8] sm:$0xf]
    %v74 = vld [vmem:[#allocation2 + $0xc] sm:$0xf]
    %v75 = vld [vmem:[#allocation2 + $0x10] sm:$0xf]
    %v76 = vld [vmem:[#allocation2 + $0x14] sm:$0xf]
    %v77 = vld [vmem:[#allocation2 + $0x18] sm:$0xf]
    %v78 = vld [vmem:[#allocation2 + $0x1c] sm:$0xf]
    %v79 = vld [vmem:[#allocation2 + $0x20] sm:$0xf]
    %v80 = vld [vmem:[#allocation2 + $0x24] sm:$0xf]
    %v81 = vld [vmem:[#allocation2 + $0x28] sm:$0xf]
    %v82 = vld [vmem:[#allocation2 + $0x2c] sm:$0xf]
    %v83 = vld [vmem:[#allocation2 + $0x30] sm:$0xf]
    %v84 = vld [vmem:[#allocation2 + $0x34] sm:$0xf]
    %v85 = vld [vmem:[#allocation2 + $0x38] sm:$0xf]
    %v86 = vld [vmem:[#allocation2 + $0x3c] sm:$0xf]
    %v103 = vunpack.c.l.b16 %v55
    %v104 = vunpack.c.l.b16 %v56
    %v105 = vunpack.c.l.b16 %v57
    %v106 = vunpack.c.l.b16 %v58
    %v107 = vunpack.c.l.b16 %v59
    %v108 = vunpack.c.l.b16 %v60
    %v109 = vunpack.c.l.b16 %v61
    %v110 = vunpack.c.l.b16 %v62
    %v111 = vunpack.c.l.b16 %v63
    %v112 = vunpack.c.l.b16 %v64
    %v113 = vunpack.c.l.b16 %v65
    %v114 = vunpack.c.l.b16 %v66
    %v115 = vunpack.c.l.b16 %v67
    %v116 = vunpack.c.l.b16 %v68
    %v117 = vunpack.c.l.b16 %v69
    %v118 = vunpack.c.l.b16 %v70
    %v119 = vpack.c.b16 %v104, %v103
    %v120 = vpack.c.b16 %v106, %v105
    %v121 = vpack.c.b16 %v108, %v107
    %v122 = vpack.c.b16 %v110, %v109
    %v123 = vpack.c.b16 %v112, %v111
    %v124 = vpack.c.b16 %v114, %v113
    %v125 = vpack.c.b16 %v116, %v115
    %v126 = vpack.c.b16 %v118, %v117
    %v151 = vunpack.c.l.b16 %v71
    %v152 = vunpack.c.l.b16 %v72
    %v153 = vunpack.c.l.b16 %v73
    %v154 = vunpack.c.l.b16 %v74
    %v155 = vunpack.c.l.b16 %v75
    %v156 = vunpack.c.l.b16 %v76
    %v157 = vunpack.c.l.b16 %v77
    %v158 = vunpack.c.l.b16 %v78
    %v159 = vunpack.c.l.b16 %v79
    %v160 = vunpack.c.l.b16 %v80
    %v161 = vunpack.c.l.b16 %v81
    %v162 = vunpack.c.l.b16 %v82
    %v163 = vunpack.c.l.b16 %v83
    %v164 = vunpack.c.l.b16 %v84
    %v165 = vunpack.c.l.b16 %v85
    %v166 = vunpack.c.l.b16 %v86
    %v167 = vpack.c.b16 %v152, %v151
    %v168 = vpack.c.b16 %v154, %v153
    %v169 = vpack.c.b16 %v156, %v155
    %v170 = vpack.c.b16 %v158, %v157
    %v171 = vpack.c.b16 %v160, %v159
    %v172 = vpack.c.b16 %v162, %v161
    %v173 = vpack.c.b16 %v164, %v163
    %v174 = vpack.c.b16 %v166, %v165
    %183 = vmatprep.subr.bf16.mxu0 0
    %184 = vmatpush1.bf16.msra.mxu0 %v167
    %185 = vmatprep.subr.bf16.mxu0 0
    %186 = vmatpush1.bf16.msra.mxu0 %v168
    %187 = vmatprep.subr.bf16.mxu0 0
    %188 = vmatpush1.bf16.msra.mxu0 %v169
    %189 = vmatprep.subr.bf16.mxu0 0
    %190 = vmatpush1.bf16.msra.mxu0 %v170
    %191 = vmatprep.subr.bf16.mxu0 0
    %192 = vmatpush1.bf16.msra.mxu0 %v171
    %193 = vmatprep.subr.bf16.mxu0 0
    %194 = vmatpush1.bf16.msra.mxu0 %v172
    %195 = vmatprep.subr.bf16.mxu0 0
    %196 = vmatpush1.bf16.msra.mxu0 %v173
    %197 = vmatprep.subr.bf16.mxu0 0
    %198 = vmatpush1.bf16.msra.mxu0 %v174
    %199 = vmatprep.subr.bf16.mxu0 0
    %200 = vmatpush1.bf16.msra.mxu0 0
    %201 = vmatprep.subr.bf16.mxu0 0
    %202 = vmatpush1.bf16.msra.mxu0 0
    %203 = vmatprep.subr.bf16.mxu0 0
    %204 = vmatpush1.bf16.msra.mxu0 0
    %205 = vmatprep.subr.bf16.mxu0 0
    %206 = vmatpush1.bf16.msra.mxu0 0
    %207 = vmatprep.subr.bf16.mxu0 0
    %208 = vmatpush1.bf16.msra.mxu0 0
    %209 = vmatprep.subr.bf16.mxu0 0
    %210 = vmatpush1.bf16.msra.mxu0 0
    %211 = vmatprep.subr.bf16.mxu0 0
    %212 = vmatpush1.bf16.msra.mxu0 0
    %213 = vmatprep.subr.bf16.mxu0 0
    %214 = vmatpush1.bf16.msra.mxu0 0
    %215 = vmatprep.mubr.bf16.mxu0 0
    %216 = vmatmul.mubr.bf16.gmra.mrb[0].mxu0 %v119
    %v217 = vpop.f32.mrb[0].mxu0
    %v218 = vadd.f32 0.0, %v217
    %v219 = vpop.f32.mrb[0].mxu0
    %v220 = vpop.f32.mrb[0].mxu0
    %v221 = vadd.f32 0.0, %v220
    %v222 = vpop.f32.mrb[0].mxu0
    %223 = vmatprep.mubr.bf16.mxu0 0
    %224 = vmatmul.mubr.bf16.gmra.mrb[0].mxu0 %v120
    %v225 = vpop.f32.mrb[0].mxu0
    %v226 = vadd.f32 0.0, %v225
    %v227 = vpop.f32.mrb[0].mxu0
    %v228 = vpop.f32.mrb[0].mxu0
    %v229 = vadd.f32 0.0, %v228
    %v230 = vpop.f32.mrb[0].mxu0
    %231 = vmatprep.mubr.bf16.mxu0 0
    %232 = vmatmul.mubr.bf16.gmra.mrb[0].mxu0 %v121
    %v233 = vpop.f32.mrb[0].mxu0
    %v234 = vadd.f32 0.0, %v233
    %v235 = vpop.f32.mrb[0].mxu0
    %v236 = vpop.f32.mrb[0].mxu0
    %v237 = vadd.f32 0.0, %v236
    %v238 = vpop.f32.mrb[0].mxu0
    %239 = vmatprep.mubr.bf16.mxu0 0
    %240 = vmatmul.mubr.bf16.gmra.mrb[0].mxu0 %v122
    %v241 = vpop.f32.mrb[0].mxu0
    %v242 = vadd.f32 0.0, %v241
    %v243 = vpop.f32.mrb[0].mxu0
    %v244 = vpop.f32.mrb[0].mxu0
    %v245 = vadd.f32 0.0, %v244
    %v246 = vpop.f32.mrb[0].mxu0
    %247 = vmatprep.mubr.bf16.mxu0 0
    %248 = vmatmul.mubr.bf16.gmra.mrb[0].mxu0 %v123
    %v249 = vpop.f32.mrb[0].mxu0
    %v250 = vadd.f32 0.0, %v249
    %v251 = vpop.f32.mrb[0].mxu0
    %v252 = vpop.f32.mrb[0].mxu0
    %v253 = vadd.f32 0.0, %v252
    %v254 = vpop.f32.mrb[0].mxu0
    %255 = vmatprep.mubr.bf16.mxu0 0
    %256 = vmatmul.mubr.bf16.gmra.mrb[0].mxu0 %v124
    %v257 = vpop.f32.mrb[0].mxu0
    %v258 = vadd.f32 0.0, %v257
    %v259 = vpop.f32.mrb[0].mxu0
    %v260 = vpop.f32.mrb[0].mxu0
    %v261 = vadd.f32 0.0, %v260
    %v262 = vpop.f32.mrb[0].mxu0
    %263 = vmatprep.mubr.bf16.mxu0 0
    %264 = vmatmul.mubr.bf16.gmra.mrb[0].mxu0 %v125
    %v265 = vpop.f32.mrb[0].mxu0
    %v266 = vadd.f32 0.0, %v265
    %v267 = vpop.f32.mrb[0].mxu0
    %v268 = vpop.f32.mrb[0].mxu0
    %v269 = vadd.f32 0.0, %v268
    %v270 = vpop.f32.mrb[0].mxu0
    %271 = vmatprep.mubr.bf16.mxu0 0
    %272 = vmatmul.mubr.bf16.gmra.mrb[0].mxu0 %v126
    %v273 = vpop.f32.mrb[0].mxu0
    %v274 = vadd.f32 0.0, %v273
    %v275 = vpop.f32.mrb[0].mxu0
    %v276 = vpop.f32.mrb[0].mxu0
    %v277 = vadd.f32 0.0, %v276
    %v278 = vpop.f32.mrb[0].mxu0
    %279 = vdwg.mxu0
    %v280 = vadd.f32 %v218, %v221
    %v281 = vadd.f32 %v280, %v226
    %v282 = vadd.f32 %v281, %v229
    %v283 = vadd.f32 %v282, %v234
    %v284 = vadd.f32 %v283, %v237
    %v285 = vadd.f32 %v284, %v242
    %v286 = vadd.f32 %v285, %v245
    %v287 = vadd.f32 %v286, %v250
    %v288 = vadd.f32 %v287, %v253
    %v289 = vadd.f32 %v288, %v258
    %v290 = vadd.f32 %v289, %v261
    %v291 = vadd.f32 %v290, %v266
    %v292 = vadd.f32 %v291, %v269
    %v293 = vadd.f32 %v292, %v274
    %v294 = vadd.f32 %v293, %v277
    %v295 = vrot.slane %v294, 4
    %v296 = vadd.f32 %v294, %v295
    %v297 = vrot.slane %v296, 2
    %v298 = vadd.f32 %v296, %v297
    %v299 = vrot.slane %v298, 1
    %v300 = vadd.f32 %v298, %v299
    %v301 = vadd.f32 %v300, 0.0
    %v302 = vmul.f32 %v218, %v218
    %v303 = vmul.f32 %v221, %v221
    %v304 = vmul.f32 %v226, %v226
    %v305 = vmul.f32 %v229, %v229
    %v306 = vmul.f32 %v234, %v234
    %v307 = vmul.f32 %v237, %v237
    %v308 = vmul.f32 %v242, %v242
    %v309 = vmul.f32 %v245, %v245
    %v310 = vmul.f32 %v250, %v250
    %v311 = vmul.f32 %v253, %v253
    %v312 = vmul.f32 %v258, %v258
    %v313 = vmul.f32 %v261, %v261
    %v314 = vmul.f32 %v266, %v266
    %v315 = vmul.f32 %v269, %v269
    %v316 = vmul.f32 %v274, %v274
    %v317 = vmul.f32 %v277, %v277
    %v318 = vadd.f32 %v302, %v303
    %v319 = vadd.f32 %v318, %v304
    %v320 = vadd.f32 %v319, %v305
    %v321 = vadd.f32 %v320, %v306
    %v322 = vadd.f32 %v321, %v307
    %v323 = vadd.f32 %v322, %v308
    %v324 = vadd.f32 %v323, %v309
    %v325 = vadd.f32 %v324, %v310
    %v326 = vadd.f32 %v325, %v311
    %v327 = vadd.f32 %v326, %v312
    %v328 = vadd.f32 %v327, %v313
    %v329 = vadd.f32 %v328, %v314
    %v330 = vadd.f32 %v329, %v315
    %v331 = vadd.f32 %v330, %v316
    %v332 = vadd.f32 %v331, %v317
    %v333 = vrot.slane %v332, 4
    %v334 = vadd.f32 %v332, %v333
    %v335 = vrot.slane %v334, 2
    %v336 = vadd.f32 %v334, %v335
    %v337 = vrot.slane %v336, 1
    %v338 = vadd.f32 %v336, %v337
    %v339 = vadd.f32 %v338, 0.0
    %s340 = scalar_lea.vmem [#allocation2], 64
    %v341 = vld [vmem:[%s340] sm:$0xf]
    %v342 = vld [vmem:[%s340 + $0x4] sm:$0xf]
    %v343 = vld [vmem:[%s340 + $0x8] sm:$0xf]
    %v344 = vld [vmem:[%s340 + $0xc] sm:$0xf]
    %v345 = vld [vmem:[%s340 + $0x10] sm:$0xf]
    %v346 = vld [vmem:[%s340 + $0x14] sm:$0xf]
    %v347 = vld [vmem:[%s340 + $0x18] sm:$0xf]
    %v348 = vld [vmem:[%s340 + $0x1c] sm:$0xf]
    %v349 = vld [vmem:[%s340 + $0x20] sm:$0xf]
    %v350 = vld [vmem:[%s340 + $0x24] sm:$0xf]
    %v351 = vld [vmem:[%s340 + $0x28] sm:$0xf]
    %v352 = vld [vmem:[%s340 + $0x2c] sm:$0xf]
    %v353 = vld [vmem:[%s340 + $0x30] sm:$0xf]
    %v354 = vld [vmem:[%s340 + $0x34] sm:$0xf]
    %v355 = vld [vmem:[%s340 + $0x38] sm:$0xf]
    %v356 = vld [vmem:[%s340 + $0x3c] sm:$0xf]
    %v373 = vunpack.c.l.b16 %v341
    %v374 = vunpack.c.l.b16 %v342
    %v375 = vunpack.c.l.b16 %v343
    %v376 = vunpack.c.l.b16 %v344
    %v377 = vunpack.c.l.b16 %v345
    %v378 = vunpack.c.l.b16 %v346
    %v379 = vunpack.c.l.b16 %v347
    %v380 = vunpack.c.l.b16 %v348
    %v381 = vunpack.c.l.b16 %v349
    %v382 = vunpack.c.l.b16 %v350
    %v383 = vunpack.c.l.b16 %v351
    %v384 = vunpack.c.l.b16 %v352
    %v385 = vunpack.c.l.b16 %v353
    %v386 = vunpack.c.l.b16 %v354
    %v387 = vunpack.c.l.b16 %v355
    %v388 = vunpack.c.l.b16 %v356
    %v389 = vpack.c.b16 %v374, %v373
    %v390 = vpack.c.b16 %v376, %v375
    %v391 = vpack.c.b16 %v378, %v377
    %v392 = vpack.c.b16 %v380, %v379
    %v393 = vpack.c.b16 %v382, %v381
    %v394 = vpack.c.b16 %v384, %v383
    %v395 = vpack.c.b16 %v386, %v385
    %v396 = vpack.c.b16 %v388, %v387
    %405 = vmatprep.subr.bf16.mxu0 0
    %406 = vmatpush1.bf16.msra.mxu0 %v389
    %407 = vmatprep.subr.bf16.mxu0 0
    %408 = vmatpush1.bf16.msra.mxu0 %v390
    %409 = vmatprep.subr.bf16.mxu0 0
    %410 = vmatpush1.bf16.msra.mxu0 %v391
    %411 = vmatprep.subr.bf16.mxu0 0
    %412 = vmatpush1.bf16.msra.mxu0 %v392
    %413 = vmatprep.subr.bf16.mxu0 0
    %414 = vmatpush1.bf16.msra.mxu0 %v393
    %415 = vmatprep.subr.bf16.mxu0 0
    %416 = vmatpush1.bf16.msra.mxu0 %v394
    %417 = vmatprep.subr.bf16.mxu0 0
    %418 = vmatpush1.bf16.msra.mxu0 %v395
    %419 = vmatprep.subr.bf16.mxu0 0
    %420 = vmatpush1.bf16.msra.mxu0 %v396
    %421 = vmatprep.subr.bf16.mxu0 0
    %422 = vmatpush1.bf16.msra.mxu0 0
    %423 = vmatprep.subr.bf16.mxu0 0
    %424 = vmatpush1.bf16.msra.mxu0 0
    %425 = vmatprep.subr.bf16.mxu0 0
    %426 = vmatpush1.bf16.msra.mxu0 0
    %427 = vmatprep.subr.bf16.mxu0 0
    %428 = vmatpush1.bf16.msra.mxu0 0
    %429 = vmatprep.subr.bf16.mxu0 0
    %430 = vmatpush1.bf16.msra.mxu0 0
    %431 = vmatprep.subr.bf16.mxu0 0
    %432 = vmatpush1.bf16.msra.mxu0 0
    %433 = vmatprep.subr.bf16.mxu0 0
    %434 = vmatpush1.bf16.msra.mxu0 0
    %435 = vmatprep.subr.bf16.mxu0 0
    %436 = vmatpush1.bf16.msra.mxu0 0
    %437 = vmatprep.mubr.bf16.mxu0 0
    %438 = vmatmul.mubr.bf16.gmra.mrb[0].mxu0 %v119
    %v439 = vpop.f32.mrb[0].mxu0
    %v440 = vadd.f32 0.0, %v439
    %v441 = vpop.f32.mrb[0].mxu0
    %v442 = vpop.f32.mrb[0].mxu0
    %v443 = vadd.f32 0.0, %v442
    %v444 = vpop.f32.mrb[0].mxu0
    %445 = vmatprep.mubr.bf16.mxu0 0
    %446 = vmatmul.mubr.bf16.gmra.mrb[0].mxu0 %v120
    %v447 = vpop.f32.mrb[0].mxu0
    %v448 = vadd.f32 0.0, %v447
    %v449 = vpop.f32.mrb[0].mxu0
    %v450 = vpop.f32.mrb[0].mxu0
    %v451 = vadd.f32 0.0, %v450
    %v452 = vpop.f32.mrb[0].mxu0
    %453 = vmatprep.mubr.bf16.mxu0 0
    %454 = vmatmul.mubr.bf16.gmra.mrb[0].mxu0 %v121
    %v455 = vpop.f32.mrb[0].mxu0
    %v456 = vadd.f32 0.0, %v455
    %v457 = vpop.f32.mrb[0].mxu0
    %v458 = vpop.f32.mrb[0].mxu0
    %v459 = vadd.f32 0.0, %v458
    %v460 = vpop.f32.mrb[0].mxu0
    %461 = vmatprep.mubr.bf16.mxu0 0
    %462 = vmatmul.mubr.bf16.gmra.mrb[0].mxu0 %v122
    %v463 = vpop.f32.mrb[0].mxu0
    %v464 = vadd.f32 0.0, %v463
    %v465 = vpop.f32.mrb[0].mxu0
    %v466 = vpop.f32.mrb[0].mxu0
    %v467 = vadd.f32 0.0, %v466
    %v468 = vpop.f32.mrb[0].mxu0
    %469 = vmatprep.mubr.bf16.mxu0 0
    %470 = vmatmul.mubr.bf16.gmra.mrb[0].mxu0 %v123
    %v471 = vpop.f32.mrb[0].mxu0
    %v472 = vadd.f32 0.0, %v471
    %v473 = vpop.f32.mrb[0].mxu0
    %v474 = vpop.f32.mrb[0].mxu0
    %v475 = vadd.f32 0.0, %v474
    %v476 = vpop.f32.mrb[0].mxu0
    %477 = vmatprep.mubr.bf16.mxu0 0
    %478 = vmatmul.mubr.bf16.gmra.mrb[0].mxu0 %v124
    %v479 = vpop.f32.mrb[0].mxu0
    %v480 = vadd.f32 0.0, %v479
    %v481 = vpop.f32.mrb[0].mxu0
    %v482 = vpop.f32.mrb[0].mxu0
    %v483 = vadd.f32 0.0, %v482
    %v484 = vpop.f32.mrb[0].mxu0
    %485 = vmatprep.mubr.bf16.mxu0 0
    %486 = vmatmul.mubr.bf16.gmra.mrb[0].mxu0 %v125
    %v487 = vpop.f32.mrb[0].mxu0
    %v488 = vadd.f32 0.0, %v487
    %v489 = vpop.f32.mrb[0].mxu0
    %v490 = vpop.f32.mrb[0].mxu0
    %v491 = vadd.f32 0.0, %v490
    %v492 = vpop.f32.mrb[0].mxu0
    %493 = vmatprep.mubr.bf16.mxu0 0
    %494 = vmatmul.mubr.bf16.gmra.mrb[0].mxu0 %v126
    %v495 = vpop.f32.mrb[0].mxu0
    %v496 = vadd.f32 0.0, %v495
    %v497 = vpop.f32.mrb[0].mxu0
    %v498 = vpop.f32.mrb[0].mxu0
    %v499 = vadd.f32 0.0, %v498
    %v500 = vpop.f32.mrb[0].mxu0
    %501 = vdwg.mxu0
    %v502 = vadd.f32 %v440, %v443
    %v503 = vadd.f32 %v502, %v448
    %v504 = vadd.f32 %v503, %v451
    %v505 = vadd.f32 %v504, %v456
    %v506 = vadd.f32 %v505, %v459
    %v507 = vadd.f32 %v506, %v464
    %v508 = vadd.f32 %v507, %v467
    %v509 = vadd.f32 %v508, %v472
    %v510 = vadd.f32 %v509, %v475
    %v511 = vadd.f32 %v510, %v480
    %v512 = vadd.f32 %v511, %v483
    %v513 = vadd.f32 %v512, %v488
    %v514 = vadd.f32 %v513, %v491
    %v515 = vadd.f32 %v514, %v496
    %v516 = vadd.f32 %v515, %v499
    %v517 = vrot.slane %v516, 4
    %v518 = vadd.f32 %v516, %v517
    %v519 = vrot.slane %v518, 2
    %v520 = vadd.f32 %v518, %v519
    %v521 = vrot.slane %v520, 1
    %v522 = vadd.f32 %v520, %v521
    %v523 = vadd.f32 %v301, %v522
    %v524 = vmul.f32 %v440, %v440
    %v525 = vmul.f32 %v443, %v443
    %v526 = vmul.f32 %v448, %v448
    %v527 = vmul.f32 %v451, %v451
    %v528 = vmul.f32 %v456, %v456
    %v529 = vmul.f32 %v459, %v459
    %v530 = vmul.f32 %v464, %v464
    %v531 = vmul.f32 %v467, %v467
    %v532 = vmul.f32 %v472, %v472
    %v533 = vmul.f32 %v475, %v475
    %v534 = vmul.f32 %v480, %v480
    %v535 = vmul.f32 %v483, %v483
    %v536 = vmul.f32 %v488, %v488
    %v537 = vmul.f32 %v491, %v491
    %v538 = vmul.f32 %v496, %v496
    %v539 = vmul.f32 %v499, %v499
    %v540 = vadd.f32 %v524, %v525
    %v541 = vadd.f32 %v540, %v526
    %v542 = vadd.f32 %v541, %v527
    %v543 = vadd.f32 %v542, %v528
    %v544 = vadd.f32 %v543, %v529
    %v545 = vadd.f32 %v544, %v530
    %v546 = vadd.f32 %v545, %v531
    %v547 = vadd.f32 %v546, %v532
    %v548 = vadd.f32 %v547, %v533
    %v549 = vadd.f32 %v548, %v534
    %v550 = vadd.f32 %v549, %v535
    %v551 = vadd.f32 %v550, %v536
    %v552 = vadd.f32 %v551, %v537
    %v553 = vadd.f32 %v552, %v538
    %v554 = vadd.f32 %v553, %v539
    %v555 = vrot.slane %v554, 4
    %v556 = vadd.f32 %v554, %v555
    %v557 = vrot.slane %v556, 2
    %v558 = vadd.f32 %v556, %v557
    %v559 = vrot.slane %v558, 1
    %v560 = vadd.f32 %v558, %v559
    %v561 = vadd.f32 %v339, %v560
    %s562 = scalar_lea.vmem [#allocation2], 128
    %v563 = vld [vmem:[%s562] sm:$0xf]
    %v564 = vld [vmem:[%s562 + $0x4] sm:$0xf]
    %v565 = vld [vmem:[%s562 + $0x8] sm:$0xf]
    %v566 = vld [vmem:[%s562 + $0xc] sm:$0xf]
    %v567 = vld [vmem:[%s562 + $0x10] sm:$0xf]
    %v568 = vld [vmem:[%s562 + $0x14] sm:$0xf]
    %v569 = vld [vmem:[%s562 + $0x18] sm:$0xf]
    %v570 = vld [vmem:[%s562 + $0x1c] sm:$0xf]
    %v571 = vld [vmem:[%s562 + $0x20] sm:$0xf]
    %v572 = vld [vmem:[%s562 + $0x24] sm:$0xf]
    %v573 = vld [vmem:[%s562 + $0x28] sm:$0xf]
    %v574 = vld [vmem:[%s562 + $0x2c] sm:$0xf]
    %v575 = vld [vmem:[%s562 + $0x30] sm:$0xf]
    %v576 = vld [vmem:[%s562 + $0x34] sm:$0xf]
    %v577 = vld [vmem:[%s562 + $0x38] sm:$0xf]
    %v578 = vld [vmem:[%s562 + $0x3c] sm:$0xf]
    %v595 = vunpack.c.l.b16 %v563
    %v596 = vunpack.c.l.b16 %v564
    %v597 = vunpack.c.l.b16 %v565
    %v598 = vunpack.c.l.b16 %v566
    %v599 = vunpack.c.l.b16 %v567
    %v600 = vunpack.c.l.b16 %v568
    %v601 = vunpack.c.l.b16 %v569
    %v602 = vunpack.c.l.b16 %v570
    %v603 = vunpack.c.l.b16 %v571
    %v604 = vunpack.c.l.b16 %v572
    %v605 = vunpack.c.l.b16 %v573
    %v606 = vunpack.c.l.b16 %v574
    %v607 = vunpack.c.l.b16 %v575
    %v608 = vunpack.c.l.b16 %v576
    %v609 = vunpack.c.l.b16 %v577
    %v610 = vunpack.c.l.b16 %v578
    %v611 = vpack.c.b16 %v596, %v595
    %v612 = vpack.c.b16 %v598, %v597
    %v613 = vpack.c.b16 %v600, %v599
    %v614 = vpack.c.b16 %v602, %v601
    %v615 = vpack.c.b16 %v604, %v603
    %v616 = vpack.c.b16 %v606, %v605
    %v617 = vpack.c.b16 %v608, %v607
    %v618 = vpack.c.b16 %v610, %v609
    %627 = vmatprep.subr.bf16.mxu0 0
    %628 = vmatpush1.bf16.msra.mxu0 %v611
    %629 = vmatprep.subr.bf16.mxu0 0
    %630 = vmatpush1.bf16.msra.mxu0 %v612
    %631 = vmatprep.subr.bf16.mxu0 0
    %632 = vmatpush1.bf16.msra.mxu0 %v613
    %633 = vmatprep.subr.bf16.mxu0 0
    %634 = vmatpush1.bf16.msra.mxu0 %v614
    %635 = vmatprep.subr.bf16.mxu0 0
    %636 = vmatpush1.bf16.msra.mxu0 %v615
    %637 = vmatprep.subr.bf16.mxu0 0
    %638 = vmatpush1.bf16.msra.mxu0 %v616
    %639 = vmatprep.subr.bf16.mxu0 0
    %640 = vmatpush1.bf16.msra.mxu0 %v617
    %641 = vmatprep.subr.bf16.mxu0 0
    %642 = vmatpush1.bf16.msra.mxu0 %v618
    %643 = vmatprep.subr.bf16.mxu0 0
    %644 = vmatpush1.bf16.msra.mxu0 0
    %645 = vmatprep.subr.bf16.mxu0 0
    %646 = vmatpush1.bf16.msra.mxu0 0
    %647 = vmatprep.subr.bf16.mxu0 0
    %648 = vmatpush1.bf16.msra.mxu0 0
    %649 = vmatprep.subr.bf16.mxu0 0
    %650 = vmatpush1.bf16.msra.mxu0 0
    %651 = vmatprep.subr.bf16.mxu0 0
    %652 = vmatpush1.bf16.msra.mxu0 0
    %653 = vmatprep.subr.bf16.mxu0 0
    %654 = vmatpush1.bf16.msra.mxu0 0
    %655 = vmatprep.subr.bf16.mxu0 0
    %656 = vmatpush1.bf16.msra.mxu0 0
    %657 = vmatprep.subr.bf16.mxu0 0
    %658 = vmatpush1.bf16.msra.mxu0 0
    %659 = vmatprep.mubr.bf16.mxu0 0
    %660 = vmatmul.mubr.bf16.gmra.mrb[0].mxu0 %v119
    %v661 = vpop.f32.mrb[0].mxu0
    %v662 = vadd.f32 0.0, %v661
    %v663 = vpop.f32.mrb[0].mxu0
    %v664 = vpop.f32.mrb[0].mxu0
    %v665 = vadd.f32 0.0, %v664
    %v666 = vpop.f32.mrb[0].mxu0
    %667 = vmatprep.mubr.bf16.mxu0 0
    %668 = vmatmul.mubr.bf16.gmra.mrb[0].mxu0 %v120
    %v669 = vpop.f32.mrb[0].mxu0
    %v670 = vadd.f32 0.0, %v669
    %v671 = vpop.f32.mrb[0].mxu0
    %v672 = vpop.f32.mrb[0].mxu0
    %v673 = vadd.f32 0.0, %v672
    %v674 = vpop.f32.mrb[0].mxu0
    %675 = vmatprep.mubr.bf16.mxu0 0
    %676 = vmatmul.mubr.bf16.gmra.mrb[0].mxu0 %v121
    %v677 = vpop.f32.mrb[0].mxu0
    %v678 = vadd.f32 0.0, %v677
    %v679 = vpop.f32.mrb[0].mxu0
    %v680 = vpop.f32.mrb[0].mxu0
    %v681 = vadd.f32 0.0, %v680
    %v682 = vpop.f32.mrb[0].mxu0
    %683 = vmatprep.mubr.bf16.mxu0 0
    %684 = vmatmul.mubr.bf16.gmra.mrb[0].mxu0 %v122
    %v685 = vpop.f32.mrb[0].mxu0
    %v686 = vadd.f32 0.0, %v685
    %v687 = vpop.f32.mrb[0].mxu0
    %v688 = vpop.f32.mrb[0].mxu0
    %v689 = vadd.f32 0.0, %v688
    %v690 = vpop.f32.mrb[0].mxu0
    %691 = vmatprep.mubr.bf16.mxu0 0
    %692 = vmatmul.mubr.bf16.gmra.mrb[0].mxu0 %v123
    %v693 = vpop.f32.mrb[0].mxu0
    %v694 = vadd.f32 0.0, %v693
    %v695 = vpop.f32.mrb[0].mxu0
    %v696 = vpop.f32.mrb[0].mxu0
    %v697 = vadd.f32 0.0, %v696
    %v698 = vpop.f32.mrb[0].mxu0
    %699 = vmatprep.mubr.bf16.mxu0 0
    %700 = vmatmul.mubr.bf16.gmra.mrb[0].mxu0 %v124
    %v701 = vpop.f32.mrb[0].mxu0
    %v702 = vadd.f32 0.0, %v701
    %v703 = vpop.f32.mrb[0].mxu0
    %v704 = vpop.f32.mrb[0].mxu0
    %v705 = vadd.f32 0.0, %v704
    %v706 = vpop.f32.mrb[0].mxu0
    %707 = vmatprep.mubr.bf16.mxu0 0
    %708 = vmatmul.mubr.bf16.gmra.mrb[0].mxu0 %v125
    %v709 = vpop.f32.mrb[0].mxu0
    %v710 = vadd.f32 0.0, %v709
    %v711 = vpop.f32.mrb[0].mxu0
    %v712 = vpop.f32.mrb[0].mxu0
    %v713 = vadd.f32 0.0, %v712
    %v714 = vpop.f32.mrb[0].mxu0
    %715 = vmatprep.mubr.bf16.mxu0 0
    %716 = vmatmul.mubr.bf16.gmra.mrb[0].mxu0 %v126
    %v717 = vpop.f32.mrb[0].mxu0
    %v718 = vadd.f32 0.0, %v717
    %v719 = vpop.f32.mrb[0].mxu0
    %v720 = vpop.f32.mrb[0].mxu0
    %v721 = vadd.f32 0.0, %v720
    %v722 = vpop.f32.mrb[0].mxu0
    %723 = vdwg.mxu0
    %v724 = vadd.f32 %v662, %v665
    %v725 = vadd.f32 %v724, %v670
    %v726 = vadd.f32 %v725, %v673
    %v727 = vadd.f32 %v726, %v678
    %v728 = vadd.f32 %v727, %v681
    %v729 = vadd.f32 %v728, %v686
    %v730 = vadd.f32 %v729, %v689
    %v731 = vadd.f32 %v730, %v694
    %v732 = vadd.f32 %v731, %v697
    %v733 = vadd.f32 %v732, %v702
    %v734 = vadd.f32 %v733, %v705
    %v735 = vadd.f32 %v734, %v710
    %v736 = vadd.f32 %v735, %v713
    %v737 = vadd.f32 %v736, %v718
    %v738 = vadd.f32 %v737, %v721
    %v739 = vrot.slane %v738, 4
    %v740 = vadd.f32 %v738, %v739
    %v741 = vrot.slane %v740, 2
    %v742 = vadd.f32 %v740, %v741
    %v743 = vrot.slane %v742, 1
    %v744 = vadd.f32 %v742, %v743
    %v745 = vadd.f32 %v523, %v744
    %v746 = vmul.f32 %v662, %v662
    %v747 = vmul.f32 %v665, %v665
    %v748 = vmul.f32 %v670, %v670
    %v749 = vmul.f32 %v673, %v673
    %v750 = vmul.f32 %v678, %v678
    %v751 = vmul.f32 %v681, %v681
    %v752 = vmul.f32 %v686, %v686
    %v753 = vmul.f32 %v689, %v689
    %v754 = vmul.f32 %v694, %v694
    %v755 = vmul.f32 %v697, %v697
    %v756 = vmul.f32 %v702, %v702
    %v757 = vmul.f32 %v705, %v705
    %v758 = vmul.f32 %v710, %v710
    %v759 = vmul.f32 %v713, %v713
    %v760 = vmul.f32 %v718, %v718
    %v761 = vmul.f32 %v721, %v721
    %v762 = vadd.f32 %v746, %v747
    %v763 = vadd.f32 %v762, %v748
    %v764 = vadd.f32 %v763, %v749
    %v765 = vadd.f32 %v764, %v750
    %v766 = vadd.f32 %v765, %v751
    %v767 = vadd.f32 %v766, %v752
    %v768 = vadd.f32 %v767, %v753
    %v769 = vadd.f32 %v768, %v754
    %v770 = vadd.f32 %v769, %v755
    %v771 = vadd.f32 %v770, %v756
    %v772 = vadd.f32 %v771, %v757
    %v773 = vadd.f32 %v772, %v758
    %v774 = vadd.f32 %v773, %v759
    %v775 = vadd.f32 %v774, %v760
    %v776 = vadd.f32 %v775, %v761
    %v777 = vrot.slane %v776, 4
    %v778 = vadd.f32 %v776, %v777
    %v779 = vrot.slane %v778, 2
    %v780 = vadd.f32 %v778, %v779
    %v781 = vrot.slane %v780, 1
    %v782 = vadd.f32 %v780, %v781
    %v783 = vadd.f32 %v561, %v782
    %s784 = scalar_lea.vmem [#allocation2], 192
    %v785 = vld [vmem:[%s784] sm:$0xf]
    %v786 = vld [vmem:[%s784 + $0x4] sm:$0xf]
    %v787 = vld [vmem:[%s784 + $0x8] sm:$0xf]
    %v788 = vld [vmem:[%s784 + $0xc] sm:$0xf]
    %v789 = vld [vmem:[%s784 + $0x10] sm:$0xf]
    %v790 = vld [vmem:[%s784 + $0x14] sm:$0xf]
    %v791 = vld [vmem:[%s784 + $0x18] sm:$0xf]
    %v792 = vld [vmem:[%s784 + $0x1c] sm:$0xf]
    %v793 = vld [vmem:[%s784 + $0x20] sm:$0xf]
    %v794 = vld [vmem:[%s784 + $0x24] sm:$0xf]
    %v795 = vld [vmem:[%s784 + $0x28] sm:$0xf]
    %v796 = vld [vmem:[%s784 + $0x2c] sm:$0xf]
    %v797 = vld [vmem:[%s784 + $0x30] sm:$0xf]
    %v798 = vld [vmem:[%s784 + $0x34] sm:$0xf]
    %v799 = vld [vmem:[%s784 + $0x38] sm:$0xf]
    %v800 = vld [vmem:[%s784 + $0x3c] sm:$0xf]
    %v817 = vunpack.c.l.b16 %v785
    %v818 = vunpack.c.l.b16 %v786
    %v819 = vunpack.c.l.b16 %v787
    %v820 = vunpack.c.l.b16 %v788
    %v821 = vunpack.c.l.b16 %v789
    %v822 = vunpack.c.l.b16 %v790
    %v823 = vunpack.c.l.b16 %v791
    %v824 = vunpack.c.l.b16 %v792
    %v825 = vunpack.c.l.b16 %v793
    %v826 = vunpack.c.l.b16 %v794
    %v827 = vunpack.c.l.b16 %v795
    %v828 = vunpack.c.l.b16 %v796
    %v829 = vunpack.c.l.b16 %v797
    %v830 = vunpack.c.l.b16 %v798
    %v831 = vunpack.c.l.b16 %v799
    %v832 = vunpack.c.l.b16 %v800
    %v833 = vpack.c.b16 %v818, %v817
    %v834 = vpack.c.b16 %v820, %v819
    %v835 = vpack.c.b16 %v822, %v821
    %v836 = vpack.c.b16 %v824, %v823
    %v837 = vpack.c.b16 %v826, %v825
    %v838 = vpack.c.b16 %v828, %v827
    %v839 = vpack.c.b16 %v830, %v829
    %v840 = vpack.c.b16 %v832, %v831
    %849 = vmatprep.subr.bf16.mxu0 0
    %850 = vmatpush1.bf16.msra.mxu0 %v833
    %851 = vmatprep.subr.bf16.mxu0 0
    %852 = vmatpush1.bf16.msra.mxu0 %v834
    %853 = vmatprep.subr.bf16.mxu0 0
    %854 = vmatpush1.bf16.msra.mxu0 %v835
    %855 = vmatprep.subr.bf16.mxu0 0
    %856 = vmatpush1.bf16.msra.mxu0 %v836
    %857 = vmatprep.subr.bf16.mxu0 0
    %858 = vmatpush1.bf16.msra.mxu0 %v837
    %859 = vmatprep.subr.bf16.mxu0 0
    %860 = vmatpush1.bf16.msra.mxu0 %v838
    %861 = vmatprep.subr.bf16.mxu0 0
    %862 = vmatpush1.bf16.msra.mxu0 %v839
    %863 = vmatprep.subr.bf16.mxu0 0
    %864 = vmatpush1.bf16.msra.mxu0 %v840
    %865 = vmatprep.subr.bf16.mxu0 0
    %866 = vmatpush1.bf16.msra.mxu0 0
    %867 = vmatprep.subr.bf16.mxu0 0
    %868 = vmatpush1.bf16.msra.mxu0 0
    %869 = vmatprep.subr.bf16.mxu0 0
    %870 = vmatpush1.bf16.msra.mxu0 0
    %871 = vmatprep.subr.bf16.mxu0 0
    %872 = vmatpush1.bf16.msra.mxu0 0
    %873 = vmatprep.subr.bf16.mxu0 0
    %874 = vmatpush1.bf16.msra.mxu0 0
    %875 = vmatprep.subr.bf16.mxu0 0
    %876 = vmatpush1.bf16.msra.mxu0 0
    %877 = vmatprep.subr.bf16.mxu0 0
    %878 = vmatpush1.bf16.msra.mxu0 0
    %879 = vmatprep.subr.bf16.mxu0 0
    %880 = vmatpush1.bf16.msra.mxu0 0
    %881 = vmatprep.mubr.bf16.mxu0 0
    %882 = vmatmul.mubr.bf16.gmra.mrb[0].mxu0 %v119
    %v883 = vpop.f32.mrb[0].mxu0
    %v884 = vadd.f32 0.0, %v883
    %v885 = vpop.f32.mrb[0].mxu0
    %v886 = vpop.f32.mrb[0].mxu0
    %v887 = vadd.f32 0.0, %v886
    %v888 = vpop.f32.mrb[0].mxu0
    %889 = vmatprep.mubr.bf16.mxu0 0
    %890 = vmatmul.mubr.bf16.gmra.mrb[0].mxu0 %v120
    %v891 = vpop.f32.mrb[0].mxu0
    %v892 = vadd.f32 0.0, %v891
    %v893 = vpop.f32.mrb[0].mxu0
    %v894 = vpop.f32.mrb[0].mxu0
    %v895 = vadd.f32 0.0, %v894
    %v896 = vpop.f32.mrb[0].mxu0
    %897 = vmatprep.mubr.bf16.mxu0 0
    %898 = vmatmul.mubr.bf16.gmra.mrb[0].mxu0 %v121
    %v899 = vpop.f32.mrb[0].mxu0
    %v900 = vadd.f32 0.0, %v899
    %v901 = vpop.f32.mrb[0].mxu0
    %v902 = vpop.f32.mrb[0].mxu0
    %v903 = vadd.f32 0.0, %v902
    %v904 = vpop.f32.mrb[0].mxu0
    %905 = vmatprep.mubr.bf16.mxu0 0
    %906 = vmatmul.mubr.bf16.gmra.mrb[0].mxu0 %v122
    %v907 = vpop.f32.mrb[0].mxu0
    %v908 = vadd.f32 0.0, %v907
    %v909 = vpop.f32.mrb[0].mxu0
    %v910 = vpop.f32.mrb[0].mxu0
    %v911 = vadd.f32 0.0, %v910
    %v912 = vpop.f32.mrb[0].mxu0
    %913 = vmatprep.mubr.bf16.mxu0 0
    %914 = vmatmul.mubr.bf16.gmra.mrb[0].mxu0 %v123
    %v915 = vpop.f32.mrb[0].mxu0
    %v916 = vadd.f32 0.0, %v915
    %v917 = vpop.f32.mrb[0].mxu0
    %v918 = vpop.f32.mrb[0].mxu0
    %v919 = vadd.f32 0.0, %v918
    %v920 = vpop.f32.mrb[0].mxu0
    %921 = vmatprep.mubr.bf16.mxu0 0
    %922 = vmatmul.mubr.bf16.gmra.mrb[0].mxu0 %v124
    %v923 = vpop.f32.mrb[0].mxu0
    %v924 = vadd.f32 0.0, %v923
    %v925 = vpop.f32.mrb[0].mxu0
    %v926 = vpop.f32.mrb[0].mxu0
    %v927 = vadd.f32 0.0, %v926
    %v928 = vpop.f32.mrb[0].mxu0
    %929 = vmatprep.mubr.bf16.mxu0 0
    %930 = vmatmul.mubr.bf16.gmra.mrb[0].mxu0 %v125
    %v931 = vpop.f32.mrb[0].mxu0
    %v932 = vadd.f32 0.0, %v931
    %v933 = vpop.f32.mrb[0].mxu0
    %v934 = vpop.f32.mrb[0].mxu0
    %v935 = vadd.f32 0.0, %v934
    %v936 = vpop.f32.mrb[0].mxu0
    %937 = vmatprep.mubr.bf16.mxu0 0
    %938 = vmatmul.mubr.bf16.gmra.mrb[0].mxu0 %v126
    %v939 = vpop.f32.mrb[0].mxu0
    %v940 = vadd.f32 0.0, %v939
    %v941 = vpop.f32.mrb[0].mxu0
    %v942 = vpop.f32.mrb[0].mxu0
    %v943 = vadd.f32 0.0, %v942
    %v944 = vpop.f32.mrb[0].mxu0
    %945 = vdwg.mxu0
    %v946 = vadd.f32 %v884, %v887
    %v947 = vadd.f32 %v946, %v892
    %v948 = vadd.f32 %v947, %v895
    %v949 = vadd.f32 %v948, %v900
    %v950 = vadd.f32 %v949, %v903
    %v951 = vadd.f32 %v950, %v908
    %v952 = vadd.f32 %v951, %v911
    %v953 = vadd.f32 %v952, %v916
    %v954 = vadd.f32 %v953, %v919
    %v955 = vadd.f32 %v954, %v924
    %v956 = vadd.f32 %v955, %v927
    %v957 = vadd.f32 %v956, %v932
    %v958 = vadd.f32 %v957, %v935
    %v959 = vadd.f32 %v958, %v940
    %v960 = vadd.f32 %v959, %v943
    %v961 = vrot.slane %v960, 4
    %v962 = vadd.f32 %v960, %v961
    %v963 = vrot.slane %v962, 2
    %v964 = vadd.f32 %v962, %v963
    %v965 = vrot.slane %v964, 1
    %v966 = vadd.f32 %v964, %v965
    %v967 = vadd.f32 %v745, %v966
    %v968 = vmul.f32 %v884, %v884
    %v969 = vmul.f32 %v887, %v887
    %v970 = vmul.f32 %v892, %v892
    %v971 = vmul.f32 %v895, %v895
    %v972 = vmul.f32 %v900, %v900
    %v973 = vmul.f32 %v903, %v903
    %v974 = vmul.f32 %v908, %v908
    %v975 = vmul.f32 %v911, %v911
    %v976 = vmul.f32 %v916, %v916
    %v977 = vmul.f32 %v919, %v919
    %v978 = vmul.f32 %v924, %v924
    %v979 = vmul.f32 %v927, %v927
    %v980 = vmul.f32 %v932, %v932
    %v981 = vmul.f32 %v935, %v935
    %v982 = vmul.f32 %v940, %v940
    %v983 = vmul.f32 %v943, %v943
    %v984 = vadd.f32 %v968, %v969
    %v985 = vadd.f32 %v984, %v970
    %v986 = vadd.f32 %v985, %v971
    %v987 = vadd.f32 %v986, %v972
    %v988 = vadd.f32 %v987, %v973
    %v989 = vadd.f32 %v988, %v974
    %v990 = vadd.f32 %v989, %v975
    %v991 = vadd.f32 %v990, %v976
    %v992 = vadd.f32 %v991, %v977
    %v993 = vadd.f32 %v992, %v978
    %v994 = vadd.f32 %v993, %v979
    %v995 = vadd.f32 %v994, %v980
    %v996 = vadd.f32 %v995, %v981
    %v997 = vadd.f32 %v996, %v982
    %v998 = vadd.f32 %v997, %v983
    %v999 = vrot.slane %v998, 4
    %v1000 = vadd.f32 %v998, %v999
    %v1001 = vrot.slane %v1000, 2
    %v1002 = vadd.f32 %v1000, %v1001
    %v1003 = vrot.slane %v1002, 1
    %v1004 = vadd.f32 %v1002, %v1003
    %v1005 = vadd.f32 %v783, %v1004
    %v1006 = vmul.f32 %v967, 0.001953125
    %v1007 = vmul.f32 %v1005, 0.001953125
    %v1008 = vmul.f32 %v1006, %v1006
    %v1009 = vsub.f32 %v1007, %v1008
    %v1010 = vmax.f32 %v1009, 0.0
    %v1011 = vld [vmem:[#allocation4] sm:$0x1]
    %v1012 = vadd.f32 %v1010, 1e-05
    %v1013 = vrsqrt.pop %v1012
    %v1014 = vmul.f32 %v1011, %v1013
    %v1015 = vld [vmem:[#allocation6] sm:$0x1]
    %v1016 = vmul.f32 %v1006, %v1014
    %v1017 = vsub.f32 %v1015, %v1016
    %v1019 = vlaneseq
    %v1020 = vshrl.u32 %v1019, 7
    %v1021 = vsub.s32 0, %v1020
    %v1022 = vrot.slane %v1014, %v1021
    %v1024 = vmul.f32 %v218, %v1022
    %v1025 = vmul.f32 %v221, %v1022
    %v1026 = vmul.f32 %v226, %v1022
    %v1027 = vmul.f32 %v229, %v1022
    %v1028 = vmul.f32 %v234, %v1022
    %v1029 = vmul.f32 %v237, %v1022
    %v1030 = vmul.f32 %v242, %v1022
    %v1031 = vmul.f32 %v245, %v1022
    %v1032 = vmul.f32 %v250, %v1022
    %v1033 = vmul.f32 %v253, %v1022
    %v1034 = vmul.f32 %v258, %v1022
    %v1035 = vmul.f32 %v261, %v1022
    %v1036 = vmul.f32 %v266, %v1022
    %v1037 = vmul.f32 %v269, %v1022
    %v1038 = vmul.f32 %v274, %v1022
    %v1039 = vmul.f32 %v277, %v1022
    %v1041 = vlaneseq
    %v1042 = vshrl.u32 %v1041, 7
    %v1043 = vsub.s32 0, %v1042
    %v1044 = vrot.slane %v1017, %v1043
    %v1046 = vadd.f32 %v1024, %v1044
    %v1047 = vadd.f32 %v1025, %v1044
    %v1048 = vadd.f32 %v1026, %v1044
    %v1049 = vadd.f32 %v1027, %v1044
    %v1050 = vadd.f32 %v1028, %v1044
    %v1051 = vadd.f32 %v1029, %v1044
    %v1052 = vadd.f32 %v1030, %v1044
    %v1053 = vadd.f32 %v1031, %v1044
    %v1054 = vadd.f32 %v1032, %v1044
    %v1055 = vadd.f32 %v1033, %v1044
    %v1056 = vadd.f32 %v1034, %v1044
    %v1057 = vadd.f32 %v1035, %v1044
    %v1058 = vadd.f32 %v1036, %v1044
    %v1059 = vadd.f32 %v1037, %v1044
    %v1060 = vadd.f32 %v1038, %v1044
    %v1061 = vadd.f32 %v1039, %v1044
    %v1062 = vmax.f32 %v1046, 0.0
    %v1063 = vmax.f32 %v1047, 0.0
    %v1064 = vmax.f32 %v1048, 0.0
    %v1065 = vmax.f32 %v1049, 0.0
    %v1066 = vmax.f32 %v1050, 0.0
    %v1067 = vmax.f32 %v1051, 0.0
    %v1068 = vmax.f32 %v1052, 0.0
    %v1069 = vmax.f32 %v1053, 0.0
    %v1070 = vmax.f32 %v1054, 0.0
    %v1071 = vmax.f32 %v1055, 0.0
    %v1072 = vmax.f32 %v1056, 0.0
    %v1073 = vmax.f32 %v1057, 0.0
    %v1074 = vmax.f32 %v1058, 0.0
    %v1075 = vmax.f32 %v1059, 0.0
    %v1076 = vmax.f32 %v1060, 0.0
    %v1077 = vmax.f32 %v1061, 0.0
    %v1078 = vpack.c.bf16 %v1063, %v1062
    %v1079 = vpack.c.bf16 %v1065, %v1064
    %v1080 = vpack.c.bf16 %v1067, %v1066
    %v1081 = vpack.c.bf16 %v1069, %v1068
    %v1082 = vpack.c.bf16 %v1071, %v1070
    %v1083 = vpack.c.bf16 %v1073, %v1072
    %v1084 = vpack.c.bf16 %v1075, %v1074
    %v1085 = vpack.c.bf16 %v1077, %v1076
    %v1094 = vunpack.c.l.b16 %v1078
    %v1095 = vunpack.c.h.b16 %v1078
    %v1096 = vunpack.c.l.b16 %v1079
    %v1097 = vunpack.c.h.b16 %v1079
    %v1098 = vunpack.c.l.b16 %v1080
    %v1099 = vunpack.c.h.b16 %v1080
    %v1100 = vunpack.c.l.b16 %v1081
    %v1101 = vunpack.c.h.b16 %v1081
    %v1102 = vunpack.c.l.b16 %v1082
    %v1103 = vunpack.c.h.b16 %v1082
    %v1104 = vunpack.c.l.b16 %v1083
    %v1105 = vunpack.c.h.b16 %v1083
    %v1106 = vunpack.c.l.b16 %v1084
    %v1107 = vunpack.c.h.b16 %v1084
    %v1108 = vunpack.c.l.b16 %v1085
    %v1109 = vunpack.c.h.b16 %v1085
    %v1110 = vpack.c.b16 %v1094, %v1094
    %v1111 = vpack.c.b16 %v1095, %v1095
    %v1112 = vpack.c.b16 %v1096, %v1096
    %v1113 = vpack.c.b16 %v1097, %v1097
    %v1114 = vpack.c.b16 %v1098, %v1098
    %v1115 = vpack.c.b16 %v1099, %v1099
    %v1116 = vpack.c.b16 %v1100, %v1100
    %v1117 = vpack.c.b16 %v1101, %v1101
    %v1118 = vpack.c.b16 %v1102, %v1102
    %v1119 = vpack.c.b16 %v1103, %v1103
    %v1120 = vpack.c.b16 %v1104, %v1104
    %v1121 = vpack.c.b16 %v1105, %v1105
    %v1122 = vpack.c.b16 %v1106, %v1106
    %v1123 = vpack.c.b16 %v1107, %v1107
    %v1124 = vpack.c.b16 %v1108, %v1108
    %v1125 = vpack.c.b16 %v1109, %v1109
    %1142 = vst [vmem:[%s4] sm:$0xf] %v1110
    %1143 = vst [vmem:[%s4 + $0x4] sm:$0xf] %v1111
    %1144 = vst [vmem:[%s4 + $0x8] sm:$0xf] %v1112
    %1145 = vst [vmem:[%s4 + $0xc] sm:$0xf] %v1113
    %1146 = vst [vmem:[%s4 + $0x10] sm:$0xf] %v1114
    %1147 = vst [vmem:[%s4 + $0x14] sm:$0xf] %v1115
    %1148 = vst [vmem:[%s4 + $0x18] sm:$0xf] %v1116
    %1149 = vst [vmem:[%s4 + $0x1c] sm:$0xf] %v1117
    %1150 = vst [vmem:[%s4 + $0x20] sm:$0xf] %v1118
    %1151 = vst [vmem:[%s4 + $0x24] sm:$0xf] %v1119
    %1152 = vst [vmem:[%s4 + $0x28] sm:$0xf] %v1120
    %1153 = vst [vmem:[%s4 + $0x2c] sm:$0xf] %v1121
    %1154 = vst [vmem:[%s4 + $0x30] sm:$0xf] %v1122
    %1155 = vst [vmem:[%s4 + $0x34] sm:$0xf] %v1123
    %1156 = vst [vmem:[%s4 + $0x38] sm:$0xf] %v1124
    %1157 = vst [vmem:[%s4 + $0x3c] sm:$0xf] %v1125
    %v1158 = vmul.f32 %v440, %v1022
    %v1159 = vmul.f32 %v443, %v1022
    %v1160 = vmul.f32 %v448, %v1022
    %v1161 = vmul.f32 %v451, %v1022
    %v1162 = vmul.f32 %v456, %v1022
    %v1163 = vmul.f32 %v459, %v1022
    %v1164 = vmul.f32 %v464, %v1022
    %v1165 = vmul.f32 %v467, %v1022
    %v1166 = vmul.f32 %v472, %v1022
    %v1167 = vmul.f32 %v475, %v1022
    %v1168 = vmul.f32 %v480, %v1022
    %v1169 = vmul.f32 %v483, %v1022
    %v1170 = vmul.f32 %v488, %v1022
    %v1171 = vmul.f32 %v491, %v1022
    %v1172 = vmul.f32 %v496, %v1022
    %v1173 = vmul.f32 %v499, %v1022
    %v1174 = vadd.f32 %v1158, %v1044
    %v1175 = vadd.f32 %v1159, %v1044
    %v1176 = vadd.f32 %v1160, %v1044
    %v1177 = vadd.f32 %v1161, %v1044
    %v1178 = vadd.f32 %v1162, %v1044
    %v1179 = vadd.f32 %v1163, %v1044
    %v1180 = vadd.f32 %v1164, %v1044
    %v1181 = vadd.f32 %v1165, %v1044
    %v1182 = vadd.f32 %v1166, %v1044
    %v1183 = vadd.f32 %v1167, %v1044
    %v1184 = vadd.f32 %v1168, %v1044
    %v1185 = vadd.f32 %v1169, %v1044
    %v1186 = vadd.f32 %v1170, %v1044
    %v1187 = vadd.f32 %v1171, %v1044
    %v1188 = vadd.f32 %v1172, %v1044
    %v1189 = vadd.f32 %v1173, %v1044
    %v1190 = vmax.f32 %v1174, 0.0
    %v1191 = vmax.f32 %v1175, 0.0
    %v1192 = vmax.f32 %v1176, 0.0
    %v1193 = vmax.f32 %v1177, 0.0
    %v1194 = vmax.f32 %v1178, 0.0
    %v1195 = vmax.f32 %v1179, 0.0
    %v1196 = vmax.f32 %v1180, 0.0
    %v1197 = vmax.f32 %v1181, 0.0
    %v1198 = vmax.f32 %v1182, 0.0
    %v1199 = vmax.f32 %v1183, 0.0
    %v1200 = vmax.f32 %v1184, 0.0
    %v1201 = vmax.f32 %v1185, 0.0
    %v1202 = vmax.f32 %v1186, 0.0
    %v1203 = vmax.f32 %v1187, 0.0
    %v1204 = vmax.f32 %v1188, 0.0
    %v1205 = vmax.f32 %v1189, 0.0
    %v1206 = vpack.c.bf16 %v1191, %v1190
    %v1207 = vpack.c.bf16 %v1193, %v1192
    %v1208 = vpack.c.bf16 %v1195, %v1194
    %v1209 = vpack.c.bf16 %v1197, %v1196
    %v1210 = vpack.c.bf16 %v1199, %v1198
    %v1211 = vpack.c.bf16 %v1201, %v1200
    %v1212 = vpack.c.bf16 %v1203, %v1202
    %v1213 = vpack.c.bf16 %v1205, %v1204
    %v1222 = vunpack.c.l.b16 %v1206
    %v1223 = vunpack.c.h.b16 %v1206
    %v1224 = vunpack.c.l.b16 %v1207
    %v1225 = vunpack.c.h.b16 %v1207
    %v1226 = vunpack.c.l.b16 %v1208
    %v1227 = vunpack.c.h.b16 %v1208
    %v1228 = vunpack.c.l.b16 %v1209
    %v1229 = vunpack.c.h.b16 %v1209
    %v1230 = vunpack.c.l.b16 %v1210
    %v1231 = vunpack.c.h.b16 %v1210
    %v1232 = vunpack.c.l.b16 %v1211
    %v1233 = vunpack.c.h.b16 %v1211
    %v1234 = vunpack.c.l.b16 %v1212
    %v1235 = vunpack.c.h.b16 %v1212
    %v1236 = vunpack.c.l.b16 %v1213
    %v1237 = vunpack.c.h.b16 %v1213
    %v1238 = vpack.c.b16 %v1222, %v1222
    %v1239 = vpack.c.b16 %v1223, %v1223
    %v1240 = vpack.c.b16 %v1224, %v1224
    %v1241 = vpack.c.b16 %v1225, %v1225
    %v1242 = vpack.c.b16 %v1226, %v1226
    %v1243 = vpack.c.b16 %v1227, %v1227
    %v1244 = vpack.c.b16 %v1228, %v1228
    %v1245 = vpack.c.b16 %v1229, %v1229
    %v1246 = vpack.c.b16 %v1230, %v1230
    %v1247 = vpack.c.b16 %v1231, %v1231
    %v1248 = vpack.c.b16 %v1232, %v1232
    %v1249 = vpack.c.b16 %v1233, %v1233
    %v1250 = vpack.c.b16 %v1234, %v1234
    %v1251 = vpack.c.b16 %v1235, %v1235
    %v1252 = vpack.c.b16 %v1236, %v1236
    %v1253 = vpack.c.b16 %v1237, %v1237
    %s1270 = scalar_lea.vmem %s4, 64
    %1271 = vst [vmem:[%s1270] sm:$0xf] %v1238
    %1272 = vst [vmem:[%s1270 + $0x4] sm:$0xf] %v1239
    %1273 = vst [vmem:[%s1270 + $0x8] sm:$0xf] %v1240
    %1274 = vst [vmem:[%s1270 + $0xc] sm:$0xf] %v1241
    %1275 = vst [vmem:[%s1270 + $0x10] sm:$0xf] %v1242
    %1276 = vst [vmem:[%s1270 + $0x14] sm:$0xf] %v1243
    %1277 = vst [vmem:[%s1270 + $0x18] sm:$0xf] %v1244
    %1278 = vst [vmem:[%s1270 + $0x1c] sm:$0xf] %v1245
    %1279 = vst [vmem:[%s1270 + $0x20] sm:$0xf] %v1246
    %1280 = vst [vmem:[%s1270 + $0x24] sm:$0xf] %v1247
    %1281 = vst [vmem:[%s1270 + $0x28] sm:$0xf] %v1248
    %1282 = vst [vmem:[%s1270 + $0x2c] sm:$0xf] %v1249
    %1283 = vst [vmem:[%s1270 + $0x30] sm:$0xf] %v1250
    %1284 = vst [vmem:[%s1270 + $0x34] sm:$0xf] %v1251
    %1285 = vst [vmem:[%s1270 + $0x38] sm:$0xf] %v1252
    %1286 = vst [vmem:[%s1270 + $0x3c] sm:$0xf] %v1253
    %v1287 = vmul.f32 %v662, %v1022
    %v1288 = vmul.f32 %v665, %v1022
    %v1289 = vmul.f32 %v670, %v1022
    %v1290 = vmul.f32 %v673, %v1022
    %v1291 = vmul.f32 %v678, %v1022
    %v1292 = vmul.f32 %v681, %v1022
    %v1293 = vmul.f32 %v686, %v1022
    %v1294 = vmul.f32 %v689, %v1022
    %v1295 = vmul.f32 %v694, %v1022
    %v1296 = vmul.f32 %v697, %v1022
    %v1297 = vmul.f32 %v702, %v1022
    %v1298 = vmul.f32 %v705, %v1022
    %v1299 = vmul.f32 %v710, %v1022
    %v1300 = vmul.f32 %v713, %v1022
    %v1301 = vmul.f32 %v718, %v1022
    %v1302 = vmul.f32 %v721, %v1022
    %v1303 = vadd.f32 %v1287, %v1044
    %v1304 = vadd.f32 %v1288, %v1044
    %v1305 = vadd.f32 %v1289, %v1044
    %v1306 = vadd.f32 %v1290, %v1044
    %v1307 = vadd.f32 %v1291, %v1044
    %v1308 = vadd.f32 %v1292, %v1044
    %v1309 = vadd.f32 %v1293, %v1044
    %v1310 = vadd.f32 %v1294, %v1044
    %v1311 = vadd.f32 %v1295, %v1044
    %v1312 = vadd.f32 %v1296, %v1044
    %v1313 = vadd.f32 %v1297, %v1044
    %v1314 = vadd.f32 %v1298, %v1044
    %v1315 = vadd.f32 %v1299, %v1044
    %v1316 = vadd.f32 %v1300, %v1044
    %v1317 = vadd.f32 %v1301, %v1044
    %v1318 = vadd.f32 %v1302, %v1044
    %v1319 = vmax.f32 %v1303, 0.0
    %v1320 = vmax.f32 %v1304, 0.0
    %v1321 = vmax.f32 %v1305, 0.0
    %v1322 = vmax.f32 %v1306, 0.0
    %v1323 = vmax.f32 %v1307, 0.0
    %v1324 = vmax.f32 %v1308, 0.0
    %v1325 = vmax.f32 %v1309, 0.0
    %v1326 = vmax.f32 %v1310, 0.0
    %v1327 = vmax.f32 %v1311, 0.0
    %v1328 = vmax.f32 %v1312, 0.0
    %v1329 = vmax.f32 %v1313, 0.0
    %v1330 = vmax.f32 %v1314, 0.0
    %v1331 = vmax.f32 %v1315, 0.0
    %v1332 = vmax.f32 %v1316, 0.0
    %v1333 = vmax.f32 %v1317, 0.0
    %v1334 = vmax.f32 %v1318, 0.0
    %v1335 = vpack.c.bf16 %v1320, %v1319
    %v1336 = vpack.c.bf16 %v1322, %v1321
    %v1337 = vpack.c.bf16 %v1324, %v1323
    %v1338 = vpack.c.bf16 %v1326, %v1325
    %v1339 = vpack.c.bf16 %v1328, %v1327
    %v1340 = vpack.c.bf16 %v1330, %v1329
    %v1341 = vpack.c.bf16 %v1332, %v1331
    %v1342 = vpack.c.bf16 %v1334, %v1333
    %v1351 = vunpack.c.l.b16 %v1335
    %v1352 = vunpack.c.h.b16 %v1335
    %v1353 = vunpack.c.l.b16 %v1336
    %v1354 = vunpack.c.h.b16 %v1336
    %v1355 = vunpack.c.l.b16 %v1337
    %v1356 = vunpack.c.h.b16 %v1337
    %v1357 = vunpack.c.l.b16 %v1338
    %v1358 = vunpack.c.h.b16 %v1338
    %v1359 = vunpack.c.l.b16 %v1339
    %v1360 = vunpack.c.h.b16 %v1339
    %v1361 = vunpack.c.l.b16 %v1340
    %v1362 = vunpack.c.h.b16 %v1340
    %v1363 = vunpack.c.l.b16 %v1341
    %v1364 = vunpack.c.h.b16 %v1341
    %v1365 = vunpack.c.l.b16 %v1342
    %v1366 = vunpack.c.h.b16 %v1342
    %v1367 = vpack.c.b16 %v1351, %v1351
    %v1368 = vpack.c.b16 %v1352, %v1352
    %v1369 = vpack.c.b16 %v1353, %v1353
    %v1370 = vpack.c.b16 %v1354, %v1354
    %v1371 = vpack.c.b16 %v1355, %v1355
    %v1372 = vpack.c.b16 %v1356, %v1356
    %v1373 = vpack.c.b16 %v1357, %v1357
    %v1374 = vpack.c.b16 %v1358, %v1358
    %v1375 = vpack.c.b16 %v1359, %v1359
    %v1376 = vpack.c.b16 %v1360, %v1360
    %v1377 = vpack.c.b16 %v1361, %v1361
    %v1378 = vpack.c.b16 %v1362, %v1362
    %v1379 = vpack.c.b16 %v1363, %v1363
    %v1380 = vpack.c.b16 %v1364, %v1364
    %v1381 = vpack.c.b16 %v1365, %v1365
    %v1382 = vpack.c.b16 %v1366, %v1366
    %s1399 = scalar_lea.vmem %s4, 128
    %1400 = vst [vmem:[%s1399] sm:$0xf] %v1367
    %1401 = vst [vmem:[%s1399 + $0x4] sm:$0xf] %v1368
    %1402 = vst [vmem:[%s1399 + $0x8] sm:$0xf] %v1369
    %1403 = vst [vmem:[%s1399 + $0xc] sm:$0xf] %v1370
    %1404 = vst [vmem:[%s1399 + $0x10] sm:$0xf] %v1371
    %1405 = vst [vmem:[%s1399 + $0x14] sm:$0xf] %v1372
    %1406 = vst [vmem:[%s1399 + $0x18] sm:$0xf] %v1373
    %1407 = vst [vmem:[%s1399 + $0x1c] sm:$0xf] %v1374
    %1408 = vst [vmem:[%s1399 + $0x20] sm:$0xf] %v1375
    %1409 = vst [vmem:[%s1399 + $0x24] sm:$0xf] %v1376
    %1410 = vst [vmem:[%s1399 + $0x28] sm:$0xf] %v1377
    %1411 = vst [vmem:[%s1399 + $0x2c] sm:$0xf] %v1378
    %1412 = vst [vmem:[%s1399 + $0x30] sm:$0xf] %v1379
    %1413 = vst [vmem:[%s1399 + $0x34] sm:$0xf] %v1380
    %1414 = vst [vmem:[%s1399 + $0x38] sm:$0xf] %v1381
    %1415 = vst [vmem:[%s1399 + $0x3c] sm:$0xf] %v1382
    %v1416 = vmul.f32 %v884, %v1022
    %v1417 = vmul.f32 %v887, %v1022
    %v1418 = vmul.f32 %v892, %v1022
    %v1419 = vmul.f32 %v895, %v1022
    %v1420 = vmul.f32 %v900, %v1022
    %v1421 = vmul.f32 %v903, %v1022
    %v1422 = vmul.f32 %v908, %v1022
    %v1423 = vmul.f32 %v911, %v1022
    %v1424 = vmul.f32 %v916, %v1022
    %v1425 = vmul.f32 %v919, %v1022
    %v1426 = vmul.f32 %v924, %v1022
    %v1427 = vmul.f32 %v927, %v1022
    %v1428 = vmul.f32 %v932, %v1022
    %v1429 = vmul.f32 %v935, %v1022
    %v1430 = vmul.f32 %v940, %v1022
    %v1431 = vmul.f32 %v943, %v1022
    %v1432 = vadd.f32 %v1416, %v1044
    %v1433 = vadd.f32 %v1417, %v1044
    %v1434 = vadd.f32 %v1418, %v1044
    %v1435 = vadd.f32 %v1419, %v1044
    %v1436 = vadd.f32 %v1420, %v1044
    %v1437 = vadd.f32 %v1421, %v1044
    %v1438 = vadd.f32 %v1422, %v1044
    %v1439 = vadd.f32 %v1423, %v1044
    %v1440 = vadd.f32 %v1424, %v1044
    %v1441 = vadd.f32 %v1425, %v1044
    %v1442 = vadd.f32 %v1426, %v1044
    %v1443 = vadd.f32 %v1427, %v1044
    %v1444 = vadd.f32 %v1428, %v1044
    %v1445 = vadd.f32 %v1429, %v1044
    %v1446 = vadd.f32 %v1430, %v1044
    %v1447 = vadd.f32 %v1431, %v1044
    %v1448 = vmax.f32 %v1432, 0.0
    %v1449 = vmax.f32 %v1433, 0.0
    %v1450 = vmax.f32 %v1434, 0.0
    %v1451 = vmax.f32 %v1435, 0.0
    %v1452 = vmax.f32 %v1436, 0.0
    %v1453 = vmax.f32 %v1437, 0.0
    %v1454 = vmax.f32 %v1438, 0.0
    %v1455 = vmax.f32 %v1439, 0.0
    %v1456 = vmax.f32 %v1440, 0.0
    %v1457 = vmax.f32 %v1441, 0.0
    %v1458 = vmax.f32 %v1442, 0.0
    %v1459 = vmax.f32 %v1443, 0.0
    %v1460 = vmax.f32 %v1444, 0.0
    %v1461 = vmax.f32 %v1445, 0.0
    %v1462 = vmax.f32 %v1446, 0.0
    %v1463 = vmax.f32 %v1447, 0.0
    %v1464 = vpack.c.bf16 %v1449, %v1448
    %v1465 = vpack.c.bf16 %v1451, %v1450
    %v1466 = vpack.c.bf16 %v1453, %v1452
    %v1467 = vpack.c.bf16 %v1455, %v1454
    %v1468 = vpack.c.bf16 %v1457, %v1456
    %v1469 = vpack.c.bf16 %v1459, %v1458
    %v1470 = vpack.c.bf16 %v1461, %v1460
    %v1471 = vpack.c.bf16 %v1463, %v1462
    %v1480 = vunpack.c.l.b16 %v1464
    %v1481 = vunpack.c.h.b16 %v1464
    %v1482 = vunpack.c.l.b16 %v1465
    %v1483 = vunpack.c.h.b16 %v1465
    %v1484 = vunpack.c.l.b16 %v1466
    %v1485 = vunpack.c.h.b16 %v1466
    %v1486 = vunpack.c.l.b16 %v1467
    %v1487 = vunpack.c.h.b16 %v1467
    %v1488 = vunpack.c.l.b16 %v1468
    %v1489 = vunpack.c.h.b16 %v1468
    %v1490 = vunpack.c.l.b16 %v1469
    %v1491 = vunpack.c.h.b16 %v1469
    %v1492 = vunpack.c.l.b16 %v1470
    %v1493 = vunpack.c.h.b16 %v1470
    %v1494 = vunpack.c.l.b16 %v1471
    %v1495 = vunpack.c.h.b16 %v1471
    %v1496 = vpack.c.b16 %v1480, %v1480
    %v1497 = vpack.c.b16 %v1481, %v1481
    %v1498 = vpack.c.b16 %v1482, %v1482
    %v1499 = vpack.c.b16 %v1483, %v1483
    %v1500 = vpack.c.b16 %v1484, %v1484
    %v1501 = vpack.c.b16 %v1485, %v1485
    %v1502 = vpack.c.b16 %v1486, %v1486
    %v1503 = vpack.c.b16 %v1487, %v1487
    %v1504 = vpack.c.b16 %v1488, %v1488
    %v1505 = vpack.c.b16 %v1489, %v1489
    %v1506 = vpack.c.b16 %v1490, %v1490
    %v1507 = vpack.c.b16 %v1491, %v1491
    %v1508 = vpack.c.b16 %v1492, %v1492
    %v1509 = vpack.c.b16 %v1493, %v1493
    %v1510 = vpack.c.b16 %v1494, %v1494
    %v1511 = vpack.c.b16 %v1495, %v1495
    %s1528 = scalar_lea.vmem %s4, 192
    %1529 = vst [vmem:[%s1528] sm:$0xf] %v1496
    %1530 = vst [vmem:[%s1528 + $0x4] sm:$0xf] %v1497
    %1531 = vst [vmem:[%s1528 + $0x8] sm:$0xf] %v1498
    %1532 = vst [vmem:[%s1528 + $0xc] sm:$0xf] %v1499
    %1533 = vst [vmem:[%s1528 + $0x10] sm:$0xf] %v1500
    %1534 = vst [vmem:[%s1528 + $0x14] sm:$0xf] %v1501
    %1535 = vst [vmem:[%s1528 + $0x18] sm:$0xf] %v1502
    %1536 = vst [vmem:[%s1528 + $0x1c] sm:$0xf] %v1503
    %1537 = vst [vmem:[%s1528 + $0x20] sm:$0xf] %v1504
    %1538 = vst [vmem:[%s1528 + $0x24] sm:$0xf] %v1505
    %1539 = vst [vmem:[%s1528 + $0x28] sm:$0xf] %v1506
    %1540 = vst [vmem:[%s1528 + $0x2c] sm:$0xf] %v1507
    %1541 = vst [vmem:[%s1528 + $0x30] sm:$0xf] %v1508
    %1542 = vst [vmem:[%s1528 + $0x34] sm:$0xf] %v1509
    %1543 = vst [vmem:[%s1528 + $0x38] sm:$0xf] %v1510
    %1544 = vst [vmem:[%s1528 + $0x3c] sm:$0xf] %v1511
    // Predicated region
    $region30: #{decoder_forward_pallas.9} parent=1 // pred_check
      _
    $region31: #{decoder_forward_pallas.9} parent=1 // pred_check_branch
      %1546 = sbr.rel (0) target = $region33
    $region32: #{decoder_forward_pallas.9} parent=1 // pred_region
      _
    $region33: #{decoder_forward_pallas.9} parent=1 // pred_fallthru
      _
    // Predicated region
    $region34: #{decoder_forward_pallas.9} parent=1 // pred_check
      _
    $region35: #{decoder_forward_pallas.9} parent=1 // pred_check_branch
      %1548 = sbr.rel (0) target = $region37
    $region36: #{decoder_forward_pallas.9} parent=1 // pred_region
      _
    $region37: #{decoder_forward_pallas.9} parent=1 // pred_fallthru
      _
    %1549 = vsyncpa [#allocation3], 1
    %1550 = vsyncpa [#allocation5], 1

// kernel: decoder_forward_pallas.10
$region0: #{decoder_forward_pallas.10}
  #allocation0 [shape = 'u32[]', space=smem, size = 0x4, offset = 0x4, fixed_abs, tag = 'smem constant byte address 0x4 - core index']
  #allocation1 [shape = 'u32[144,128]{1,0:T(1,128)}', space=vmem, size = 0x12000, scoped, tag = 'internal scratch']
  %s0 = inlined_call_operand.vmem [shape: bf16[512,128], index: 0, kind: input, shape index: {}]
  %s1 = inlined_call_operand.hbm [shape: bf16[4,128,128], index: 1, kind: input, shape index: {}]
  %s2 = inlined_call_operand.hbm [shape: f32[1,128], index: 2, kind: input, shape index: {}]
  %s3 = inlined_call_operand.hbm [shape: f32[1,128], index: 3, kind: input, shape index: {}]
  %s4 = inlined_call_operand.vmem [shape: bf16[4,512,128], index: 4, kind: output, shape index: {}]
  %s5 = sld [smem:[#allocation0]]
  $region38: #{decoder_forward_pallas.10} parent=0
    _
  %s7 = ssub.s32 1, %s5
  %s8 = scalar_select 0, %s7, %s5
  $region1: #{decoder_forward_pallas.10} parent=0
    #allocation2 [shape = 'u8[131072]{0}', space=vmem, size = 0x20000, scoped, tag = 'input window, operand 1, single buffered']
    #allocation3 [shape = 's32[1]{0}', space=sflag, size = 0x4, scoped, tag = 'scoped memory for decoder_forward_pallas.10']
    #allocation4 [shape = 'u8[512]{0}', space=vmem, size = 0x400, scoped, tag = 'input window, operand 2, single buffered']
    #allocation5 [shape = 's32[1]{0}', space=sflag, size = 0x4, scoped, tag = 'scoped memory for decoder_forward_pallas.10']
    #allocation6 [shape = 'u8[512]{0}', space=vmem, size = 0x400, scoped, tag = 'input window, operand 3, single buffered']
    %9 = vsyncpa [#allocation3], 0
    %10 = vsyncpa [#allocation5], 0
    // Predicated region
    $region2: #{decoder_forward_pallas.10} parent=1 // pred_check
      _
    $region3: #{decoder_forward_pallas.10} parent=1 // pred_check_branch
      %12 = sbr.rel (0) target = $region5
    $region4: #{decoder_forward_pallas.10} parent=1 // pred_region
      _
    $region5: #{decoder_forward_pallas.10} parent=1 // pred_fallthru
      _
    // Predicated region
    $region6: #{decoder_forward_pallas.10} parent=1 // pred_check
      _
    $region7: #{decoder_forward_pallas.10} parent=1 // pred_check_branch
      %14 = sbr.rel (0) target = $region9
    $region8: #{decoder_forward_pallas.10} parent=1 // pred_region
      %s16 = ssub.s32 4096, 4096
      %17 = vsyncadd [#allocation3], %s16
      %s18 = sshll.u32 [#allocation2], 4
      %s19 = int_to_ptr.vmem [resolvable:$true] %s18
      %24 = dma.hbm_to_vmem [thread:$0]  %s1, 4096, %s19, [#allocation3], 64, 64, 4
    $region9: #{decoder_forward_pallas.10} parent=1 // pred_fallthru
      _
    // Predicated region
    $region10: #{decoder_forward_pallas.10} parent=1 // pred_check
      _
    $region11: #{decoder_forward_pallas.10} parent=1 // pred_check_branch
      %26 = sbr.rel (0) target = $region13
    $region12: #{decoder_forward_pallas.10} parent=1 // pred_region
      %s28 = ssub.s32 16, 16
      %29 = vsyncadd [#allocation5], %s28
      %s31 = sshll.u32 [#allocation4], 4
      %s32 = int_to_ptr.vmem [resolvable:$true] %s31
      %34 = dma.hbm_to_vmem [thread:$0]  %s2, 16, %s32, [#allocation5]
    $region13: #{decoder_forward_pallas.10} parent=1 // pred_fallthru
      _
    // Predicated region
    $region14: #{decoder_forward_pallas.10} parent=1 // pred_check
      _
    $region15: #{decoder_forward_pallas.10} parent=1 // pred_check_branch
      %36 = sbr.rel (0) target = $region17
    $region16: #{decoder_forward_pallas.10} parent=1 // pred_region
      %s38 = ssub.s32 16, 16
      %39 = vsyncadd [#allocation5], %s38
      %s41 = sshll.u32 [#allocation6], 4
      %s42 = int_to_ptr.vmem [resolvable:$true] %s41
      %44 = dma.hbm_to_vmem [thread:$0]  %s3, 16, %s42, [#allocation5]
    $region17: #{decoder_forward_pallas.10} parent=1 // pred_fallthru
      _
    // Predicated region
    $region18: #{decoder_forward_pallas.10} parent=1 // pred_check
      _
    $region19: #{decoder_forward_pallas.10} parent=1 // pred_check_branch
      %46 = sbr.rel (0) target = $region21
    $region20: #{decoder_forward_pallas.10} parent=1 // pred_region
      %47 = dma.done [#allocation3], 4096
    $region21: #{decoder_forward_pallas.10} parent=1 // pred_fallthru
      _
    // Predicated region
    $region22: #{decoder_forward_pallas.10} parent=1 // pred_check
      _
    $region23: #{decoder_forward_pallas.10} parent=1 // pred_check_branch
      %49 = sbr.rel (0) target = $region25
    $region24: #{decoder_forward_pallas.10} parent=1 // pred_region
      %50 = dma.done [#allocation5], 16
    $region25: #{decoder_forward_pallas.10} parent=1 // pred_fallthru
      _
    // Predicated region
    $region26: #{decoder_forward_pallas.10} parent=1 // pred_check
      _
    $region27: #{decoder_forward_pallas.10} parent=1 // pred_check_branch
      %52 = sbr.rel (0) target = $region29
    $region28: #{decoder_forward_pallas.10} parent=1 // pred_region
      %53 = dma.done [#allocation5], 16
    $region29: #{decoder_forward_pallas.10} parent=1 // pred_fallthru
      _
    %v55 = vld [vmem:[%s0] sm:$0xf]
    %v56 = vld [vmem:[%s0 + $0x4] sm:$0xf]
    %v57 = vld [vmem:[%s0 + $0x8] sm:$0xf]
    %v58 = vld [vmem:[%s0 + $0xc] sm:$0xf]
    %v59 = vld [vmem:[%s0 + $0x10] sm:$0xf]
    %v60 = vld [vmem:[%s0 + $0x14] sm:$0xf]
    %v61 = vld [vmem:[%s0 + $0x18] sm:$0xf]
    %v62 = vld [vmem:[%s0 + $0x1c] sm:$0xf]
    %v63 = vld [vmem:[%s0 + $0x20] sm:$0xf]
    %v64 = vld [vmem:[%s0 + $0x24] sm:$0xf]
    %v65 = vld [vmem:[%s0 + $0x28] sm:$0xf]
    %v66 = vld [vmem:[%s0 + $0x2c] sm:$0xf]
    %v67 = vld [vmem:[%s0 + $0x30] sm:$0xf]
    %v68 = vld [vmem:[%s0 + $0x34] sm:$0xf]
    %v69 = vld [vmem:[%s0 + $0x38] sm:$0xf]
    %v70 = vld [vmem:[%s0 + $0x3c] sm:$0xf]
    %v71 = vld [vmem:[%s0 + $0x40] sm:$0xf]
    %v72 = vld [vmem:[%s0 + $0x44] sm:$0xf]
    %v73 = vld [vmem:[%s0 + $0x48] sm:$0xf]
    %v74 = vld [vmem:[%s0 + $0x4c] sm:$0xf]
    %v75 = vld [vmem:[%s0 + $0x50] sm:$0xf]
    %v76 = vld [vmem:[%s0 + $0x54] sm:$0xf]
    %v77 = vld [vmem:[%s0 + $0x58] sm:$0xf]
    %v78 = vld [vmem:[%s0 + $0x5c] sm:$0xf]
    %v79 = vld [vmem:[%s0 + $0x60] sm:$0xf]
    %v80 = vld [vmem:[%s0 + $0x64] sm:$0xf]
    %v81 = vld [vmem:[%s0 + $0x68] sm:$0xf]
    %v82 = vld [vmem:[%s0 + $0x6c] sm:$0xf]
    %v83 = vld [vmem:[%s0 + $0x70] sm:$0xf]
    %v84 = vld [vmem:[%s0 + $0x74] sm:$0xf]
    %v85 = vld [vmem:[%s0 + $0x78] sm:$0xf]
    %v86 = vld [vmem:[%s0 + $0x7c] sm:$0xf]
    %v87 = vld [vmem:[%s0 + $0x80] sm:$0xf]
    %v88 = vld [vmem:[%s0 + $0x84] sm:$0xf]
    %v89 = vld [vmem:[%s0 + $0x88] sm:$0xf]
    %v90 = vld [vmem:[%s0 + $0x8c] sm:$0xf]
    %v91 = vld [vmem:[%s0 + $0x90] sm:$0xf]
    %v92 = vld [vmem:[%s0 + $0x94] sm:$0xf]
    %v93 = vld [vmem:[%s0 + $0x98] sm:$0xf]
    %v94 = vld [vmem:[%s0 + $0x9c] sm:$0xf]
    %v95 = vld [vmem:[%s0 + $0xa0] sm:$0xf]
    %v96 = vld [vmem:[%s0 + $0xa4] sm:$0xf]
    %v97 = vld [vmem:[%s0 + $0xa8] sm:$0xf]
    %v98 = vld [vmem:[%s0 + $0xac] sm:$0xf]
    %v99 = vld [vmem:[%s0 + $0xb0] sm:$0xf]
    %v100 = vld [vmem:[%s0 + $0xb4] sm:$0xf]
    %v101 = vld [vmem:[%s0 + $0xb8] sm:$0xf]
    %v102 = vld [vmem:[%s0 + $0xbc] sm:$0xf]
    %v103 = vld [vmem:[%s0 + $0xc0] sm:$0xf]
    %v104 = vld [vmem:[%s0 + $0xc4] sm:$0xf]
    %v105 = vld [vmem:[%s0 + $0xc8] sm:$0xf]
    %v106 = vld [vmem:[%s0 + $0xcc] sm:$0xf]
    %v107 = vld [vmem:[%s0 + $0xd0] sm:$0xf]
    %v108 = vld [vmem:[%s0 + $0xd4] sm:$0xf]
    %v109 = vld [vmem:[%s0 + $0xd8] sm:$0xf]
    %v110 = vld [vmem:[%s0 + $0xdc] sm:$0xf]
    %v111 = vld [vmem:[%s0 + $0xe0] sm:$0xf]
    %v112 = vld [vmem:[%s0 + $0xe4] sm:$0xf]
    %v113 = vld [vmem:[%s0 + $0xe8] sm:$0xf]
    %v114 = vld [vmem:[%s0 + $0xec] sm:$0xf]
    %v115 = vld [vmem:[%s0 + $0xf0] sm:$0xf]
    %v116 = vld [vmem:[%s0 + $0xf4] sm:$0xf]
    %v117 = vld [vmem:[%s0 + $0xf8] sm:$0xf]
    %v118 = vld [vmem:[%s0 + $0xfc] sm:$0xf]
    %v119 = vld [vmem:[#allocation2] sm:$0xf]
    %v120 = vld [vmem:[#allocation2 + $0x4] sm:$0xf]
    %v121 = vld [vmem:[#allocation2 + $0x8] sm:$0xf]
    %v122 = vld [vmem:[#allocation2 + $0xc] sm:$0xf]
    %v123 = vld [vmem:[#allocation2 + $0x10] sm:$0xf]
    %v124 = vld [vmem:[#allocation2 + $0x14] sm:$0xf]
    %v125 = vld [vmem:[#allocation2 + $0x18] sm:$0xf]
    %v126 = vld [vmem:[#allocation2 + $0x1c] sm:$0xf]
    %v127 = vld [vmem:[#allocation2 + $0x20] sm:$0xf]
    %v128 = vld [vmem:[#allocation2 + $0x24] sm:$0xf]
    %v129 = vld [vmem:[#allocation2 + $0x28] sm:$0xf]
    %v130 = vld [vmem:[#allocation2 + $0x2c] sm:$0xf]
    %v131 = vld [vmem:[#allocation2 + $0x30] sm:$0xf]
    %v132 = vld [vmem:[#allocation2 + $0x34] sm:$0xf]
    %v133 = vld [vmem:[#allocation2 + $0x38] sm:$0xf]
    %v134 = vld [vmem:[#allocation2 + $0x3c] sm:$0xf]
    %v199 = vunpack.c.l.b16 %v55
    %v200 = vunpack.c.l.b16 %v56
    %v201 = vunpack.c.l.b16 %v57
    %v202 = vunpack.c.l.b16 %v58
    %v203 = vunpack.c.l.b16 %v59
    %v204 = vunpack.c.l.b16 %v60
    %v205 = vunpack.c.l.b16 %v61
    %v206 = vunpack.c.l.b16 %v62
    %v207 = vunpack.c.l.b16 %v63
    %v208 = vunpack.c.l.b16 %v64
    %v209 = vunpack.c.l.b16 %v65
    %v210 = vunpack.c.l.b16 %v66
    %v211 = vunpack.c.l.b16 %v67
    %v212 = vunpack.c.l.b16 %v68
    %v213 = vunpack.c.l.b16 %v69
    %v214 = vunpack.c.l.b16 %v70
    %v215 = vunpack.c.l.b16 %v71
    %v216 = vunpack.c.l.b16 %v72
    %v217 = vunpack.c.l.b16 %v73
    %v218 = vunpack.c.l.b16 %v74
    %v219 = vunpack.c.l.b16 %v75
    %v220 = vunpack.c.l.b16 %v76
    %v221 = vunpack.c.l.b16 %v77
    %v222 = vunpack.c.l.b16 %v78
    %v223 = vunpack.c.l.b16 %v79
    %v224 = vunpack.c.l.b16 %v80
    %v225 = vunpack.c.l.b16 %v81
    %v226 = vunpack.c.l.b16 %v82
    %v227 = vunpack.c.l.b16 %v83
    %v228 = vunpack.c.l.b16 %v84
    %v229 = vunpack.c.l.b16 %v85
    %v230 = vunpack.c.l.b16 %v86
    %v231 = vunpack.c.l.b16 %v87
    %v232 = vunpack.c.l.b16 %v88
    %v233 = vunpack.c.l.b16 %v89
    %v234 = vunpack.c.l.b16 %v90
    %v235 = vunpack.c.l.b16 %v91
    %v236 = vunpack.c.l.b16 %v92
    %v237 = vunpack.c.l.b16 %v93
    %v238 = vunpack.c.l.b16 %v94
    %v239 = vunpack.c.l.b16 %v95
    %v240 = vunpack.c.l.b16 %v96
    %v241 = vunpack.c.l.b16 %v97
    %v242 = vunpack.c.l.b16 %v98
    %v243 = vunpack.c.l.b16 %v99
    %v244 = vunpack.c.l.b16 %v100
    %v245 = vunpack.c.l.b16 %v101
    %v246 = vunpack.c.l.b16 %v102
    %v247 = vunpack.c.l.b16 %v103
    %v248 = vunpack.c.l.b16 %v104
    %v249 = vunpack.c.l.b16 %v105
    %v250 = vunpack.c.l.b16 %v106
    %v251 = vunpack.c.l.b16 %v107
    %v252 = vunpack.c.l.b16 %v108
    %v253 = vunpack.c.l.b16 %v109
    %v254 = vunpack.c.l.b16 %v110
    %v255 = vunpack.c.l.b16 %v111
    %v256 = vunpack.c.l.b16 %v112
    %v257 = vunpack.c.l.b16 %v113
    %v258 = vunpack.c.l.b16 %v114
    %v259 = vunpack.c.l.b16 %v115
    %v260 = vunpack.c.l.b16 %v116
    %v261 = vunpack.c.l.b16 %v117
    %v262 = vunpack.c.l.b16 %v118
    %v263 = vpack.c.b16 %v200, %v199
    %v264 = vpack.c.b16 %v202, %v201
    %v265 = vpack.c.b16 %v204, %v203
    %v266 = vpack.c.b16 %v206, %v205
    %v267 = vpack.c.b16 %v208, %v207
    %v268 = vpack.c.b16 %v210, %v209
    %v269 = vpack.c.b16 %v212, %v211
    %v270 = vpack.c.b16 %v214, %v213
    %v271 = vpack.c.b16 %v216, %v215
    %v272 = vpack.c.b16 %v218, %v217
    %v273 = vpack.c.b16 %v220, %v219
    %v274 = vpack.c.b16 %v222, %v221
    %v275 = vpack.c.b16 %v224, %v223
    %v276 = vpack.c.b16 %v226, %v225
    %v277 = vpack.c.b16 %v228, %v227
    %v278 = vpack.c.b16 %v230, %v229
    %v279 = vpack.c.b16 %v232, %v231
    %v280 = vpack.c.b16 %v234, %v233
    %v281 = vpack.c.b16 %v236, %v235
    %v282 = vpack.c.b16 %v238, %v237
    %v283 = vpack.c.b16 %v240, %v239
    %v284 = vpack.c.b16 %v242, %v241
    %v285 = vpack.c.b16 %v244, %v243
    %v286 = vpack.c.b16 %v246, %v245
    %v287 = vpack.c.b16 %v248, %v247
    %v288 = vpack.c.b16 %v250, %v249
    %v289 = vpack.c.b16 %v252, %v251
    %v290 = vpack.c.b16 %v254, %v253
    %v291 = vpack.c.b16 %v256, %v255
    %v292 = vpack.c.b16 %v258, %v257
    %v293 = vpack.c.b16 %v260, %v259
    %v294 = vpack.c.b16 %v262, %v261
    %v343 = vunpack.c.l.b16 %v119
    %v344 = vunpack.c.l.b16 %v120
    %v345 = vunpack.c.l.b16 %v121
    %v346 = vunpack.c.l.b16 %v122
    %v347 = vunpack.c.l.b16 %v123
    %v348 = vunpack.c.l.b16 %v124
    %v349 = vunpack.c.l.b16 %v125
    %v350 = vunpack.c.l.b16 %v126
    %v351 = vunpack.c.l.b16 %v127
    %v352 = vunpack.c.l.b16 %v128
    %v353 = vunpack.c.l.b16 %v129
    %v354 = vunpack.c.l.b16 %v130
    %v355 = vunpack.c.l.b16 %v131
    %v356 = vunpack.c.l.b16 %v132
    %v357 = vunpack.c.l.b16 %v133
    %v358 = vunpack.c.l.b16 %v134
    %v359 = vpack.c.b16 %v344, %v343
    %v360 = vpack.c.b16 %v346, %v345
    %v361 = vpack.c.b16 %v348, %v347
    %v362 = vpack.c.b16 %v350, %v349
    %v363 = vpack.c.b16 %v352, %v351
    %v364 = vpack.c.b16 %v354, %v353
    %v365 = vpack.c.b16 %v356, %v355
    %v366 = vpack.c.b16 %v358, %v357
    %375 = vmatprep.subr.bf16.mxu0 0
    %376 = vmatpush1.bf16.msra.mxu0 %v359
    %377 = vmatprep.subr.bf16.mxu0 0
    %378 = vmatpush1.bf16.msra.mxu0 %v360
    %379 = vmatprep.subr.bf16.mxu0 0
    %380 = vmatpush1.bf16.msra.mxu0 %v361
    %381 = vmatprep.subr.bf16.mxu0 0
    %382 = vmatpush1.bf16.msra.mxu0 %v362
    %383 = vmatprep.subr.bf16.mxu0 0
    %384 = vmatpush1.bf16.msra.mxu0 %v363
    %385 = vmatprep.subr.bf16.mxu0 0
    %386 = vmatpush1.bf16.msra.mxu0 %v364
    %387 = vmatprep.subr.bf16.mxu0 0
    %388 = vmatpush1.bf16.msra.mxu0 %v365
    %389 = vmatprep.subr.bf16.mxu0 0
    %390 = vmatpush1.bf16.msra.mxu0 %v366
    %391 = vmatprep.subr.bf16.mxu0 0
    %392 = vmatpush1.bf16.msra.mxu0 0
    %393 = vmatprep.subr.bf16.mxu0 0
    %394 = vmatpush1.bf16.msra.mxu0 0
    %395 = vmatprep.subr.bf16.mxu0 0
    %396 = vmatpush1.bf16.msra.mxu0 0
    %397 = vmatprep.subr.bf16.mxu0 0
    %398 = vmatpush1.bf16.msra.mxu0 0
    %399 = vmatprep.subr.bf16.mxu0 0
    %400 = vmatpush1.bf16.msra.mxu0 0
    %401 = vmatprep.subr.bf16.mxu0 0
    %402 = vmatpush1.bf16.msra.mxu0 0
    %403 = vmatprep.subr.bf16.mxu0 0
    %404 = vmatpush1.bf16.msra.mxu0 0
    %405 = vmatprep.subr.bf16.mxu0 0
    %406 = vmatpush1.bf16.msra.mxu0 0
    %407 = vmatprep.mubr.bf16.mxu0 0
    %408 = vmatmul.mubr.bf16.gmra.mrb[0].mxu0 %v263
    %v409 = vpop.f32.mrb[0].mxu0
    %v410 = vadd.f32 0.0, %v409
    %v411 = vpop.f32.mrb[0].mxu0
    %v412 = vpop.f32.mrb[0].mxu0
    %v413 = vadd.f32 0.0, %v412
    %v414 = vpop.f32.mrb[0].mxu0
    %415 = vmatprep.mubr.bf16.mxu0 0
    %416 = vmatmul.mubr.bf16.gmra.mrb[0].mxu0 %v264
    %v417 = vpop.f32.mrb[0].mxu0
    %v418 = vadd.f32 0.0, %v417
    %v419 = vpop.f32.mrb[0].mxu0
    %v420 = vpop.f32.mrb[0].mxu0
    %v421 = vadd.f32 0.0, %v420
    %v422 = vpop.f32.mrb[0].mxu0
    %423 = vmatprep.mubr.bf16.mxu0 0
    %424 = vmatmul.mubr.bf16.gmra.mrb[0].mxu0 %v265
    %v425 = vpop.f32.mrb[0].mxu0
    %v426 = vadd.f32 0.0, %v425
    %v427 = vpop.f32.mrb[0].mxu0
    %v428 = vpop.f32.mrb[0].mxu0
    %v429 = vadd.f32 0.0, %v428
    %v430 = vpop.f32.mrb[0].mxu0
    %431 = vmatprep.mubr.bf16.mxu0 0
    %432 = vmatmul.mubr.bf16.gmra.mrb[0].mxu0 %v266
    %v433 = vpop.f32.mrb[0].mxu0
    %v434 = vadd.f32 0.0, %v433
    %v435 = vpop.f32.mrb[0].mxu0
    %v436 = vpop.f32.mrb[0].mxu0
    %v437 = vadd.f32 0.0, %v436
    %v438 = vpop.f32.mrb[0].mxu0
    %439 = vmatprep.mubr.bf16.mxu0 0
    %440 = vmatmul.mubr.bf16.gmra.mrb[0].mxu0 %v267
    %v441 = vpop.f32.mrb[0].mxu0
    %v442 = vadd.f32 0.0, %v441
    %v443 = vpop.f32.mrb[0].mxu0
    %v444 = vpop.f32.mrb[0].mxu0
    %v445 = vadd.f32 0.0, %v444
    %v446 = vpop.f32.mrb[0].mxu0
    %447 = vmatprep.mubr.bf16.mxu0 0
    %448 = vmatmul.mubr.bf16.gmra.mrb[0].mxu0 %v268
    %v449 = vpop.f32.mrb[0].mxu0
    %v450 = vadd.f32 0.0, %v449
    %v451 = vpop.f32.mrb[0].mxu0
    %v452 = vpop.f32.mrb[0].mxu0
    %v453 = vadd.f32 0.0, %v452
    %v454 = vpop.f32.mrb[0].mxu0
    %455 = vmatprep.mubr.bf16.mxu0 0
    %456 = vmatmul.mubr.bf16.gmra.mrb[0].mxu0 %v269
    %v457 = vpop.f32.mrb[0].mxu0
    %v458 = vadd.f32 0.0, %v457
    %v459 = vpop.f32.mrb[0].mxu0
    %v460 = vpop.f32.mrb[0].mxu0
    %v461 = vadd.f32 0.0, %v460
    %v462 = vpop.f32.mrb[0].mxu0
    %463 = vmatprep.mubr.bf16.mxu0 0
    %464 = vmatmul.mubr.bf16.gmra.mrb[0].mxu0 %v270
    %v465 = vpop.f32.mrb[0].mxu0
    %v466 = vadd.f32 0.0, %v465
    %v467 = vpop.f32.mrb[0].mxu0
    %v468 = vpop.f32.mrb[0].mxu0
    %v469 = vadd.f32 0.0, %v468
    %v470 = vpop.f32.mrb[0].mxu0
    %471 = vmatprep.mubr.bf16.mxu0 0
    %472 = vmatmul.mubr.bf16.gmra.mrb[0].mxu0 %v271
    %v473 = vpop.f32.mrb[0].mxu0
    %v474 = vadd.f32 0.0, %v473
    %v475 = vpop.f32.mrb[0].mxu0
    %v476 = vpop.f32.mrb[0].mxu0
    %v477 = vadd.f32 0.0, %v476
    %v478 = vpop.f32.mrb[0].mxu0
    %479 = vmatprep.mubr.bf16.mxu0 0
    %480 = vmatmul.mubr.bf16.gmra.mrb[0].mxu0 %v272
    %v481 = vpop.f32.mrb[0].mxu0
    %v482 = vadd.f32 0.0, %v481
    %v483 = vpop.f32.mrb[0].mxu0
    %v484 = vpop.f32.mrb[0].mxu0
    %v485 = vadd.f32 0.0, %v484
    %v486 = vpop.f32.mrb[0].mxu0
    %487 = vmatprep.mubr.bf16.mxu0 0
    %488 = vmatmul.mubr.bf16.gmra.mrb[0].mxu0 %v273
    %v489 = vpop.f32.mrb[0].mxu0
    %v490 = vadd.f32 0.0, %v489
    %v491 = vpop.f32.mrb[0].mxu0
    %v492 = vpop.f32.mrb[0].mxu0
    %v493 = vadd.f32 0.0, %v492
    %v494 = vpop.f32.mrb[0].mxu0
    %495 = vmatprep.mubr.bf16.mxu0 0
    %496 = vmatmul.mubr.bf16.gmra.mrb[0].mxu0 %v274
    %v497 = vpop.f32.mrb[0].mxu0
    %v498 = vadd.f32 0.0, %v497
    %v499 = vpop.f32.mrb[0].mxu0
    %v500 = vpop.f32.mrb[0].mxu0
    %v501 = vadd.f32 0.0, %v500
    %v502 = vpop.f32.mrb[0].mxu0
    %503 = vmatprep.mubr.bf16.mxu0 0
    %504 = vmatmul.mubr.bf16.gmra.mrb[0].mxu0 %v275
    %v505 = vpop.f32.mrb[0].mxu0
    %v506 = vadd.f32 0.0, %v505
    %v507 = vpop.f32.mrb[0].mxu0
    %v508 = vpop.f32.mrb[0].mxu0
    %v509 = vadd.f32 0.0, %v508
    %v510 = vpop.f32.mrb[0].mxu0
    %511 = vmatprep.mubr.bf16.mxu0 0
    %512 = vmatmul.mubr.bf16.gmra.mrb[0].mxu0 %v276
    %v513 = vpop.f32.mrb[0].mxu0
    %v514 = vadd.f32 0.0, %v513
    %v515 = vpop.f32.mrb[0].mxu0
    %v516 = vpop.f32.mrb[0].mxu0
    %v517 = vadd.f32 0.0, %v516
    %v518 = vpop.f32.mrb[0].mxu0
    %519 = vmatprep.mubr.bf16.mxu0 0
    %520 = vmatmul.mubr.bf16.gmra.mrb[0].mxu0 %v277
    %v521 = vpop.f32.mrb[0].mxu0
    %v522 = vadd.f32 0.0, %v521
    %v523 = vpop.f32.mrb[0].mxu0
    %v524 = vpop.f32.mrb[0].mxu0
    %v525 = vadd.f32 0.0, %v524
    %v526 = vpop.f32.mrb[0].mxu0
    %527 = vmatprep.mubr.bf16.mxu0 0
    %528 = vmatmul.mubr.bf16.gmra.mrb[0].mxu0 %v278
    %v529 = vpop.f32.mrb[0].mxu0
    %v530 = vadd.f32 0.0, %v529
    %v531 = vpop.f32.mrb[0].mxu0
    %v532 = vpop.f32.mrb[0].mxu0
    %v533 = vadd.f32 0.0, %v532
    %v534 = vpop.f32.mrb[0].mxu0
    %535 = vmatprep.mubr.bf16.mxu0 0
    %536 = vmatmul.mubr.bf16.gmra.mrb[0].mxu0 %v279
    %v537 = vpop.f32.mrb[0].mxu0
    %v538 = vadd.f32 0.0, %v537
    %v539 = vpop.f32.mrb[0].mxu0
    %v540 = vpop.f32.mrb[0].mxu0
    %v541 = vadd.f32 0.0, %v540
    %v542 = vpop.f32.mrb[0].mxu0
    %543 = vmatprep.mubr.bf16.mxu0 0
    %544 = vmatmul.mubr.bf16.gmra.mrb[0].mxu0 %v280
    %v545 = vpop.f32.mrb[0].mxu0
    %v546 = vadd.f32 0.0, %v545
    %v547 = vpop.f32.mrb[0].mxu0
    %v548 = vpop.f32.mrb[0].mxu0
    %v549 = vadd.f32 0.0, %v548
    %v550 = vpop.f32.mrb[0].mxu0
    %551 = vmatprep.mubr.bf16.mxu0 0
    %552 = vmatmul.mubr.bf16.gmra.mrb[0].mxu0 %v281
    %v553 = vpop.f32.mrb[0].mxu0
    %v554 = vadd.f32 0.0, %v553
    %v555 = vpop.f32.mrb[0].mxu0
    %v556 = vpop.f32.mrb[0].mxu0
    %v557 = vadd.f32 0.0, %v556
    %v558 = vpop.f32.mrb[0].mxu0
    %559 = vmatprep.mubr.bf16.mxu0 0
    %560 = vmatmul.mubr.bf16.gmra.mrb[0].mxu0 %v282
    %v561 = vpop.f32.mrb[0].mxu0
    %v562 = vadd.f32 0.0, %v561
    %v563 = vpop.f32.mrb[0].mxu0
    %v564 = vpop.f32.mrb[0].mxu0
    %v565 = vadd.f32 0.0, %v564
    %v566 = vpop.f32.mrb[0].mxu0
    %567 = vmatprep.mubr.bf16.mxu0 0
    %568 = vmatmul.mubr.bf16.gmra.mrb[0].mxu0 %v283
    %v569 = vpop.f32.mrb[0].mxu0
    %v570 = vadd.f32 0.0, %v569
    %v571 = vpop.f32.mrb[0].mxu0
    %v572 = vpop.f32.mrb[0].mxu0
    %v573 = vadd.f32 0.0, %v572
    %v574 = vpop.f32.mrb[0].mxu0
    %575 = vmatprep.mubr.bf16.mxu0 0
    %576 = vmatmul.mubr.bf16.gmra.mrb[0].mxu0 %v284
    %v577 = vpop.f32.mrb[0].mxu0
    %v578 = vadd.f32 0.0, %v577
    %v579 = vpop.f32.mrb[0].mxu0
    %v580 = vpop.f32.mrb[0].mxu0
    %v581 = vadd.f32 0.0, %v580
    %v582 = vpop.f32.mrb[0].mxu0
    %583 = vmatprep.mubr.bf16.mxu0 0
    %584 = vmatmul.mubr.bf16.gmra.mrb[0].mxu0 %v285
    %v585 = vpop.f32.mrb[0].mxu0
    %v586 = vadd.f32 0.0, %v585
    %v587 = vpop.f32.mrb[0].mxu0
    %v588 = vpop.f32.mrb[0].mxu0
    %v589 = vadd.f32 0.0, %v588
    %v590 = vpop.f32.mrb[0].mxu0
    %591 = vmatprep.mubr.bf16.mxu0 0
    %592 = vmatmul.mubr.bf16.gmra.mrb[0].mxu0 %v286
    %v593 = vpop.f32.mrb[0].mxu0
    %v594 = vadd.f32 0.0, %v593
    %v595 = vpop.f32.mrb[0].mxu0
    %v596 = vpop.f32.mrb[0].mxu0
    %v597 = vadd.f32 0.0, %v596
    %v598 = vpop.f32.mrb[0].mxu0
    %599 = vmatprep.mubr.bf16.mxu0 0
    %600 = vmatmul.mubr.bf16.gmra.mrb[0].mxu0 %v287
    %v601 = vpop.f32.mrb[0].mxu0
    %v602 = vadd.f32 0.0, %v601
    %v603 = vpop.f32.mrb[0].mxu0
    %v604 = vpop.f32.mrb[0].mxu0
    %v605 = vadd.f32 0.0, %v604
    %v606 = vpop.f32.mrb[0].mxu0
    %607 = vmatprep.mubr.bf16.mxu0 0
    %608 = vmatmul.mubr.bf16.gmra.mrb[0].mxu0 %v288
    %v609 = vpop.f32.mrb[0].mxu0
    %v610 = vadd.f32 0.0, %v609
    %v611 = vpop.f32.mrb[0].mxu0
    %v612 = vpop.f32.mrb[0].mxu0
    %v613 = vadd.f32 0.0, %v612
    %v614 = vpop.f32.mrb[0].mxu0
    %615 = vmatprep.mubr.bf16.mxu0 0
    %616 = vmatmul.mubr.bf16.gmra.mrb[0].mxu0 %v289
    %v617 = vpop.f32.mrb[0].mxu0
    %v618 = vadd.f32 0.0, %v617
    %v619 = vpop.f32.mrb[0].mxu0
    %v620 = vpop.f32.mrb[0].mxu0
    %v621 = vadd.f32 0.0, %v620
    %v622 = vpop.f32.mrb[0].mxu0
    %623 = vmatprep.mubr.bf16.mxu0 0
    %624 = vmatmul.mubr.bf16.gmra.mrb[0].mxu0 %v290
    %v625 = vpop.f32.mrb[0].mxu0
    %v626 = vadd.f32 0.0, %v625
    %v627 = vpop.f32.mrb[0].mxu0
    %v628 = vpop.f32.mrb[0].mxu0
    %v629 = vadd.f32 0.0, %v628
    %v630 = vpop.f32.mrb[0].mxu0
    %631 = vmatprep.mubr.bf16.mxu0 0
    %632 = vmatmul.mubr.bf16.gmra.mrb[0].mxu0 %v291
    %v633 = vpop.f32.mrb[0].mxu0
    %v634 = vadd.f32 0.0, %v633
    %v635 = vpop.f32.mrb[0].mxu0
    %v636 = vpop.f32.mrb[0].mxu0
    %v637 = vadd.f32 0.0, %v636
    %v638 = vpop.f32.mrb[0].mxu0
    %639 = vmatprep.mubr.bf16.mxu0 0
    %640 = vmatmul.mubr.bf16.gmra.mrb[0].mxu0 %v292
    %v641 = vpop.f32.mrb[0].mxu0
    %v642 = vadd.f32 0.0, %v641
    %v643 = vpop.f32.mrb[0].mxu0
    %v644 = vpop.f32.mrb[0].mxu0
    %v645 = vadd.f32 0.0, %v644
    %v646 = vpop.f32.mrb[0].mxu0
    %647 = vmatprep.mubr.bf16.mxu0 0
    %648 = vmatmul.mubr.bf16.gmra.mrb[0].mxu0 %v293
    %v649 = vpop.f32.mrb[0].mxu0
    %v650 = vadd.f32 0.0, %v649
    %v651 = vpop.f32.mrb[0].mxu0
    %v652 = vpop.f32.mrb[0].mxu0
    %v653 = vadd.f32 0.0, %v652
    %v654 = vpop.f32.mrb[0].mxu0
    %655 = vmatprep.mubr.bf16.mxu0 0
    %656 = vmatmul.mubr.bf16.gmra.mrb[0].mxu0 %v294
    %v657 = vpop.f32.mrb[0].mxu0
    %v658 = vadd.f32 0.0, %v657
    %v659 = vpop.f32.mrb[0].mxu0
    %v660 = vpop.f32.mrb[0].mxu0
    %v661 = vadd.f32 0.0, %v660
    %v662 = vpop.f32.mrb[0].mxu0
    %663 = vdwg.mxu0
    %v664 = vadd.f32 %v410, %v413
    %v665 = vadd.f32 %v664, %v418
    %v666 = vadd.f32 %v665, %v421
    %v667 = vadd.f32 %v666, %v426
    %v668 = vadd.f32 %v667, %v429
    %v669 = vadd.f32 %v668, %v434
    %v670 = vadd.f32 %v669, %v437
    %v671 = vadd.f32 %v670, %v442
    %v672 = vadd.f32 %v671, %v445
    %v673 = vadd.f32 %v672, %v450
    %v674 = vadd.f32 %v673, %v453
    %v675 = vadd.f32 %v674, %v458
    %v676 = vadd.f32 %v675, %v461
    %v677 = vadd.f32 %v676, %v466
    %v678 = vadd.f32 %v677, %v469
    %v679 = vadd.f32 %v678, %v474
    %v680 = vadd.f32 %v679, %v477
    %v681 = vadd.f32 %v680, %v482
    %v682 = vadd.f32 %v681, %v485
    %v683 = vadd.f32 %v682, %v490
    %v684 = vadd.f32 %v683, %v493
    %v685 = vadd.f32 %v684, %v498
    %v686 = vadd.f32 %v685, %v501
    %v687 = vadd.f32 %v686, %v506
    %v688 = vadd.f32 %v687, %v509
    %v689 = vadd.f32 %v688, %v514
    %v690 = vadd.f32 %v689, %v517
    %v691 = vadd.f32 %v690, %v522
    %v692 = vadd.f32 %v691, %v525
    %v693 = vadd.f32 %v692, %v530
    %v694 = vadd.f32 %v693, %v533
    %v695 = vadd.f32 %v694, %v538
    %v696 = vadd.f32 %v695, %v541
    %v697 = vadd.f32 %v696, %v546
    %v698 = vadd.f32 %v697, %v549
    %v699 = vadd.f32 %v698, %v554
    %v700 = vadd.f32 %v699, %v557
    %v701 = vadd.f32 %v700, %v562
    %v702 = vadd.f32 %v701, %v565
    %v703 = vadd.f32 %v702, %v570
    %v704 = vadd.f32 %v703, %v573
    %v705 = vadd.f32 %v704, %v578
    %v706 = vadd.f32 %v705, %v581
    %v707 = vadd.f32 %v706, %v586
    %v708 = vadd.f32 %v707, %v589
    %v709 = vadd.f32 %v708, %v594
    %v710 = vadd.f32 %v709, %v597
    %v711 = vadd.f32 %v710, %v602
    %v712 = vadd.f32 %v711, %v605
    %v713 = vadd.f32 %v712, %v610
    %v714 = vadd.f32 %v713, %v613
    %v715 = vadd.f32 %v714, %v618
    %v716 = vadd.f32 %v715, %v621
    %v717 = vadd.f32 %v716, %v626
    %v718 = vadd.f32 %v717, %v629
    %v719 = vadd.f32 %v718, %v634
    %v720 = vadd.f32 %v719, %v637
    %v721 = vadd.f32 %v720, %v642
    %v722 = vadd.f32 %v721, %v645
    %v723 = vadd.f32 %v722, %v650
    %v724 = vadd.f32 %v723, %v653
    %v725 = vadd.f32 %v724, %v658
    %v726 = vadd.f32 %v725, %v661
    %v727 = vrot.slane %v726, 4
    %v728 = vadd.f32 %v726, %v727
    %v729 = vrot.slane %v728, 2
    %v730 = vadd.f32 %v728, %v729
    %v731 = vrot.slane %v730, 1
    %v732 = vadd.f32 %v730, %v731
    %v733 = vadd.f32 %v732, 0.0
    %v734 = vmul.f32 %v410, %v410
    %v735 = vmul.f32 %v413, %v413
    %v736 = vmul.f32 %v418, %v418
    %v737 = vmul.f32 %v421, %v421
    %v738 = vmul.f32 %v426, %v426
    %v739 = vmul.f32 %v429, %v429
    %v740 = vmul.f32 %v434, %v434
    %v741 = vmul.f32 %v437, %v437
    %v742 = vmul.f32 %v442, %v442
    %v743 = vmul.f32 %v445, %v445
    %v744 = vmul.f32 %v450, %v450
    %v745 = vmul.f32 %v453, %v453
    %v746 = vmul.f32 %v458, %v458
    %v747 = vmul.f32 %v461, %v461
    %v748 = vmul.f32 %v466, %v466
    %v749 = vmul.f32 %v469, %v469
    %v750 = vmul.f32 %v474, %v474
    %v751 = vmul.f32 %v477, %v477
    %v752 = vmul.f32 %v482, %v482
    %v753 = vmul.f32 %v485, %v485
    %v754 = vmul.f32 %v490, %v490
    %v755 = vmul.f32 %v493, %v493
    %v756 = vmul.f32 %v498, %v498
    %v757 = vmul.f32 %v501, %v501
    %v758 = vmul.f32 %v506, %v506
    %v759 = vmul.f32 %v509, %v509
    %v760 = vmul.f32 %v514, %v514
    %v761 = vmul.f32 %v517, %v517
    %v762 = vmul.f32 %v522, %v522
    %v763 = vmul.f32 %v525, %v525
    %v764 = vmul.f32 %v530, %v530
    %v765 = vmul.f32 %v533, %v533
    %v766 = vmul.f32 %v538, %v538
    %v767 = vmul.f32 %v541, %v541
    %v768 = vmul.f32 %v546, %v546
    %v769 = vmul.f32 %v549, %v549
    %v770 = vmul.f32 %v554, %v554
    %v771 = vmul.f32 %v557, %v557
    %v772 = vmul.f32 %v562, %v562
    %v773 = vmul.f32 %v565, %v565
    %v774 = vmul.f32 %v570, %v570
    %v775 = vmul.f32 %v573, %v573
    %v776 = vmul.f32 %v578, %v578
    %v777 = vmul.f32 %v581, %v581
    %v778 = vmul.f32 %v586, %v586
    %v779 = vmul.f32 %v589, %v589
    %v780 = vmul.f32 %v594, %v594
    %v781 = vmul.f32 %v597, %v597
    %v782 = vmul.f32 %v602, %v602
    %v783 = vmul.f32 %v605, %v605
    %v784 = vmul.f32 %v610, %v610
    %v785 = vmul.f32 %v613, %v613
    %v786 = vmul.f32 %v618, %v618
    %v787 = vmul.f32 %v621, %v621
    %v788 = vmul.f32 %v626, %v626
    %v789 = vmul.f32 %v629, %v629
    %v790 = vmul.f32 %v634, %v634
    %v791 = vmul.f32 %v637, %v637
    %v792 = vmul.f32 %v642, %v642
    %v793 = vmul.f32 %v645, %v645
    %v794 = vmul.f32 %v650, %v650
    %v795 = vmul.f32 %v653, %v653
    %v796 = vmul.f32 %v658, %v658
    %v797 = vmul.f32 %v661, %v661
    %v798 = vadd.f32 %v734, %v735
    %v799 = vadd.f32 %v798, %v736
    %v800 = vadd.f32 %v799, %v737
    %v801 = vadd.f32 %v800, %v738
    %v802 = vadd.f32 %v801, %v739
    %v803 = vadd.f32 %v802, %v740
    %v804 = vadd.f32 %v803, %v741
    %v805 = vadd.f32 %v804, %v742
    %v806 = vadd.f32 %v805, %v743
    %v807 = vadd.f32 %v806, %v744
    %v808 = vadd.f32 %v807, %v745
    %v809 = vadd.f32 %v808, %v746
    %v810 = vadd.f32 %v809, %v747
    %v811 = vadd.f32 %v810, %v748
    %v812 = vadd.f32 %v811, %v749
    %v813 = vadd.f32 %v812, %v750
    %v814 = vadd.f32 %v813, %v751
    %v815 = vadd.f32 %v814, %v752
    %v816 = vadd.f32 %v815, %v753
    %v817 = vadd.f32 %v816, %v754
    %v818 = vadd.f32 %v817, %v755
    %v819 = vadd.f32 %v818, %v756
    %v820 = vadd.f32 %v819, %v757
    %v821 = vadd.f32 %v820, %v758
    %v822 = vadd.f32 %v821, %v759
    %v823 = vadd.f32 %v822, %v760
    %v824 = vadd.f32 %v823, %v761
    %v825 = vadd.f32 %v824, %v762
    %v826 = vadd.f32 %v825, %v763
    %v827 = vadd.f32 %v826, %v764
    %v828 = vadd.f32 %v827, %v765
    %v829 = vadd.f32 %v828, %v766
    %v830 = vadd.f32 %v829, %v767
    %v831 = vadd.f32 %v830, %v768
    %v832 = vadd.f32 %v831, %v769
    %v833 = vadd.f32 %v832, %v770
    %v834 = vadd.f32 %v833, %v771
    %v835 = vadd.f32 %v834, %v772
    %v836 = vadd.f32 %v835, %v773
    %v837 = vadd.f32 %v836, %v774
    %v838 = vadd.f32 %v837, %v775
    %v839 = vadd.f32 %v838, %v776
    %v840 = vadd.f32 %v839, %v777
    %v841 = vadd.f32 %v840, %v778
    %v842 = vadd.f32 %v841, %v779
    %v843 = vadd.f32 %v842, %v780
    %v844 = vadd.f32 %v843, %v781
    %v845 = vadd.f32 %v844, %v782
    %v846 = vadd.f32 %v845, %v783
    %v847 = vadd.f32 %v846, %v784
    %v848 = vadd.f32 %v847, %v785
    %v849 = vadd.f32 %v848, %v786
    %v850 = vadd.f32 %v849, %v787
    %v851 = vadd.f32 %v850, %v788
    %v852 = vadd.f32 %v851, %v789
    %v853 = vadd.f32 %v852, %v790
    %v854 = vadd.f32 %v853, %v791
    %v855 = vadd.f32 %v854, %v792
    %v856 = vadd.f32 %v855, %v793
    %v857 = vadd.f32 %v856, %v794
    %v858 = vadd.f32 %v857, %v795
    %v859 = vadd.f32 %v858, %v796
    %v860 = vadd.f32 %v859, %v797
    %v861 = vrot.slane %v860, 4
    %v862 = vadd.f32 %v860, %v861
    %v863 = vrot.slane %v862, 2
    %v864 = vadd.f32 %v862, %v863
    %v865 = vrot.slane %v864, 1
    %v866 = vadd.f32 %v864, %v865
    %v867 = vadd.f32 %v866, 0.0
    %s868 = scalar_lea.vmem [#allocation2], 64
    %v869 = vld [vmem:[%s868] sm:$0xf]
    %v870 = vld [vmem:[%s868 + $0x4] sm:$0xf]
    %v871 = vld [vmem:[%s868 + $0x8] sm:$0xf]
    %v872 = vld [vmem:[%s868 + $0xc] sm:$0xf]
    %v873 = vld [vmem:[%s868 + $0x10] sm:$0xf]
    %v874 = vld [vmem:[%s868 + $0x14] sm:$0xf]
    %v875 = vld [vmem:[%s868 + $0x18] sm:$0xf]
    %v876 = vld [vmem:[%s868 + $0x1c] sm:$0xf]
    %v877 = vld [vmem:[%s868 + $0x20] sm:$0xf]
    %v878 = vld [vmem:[%s868 + $0x24] sm:$0xf]
    %v879 = vld [vmem:[%s868 + $0x28] sm:$0xf]
    %v880 = vld [vmem:[%s868 + $0x2c] sm:$0xf]
    %v881 = vld [vmem:[%s868 + $0x30] sm:$0xf]
    %v882 = vld [vmem:[%s868 + $0x34] sm:$0xf]
    %v883 = vld [vmem:[%s868 + $0x38] sm:$0xf]
    %v884 = vld [vmem:[%s868 + $0x3c] sm:$0xf]
    %v901 = vunpack.c.l.b16 %v869
    %v902 = vunpack.c.l.b16 %v870
    %v903 = vunpack.c.l.b16 %v871
    %v904 = vunpack.c.l.b16 %v872
    %v905 = vunpack.c.l.b16 %v873
    %v906 = vunpack.c.l.b16 %v874
    %v907 = vunpack.c.l.b16 %v875
    %v908 = vunpack.c.l.b16 %v876
    %v909 = vunpack.c.l.b16 %v877
    %v910 = vunpack.c.l.b16 %v878
    %v911 = vunpack.c.l.b16 %v879
    %v912 = vunpack.c.l.b16 %v880
    %v913 = vunpack.c.l.b16 %v881
    %v914 = vunpack.c.l.b16 %v882
    %v915 = vunpack.c.l.b16 %v883
    %v916 = vunpack.c.l.b16 %v884
    %v917 = vpack.c.b16 %v902, %v901
    %v918 = vpack.c.b16 %v904, %v903
    %v919 = vpack.c.b16 %v906, %v905
    %v920 = vpack.c.b16 %v908, %v907
    %v921 = vpack.c.b16 %v910, %v909
    %v922 = vpack.c.b16 %v912, %v911
    %v923 = vpack.c.b16 %v914, %v913
    %v924 = vpack.c.b16 %v916, %v915
    %933 = vmatprep.subr.bf16.mxu0 0
    %934 = vmatpush1.bf16.msra.mxu0 %v917
    %935 = vmatprep.subr.bf16.mxu0 0
    %936 = vmatpush1.bf16.msra.mxu0 %v918
    %937 = vmatprep.subr.bf16.mxu0 0
    %938 = vmatpush1.bf16.msra.mxu0 %v919
    %939 = vmatprep.subr.bf16.mxu0 0
    %940 = vmatpush1.bf16.msra.mxu0 %v920
    %941 = vmatprep.subr.bf16.mxu0 0
    %942 = vmatpush1.bf16.msra.mxu0 %v921
    %943 = vmatprep.subr.bf16.mxu0 0
    %944 = vmatpush1.bf16.msra.mxu0 %v922
    %945 = vmatprep.subr.bf16.mxu0 0
    %946 = vmatpush1.bf16.msra.mxu0 %v923
    %947 = vmatprep.subr.bf16.mxu0 0
    %948 = vmatpush1.bf16.msra.mxu0 %v924
    %949 = vmatprep.subr.bf16.mxu0 0
    %950 = vmatpush1.bf16.msra.mxu0 0
    %951 = vmatprep.subr.bf16.mxu0 0
    %952 = vmatpush1.bf16.msra.mxu0 0
    %953 = vmatprep.subr.bf16.mxu0 0
    %954 = vmatpush1.bf16.msra.mxu0 0
    %955 = vmatprep.subr.bf16.mxu0 0
    %956 = vmatpush1.bf16.msra.mxu0 0
    %957 = vmatprep.subr.bf16.mxu0 0
    %958 = vmatpush1.bf16.msra.mxu0 0
    %959 = vmatprep.subr.bf16.mxu0 0
    %960 = vmatpush1.bf16.msra.mxu0 0
    %961 = vmatprep.subr.bf16.mxu0 0
    %962 = vmatpush1.bf16.msra.mxu0 0
    %963 = vmatprep.subr.bf16.mxu0 0
    %964 = vmatpush1.bf16.msra.mxu0 0
    %965 = vmatprep.mubr.bf16.mxu0 0
    %966 = vmatmul.mubr.bf16.gmra.mrb[0].mxu0 %v263
    %v967 = vpop.f32.mrb[0].mxu0
    %v968 = vadd.f32 0.0, %v967
    %v969 = vpop.f32.mrb[0].mxu0
    %v970 = vpop.f32.mrb[0].mxu0
    %v971 = vadd.f32 0.0, %v970
    %v972 = vpop.f32.mrb[0].mxu0
    %973 = vmatprep.mubr.bf16.mxu0 0
    %974 = vmatmul.mubr.bf16.gmra.mrb[0].mxu0 %v264
    %v975 = vpop.f32.mrb[0].mxu0
    %v976 = vadd.f32 0.0, %v975
    %v977 = vpop.f32.mrb[0].mxu0
    %v978 = vpop.f32.mrb[0].mxu0
    %v979 = vadd.f32 0.0, %v978
    %v980 = vpop.f32.mrb[0].mxu0
    %981 = vmatprep.mubr.bf16.mxu0 0
    %982 = vmatmul.mubr.bf16.gmra.mrb[0].mxu0 %v265
    %v983 = vpop.f32.mrb[0].mxu0
    %v984 = vadd.f32 0.0, %v983
    %v985 = vpop.f32.mrb[0].mxu0
    %v986 = vpop.f32.mrb[0].mxu0
    %v987 = vadd.f32 0.0, %v986
    %v988 = vpop.f32.mrb[0].mxu0
    %989 = vmatprep.mubr.bf16.mxu0 0
    %990 = vmatmul.mubr.bf16.gmra.mrb[0].mxu0 %v266
    %v991 = vpop.f32.mrb[0].mxu0
    %v992 = vadd.f32 0.0, %v991
    %v993 = vpop.f32.mrb[0].mxu0
    %v994 = vpop.f32.mrb[0].mxu0
    %v995 = vadd.f32 0.0, %v994
    %v996 = vpop.f32.mrb[0].mxu0
    %997 = vmatprep.mubr.bf16.mxu0 0
    %998 = vmatmul.mubr.bf16.gmra.mrb[0].mxu0 %v267
    %v999 = vpop.f32.mrb[0].mxu0
    %v1000 = vadd.f32 0.0, %v999
    %v1001 = vpop.f32.mrb[0].mxu0
    %v1002 = vpop.f32.mrb[0].mxu0
    %v1003 = vadd.f32 0.0, %v1002
    %v1004 = vpop.f32.mrb[0].mxu0
    %1005 = vmatprep.mubr.bf16.mxu0 0
    %1006 = vmatmul.mubr.bf16.gmra.mrb[0].mxu0 %v268
    %v1007 = vpop.f32.mrb[0].mxu0
    %v1008 = vadd.f32 0.0, %v1007
    %v1009 = vpop.f32.mrb[0].mxu0
    %v1010 = vpop.f32.mrb[0].mxu0
    %v1011 = vadd.f32 0.0, %v1010
    %v1012 = vpop.f32.mrb[0].mxu0
    %1013 = vmatprep.mubr.bf16.mxu0 0
    %1014 = vmatmul.mubr.bf16.gmra.mrb[0].mxu0 %v269
    %v1015 = vpop.f32.mrb[0].mxu0
    %v1016 = vadd.f32 0.0, %v1015
    %v1017 = vpop.f32.mrb[0].mxu0
    %v1018 = vpop.f32.mrb[0].mxu0
    %v1019 = vadd.f32 0.0, %v1018
    %v1020 = vpop.f32.mrb[0].mxu0
    %1021 = vmatprep.mubr.bf16.mxu0 0
    %1022 = vmatmul.mubr.bf16.gmra.mrb[0].mxu0 %v270
    %v1023 = vpop.f32.mrb[0].mxu0
    %v1024 = vadd.f32 0.0, %v1023
    %v1025 = vpop.f32.mrb[0].mxu0
    %v1026 = vpop.f32.mrb[0].mxu0
    %v1027 = vadd.f32 0.0, %v1026
    %v1028 = vpop.f32.mrb[0].mxu0
    %1029 = vmatprep.mubr.bf16.mxu0 0
    %1030 = vmatmul.mubr.bf16.gmra.mrb[0].mxu0 %v271
    %v1031 = vpop.f32.mrb[0].mxu0
    %v1032 = vadd.f32 0.0, %v1031
    %v1033 = vpop.f32.mrb[0].mxu0
    %v1034 = vpop.f32.mrb[0].mxu0
    %v1035 = vadd.f32 0.0, %v1034
    %v1036 = vpop.f32.mrb[0].mxu0
    %1037 = vmatprep.mubr.bf16.mxu0 0
    %1038 = vmatmul.mubr.bf16.gmra.mrb[0].mxu0 %v272
    %v1039 = vpop.f32.mrb[0].mxu0
    %v1040 = vadd.f32 0.0, %v1039
    %v1041 = vpop.f32.mrb[0].mxu0
    %v1042 = vpop.f32.mrb[0].mxu0
    %v1043 = vadd.f32 0.0, %v1042
    %v1044 = vpop.f32.mrb[0].mxu0
    %1045 = vmatprep.mubr.bf16.mxu0 0
    %1046 = vmatmul.mubr.bf16.gmra.mrb[0].mxu0 %v273
    %v1047 = vpop.f32.mrb[0].mxu0
    %v1048 = vadd.f32 0.0, %v1047
    %v1049 = vpop.f32.mrb[0].mxu0
    %v1050 = vpop.f32.mrb[0].mxu0
    %v1051 = vadd.f32 0.0, %v1050
    %v1052 = vpop.f32.mrb[0].mxu0
    %1053 = vmatprep.mubr.bf16.mxu0 0
    %1054 = vmatmul.mubr.bf16.gmra.mrb[0].mxu0 %v274
    %v1055 = vpop.f32.mrb[0].mxu0
    %v1056 = vadd.f32 0.0, %v1055
    %v1057 = vpop.f32.mrb[0].mxu0
    %v1058 = vpop.f32.mrb[0].mxu0
    %v1059 = vadd.f32 0.0, %v1058
    %v1060 = vpop.f32.mrb[0].mxu0
    %1061 = vmatprep.mubr.bf16.mxu0 0
    %1062 = vmatmul.mubr.bf16.gmra.mrb[0].mxu0 %v275
    %v1063 = vpop.f32.mrb[0].mxu0
    %v1064 = vadd.f32 0.0, %v1063
    %v1065 = vpop.f32.mrb[0].mxu0
    %v1066 = vpop.f32.mrb[0].mxu0
    %v1067 = vadd.f32 0.0, %v1066
    %v1068 = vpop.f32.mrb[0].mxu0
    %1069 = vmatprep.mubr.bf16.mxu0 0
    %1070 = vmatmul.mubr.bf16.gmra.mrb[0].mxu0 %v276
    %v1071 = vpop.f32.mrb[0].mxu0
    %v1072 = vadd.f32 0.0, %v1071
    %v1073 = vpop.f32.mrb[0].mxu0
    %v1074 = vpop.f32.mrb[0].mxu0
    %v1075 = vadd.f32 0.0, %v1074
    %v1076 = vpop.f32.mrb[0].mxu0
    %1077 = vmatprep.mubr.bf16.mxu0 0
    %1078 = vmatmul.mubr.bf16.gmra.mrb[0].mxu0 %v277
    %v1079 = vpop.f32.mrb[0].mxu0
    %v1080 = vadd.f32 0.0, %v1079
    %v1081 = vpop.f32.mrb[0].mxu0
    %v1082 = vpop.f32.mrb[0].mxu0
    %v1083 = vadd.f32 0.0, %v1082
    %v1084 = vpop.f32.mrb[0].mxu0
    %1085 = vmatprep.mubr.bf16.mxu0 0
    %1086 = vmatmul.mubr.bf16.gmra.mrb[0].mxu0 %v278
    %v1087 = vpop.f32.mrb[0].mxu0
    %v1088 = vadd.f32 0.0, %v1087
    %v1089 = vpop.f32.mrb[0].mxu0
    %v1090 = vpop.f32.mrb[0].mxu0
    %v1091 = vadd.f32 0.0, %v1090
    %v1092 = vpop.f32.mrb[0].mxu0
    %1093 = vmatprep.mubr.bf16.mxu0 0
    %1094 = vmatmul.mubr.bf16.gmra.mrb[0].mxu0 %v279
    %v1095 = vpop.f32.mrb[0].mxu0
    %v1096 = vadd.f32 0.0, %v1095
    %v1097 = vpop.f32.mrb[0].mxu0
    %v1098 = vpop.f32.mrb[0].mxu0
    %v1099 = vadd.f32 0.0, %v1098
    %v1100 = vpop.f32.mrb[0].mxu0
    %1101 = vmatprep.mubr.bf16.mxu0 0
    %1102 = vmatmul.mubr.bf16.gmra.mrb[0].mxu0 %v280
    %v1103 = vpop.f32.mrb[0].mxu0
    %v1104 = vadd.f32 0.0, %v1103
    %v1105 = vpop.f32.mrb[0].mxu0
    %v1106 = vpop.f32.mrb[0].mxu0
    %v1107 = vadd.f32 0.0, %v1106
    %v1108 = vpop.f32.mrb[0].mxu0
    %1109 = vmatprep.mubr.bf16.mxu0 0
    %1110 = vmatmul.mubr.bf16.gmra.mrb[0].mxu0 %v281
    %v1111 = vpop.f32.mrb[0].mxu0
    %v1112 = vadd.f32 0.0, %v1111
    %v1113 = vpop.f32.mrb[0].mxu0
    %v1114 = vpop.f32.mrb[0].mxu0
    %v1115 = vadd.f32 0.0, %v1114
    %v1116 = vpop.f32.mrb[0].mxu0
    %1117 = vmatprep.mubr.bf16.mxu0 0
    %1118 = vmatmul.mubr.bf16.gmra.mrb[0].mxu0 %v282
    %v1119 = vpop.f32.mrb[0].mxu0
    %v1120 = vadd.f32 0.0, %v1119
    %v1121 = vpop.f32.mrb[0].mxu0
    %v1122 = vpop.f32.mrb[0].mxu0
    %v1123 = vadd.f32 0.0, %v1122
    %v1124 = vpop.f32.mrb[0].mxu0
    %1125 = vmatprep.mubr.bf16.mxu0 0
    %1126 = vmatmul.mubr.bf16.gmra.mrb[0].mxu0 %v283
    %v1127 = vpop.f32.mrb[0].mxu0
    %v1128 = vadd.f32 0.0, %v1127
    %v1129 = vpop.f32.mrb[0].mxu0
    %v1130 = vpop.f32.mrb[0].mxu0
    %v1131 = vadd.f32 0.0, %v1130
    %v1132 = vpop.f32.mrb[0].mxu0
    %1133 = vmatprep.mubr.bf16.mxu0 0
    %1134 = vmatmul.mubr.bf16.gmra.mrb[0].mxu0 %v284
    %v1135 = vpop.f32.mrb[0].mxu0
    %v1136 = vadd.f32 0.0, %v1135
    %v1137 = vpop.f32.mrb[0].mxu0
    %v1138 = vpop.f32.mrb[0].mxu0
    %v1139 = vadd.f32 0.0, %v1138
    %v1140 = vpop.f32.mrb[0].mxu0
    %1141 = vmatprep.mubr.bf16.mxu0 0
    %1142 = vmatmul.mubr.bf16.gmra.mrb[0].mxu0 %v285
    %v1143 = vpop.f32.mrb[0].mxu0
    %v1144 = vadd.f32 0.0, %v1143
    %v1145 = vpop.f32.mrb[0].mxu0
    %v1146 = vpop.f32.mrb[0].mxu0
    %v1147 = vadd.f32 0.0, %v1146
    %v1148 = vpop.f32.mrb[0].mxu0
    %1149 = vmatprep.mubr.bf16.mxu0 0
    %1150 = vmatmul.mubr.bf16.gmra.mrb[0].mxu0 %v286
    %v1151 = vpop.f32.mrb[0].mxu0
    %v1152 = vadd.f32 0.0, %v1151
    %v1153 = vpop.f32.mrb[0].mxu0
    %v1154 = vpop.f32.mrb[0].mxu0
    %v1155 = vadd.f32 0.0, %v1154
    %v1156 = vpop.f32.mrb[0].mxu0
    %1157 = vmatprep.mubr.bf16.mxu0 0
    %1158 = vmatmul.mubr.bf16.gmra.mrb[0].mxu0 %v287
    %v1159 = vpop.f32.mrb[0].mxu0
    %v1160 = vadd.f32 0.0, %v1159
    %v1161 = vpop.f32.mrb[0].mxu0
    %v1162 = vpop.f32.mrb[0].mxu0
    %v1163 = vadd.f32 0.0, %v1162
    %v1164 = vpop.f32.mrb[0].mxu0
    %1165 = vmatprep.mubr.bf16.mxu0 0
    %1166 = vmatmul.mubr.bf16.gmra.mrb[0].mxu0 %v288
    %v1167 = vpop.f32.mrb[0].mxu0
    %v1168 = vadd.f32 0.0, %v1167
    %v1169 = vpop.f32.mrb[0].mxu0
    %v1170 = vpop.f32.mrb[0].mxu0
    %v1171 = vadd.f32 0.0, %v1170
    %v1172 = vpop.f32.mrb[0].mxu0
    %1173 = vmatprep.mubr.bf16.mxu0 0
    %1174 = vmatmul.mubr.bf16.gmra.mrb[0].mxu0 %v289
    %v1175 = vpop.f32.mrb[0].mxu0
    %v1176 = vadd.f32 0.0, %v1175
    %v1177 = vpop.f32.mrb[0].mxu0
    %v1178 = vpop.f32.mrb[0].mxu0
    %v1179 = vadd.f32 0.0, %v1178
    %v1180 = vpop.f32.mrb[0].mxu0
    %1181 = vmatprep.mubr.bf16.mxu0 0
    %1182 = vmatmul.mubr.bf16.gmra.mrb[0].mxu0 %v290
    %v1183 = vpop.f32.mrb[0].mxu0
    %v1184 = vadd.f32 0.0, %v1183
    %v1185 = vpop.f32.mrb[0].mxu0
    %v1186 = vpop.f32.mrb[0].mxu0
    %v1187 = vadd.f32 0.0, %v1186
    %v1188 = vpop.f32.mrb[0].mxu0
    %1189 = vmatprep.mubr.bf16.mxu0 0
    %1190 = vmatmul.mubr.bf16.gmra.mrb[0].mxu0 %v291
    %v1191 = vpop.f32.mrb[0].mxu0
    %v1192 = vadd.f32 0.0, %v1191
    %v1193 = vpop.f32.mrb[0].mxu0
    %v1194 = vpop.f32.mrb[0].mxu0
    %v1195 = vadd.f32 0.0, %v1194
    %v1196 = vpop.f32.mrb[0].mxu0
    %1197 = vmatprep.mubr.bf16.mxu0 0
    %1198 = vmatmul.mubr.bf16.gmra.mrb[0].mxu0 %v292
    %v1199 = vpop.f32.mrb[0].mxu0
    %v1200 = vadd.f32 0.0, %v1199
    %v1201 = vpop.f32.mrb[0].mxu0
    %v1202 = vpop.f32.mrb[0].mxu0
    %v1203 = vadd.f32 0.0, %v1202
    %v1204 = vpop.f32.mrb[0].mxu0
    %1205 = vmatprep.mubr.bf16.mxu0 0
    %1206 = vmatmul.mubr.bf16.gmra.mrb[0].mxu0 %v293
    %v1207 = vpop.f32.mrb[0].mxu0
    %v1208 = vadd.f32 0.0, %v1207
    %v1209 = vpop.f32.mrb[0].mxu0
    %v1210 = vpop.f32.mrb[0].mxu0
    %v1211 = vadd.f32 0.0, %v1210
    %v1212 = vpop.f32.mrb[0].mxu0
    %1213 = vmatprep.mubr.bf16.mxu0 0
    %1214 = vmatmul.mubr.bf16.gmra.mrb[0].mxu0 %v294
    %v1215 = vpop.f32.mrb[0].mxu0
    %v1216 = vadd.f32 0.0, %v1215
    %v1217 = vpop.f32.mrb[0].mxu0
    %v1218 = vpop.f32.mrb[0].mxu0
    %v1219 = vadd.f32 0.0, %v1218
    %v1220 = vpop.f32.mrb[0].mxu0
    %1221 = vdwg.mxu0
    %v1222 = vadd.f32 %v968, %v971
    %v1223 = vadd.f32 %v1222, %v976
    %v1224 = vadd.f32 %v1223, %v979
    %v1225 = vadd.f32 %v1224, %v984
    %v1226 = vadd.f32 %v1225, %v987
    %v1227 = vadd.f32 %v1226, %v992
    %v1228 = vadd.f32 %v1227, %v995
    %v1229 = vadd.f32 %v1228, %v1000
    %v1230 = vadd.f32 %v1229, %v1003
    %v1231 = vadd.f32 %v1230, %v1008
    %v1232 = vadd.f32 %v1231, %v1011
    %v1233 = vadd.f32 %v1232, %v1016
    %v1234 = vadd.f32 %v1233, %v1019
    %v1235 = vadd.f32 %v1234, %v1024
    %v1236 = vadd.f32 %v1235, %v1027
    %v1237 = vadd.f32 %v1236, %v1032
    %v1238 = vadd.f32 %v1237, %v1035
    %v1239 = vadd.f32 %v1238, %v1040
    %v1240 = vadd.f32 %v1239, %v1043
    %v1241 = vadd.f32 %v1240, %v1048
    %v1242 = vadd.f32 %v1241, %v1051
    %v1243 = vadd.f32 %v1242, %v1056
    %v1244 = vadd.f32 %v1243, %v1059
    %v1245 = vadd.f32 %v1244, %v1064
    %v1246 = vadd.f32 %v1245, %v1067
    %v1247 = vadd.f32 %v1246, %v1072
    %v1248 = vadd.f32 %v1247, %v1075
    %v1249 = vadd.f32 %v1248, %v1080
    %v1250 = vadd.f32 %v1249, %v1083
    %v1251 = vadd.f32 %v1250, %v1088
    %v1252 = vadd.f32 %v1251, %v1091
    %v1253 = vadd.f32 %v1252, %v1096
    %v1254 = vadd.f32 %v1253, %v1099
    %v1255 = vadd.f32 %v1254, %v1104
    %v1256 = vadd.f32 %v1255, %v1107
    %v1257 = vadd.f32 %v1256, %v1112
    %v1258 = vadd.f32 %v1257, %v1115
    %v1259 = vadd.f32 %v1258, %v1120
    %v1260 = vadd.f32 %v1259, %v1123
    %v1261 = vadd.f32 %v1260, %v1128
    %v1262 = vadd.f32 %v1261, %v1131
    %v1263 = vadd.f32 %v1262, %v1136
    %v1264 = vadd.f32 %v1263, %v1139
    %v1265 = vadd.f32 %v1264, %v1144
    %v1266 = vadd.f32 %v1265, %v1147
    %v1267 = vadd.f32 %v1266, %v1152
    %v1268 = vadd.f32 %v1267, %v1155
    %v1269 = vadd.f32 %v1268, %v1160
    %v1270 = vadd.f32 %v1269, %v1163
    %v1271 = vadd.f32 %v1270, %v1168
    %v1272 = vadd.f32 %v1271, %v1171
    %v1273 = vadd.f32 %v1272, %v1176
    %v1274 = vadd.f32 %v1273, %v1179
    %v1275 = vadd.f32 %v1274, %v1184
    %v1276 = vadd.f32 %v1275, %v1187
    %v1277 = vadd.f32 %v1276, %v1192
    %v1278 = vadd.f32 %v1277, %v1195
    %v1279 = vadd.f32 %v1278, %v1200
    %v1280 = vadd.f32 %v1279, %v1203
    %v1281 = vadd.f32 %v1280, %v1208
    %v1282 = vadd.f32 %v1281, %v1211
    %v1283 = vadd.f32 %v1282, %v1216
    %v1284 = vadd.f32 %v1283, %v1219
    %v1285 = vrot.slane %v1284, 4
    %v1286 = vadd.f32 %v1284, %v1285
    %v1287 = vrot.slane %v1286, 2
    %v1288 = vadd.f32 %v1286, %v1287
    %v1289 = vrot.slane %v1288, 1
    %v1290 = vadd.f32 %v1288, %v1289
    %v1291 = vadd.f32 %v733, %v1290
    %v1292 = vmul.f32 %v968, %v968
    %v1293 = vmul.f32 %v971, %v971
    %v1294 = vmul.f32 %v976, %v976
    %v1295 = vmul.f32 %v979, %v979
    %v1296 = vmul.f32 %v984, %v984
    %v1297 = vmul.f32 %v987, %v987
    %v1298 = vmul.f32 %v992, %v992
    %v1299 = vmul.f32 %v995, %v995
    %v1300 = vmul.f32 %v1000, %v1000
    %v1301 = vmul.f32 %v1003, %v1003
    %v1302 = vmul.f32 %v1008, %v1008
    %v1303 = vmul.f32 %v1011, %v1011
    %v1304 = vmul.f32 %v1016, %v1016
    %v1305 = vmul.f32 %v1019, %v1019
    %v1306 = vmul.f32 %v1024, %v1024
    %v1307 = vmul.f32 %v1027, %v1027
    %v1308 = vmul.f32 %v1032, %v1032
    %v1309 = vmul.f32 %v1035, %v1035
    %v1310 = vmul.f32 %v1040, %v1040
    %v1311 = vmul.f32 %v1043, %v1043
    %v1312 = vmul.f32 %v1048, %v1048
    %v1313 = vmul.f32 %v1051, %v1051
    %v1314 = vmul.f32 %v1056, %v1056
    %v1315 = vmul.f32 %v1059, %v1059
    %v1316 = vmul.f32 %v1064, %v1064
    %v1317 = vmul.f32 %v1067, %v1067
    %v1318 = vmul.f32 %v1072, %v1072
    %v1319 = vmul.f32 %v1075, %v1075
    %v1320 = vmul.f32 %v1080, %v1080
    %v1321 = vmul.f32 %v1083, %v1083
    %v1322 = vmul.f32 %v1088, %v1088
    %v1323 = vmul.f32 %v1091, %v1091
    %v1324 = vmul.f32 %v1096, %v1096
    %v1325 = vmul.f32 %v1099, %v1099
    %v1326 = vmul.f32 %v1104, %v1104
    %v1327 = vmul.f32 %v1107, %v1107
    %v1328 = vmul.f32 %v1112, %v1112
    %v1329 = vmul.f32 %v1115, %v1115
    %v1330 = vmul.f32 %v1120, %v1120
    %v1331 = vmul.f32 %v1123, %v1123
    %v1332 = vmul.f32 %v1128, %v1128
    %v1333 = vmul.f32 %v1131, %v1131
    %v1334 = vmul.f32 %v1136, %v1136
    %v1335 = vmul.f32 %v1139, %v1139
    %v1336 = vmul.f32 %v1144, %v1144
    %v1337 = vmul.f32 %v1147, %v1147
    %v1338 = vmul.f32 %v1152, %v1152
    %v1339 = vmul.f32 %v1155, %v1155
    %v1340 = vmul.f32 %v1160, %v1160
    %v1341 = vmul.f32 %v1163, %v1163
    %v1342 = vmul.f32 %v1168, %v1168
    %v1343 = vmul.f32 %v1171, %v1171
    %v1344 = vmul.f32 %v1176, %v1176
    %v1345 = vmul.f32 %v1179, %v1179
    %v1346 = vmul.f32 %v1184, %v1184
    %v1347 = vmul.f32 %v1187, %v1187
    %v1348 = vmul.f32 %v1192, %v1192
    %v1349 = vmul.f32 %v1195, %v1195
    %v1350 = vmul.f32 %v1200, %v1200
    %v1351 = vmul.f32 %v1203, %v1203
    %v1352 = vmul.f32 %v1208, %v1208
    %v1353 = vmul.f32 %v1211, %v1211
    %v1354 = vmul.f32 %v1216, %v1216
    %v1355 = vmul.f32 %v1219, %v1219
    %v1356 = vadd.f32 %v1292, %v1293
    %v1357 = vadd.f32 %v1356, %v1294
    %v1358 = vadd.f32 %v1357, %v1295
    %v1359 = vadd.f32 %v1358, %v1296
    %v1360 = vadd.f32 %v1359, %v1297
    %v1361 = vadd.f32 %v1360, %v1298
    %v1362 = vadd.f32 %v1361, %v1299
    %v1363 = vadd.f32 %v1362, %v1300
    %v1364 = vadd.f32 %v1363, %v1301
    %v1365 = vadd.f32 %v1364, %v1302
    %v1366 = vadd.f32 %v1365, %v1303
    %v1367 = vadd.f32 %v1366, %v1304
    %v1368 = vadd.f32 %v1367, %v1305
    %v1369 = vadd.f32 %v1368, %v1306
    %v1370 = vadd.f32 %v1369, %v1307
    %v1371 = vadd.f32 %v1370, %v1308
    %v1372 = vadd.f32 %v1371, %v1309
    %v1373 = vadd.f32 %v1372, %v1310
    %v1374 = vadd.f32 %v1373, %v1311
    %v1375 = vadd.f32 %v1374, %v1312
    %v1376 = vadd.f32 %v1375, %v1313
    %v1377 = vadd.f32 %v1376, %v1314
    %v1378 = vadd.f32 %v1377, %v1315
    %v1379 = vadd.f32 %v1378, %v1316
    %v1380 = vadd.f32 %v1379, %v1317
    %v1381 = vadd.f32 %v1380, %v1318
    %v1382 = vadd.f32 %v1381, %v1319
    %v1383 = vadd.f32 %v1382, %v1320
    %v1384 = vadd.f32 %v1383, %v1321
    %v1385 = vadd.f32 %v1384, %v1322
    %v1386 = vadd.f32 %v1385, %v1323
    %v1387 = vadd.f32 %v1386, %v1324
    %v1388 = vadd.f32 %v1387, %v1325
    %v1389 = vadd.f32 %v1388, %v1326
    %v1390 = vadd.f32 %v1389, %v1327
    %v1391 = vadd.f32 %v1390, %v1328
    %v1392 = vadd.f32 %v1391, %v1329
    %v1393 = vadd.f32 %v1392, %v1330
    %v1394 = vadd.f32 %v1393, %v1331
    %v1395 = vadd.f32 %v1394, %v1332
    %v1396 = vadd.f32 %v1395, %v1333
    %v1397 = vadd.f32 %v1396, %v1334
    %v1398 = vadd.f32 %v1397, %v1335
    %v1399 = vadd.f32 %v1398, %v1336
    %v1400 = vadd.f32 %v1399, %v1337
    %v1401 = vadd.f32 %v1400, %v1338
    %v1402 = vadd.f32 %v1401, %v1339
    %v1403 = vadd.f32 %v1402, %v1340
    %v1404 = vadd.f32 %v1403, %v1341
    %v1405 = vadd.f32 %v1404, %v1342
    %v1406 = vadd.f32 %v1405, %v1343
    %v1407 = vadd.f32 %v1406, %v1344
    %v1408 = vadd.f32 %v1407, %v1345
    %v1409 = vadd.f32 %v1408, %v1346
    %v1410 = vadd.f32 %v1409, %v1347
    %v1411 = vadd.f32 %v1410, %v1348
    %v1412 = vadd.f32 %v1411, %v1349
    %v1413 = vadd.f32 %v1412, %v1350
    %v1414 = vadd.f32 %v1413, %v1351
    %v1415 = vadd.f32 %v1414, %v1352
    %v1416 = vadd.f32 %v1415, %v1353
    %v1417 = vadd.f32 %v1416, %v1354
    %v1418 = vadd.f32 %v1417, %v1355
    %v1419 = vrot.slane %v1418, 4
    %v1420 = vadd.f32 %v1418, %v1419
    %v1421 = vrot.slane %v1420, 2
    %v1422 = vadd.f32 %v1420, %v1421
    %v1423 = vrot.slane %v1422, 1
    %v1424 = vadd.f32 %v1422, %v1423
    %v1425 = vadd.f32 %v867, %v1424
    %s1426 = scalar_lea.vmem [#allocation2], 128
    %v1427 = vld [vmem:[%s1426] sm:$0xf]
    %v1428 = vld [vmem:[%s1426 + $0x4] sm:$0xf]
    %v1429 = vld [vmem:[%s1426 + $0x8] sm:$0xf]
    %v1430 = vld [vmem:[%s1426 + $0xc] sm:$0xf]
    %v1431 = vld [vmem:[%s1426 + $0x10] sm:$0xf]
    %v1432 = vld [vmem:[%s1426 + $0x14] sm:$0xf]
    %v1433 = vld [vmem:[%s1426 + $0x18] sm:$0xf]
    %v1434 = vld [vmem:[%s1426 + $0x1c] sm:$0xf]
    %v1435 = vld [vmem:[%s1426 + $0x20] sm:$0xf]
    %v1436 = vld [vmem:[%s1426 + $0x24] sm:$0xf]
    %v1437 = vld [vmem:[%s1426 + $0x28] sm:$0xf]
    %v1438 = vld [vmem:[%s1426 + $0x2c] sm:$0xf]
    %v1439 = vld [vmem:[%s1426 + $0x30] sm:$0xf]
    %v1440 = vld [vmem:[%s1426 + $0x34] sm:$0xf]
    %v1441 = vld [vmem:[%s1426 + $0x38] sm:$0xf]
    %v1442 = vld [vmem:[%s1426 + $0x3c] sm:$0xf]
    %v1459 = vunpack.c.l.b16 %v1427
    %v1460 = vunpack.c.l.b16 %v1428
    %v1461 = vunpack.c.l.b16 %v1429
    %v1462 = vunpack.c.l.b16 %v1430
    %v1463 = vunpack.c.l.b16 %v1431
    %v1464 = vunpack.c.l.b16 %v1432
    %v1465 = vunpack.c.l.b16 %v1433
    %v1466 = vunpack.c.l.b16 %v1434
    %v1467 = vunpack.c.l.b16 %v1435
    %v1468 = vunpack.c.l.b16 %v1436
    %v1469 = vunpack.c.l.b16 %v1437
    %v1470 = vunpack.c.l.b16 %v1438
    %v1471 = vunpack.c.l.b16 %v1439
    %v1472 = vunpack.c.l.b16 %v1440
    %v1473 = vunpack.c.l.b16 %v1441
    %v1474 = vunpack.c.l.b16 %v1442
    %v1475 = vpack.c.b16 %v1460, %v1459
    %v1476 = vpack.c.b16 %v1462, %v1461
    %v1477 = vpack.c.b16 %v1464, %v1463
    %v1478 = vpack.c.b16 %v1466, %v1465
    %v1479 = vpack.c.b16 %v1468, %v1467
    %v1480 = vpack.c.b16 %v1470, %v1469
    %v1481 = vpack.c.b16 %v1472, %v1471
    %v1482 = vpack.c.b16 %v1474, %v1473
    %1491 = vmatprep.subr.bf16.mxu0 0
    %1492 = vmatpush1.bf16.msra.mxu0 %v1475
    %1493 = vmatprep.subr.bf16.mxu0 0
    %1494 = vmatpush1.bf16.msra.mxu0 %v1476
    %1495 = vmatprep.subr.bf16.mxu0 0
    %1496 = vmatpush1.bf16.msra.mxu0 %v1477
    %1497 = vmatprep.subr.bf16.mxu0 0
    %1498 = vmatpush1.bf16.msra.mxu0 %v1478
    %1499 = vmatprep.subr.bf16.mxu0 0
    %1500 = vmatpush1.bf16.msra.mxu0 %v1479
    %1501 = vmatprep.subr.bf16.mxu0 0
    %1502 = vmatpush1.bf16.msra.mxu0 %v1480
    %1503 = vmatprep.subr.bf16.mxu0 0
    %1504 = vmatpush1.bf16.msra.mxu0 %v1481
    %1505 = vmatprep.subr.bf16.mxu0 0
    %1506 = vmatpush1.bf16.msra.mxu0 %v1482
    %1507 = vmatprep.subr.bf16.mxu0 0
    %1508 = vmatpush1.bf16.msra.mxu0 0
    %1509 = vmatprep.subr.bf16.mxu0 0
    %1510 = vmatpush1.bf16.msra.mxu0 0
    %1511 = vmatprep.subr.bf16.mxu0 0
    %1512 = vmatpush1.bf16.msra.mxu0 0
    %1513 = vmatprep.subr.bf16.mxu0 0
    %1514 = vmatpush1.bf16.msra.mxu0 0
    %1515 = vmatprep.subr.bf16.mxu0 0
    %1516 = vmatpush1.bf16.msra.mxu0 0
    %1517 = vmatprep.subr.bf16.mxu0 0
    %1518 = vmatpush1.bf16.msra.mxu0 0
    %1519 = vmatprep.subr.bf16.mxu0 0
    %1520 = vmatpush1.bf16.msra.mxu0 0
    %1521 = vmatprep.subr.bf16.mxu0 0
    %1522 = vmatpush1.bf16.msra.mxu0 0
    %1523 = vmatprep.mubr.bf16.mxu0 0
    %1524 = vmatmul.mubr.bf16.gmra.mrb[0].mxu0 %v263
    %v1525 = vpop.f32.mrb[0].mxu0
    %v1526 = vadd.f32 0.0, %v1525
    %v1527 = vpop.f32.mrb[0].mxu0
    %v1528 = vpop.f32.mrb[0].mxu0
    %v1529 = vadd.f32 0.0, %v1528
    %v1530 = vpop.f32.mrb[0].mxu0
    %1531 = vmatprep.mubr.bf16.mxu0 0
    %1532 = vmatmul.mubr.bf16.gmra.mrb[0].mxu0 %v264
    %v1533 = vpop.f32.mrb[0].mxu0
    %v1534 = vadd.f32 0.0, %v1533
    %v1535 = vpop.f32.mrb[0].mxu0
    %v1536 = vpop.f32.mrb[0].mxu0
    %v1537 = vadd.f32 0.0, %v1536
    %v1538 = vpop.f32.mrb[0].mxu0
    %1539 = vmatprep.mubr.bf16.mxu0 0
    %1540 = vmatmul.mubr.bf16.gmra.mrb[0].mxu0 %v265
    %v1541 = vpop.f32.mrb[0].mxu0
    %v1542 = vadd.f32 0.0, %v1541
    %v1543 = vpop.f32.mrb[0].mxu0
    %v1544 = vpop.f32.mrb[0].mxu0
    %v1545 = vadd.f32 0.0, %v1544
    %v1546 = vpop.f32.mrb[0].mxu0
    %1547 = vmatprep.mubr.bf16.mxu0 0
    %1548 = vmatmul.mubr.bf16.gmra.mrb[0].mxu0 %v266
    %v1549 = vpop.f32.mrb[0].mxu0
    %v1550 = vadd.f32 0.0, %v1549
    %v1551 = vpop.f32.mrb[0].mxu0
    %v1552 = vpop.f32.mrb[0].mxu0
    %v1553 = vadd.f32 0.0, %v1552
    %v1554 = vpop.f32.mrb[0].mxu0
    %1555 = vmatprep.mubr.bf16.mxu0 0
    %1556 = vmatmul.mubr.bf16.gmra.mrb[0].mxu0 %v267
    %v1557 = vpop.f32.mrb[0].mxu0
    %v1558 = vadd.f32 0.0, %v1557
    %v1559 = vpop.f32.mrb[0].mxu0
    %v1560 = vpop.f32.mrb[0].mxu0
    %v1561 = vadd.f32 0.0, %v1560
    %v1562 = vpop.f32.mrb[0].mxu0
    %1563 = vmatprep.mubr.bf16.mxu0 0
    %1564 = vmatmul.mubr.bf16.gmra.mrb[0].mxu0 %v268
    %v1565 = vpop.f32.mrb[0].mxu0
    %v1566 = vadd.f32 0.0, %v1565
    %v1567 = vpop.f32.mrb[0].mxu0
    %v1568 = vpop.f32.mrb[0].mxu0
    %v1569 = vadd.f32 0.0, %v1568
    %v1570 = vpop.f32.mrb[0].mxu0
    %1571 = vmatprep.mubr.bf16.mxu0 0
    %1572 = vmatmul.mubr.bf16.gmra.mrb[0].mxu0 %v269
    %v1573 = vpop.f32.mrb[0].mxu0
    %v1574 = vadd.f32 0.0, %v1573
    %v1575 = vpop.f32.mrb[0].mxu0
    %v1576 = vpop.f32.mrb[0].mxu0
    %v1577 = vadd.f32 0.0, %v1576
    %v1578 = vpop.f32.mrb[0].mxu0
    %1579 = vmatprep.mubr.bf16.mxu0 0
    %1580 = vmatmul.mubr.bf16.gmra.mrb[0].mxu0 %v270
    %v1581 = vpop.f32.mrb[0].mxu0
    %v1582 = vadd.f32 0.0, %v1581
    %v1583 = vpop.f32.mrb[0].mxu0
    %v1584 = vpop.f32.mrb[0].mxu0
    %v1585 = vadd.f32 0.0, %v1584
    %v1586 = vpop.f32.mrb[0].mxu0
    %1587 = vmatprep.mubr.bf16.mxu0 0
    %1588 = vmatmul.mubr.bf16.gmra.mrb[0].mxu0 %v271
    %v1589 = vpop.f32.mrb[0].mxu0
    %v1590 = vadd.f32 0.0, %v1589
    %v1591 = vpop.f32.mrb[0].mxu0
    %v1592 = vpop.f32.mrb[0].mxu0
    %v1593 = vadd.f32 0.0, %v1592
    %v1594 = vpop.f32.mrb[0].mxu0
    %1595 = vmatprep.mubr.bf16.mxu0 0
    %1596 = vmatmul.mubr.bf16.gmra.mrb[0].mxu0 %v272
    %v1597 = vpop.f32.mrb[0].mxu0
    %v1598 = vadd.f32 0.0, %v1597
    %v1599 = vpop.f32.mrb[0].mxu0
    %v1600 = vpop.f32.mrb[0].mxu0
    %v1601 = vadd.f32 0.0, %v1600
    %v1602 = vpop.f32.mrb[0].mxu0
    %1603 = vmatprep.mubr.bf16.mxu0 0
    %1604 = vmatmul.mubr.bf16.gmra.mrb[0].mxu0 %v273
    %v1605 = vpop.f32.mrb[0].mxu0
    %v1606 = vadd.f32 0.0, %v1605
    %v1607 = vpop.f32.mrb[0].mxu0
    %v1608 = vpop.f32.mrb[0].mxu0
    %v1609 = vadd.f32 0.0, %v1608
    %v1610 = vpop.f32.mrb[0].mxu0
    %1611 = vmatprep.mubr.bf16.mxu0 0
    %1612 = vmatmul.mubr.bf16.gmra.mrb[0].mxu0 %v274
    %v1613 = vpop.f32.mrb[0].mxu0
    %v1614 = vadd.f32 0.0, %v1613
    %v1615 = vpop.f32.mrb[0].mxu0
    %v1616 = vpop.f32.mrb[0].mxu0
    %v1617 = vadd.f32 0.0, %v1616
    %v1618 = vpop.f32.mrb[0].mxu0
    %1619 = vmatprep.mubr.bf16.mxu0 0
    %1620 = vmatmul.mubr.bf16.gmra.mrb[0].mxu0 %v275
    %v1621 = vpop.f32.mrb[0].mxu0
    %v1622 = vadd.f32 0.0, %v1621
    %v1623 = vpop.f32.mrb[0].mxu0
    %v1624 = vpop.f32.mrb[0].mxu0
    %v1625 = vadd.f32 0.0, %v1624
    %v1626 = vpop.f32.mrb[0].mxu0
    %1627 = vmatprep.mubr.bf16.mxu0 0
    %1628 = vmatmul.mubr.bf16.gmra.mrb[0].mxu0 %v276
    %v1629 = vpop.f32.mrb[0].mxu0
    %v1630 = vadd.f32 0.0, %v1629
    %v1631 = vpop.f32.mrb[0].mxu0
    %v1632 = vpop.f32.mrb[0].mxu0
    %v1633 = vadd.f32 0.0, %v1632
    %v1634 = vpop.f32.mrb[0].mxu0
    %1635 = vmatprep.mubr.bf16.mxu0 0
    %1636 = vmatmul.mubr.bf16.gmra.mrb[0].mxu0 %v277
    %v1637 = vpop.f32.mrb[0].mxu0
    %v1638 = vadd.f32 0.0, %v1637
    %v1639 = vpop.f32.mrb[0].mxu0
    %v1640 = vpop.f32.mrb[0].mxu0
    %v1641 = vadd.f32 0.0, %v1640
    %v1642 = vpop.f32.mrb[0].mxu0
    %1643 = vmatprep.mubr.bf16.mxu0 0
    %1644 = vmatmul.mubr.bf16.gmra.mrb[0].mxu0 %v278
    %v1645 = vpop.f32.mrb[0].mxu0
    %v1646 = vadd.f32 0.0, %v1645
    %v1647 = vpop.f32.mrb[0].mxu0
    %v1648 = vpop.f32.mrb[0].mxu0
    %v1649 = vadd.f32 0.0, %v1648
    %v1650 = vpop.f32.mrb[0].mxu0
    %1651 = vmatprep.mubr.bf16.mxu0 0
    %1652 = vmatmul.mubr.bf16.gmra.mrb[0].mxu0 %v279
    %v1653 = vpop.f32.mrb[0].mxu0
    %v1654 = vadd.f32 0.0, %v1653
    %v1655 = vpop.f32.mrb[0].mxu0
    %v1656 = vpop.f32.mrb[0].mxu0
    %v1657 = vadd.f32 0.0, %v1656
    %v1658 = vpop.f32.mrb[0].mxu0
    %1659 = vmatprep.mubr.bf16.mxu0 0
    %1660 = vmatmul.mubr.bf16.gmra.mrb[0].mxu0 %v280
    %v1661 = vpop.f32.mrb[0].mxu0
    %v1662 = vadd.f32 0.0, %v1661
    %v1663 = vpop.f32.mrb[0].mxu0
    %v1664 = vpop.f32.mrb[0].mxu0
    %v1665 = vadd.f32 0.0, %v1664
    %v1666 = vpop.f32.mrb[0].mxu0
    %1667 = vmatprep.mubr.bf16.mxu0 0
    %1668 = vmatmul.mubr.bf16.gmra.mrb[0].mxu0 %v281
    %v1669 = vpop.f32.mrb[0].mxu0
    %v1670 = vadd.f32 0.0, %v1669
    %v1671 = vpop.f32.mrb[0].mxu0
    %v1672 = vpop.f32.mrb[0].mxu0
    %v1673 = vadd.f32 0.0, %v1672
    %v1674 = vpop.f32.mrb[0].mxu0
    %1675 = vmatprep.mubr.bf16.mxu0 0
    %1676 = vmatmul.mubr.bf16.gmra.mrb[0].mxu0 %v282
    %v1677 = vpop.f32.mrb[0].mxu0
    %v1678 = vadd.f32 0.0, %v1677
    %v1679 = vpop.f32.mrb[0].mxu0
    %v1680 = vpop.f32.mrb[0].mxu0
    %v1681 = vadd.f32 0.0, %v1680
    %v1682 = vpop.f32.mrb[0].mxu0
    %1683 = vmatprep.mubr.bf16.mxu0 0
    %1684 = vmatmul.mubr.bf16.gmra.mrb[0].mxu0 %v283
    %v1685 = vpop.f32.mrb[0].mxu0
    %v1686 = vadd.f32 0.0, %v1685
    %v1687 = vpop.f32.mrb[0].mxu0
    %v1688 = vpop.f32.mrb[0].mxu0
    %v1689 = vadd.f32 0.0, %v1688
    %v1690 = vpop.f32.mrb[0].mxu0
    %1691 = vmatprep.mubr.bf16.mxu0 0
    %1692 = vmatmul.mubr.bf16.gmra.mrb[0].mxu0 %v284
    %v1693 = vpop.f32.mrb[0].mxu0
    %v1694 = vadd.f32 0.0, %v1693
    %v1695 = vpop.f32.mrb[0].mxu0
    %v1696 = vpop.f32.mrb[0].mxu0
    %v1697 = vadd.f32 0.0, %v1696
    %v1698 = vpop.f32.mrb[0].mxu0
    %1699 = vmatprep.mubr.bf16.mxu0 0
    %1700 = vmatmul.mubr.bf16.gmra.mrb[0].mxu0 %v285
    %v1701 = vpop.f32.mrb[0].mxu0
    %v1702 = vadd.f32 0.0, %v1701
    %v1703 = vpop.f32.mrb[0].mxu0
    %v1704 = vpop.f32.mrb[0].mxu0
    %v1705 = vadd.f32 0.0, %v1704
    %v1706 = vpop.f32.mrb[0].mxu0
    %1707 = vmatprep.mubr.bf16.mxu0 0
    %1708 = vmatmul.mubr.bf16.gmra.mrb[0].mxu0 %v286
    %v1709 = vpop.f32.mrb[0].mxu0
    %v1710 = vadd.f32 0.0, %v1709
    %v1711 = vpop.f32.mrb[0].mxu0
    %v1712 = vpop.f32.mrb[0].mxu0
    %v1713 = vadd.f32 0.0, %v1712
    %v1714 = vpop.f32.mrb[0].mxu0
    %1715 = vmatprep.mubr.bf16.mxu0 0
    %1716 = vmatmul.mubr.bf16.gmra.mrb[0].mxu0 %v287
    %v1717 = vpop.f32.mrb[0].mxu0
    %v1718 = vadd.f32 0.0, %v1717
    %v1719 = vpop.f32.mrb[0].mxu0
    %v1720 = vpop.f32.mrb[0].mxu0
    %v1721 = vadd.f32 0.0, %v1720
    %v1722 = vpop.f32.mrb[0].mxu0
    %1723 = vmatprep.mubr.bf16.mxu0 0
    %1724 = vmatmul.mubr.bf16.gmra.mrb[0].mxu0 %v288
    %v1725 = vpop.f32.mrb[0].mxu0
    %v1726 = vadd.f32 0.0, %v1725
    %v1727 = vpop.f32.mrb[0].mxu0
    %v1728 = vpop.f32.mrb[0].mxu0
    %v1729 = vadd.f32 0.0, %v1728
    %v1730 = vpop.f32.mrb[0].mxu0
    %1731 = vmatprep.mubr.bf16.mxu0 0
    %1732 = vmatmul.mubr.bf16.gmra.mrb[0].mxu0 %v289
    %v1733 = vpop.f32.mrb[0].mxu0
    %v1734 = vadd.f32 0.0, %v1733
    %v1735 = vpop.f32.mrb[0].mxu0
    %v1736 = vpop.f32.mrb[0].mxu0
    %v1737 = vadd.f32 0.0, %v1736
    %v1738 = vpop.f32.mrb[0].mxu0
    %1739 = vmatprep.mubr.bf16.mxu0 0
    %1740 = vmatmul.mubr.bf16.gmra.mrb[0].mxu0 %v290
    %v1741 = vpop.f32.mrb[0].mxu0
    %v1742 = vadd.f32 0.0, %v1741
    %v1743 = vpop.f32.mrb[0].mxu0
    %v1744 = vpop.f32.mrb[0].mxu0
    %v1745 = vadd.f32 0.0, %v1744
    %v1746 = vpop.f32.mrb[0].mxu0
    %1747 = vmatprep.mubr.bf16.mxu0 0
    %1748 = vmatmul.mubr.bf16.gmra.mrb[0].mxu0 %v291
    %v1749 = vpop.f32.mrb[0].mxu0
    %v1750 = vadd.f32 0.0, %v1749
    %v1751 = vpop.f32.mrb[0].mxu0
    %v1752 = vpop.f32.mrb[0].mxu0
    %v1753 = vadd.f32 0.0, %v1752
    %v1754 = vpop.f32.mrb[0].mxu0
    %1755 = vmatprep.mubr.bf16.mxu0 0
    %1756 = vmatmul.mubr.bf16.gmra.mrb[0].mxu0 %v292
    %v1757 = vpop.f32.mrb[0].mxu0
    %v1758 = vadd.f32 0.0, %v1757
    %v1759 = vpop.f32.mrb[0].mxu0
    %v1760 = vpop.f32.mrb[0].mxu0
    %v1761 = vadd.f32 0.0, %v1760
    %v1762 = vpop.f32.mrb[0].mxu0
    %1763 = vmatprep.mubr.bf16.mxu0 0
    %1764 = vmatmul.mubr.bf16.gmra.mrb[0].mxu0 %v293
    %v1765 = vpop.f32.mrb[0].mxu0
    %v1766 = vadd.f32 0.0, %v1765
    %v1767 = vpop.f32.mrb[0].mxu0
    %v1768 = vpop.f32.mrb[0].mxu0
    %v1769 = vadd.f32 0.0, %v1768
    %v1770 = vpop.f32.mrb[0].mxu0
    %1771 = vmatprep.mubr.bf16.mxu0 0
    %1772 = vmatmul.mubr.bf16.gmra.mrb[0].mxu0 %v294
    %v1773 = vpop.f32.mrb[0].mxu0
    %v1774 = vadd.f32 0.0, %v1773
    %v1775 = vpop.f32.mrb[0].mxu0
    %v1776 = vpop.f32.mrb[0].mxu0
    %v1777 = vadd.f32 0.0, %v1776
    %v1778 = vpop.f32.mrb[0].mxu0
    %1779 = vdwg.mxu0
    %v1780 = vadd.f32 %v1526, %v1529
    %v1781 = vadd.f32 %v1780, %v1534
    %v1782 = vadd.f32 %v1781, %v1537
    %v1783 = vadd.f32 %v1782, %v1542
    %v1784 = vadd.f32 %v1783, %v1545
    %v1785 = vadd.f32 %v1784, %v1550
    %v1786 = vadd.f32 %v1785, %v1553
    %v1787 = vadd.f32 %v1786, %v1558
    %v1788 = vadd.f32 %v1787, %v1561
    %v1789 = vadd.f32 %v1788, %v1566
    %v1790 = vadd.f32 %v1789, %v1569
    %v1791 = vadd.f32 %v1790, %v1574
    %v1792 = vadd.f32 %v1791, %v1577
    %v1793 = vadd.f32 %v1792, %v1582
    %v1794 = vadd.f32 %v1793, %v1585
    %v1795 = vadd.f32 %v1794, %v1590
    %v1796 = vadd.f32 %v1795, %v1593
    %v1797 = vadd.f32 %v1796, %v1598
    %v1798 = vadd.f32 %v1797, %v1601
    %v1799 = vadd.f32 %v1798, %v1606
    %v1800 = vadd.f32 %v1799, %v1609
    %v1801 = vadd.f32 %v1800, %v1614
    %v1802 = vadd.f32 %v1801, %v1617
    %v1803 = vadd.f32 %v1802, %v1622
    %v1804 = vadd.f32 %v1803, %v1625
    %v1805 = vadd.f32 %v1804, %v1630
    %v1806 = vadd.f32 %v1805, %v1633
    %v1807 = vadd.f32 %v1806, %v1638
    %v1808 = vadd.f32 %v1807, %v1641
    %v1809 = vadd.f32 %v1808, %v1646
    %v1810 = vadd.f32 %v1809, %v1649
    %v1811 = vadd.f32 %v1810, %v1654
    %v1812 = vadd.f32 %v1811, %v1657
    %v1813 = vadd.f32 %v1812, %v1662
    %v1814 = vadd.f32 %v1813, %v1665
    %v1815 = vadd.f32 %v1814, %v1670
    %v1816 = vadd.f32 %v1815, %v1673
    %v1817 = vadd.f32 %v1816, %v1678
    %v1818 = vadd.f32 %v1817, %v1681
    %v1819 = vadd.f32 %v1818, %v1686
    %v1820 = vadd.f32 %v1819, %v1689
    %v1821 = vadd.f32 %v1820, %v1694
    %v1822 = vadd.f32 %v1821, %v1697
    %v1823 = vadd.f32 %v1822, %v1702
    %v1824 = vadd.f32 %v1823, %v1705
    %v1825 = vadd.f32 %v1824, %v1710
    %v1826 = vadd.f32 %v1825, %v1713
    %v1827 = vadd.f32 %v1826, %v1718
    %v1828 = vadd.f32 %v1827, %v1721
    %v1829 = vadd.f32 %v1828, %v1726
    %v1830 = vadd.f32 %v1829, %v1729
    %v1831 = vadd.f32 %v1830, %v1734
    %v1832 = vadd.f32 %v1831, %v1737
    %v1833 = vadd.f32 %v1832, %v1742
    %v1834 = vadd.f32 %v1833, %v1745
    %v1835 = vadd.f32 %v1834, %v1750
    %v1836 = vadd.f32 %v1835, %v1753
    %v1837 = vadd.f32 %v1836, %v1758
    %v1838 = vadd.f32 %v1837, %v1761
    %v1839 = vadd.f32 %v1838, %v1766
    %v1840 = vadd.f32 %v1839, %v1769
    %v1841 = vadd.f32 %v1840, %v1774
    %v1842 = vadd.f32 %v1841, %v1777
    %v1843 = vrot.slane %v1842, 4
    %v1844 = vadd.f32 %v1842, %v1843
    %v1845 = vrot.slane %v1844, 2
    %v1846 = vadd.f32 %v1844, %v1845
    %v1847 = vrot.slane %v1846, 1
    %v1848 = vadd.f32 %v1846, %v1847
    %v1849 = vadd.f32 %v1291, %v1848
    %v1850 = vmul.f32 %v1526, %v1526
    %v1851 = vmul.f32 %v1529, %v1529
    %v1852 = vmul.f32 %v1534, %v1534
    %v1853 = vmul.f32 %v1537, %v1537
    %v1854 = vmul.f32 %v1542, %v1542
    %v1855 = vmul.f32 %v1545, %v1545
    %v1856 = vmul.f32 %v1550, %v1550
    %v1857 = vmul.f32 %v1553, %v1553
    %v1858 = vmul.f32 %v1558, %v1558
    %v1859 = vmul.f32 %v1561, %v1561
    %v1860 = vmul.f32 %v1566, %v1566
    %v1861 = vmul.f32 %v1569, %v1569
    %v1862 = vmul.f32 %v1574, %v1574
    %v1863 = vmul.f32 %v1577, %v1577
    %v1864 = vmul.f32 %v1582, %v1582
    %v1865 = vmul.f32 %v1585, %v1585
    %v1866 = vmul.f32 %v1590, %v1590
    %v1867 = vmul.f32 %v1593, %v1593
    %v1868 = vmul.f32 %v1598, %v1598
    %v1869 = vmul.f32 %v1601, %v1601
    %v1870 = vmul.f32 %v1606, %v1606
    %v1871 = vmul.f32 %v1609, %v1609
    %v1872 = vmul.f32 %v1614, %v1614
    %v1873 = vmul.f32 %v1617, %v1617
    %v1874 = vmul.f32 %v1622, %v1622
    %v1875 = vmul.f32 %v1625, %v1625
    %v1876 = vmul.f32 %v1630, %v1630
    %v1877 = vmul.f32 %v1633, %v1633
    %v1878 = vmul.f32 %v1638, %v1638
    %v1879 = vmul.f32 %v1641, %v1641
    %v1880 = vmul.f32 %v1646, %v1646
    %v1881 = vmul.f32 %v1649, %v1649
    %v1882 = vmul.f32 %v1654, %v1654
    %v1883 = vmul.f32 %v1657, %v1657
    %v1884 = vmul.f32 %v1662, %v1662
    %v1885 = vmul.f32 %v1665, %v1665
    %v1886 = vmul.f32 %v1670, %v1670
    %v1887 = vmul.f32 %v1673, %v1673
    %v1888 = vmul.f32 %v1678, %v1678
    %v1889 = vmul.f32 %v1681, %v1681
    %v1890 = vmul.f32 %v1686, %v1686
    %v1891 = vmul.f32 %v1689, %v1689
    %v1892 = vmul.f32 %v1694, %v1694
    %v1893 = vmul.f32 %v1697, %v1697
    %v1894 = vmul.f32 %v1702, %v1702
    %v1895 = vmul.f32 %v1705, %v1705
    %v1896 = vmul.f32 %v1710, %v1710
    %v1897 = vmul.f32 %v1713, %v1713
    %v1898 = vmul.f32 %v1718, %v1718
    %v1899 = vmul.f32 %v1721, %v1721
    %v1900 = vmul.f32 %v1726, %v1726
    %v1901 = vmul.f32 %v1729, %v1729
    %v1902 = vmul.f32 %v1734, %v1734
    %v1903 = vmul.f32 %v1737, %v1737
    %v1904 = vmul.f32 %v1742, %v1742
    %v1905 = vmul.f32 %v1745, %v1745
    %v1906 = vmul.f32 %v1750, %v1750
    %v1907 = vmul.f32 %v1753, %v1753
    %v1908 = vmul.f32 %v1758, %v1758
    %v1909 = vmul.f32 %v1761, %v1761
    %v1910 = vmul.f32 %v1766, %v1766
    %v1911 = vmul.f32 %v1769, %v1769
    %v1912 = vmul.f32 %v1774, %v1774
    %v1913 = vmul.f32 %v1777, %v1777
    %v1914 = vadd.f32 %v1850, %v1851
    %v1915 = vadd.f32 %v1914, %v1852
    %v1916 = vadd.f32 %v1915, %v1853
    %v1917 = vadd.f32 %v1916, %v1854
    %v1918 = vadd.f32 %v1917, %v1855
    %v1919 = vadd.f32 %v1918, %v1856
    %v1920 = vadd.f32 %v1919, %v1857
    %v1921 = vadd.f32 %v1920, %v1858
    %v1922 = vadd.f32 %v1921, %v1859
    %v1923 = vadd.f32 %v1922, %v1860
    %v1924 = vadd.f32 %v1923, %v1861
    %v1925 = vadd.f32 %v1924, %v1862
    %v1926 = vadd.f32 %v1925, %v1863
    %v1927 = vadd.f32 %v1926, %v1864
    %v1928 = vadd.f32 %v1927, %v1865
    %v1929 = vadd.f32 %v1928, %v1866
    %v1930 = vadd.f32 %v1929, %v1867
    %v1931 = vadd.f32 %v1930, %v1868
    %v1932 = vadd.f32 %v1931, %v1869
    %v1933 = vadd.f32 %v1932, %v1870
    %v1934 = vadd.f32 %v1933, %v1871
    %v1935 = vadd.f32 %v1934, %v1872
    %v1936 = vadd.f32 %v1935, %v1873
    %v1937 = vadd.f32 %v1936, %v1874
    %v1938 = vadd.f32 %v1937, %v1875
    %v1939 = vadd.f32 %v1938, %v1876
    %v1940 = vadd.f32 %v1939, %v1877
    %v1941 = vadd.f32 %v1940, %v1878
    %v1942 = vadd.f32 %v1941, %v1879
    %v1943 = vadd.f32 %v1942, %v1880
    %v1944 = vadd.f32 %v1943, %v1881
    %v1945 = vadd.f32 %v1944, %v1882
    %v1946 = vadd.f32 %v1945, %v1883
    %v1947 = vadd.f32 %v1946, %v1884
    %v1948 = vadd.f32 %v1947, %v1885
    %v1949 = vadd.f32 %v1948, %v1886
    %v1950 = vadd.f32 %v1949, %v1887
    %v1951 = vadd.f32 %v1950, %v1888
    %v1952 = vadd.f32 %v1951, %v1889
    %v1953 = vadd.f32 %v1952, %v1890
    %v1954 = vadd.f32 %v1953, %v1891
    %v1955 = vadd.f32 %v1954, %v1892
    %v1956 = vadd.f32 %v1955, %v1893
    %v1957 = vadd.f32 %v1956, %v1894
    %v1958 = vadd.f32 %v1957, %v1895
    %v1959 = vadd.f32 %v1958, %v1896
    %v1960 = vadd.f32 %v1959, %v1897
    %v1961 = vadd.f32 %v1960, %v1898
    %v1962 = vadd.f32 %v1961, %v1899
    %v1963 = vadd.f32 %v1962, %v1900
    %v1964 = vadd.f32 %v1963, %v1901
    %v1965 = vadd.f32 %v1964, %v1902
    %v1966 = vadd.f32 %v1965, %v1903
    %v1967 = vadd.f32 %v1966, %v1904
    %v1968 = vadd.f32 %v1967, %v1905
    %v1969 = vadd.f32 %v1968, %v1906
    %v1970 = vadd.f32 %v1969, %v1907
    %v1971 = vadd.f32 %v1970, %v1908
    %v1972 = vadd.f32 %v1971, %v1909
    %v1973 = vadd.f32 %v1972, %v1910
    %v1974 = vadd.f32 %v1973, %v1911
    %v1975 = vadd.f32 %v1974, %v1912
    %v1976 = vadd.f32 %v1975, %v1913
    %v1977 = vrot.slane %v1976, 4
    %v1978 = vadd.f32 %v1976, %v1977
    %v1979 = vrot.slane %v1978, 2
    %v1980 = vadd.f32 %v1978, %v1979
    %v1981 = vrot.slane %v1980, 1
    %v1982 = vadd.f32 %v1980, %v1981
    %v1983 = vadd.f32 %v1425, %v1982
    %s1984 = scalar_lea.vmem [#allocation2], 192
    %v1985 = vld [vmem:[%s1984] sm:$0xf]
    %v1986 = vld [vmem:[%s1984 + $0x4] sm:$0xf]
    %v1987 = vld [vmem:[%s1984 + $0x8] sm:$0xf]
    %v1988 = vld [vmem:[%s1984 + $0xc] sm:$0xf]
    %v1989 = vld [vmem:[%s1984 + $0x10] sm:$0xf]
    %v1990 = vld [vmem:[%s1984 + $0x14] sm:$0xf]
    %v1991 = vld [vmem:[%s1984 + $0x18] sm:$0xf]
    %v1992 = vld [vmem:[%s1984 + $0x1c] sm:$0xf]
    %v1993 = vld [vmem:[%s1984 + $0x20] sm:$0xf]
    %v1994 = vld [vmem:[%s1984 + $0x24] sm:$0xf]
    %v1995 = vld [vmem:[%s1984 + $0x28] sm:$0xf]
    %v1996 = vld [vmem:[%s1984 + $0x2c] sm:$0xf]
    %v1997 = vld [vmem:[%s1984 + $0x30] sm:$0xf]
    %v1998 = vld [vmem:[%s1984 + $0x34] sm:$0xf]
    %v1999 = vld [vmem:[%s1984 + $0x38] sm:$0xf]
    %v2000 = vld [vmem:[%s1984 + $0x3c] sm:$0xf]
    %v2017 = vunpack.c.l.b16 %v1985
    %v2018 = vunpack.c.l.b16 %v1986
    %v2019 = vunpack.c.l.b16 %v1987
    %v2020 = vunpack.c.l.b16 %v1988
    %v2021 = vunpack.c.l.b16 %v1989
    %v2022 = vunpack.c.l.b16 %v1990
    %v2023 = vunpack.c.l.b16 %v1991
    %v2024 = vunpack.c.l.b16 %v1992
    %v2025 = vunpack.c.l.b16 %v1993
    %v2026 = vunpack.c.l.b16 %v1994
    %v2027 = vunpack.c.l.b16 %v1995
    %v2028 = vunpack.c.l.b16 %v1996
    %v2029 = vunpack.c.l.b16 %v1997
    %v2030 = vunpack.c.l.b16 %v1998
    %v2031 = vunpack.c.l.b16 %v1999
    %v2032 = vunpack.c.l.b16 %v2000
    %v2033 = vpack.c.b16 %v2018, %v2017
    %v2034 = vpack.c.b16 %v2020, %v2019
    %v2035 = vpack.c.b16 %v2022, %v2021
    %v2036 = vpack.c.b16 %v2024, %v2023
    %v2037 = vpack.c.b16 %v2026, %v2025
    %v2038 = vpack.c.b16 %v2028, %v2027
    %v2039 = vpack.c.b16 %v2030, %v2029
    %v2040 = vpack.c.b16 %v2032, %v2031
    %2049 = vmatprep.subr.bf16.mxu0 0
    %2050 = vmatpush1.bf16.msra.mxu0 %v2033
    %2051 = vmatprep.subr.bf16.mxu0 0
    %2052 = vmatpush1.bf16.msra.mxu0 %v2034
    %2053 = vmatprep.subr.bf16.mxu0 0
    %2054 = vmatpush1.bf16.msra.mxu0 %v2035
    %2055 = vmatprep.subr.bf16.mxu0 0
    %2056 = vmatpush1.bf16.msra.mxu0 %v2036
    %2057 = vmatprep.subr.bf16.mxu0 0
    %2058 = vmatpush1.bf16.msra.mxu0 %v2037
    %2059 = vmatprep.subr.bf16.mxu0 0
    %2060 = vmatpush1.bf16.msra.mxu0 %v2038
    %2061 = vmatprep.subr.bf16.mxu0 0
    %2062 = vmatpush1.bf16.msra.mxu0 %v2039
    %2063 = vmatprep.subr.bf16.mxu0 0
    %2064 = vmatpush1.bf16.msra.mxu0 %v2040
    %2065 = vmatprep.subr.bf16.mxu0 0
    %2066 = vmatpush1.bf16.msra.mxu0 0
    %2067 = vmatprep.subr.bf16.mxu0 0
    %2068 = vmatpush1.bf16.msra.mxu0 0
    %2069 = vmatprep.subr.bf16.mxu0 0
    %2070 = vmatpush1.bf16.msra.mxu0 0
    %2071 = vmatprep.subr.bf16.mxu0 0
    %2072 = vmatpush1.bf16.msra.mxu0 0
    %2073 = vmatprep.subr.bf16.mxu0 0
    %2074 = vmatpush1.bf16.msra.mxu0 0
    %2075 = vmatprep.subr.bf16.mxu0 0
    %2076 = vmatpush1.bf16.msra.mxu0 0
    %2077 = vmatprep.subr.bf16.mxu0 0
    %2078 = vmatpush1.bf16.msra.mxu0 0
    %2079 = vmatprep.subr.bf16.mxu0 0
    %2080 = vmatpush1.bf16.msra.mxu0 0
    %2081 = vmatprep.mubr.bf16.mxu0 0
    %2082 = vmatmul.mubr.bf16.gmra.mrb[0].mxu0 %v263
    %v2083 = vpop.f32.mrb[0].mxu0
    %v2084 = vadd.f32 0.0, %v2083
    %v2085 = vpop.f32.mrb[0].mxu0
    %v2086 = vpop.f32.mrb[0].mxu0
    %v2087 = vadd.f32 0.0, %v2086
    %v2088 = vpop.f32.mrb[0].mxu0
    %2089 = vmatprep.mubr.bf16.mxu0 0
    %2090 = vmatmul.mubr.bf16.gmra.mrb[0].mxu0 %v264
    %v2091 = vpop.f32.mrb[0].mxu0
    %v2092 = vadd.f32 0.0, %v2091
    %v2093 = vpop.f32.mrb[0].mxu0
    %v2094 = vpop.f32.mrb[0].mxu0
    %v2095 = vadd.f32 0.0, %v2094
    %v2096 = vpop.f32.mrb[0].mxu0
    %2097 = vmatprep.mubr.bf16.mxu0 0
    %2098 = vmatmul.mubr.bf16.gmra.mrb[0].mxu0 %v265
    %v2099 = vpop.f32.mrb[0].mxu0
    %v2100 = vadd.f32 0.0, %v2099
    %v2101 = vpop.f32.mrb[0].mxu0
    %v2102 = vpop.f32.mrb[0].mxu0
    %v2103 = vadd.f32 0.0, %v2102
    %v2104 = vpop.f32.mrb[0].mxu0
    %2105 = vmatprep.mubr.bf16.mxu0 0
    %2106 = vmatmul.mubr.bf16.gmra.mrb[0].mxu0 %v266
    %v2107 = vpop.f32.mrb[0].mxu0
    %v2108 = vadd.f32 0.0, %v2107
    %v2109 = vpop.f32.mrb[0].mxu0
    %v2110 = vpop.f32.mrb[0].mxu0
    %v2111 = vadd.f32 0.0, %v2110
    %v2112 = vpop.f32.mrb[0].mxu0
    %2113 = vmatprep.mubr.bf16.mxu0 0
    %2114 = vmatmul.mubr.bf16.gmra.mrb[0].mxu0 %v267
    %v2115 = vpop.f32.mrb[0].mxu0
    %v2116 = vadd.f32 0.0, %v2115
    %v2117 = vpop.f32.mrb[0].mxu0
    %v2118 = vpop.f32.mrb[0].mxu0
    %v2119 = vadd.f32 0.0, %v2118
    %v2120 = vpop.f32.mrb[0].mxu0
    %2121 = vmatprep.mubr.bf16.mxu0 0
    %2122 = vmatmul.mubr.bf16.gmra.mrb[0].mxu0 %v268
    %v2123 = vpop.f32.mrb[0].mxu0
    %v2124 = vadd.f32 0.0, %v2123
    %v2125 = vpop.f32.mrb[0].mxu0
    %v2126 = vpop.f32.mrb[0].mxu0
    %v2127 = vadd.f32 0.0, %v2126
    %v2128 = vpop.f32.mrb[0].mxu0
    %2129 = vmatprep.mubr.bf16.mxu0 0
    %2130 = vmatmul.mubr.bf16.gmra.mrb[0].mxu0 %v269
    %v2131 = vpop.f32.mrb[0].mxu0
    %v2132 = vadd.f32 0.0, %v2131
    %v2133 = vpop.f32.mrb[0].mxu0
    %v2134 = vpop.f32.mrb[0].mxu0
    %v2135 = vadd.f32 0.0, %v2134
    %v2136 = vpop.f32.mrb[0].mxu0
    %2137 = vmatprep.mubr.bf16.mxu0 0
    %2138 = vmatmul.mubr.bf16.gmra.mrb[0].mxu0 %v270
    %v2139 = vpop.f32.mrb[0].mxu0
    %v2140 = vadd.f32 0.0, %v2139
    %v2141 = vpop.f32.mrb[0].mxu0
    %v2142 = vpop.f32.mrb[0].mxu0
    %v2143 = vadd.f32 0.0, %v2142
    %v2144 = vpop.f32.mrb[0].mxu0
    %2145 = vmatprep.mubr.bf16.mxu0 0
    %2146 = vmatmul.mubr.bf16.gmra.mrb[0].mxu0 %v271
    %v2147 = vpop.f32.mrb[0].mxu0
    %v2148 = vadd.f32 0.0, %v2147
    %v2149 = vpop.f32.mrb[0].mxu0
    %v2150 = vpop.f32.mrb[0].mxu0
    %v2151 = vadd.f32 0.0, %v2150
    %v2152 = vpop.f32.mrb[0].mxu0
    %2153 = vmatprep.mubr.bf16.mxu0 0
    %2154 = vmatmul.mubr.bf16.gmra.mrb[0].mxu0 %v272
    %v2155 = vpop.f32.mrb[0].mxu0
    %v2156 = vadd.f32 0.0, %v2155
    %v2157 = vpop.f32.mrb[0].mxu0
    %v2158 = vpop.f32.mrb[0].mxu0
    %v2159 = vadd.f32 0.0, %v2158
    %v2160 = vpop.f32.mrb[0].mxu0
    %2161 = vmatprep.mubr.bf16.mxu0 0
    %2162 = vmatmul.mubr.bf16.gmra.mrb[0].mxu0 %v273
    %v2163 = vpop.f32.mrb[0].mxu0
    %v2164 = vadd.f32 0.0, %v2163
    %v2165 = vpop.f32.mrb[0].mxu0
    %v2166 = vpop.f32.mrb[0].mxu0
    %v2167 = vadd.f32 0.0, %v2166
    %v2168 = vpop.f32.mrb[0].mxu0
    %2169 = vmatprep.mubr.bf16.mxu0 0
    %2170 = vmatmul.mubr.bf16.gmra.mrb[0].mxu0 %v274
    %v2171 = vpop.f32.mrb[0].mxu0
    %v2172 = vadd.f32 0.0, %v2171
    %v2173 = vpop.f32.mrb[0].mxu0
    %v2174 = vpop.f32.mrb[0].mxu0
    %v2175 = vadd.f32 0.0, %v2174
    %v2176 = vpop.f32.mrb[0].mxu0
    %2177 = vmatprep.mubr.bf16.mxu0 0
    %2178 = vmatmul.mubr.bf16.gmra.mrb[0].mxu0 %v275
    %v2179 = vpop.f32.mrb[0].mxu0
    %v2180 = vadd.f32 0.0, %v2179
    %v2181 = vpop.f32.mrb[0].mxu0
    %v2182 = vpop.f32.mrb[0].mxu0
    %v2183 = vadd.f32 0.0, %v2182
    %v2184 = vpop.f32.mrb[0].mxu0
    %2185 = vmatprep.mubr.bf16.mxu0 0
    %2186 = vmatmul.mubr.bf16.gmra.mrb[0].mxu0 %v276
    %v2187 = vpop.f32.mrb[0].mxu0
    %v2188 = vadd.f32 0.0, %v2187
    %v2189 = vpop.f32.mrb[0].mxu0
    %v2190 = vpop.f32.mrb[0].mxu0
    %v2191 = vadd.f32 0.0, %v2190
    %v2192 = vpop.f32.mrb[0].mxu0
    %2193 = vmatprep.mubr.bf16.mxu0 0
    %2194 = vmatmul.mubr.bf16.gmra.mrb[0].mxu0 %v277
    %v2195 = vpop.f32.mrb[0].mxu0
    %v2196 = vadd.f32 0.0, %v2195
    %v2197 = vpop.f32.mrb[0].mxu0
    %v2198 = vpop.f32.mrb[0].mxu0
    %v2199 = vadd.f32 0.0, %v2198
    %v2200 = vpop.f32.mrb[0].mxu0
    %2201 = vmatprep.mubr.bf16.mxu0 0
    %2202 = vmatmul.mubr.bf16.gmra.mrb[0].mxu0 %v278
    %v2203 = vpop.f32.mrb[0].mxu0
    %v2204 = vadd.f32 0.0, %v2203
    %v2205 = vpop.f32.mrb[0].mxu0
    %v2206 = vpop.f32.mrb[0].mxu0
    %v2207 = vadd.f32 0.0, %v2206
    %v2208 = vpop.f32.mrb[0].mxu0
    %2209 = vmatprep.mubr.bf16.mxu0 0
    %2210 = vmatmul.mubr.bf16.gmra.mrb[0].mxu0 %v279
    %v2211 = vpop.f32.mrb[0].mxu0
    %v2212 = vadd.f32 0.0, %v2211
    %v2213 = vpop.f32.mrb[0].mxu0
    %v2214 = vpop.f32.mrb[0].mxu0
    %v2215 = vadd.f32 0.0, %v2214
    %v2216 = vpop.f32.mrb[0].mxu0
    %2217 = vmatprep.mubr.bf16.mxu0 0
    %2218 = vmatmul.mubr.bf16.gmra.mrb[0].mxu0 %v280
    %v2219 = vpop.f32.mrb[0].mxu0
    %v2220 = vadd.f32 0.0, %v2219
    %v2221 = vpop.f32.mrb[0].mxu0
    %v2222 = vpop.f32.mrb[0].mxu0
    %v2223 = vadd.f32 0.0, %v2222
    %v2224 = vpop.f32.mrb[0].mxu0
    %2225 = vmatprep.mubr.bf16.mxu0 0
    %2226 = vmatmul.mubr.bf16.gmra.mrb[0].mxu0 %v281
    %v2227 = vpop.f32.mrb[0].mxu0
    %v2228 = vadd.f32 0.0, %v2227
    %v2229 = vpop.f32.mrb[0].mxu0
    %v2230 = vpop.f32.mrb[0].mxu0
    %v2231 = vadd.f32 0.0, %v2230
    %v2232 = vpop.f32.mrb[0].mxu0
    %2233 = vmatprep.mubr.bf16.mxu0 0
    %2234 = vmatmul.mubr.bf16.gmra.mrb[0].mxu0 %v282
    %v2235 = vpop.f32.mrb[0].mxu0
    %v2236 = vadd.f32 0.0, %v2235
    %v2237 = vpop.f32.mrb[0].mxu0
    %v2238 = vpop.f32.mrb[0].mxu0
    %v2239 = vadd.f32 0.0, %v2238
    %v2240 = vpop.f32.mrb[0].mxu0
    %2241 = vmatprep.mubr.bf16.mxu0 0
    %2242 = vmatmul.mubr.bf16.gmra.mrb[0].mxu0 %v283
    %v2243 = vpop.f32.mrb[0].mxu0
    %v2244 = vadd.f32 0.0, %v2243
    %v2245 = vpop.f32.mrb[0].mxu0
    %v2246 = vpop.f32.mrb[0].mxu0
    %v2247 = vadd.f32 0.0, %v2246
    %v2248 = vpop.f32.mrb[0].mxu0
    %2249 = vmatprep.mubr.bf16.mxu0 0
    %2250 = vmatmul.mubr.bf16.gmra.mrb[0].mxu0 %v284
    %v2251 = vpop.f32.mrb[0].mxu0
    %v2252 = vadd.f32 0.0, %v2251
    %v2253 = vpop.f32.mrb[0].mxu0
    %v2254 = vpop.f32.mrb[0].mxu0
    %v2255 = vadd.f32 0.0, %v2254
    %v2256 = vpop.f32.mrb[0].mxu0
    %2257 = vmatprep.mubr.bf16.mxu0 0
    %2258 = vmatmul.mubr.bf16.gmra.mrb[0].mxu0 %v285
    %v2259 = vpop.f32.mrb[0].mxu0
    %v2260 = vadd.f32 0.0, %v2259
    %v2261 = vpop.f32.mrb[0].mxu0
    %v2262 = vpop.f32.mrb[0].mxu0
    %v2263 = vadd.f32 0.0, %v2262
    %v2264 = vpop.f32.mrb[0].mxu0
    %2265 = vmatprep.mubr.bf16.mxu0 0
    %2266 = vmatmul.mubr.bf16.gmra.mrb[0].mxu0 %v286
    %v2267 = vpop.f32.mrb[0].mxu0
    %v2268 = vadd.f32 0.0, %v2267
    %v2269 = vpop.f32.mrb[0].mxu0
    %v2270 = vpop.f32.mrb[0].mxu0
    %v2271 = vadd.f32 0.0, %v2270
    %v2272 = vpop.f32.mrb[0].mxu0
    %2273 = vmatprep.mubr.bf16.mxu0 0
    %2274 = vmatmul.mubr.bf16.gmra.mrb[0].mxu0 %v287
    %v2275 = vpop.f32.mrb[0].mxu0
    %v2276 = vadd.f32 0.0, %v2275
    %v2277 = vpop.f32.mrb[0].mxu0
    %v2278 = vpop.f32.mrb[0].mxu0
    %v2279 = vadd.f32 0.0, %v2278
    %v2280 = vpop.f32.mrb[0].mxu0
    %2281 = vmatprep.mubr.bf16.mxu0 0
    %2282 = vmatmul.mubr.bf16.gmra.mrb[0].mxu0 %v288
    %v2283 = vpop.f32.mrb[0].mxu0
    %v2284 = vadd.f32 0.0, %v2283
    %v2285 = vpop.f32.mrb[0].mxu0
    %v2286 = vpop.f32.mrb[0].mxu0
    %v2287 = vadd.f32 0.0, %v2286
    %v2288 = vpop.f32.mrb[0].mxu0
    %2289 = vmatprep.mubr.bf16.mxu0 0
    %2290 = vmatmul.mubr.bf16.gmra.mrb[0].mxu0 %v289
    %v2291 = vpop.f32.mrb[0].mxu0
    %v2292 = vadd.f32 0.0, %v2291
    %v2293 = vpop.f32.mrb[0].mxu0
    %v2294 = vpop.f32.mrb[0].mxu0
    %v2295 = vadd.f32 0.0, %v2294
    %v2296 = vpop.f32.mrb[0].mxu0
    %2297 = vmatprep.mubr.bf16.mxu0 0
    %2298 = vmatmul.mubr.bf16.gmra.mrb[0].mxu0 %v290
    %v2299 = vpop.f32.mrb[0].mxu0
    %v2300 = vadd.f32 0.0, %v2299
    %v2301 = vpop.f32.mrb[0].mxu0
    %v2302 = vpop.f32.mrb[0].mxu0
    %v2303 = vadd.f32 0.0, %v2302
    %v2304 = vpop.f32.mrb[0].mxu0
    %2305 = vmatprep.mubr.bf16.mxu0 0
    %2306 = vmatmul.mubr.bf16.gmra.mrb[0].mxu0 %v291
    %v2307 = vpop.f32.mrb[0].mxu0
    %v2308 = vadd.f32 0.0, %v2307
    %v2309 = vpop.f32.mrb[0].mxu0
    %v2310 = vpop.f32.mrb[0].mxu0
    %v2311 = vadd.f32 0.0, %v2310
    %v2312 = vpop.f32.mrb[0].mxu0
    %2313 = vmatprep.mubr.bf16.mxu0 0
    %2314 = vmatmul.mubr.bf16.gmra.mrb[0].mxu0 %v292
    %v2315 = vpop.f32.mrb[0].mxu0
    %v2316 = vadd.f32 0.0, %v2315
    %v2317 = vpop.f32.mrb[0].mxu0
    %v2318 = vpop.f32.mrb[0].mxu0
    %v2319 = vadd.f32 0.0, %v2318
    %v2320 = vpop.f32.mrb[0].mxu0
    %2321 = vmatprep.mubr.bf16.mxu0 0
    %2322 = vmatmul.mubr.bf16.gmra.mrb[0].mxu0 %v293
    %v2323 = vpop.f32.mrb[0].mxu0
    %v2324 = vadd.f32 0.0, %v2323
    %v2325 = vpop.f32.mrb[0].mxu0
    %v2326 = vpop.f32.mrb[0].mxu0
    %v2327 = vadd.f32 0.0, %v2326
    %v2328 = vpop.f32.mrb[0].mxu0
    %2329 = vmatprep.mubr.bf16.mxu0 0
    %2330 = vmatmul.mubr.bf16.gmra.mrb[0].mxu0 %v294
    %v2331 = vpop.f32.mrb[0].mxu0
    %v2332 = vadd.f32 0.0, %v2331
    %v2333 = vpop.f32.mrb[0].mxu0
    %v2334 = vpop.f32.mrb[0].mxu0
    %v2335 = vadd.f32 0.0, %v2334
    %v2336 = vpop.f32.mrb[0].mxu0
    %2337 = vdwg.mxu0
    %v2338 = vadd.f32 %v2084, %v2087
    %v2339 = vadd.f32 %v2338, %v2092
    %v2340 = vadd.f32 %v2339, %v2095
    %v2341 = vadd.f32 %v2340, %v2100
    %v2342 = vadd.f32 %v2341, %v2103
    %v2343 = vadd.f32 %v2342, %v2108
    %v2344 = vadd.f32 %v2343, %v2111
    %v2345 = vadd.f32 %v2344, %v2116
    %v2346 = vadd.f32 %v2345, %v2119
    %v2347 = vadd.f32 %v2346, %v2124
    %v2348 = vadd.f32 %v2347, %v2127
    %v2349 = vadd.f32 %v2348, %v2132
    %v2350 = vadd.f32 %v2349, %v2135
    %v2351 = vadd.f32 %v2350, %v2140
    %v2352 = vadd.f32 %v2351, %v2143
    %v2353 = vadd.f32 %v2352, %v2148
    %v2354 = vadd.f32 %v2353, %v2151
    %v2355 = vadd.f32 %v2354, %v2156
    %v2356 = vadd.f32 %v2355, %v2159
    %v2357 = vadd.f32 %v2356, %v2164
    %v2358 = vadd.f32 %v2357, %v2167
    %v2359 = vadd.f32 %v2358, %v2172
    %v2360 = vadd.f32 %v2359, %v2175
    %v2361 = vadd.f32 %v2360, %v2180
    %v2362 = vadd.f32 %v2361, %v2183
    %v2363 = vadd.f32 %v2362, %v2188
    %v2364 = vadd.f32 %v2363, %v2191
    %v2365 = vadd.f32 %v2364, %v2196
    %v2366 = vadd.f32 %v2365, %v2199
    %v2367 = vadd.f32 %v2366, %v2204
    %v2368 = vadd.f32 %v2367, %v2207
    %v2369 = vadd.f32 %v2368, %v2212
    %v2370 = vadd.f32 %v2369, %v2215
    %v2371 = vadd.f32 %v2370, %v2220
    %v2372 = vadd.f32 %v2371, %v2223
    %v2373 = vadd.f32 %v2372, %v2228
    %v2374 = vadd.f32 %v2373, %v2231
    %v2375 = vadd.f32 %v2374, %v2236
    %v2376 = vadd.f32 %v2375, %v2239
    %v2377 = vadd.f32 %v2376, %v2244
    %v2378 = vadd.f32 %v2377, %v2247
    %v2379 = vadd.f32 %v2378, %v2252
    %v2380 = vadd.f32 %v2379, %v2255
    %v2381 = vadd.f32 %v2380, %v2260
    %v2382 = vadd.f32 %v2381, %v2263
    %v2383 = vadd.f32 %v2382, %v2268
    %v2384 = vadd.f32 %v2383, %v2271
    %v2385 = vadd.f32 %v2384, %v2276
    %v2386 = vadd.f32 %v2385, %v2279
    %v2387 = vadd.f32 %v2386, %v2284
    %v2388 = vadd.f32 %v2387, %v2287
    %v2389 = vadd.f32 %v2388, %v2292
    %v2390 = vadd.f32 %v2389, %v2295
    %v2391 = vadd.f32 %v2390, %v2300
    %v2392 = vadd.f32 %v2391, %v2303
    %v2393 = vadd.f32 %v2392, %v2308
    %v2394 = vadd.f32 %v2393, %v2311
    %v2395 = vadd.f32 %v2394, %v2316
    %v2396 = vadd.f32 %v2395, %v2319
    %v2397 = vadd.f32 %v2396, %v2324
    %v2398 = vadd.f32 %v2397, %v2327
    %v2399 = vadd.f32 %v2398, %v2332
    %v2400 = vadd.f32 %v2399, %v2335
    %v2401 = vrot.slane %v2400, 4
    %v2402 = vadd.f32 %v2400, %v2401
    %v2403 = vrot.slane %v2402, 2
    %v2404 = vadd.f32 %v2402, %v2403
    %v2405 = vrot.slane %v2404, 1
    %v2406 = vadd.f32 %v2404, %v2405
    %v2407 = vadd.f32 %v1849, %v2406
    %v2408 = vmul.f32 %v2084, %v2084
    %v2409 = vmul.f32 %v2087, %v2087
    %v2410 = vmul.f32 %v2092, %v2092
    %v2411 = vmul.f32 %v2095, %v2095
    %v2412 = vmul.f32 %v2100, %v2100
    %v2413 = vmul.f32 %v2103, %v2103
    %v2414 = vmul.f32 %v2108, %v2108
    %v2415 = vmul.f32 %v2111, %v2111
    %v2416 = vmul.f32 %v2116, %v2116
    %v2417 = vmul.f32 %v2119, %v2119
    %v2418 = vmul.f32 %v2124, %v2124
    %v2419 = vmul.f32 %v2127, %v2127
    %v2420 = vmul.f32 %v2132, %v2132
    %v2421 = vmul.f32 %v2135, %v2135
    %v2422 = vmul.f32 %v2140, %v2140
    %v2423 = vmul.f32 %v2143, %v2143
    %v2424 = vmul.f32 %v2148, %v2148
    %v2425 = vmul.f32 %v2151, %v2151
    %v2426 = vmul.f32 %v2156, %v2156
    %v2427 = vmul.f32 %v2159, %v2159
    %v2428 = vmul.f32 %v2164, %v2164
    %v2429 = vmul.f32 %v2167, %v2167
    %v2430 = vmul.f32 %v2172, %v2172
    %v2431 = vmul.f32 %v2175, %v2175
    %v2432 = vmul.f32 %v2180, %v2180
    %v2433 = vmul.f32 %v2183, %v2183
    %v2434 = vmul.f32 %v2188, %v2188
    %v2435 = vmul.f32 %v2191, %v2191
    %v2436 = vmul.f32 %v2196, %v2196
    %v2437 = vmul.f32 %v2199, %v2199
    %v2438 = vmul.f32 %v2204, %v2204
    %v2439 = vmul.f32 %v2207, %v2207
    %v2440 = vmul.f32 %v2212, %v2212
    %v2441 = vmul.f32 %v2215, %v2215
    %v2442 = vmul.f32 %v2220, %v2220
    %v2443 = vmul.f32 %v2223, %v2223
    %v2444 = vmul.f32 %v2228, %v2228
    %v2445 = vmul.f32 %v2231, %v2231
    %v2446 = vmul.f32 %v2236, %v2236
    %v2447 = vmul.f32 %v2239, %v2239
    %v2448 = vmul.f32 %v2244, %v2244
    %v2449 = vmul.f32 %v2247, %v2247
    %v2450 = vmul.f32 %v2252, %v2252
    %v2451 = vmul.f32 %v2255, %v2255
    %v2452 = vmul.f32 %v2260, %v2260
    %v2453 = vmul.f32 %v2263, %v2263
    %v2454 = vmul.f32 %v2268, %v2268
    %v2455 = vmul.f32 %v2271, %v2271
    %v2456 = vmul.f32 %v2276, %v2276
    %v2457 = vmul.f32 %v2279, %v2279
    %v2458 = vmul.f32 %v2284, %v2284
    %v2459 = vmul.f32 %v2287, %v2287
    %v2460 = vmul.f32 %v2292, %v2292
    %v2461 = vmul.f32 %v2295, %v2295
    %v2462 = vmul.f32 %v2300, %v2300
    %v2463 = vmul.f32 %v2303, %v2303
    %v2464 = vmul.f32 %v2308, %v2308
    %v2465 = vmul.f32 %v2311, %v2311
    %v2466 = vmul.f32 %v2316, %v2316
    %v2467 = vmul.f32 %v2319, %v2319
    %v2468 = vmul.f32 %v2324, %v2324
    %v2469 = vmul.f32 %v2327, %v2327
    %v2470 = vmul.f32 %v2332, %v2332
    %v2471 = vmul.f32 %v2335, %v2335
    %v2472 = vadd.f32 %v2408, %v2409
    %v2473 = vadd.f32 %v2472, %v2410
    %v2474 = vadd.f32 %v2473, %v2411
    %v2475 = vadd.f32 %v2474, %v2412
    %v2476 = vadd.f32 %v2475, %v2413
    %v2477 = vadd.f32 %v2476, %v2414
    %v2478 = vadd.f32 %v2477, %v2415
    %v2479 = vadd.f32 %v2478, %v2416
    %v2480 = vadd.f32 %v2479, %v2417
    %v2481 = vadd.f32 %v2480, %v2418
    %v2482 = vadd.f32 %v2481, %v2419
    %v2483 = vadd.f32 %v2482, %v2420
    %v2484 = vadd.f32 %v2483, %v2421
    %v2485 = vadd.f32 %v2484, %v2422
    %v2486 = vadd.f32 %v2485, %v2423
    %v2487 = vadd.f32 %v2486, %v2424
    %v2488 = vadd.f32 %v2487, %v2425
    %v2489 = vadd.f32 %v2488, %v2426
    %v2490 = vadd.f32 %v2489, %v2427
    %v2491 = vadd.f32 %v2490, %v2428
    %v2492 = vadd.f32 %v2491, %v2429
    %v2493 = vadd.f32 %v2492, %v2430
    %v2494 = vadd.f32 %v2493, %v2431
    %v2495 = vadd.f32 %v2494, %v2432
    %v2496 = vadd.f32 %v2495, %v2433
    %v2497 = vadd.f32 %v2496, %v2434
    %v2498 = vadd.f32 %v2497, %v2435
    %v2499 = vadd.f32 %v2498, %v2436
    %v2500 = vadd.f32 %v2499, %v2437
    %v2501 = vadd.f32 %v2500, %v2438
    %v2502 = vadd.f32 %v2501, %v2439
    %v2503 = vadd.f32 %v2502, %v2440
    %v2504 = vadd.f32 %v2503, %v2441
    %v2505 = vadd.f32 %v2504, %v2442
    %v2506 = vadd.f32 %v2505, %v2443
    %v2507 = vadd.f32 %v2506, %v2444
    %v2508 = vadd.f32 %v2507, %v2445
    %v2509 = vadd.f32 %v2508, %v2446
    %v2510 = vadd.f32 %v2509, %v2447
    %v2511 = vadd.f32 %v2510, %v2448
    %v2512 = vadd.f32 %v2511, %v2449
    %v2513 = vadd.f32 %v2512, %v2450
    %v2514 = vadd.f32 %v2513, %v2451
    %v2515 = vadd.f32 %v2514, %v2452
    %v2516 = vadd.f32 %v2515, %v2453
    %v2517 = vadd.f32 %v2516, %v2454
    %v2518 = vadd.f32 %v2517, %v2455
    %v2519 = vadd.f32 %v2518, %v2456
    %v2520 = vadd.f32 %v2519, %v2457
    %v2521 = vadd.f32 %v2520, %v2458
    %v2522 = vadd.f32 %v2521, %v2459
    %v2523 = vadd.f32 %v2522, %v2460
    %v2524 = vadd.f32 %v2523, %v2461
    %v2525 = vadd.f32 %v2524, %v2462
    %v2526 = vadd.f32 %v2525, %v2463
    %v2527 = vadd.f32 %v2526, %v2464
    %v2528 = vadd.f32 %v2527, %v2465
    %v2529 = vadd.f32 %v2528, %v2466
    %v2530 = vadd.f32 %v2529, %v2467
    %v2531 = vadd.f32 %v2530, %v2468
    %v2532 = vadd.f32 %v2531, %v2469
    %v2533 = vadd.f32 %v2532, %v2470
    %v2534 = vadd.f32 %v2533, %v2471
    %v2535 = vrot.slane %v2534, 4
    %v2536 = vadd.f32 %v2534, %v2535
    %v2537 = vrot.slane %v2536, 2
    %v2538 = vadd.f32 %v2536, %v2537
    %v2539 = vrot.slane %v2538, 1
    %v2540 = vadd.f32 %v2538, %v2539
    %v2541 = vadd.f32 %v1983, %v2540
    %v2542 = vmul.f32 %v2407, 0.00048828125
    %v2543 = vmul.f32 %v2541, 0.00048828125
    %v2544 = vmul.f32 %v2542, %v2542
    %v2545 = vsub.f32 %v2543, %v2544
    %v2546 = vmax.f32 %v2545, 0.0
    %v2547 = vld [vmem:[#allocation4] sm:$0x1]
    %v2548 = vadd.f32 %v2546, 1e-05
    %v2549 = vrsqrt.pop %v2548
    %v2550 = vmul.f32 %v2547, %v2549
    %v2551 = vld [vmem:[#allocation6] sm:$0x1]
    %v2552 = vmul.f32 %v2542, %v2550
    %v2553 = vsub.f32 %v2551, %v2552
    %v2555 = vlaneseq
    %v2556 = vshrl.u32 %v2555, 7
    %v2557 = vsub.s32 0, %v2556
    %v2558 = vrot.slane %v2550, %v2557
    %v2560 = vmul.f32 %v410, %v2558
    %v2561 = vmul.f32 %v413, %v2558
    %v2562 = vmul.f32 %v418, %v2558
    %v2563 = vmul.f32 %v421, %v2558
    %v2564 = vmul.f32 %v426, %v2558
    %v2565 = vmul.f32 %v429, %v2558
    %v2566 = vmul.f32 %v434, %v2558
    %v2567 = vmul.f32 %v437, %v2558
    %v2568 = vmul.f32 %v442, %v2558
    %v2569 = vmul.f32 %v445, %v2558
    %v2570 = vmul.f32 %v450, %v2558
    %v2571 = vmul.f32 %v453, %v2558
    %v2572 = vmul.f32 %v458, %v2558
    %v2573 = vmul.f32 %v461, %v2558
    %v2574 = vmul.f32 %v466, %v2558
    %v2575 = vmul.f32 %v469, %v2558
    %v2576 = vmul.f32 %v474, %v2558
    %v2577 = vmul.f32 %v477, %v2558
    %v2578 = vmul.f32 %v482, %v2558
    %v2579 = vmul.f32 %v485, %v2558
    %v2580 = vmul.f32 %v490, %v2558
    %v2581 = vmul.f32 %v493, %v2558
    %v2582 = vmul.f32 %v498, %v2558
    %v2583 = vmul.f32 %v501, %v2558
    %v2584 = vmul.f32 %v506, %v2558
    %v2585 = vmul.f32 %v509, %v2558
    %v2586 = vmul.f32 %v514, %v2558
    %v2587 = vmul.f32 %v517, %v2558
    %v2588 = vmul.f32 %v522, %v2558
    %v2589 = vmul.f32 %v525, %v2558
    %v2590 = vmul.f32 %v530, %v2558
    %v2591 = vmul.f32 %v533, %v2558
    %v2592 = vmul.f32 %v538, %v2558
    %v2593 = vmul.f32 %v541, %v2558
    %v2594 = vmul.f32 %v546, %v2558
    %v2595 = vmul.f32 %v549, %v2558
    %v2596 = vmul.f32 %v554, %v2558
    %v2597 = vmul.f32 %v557, %v2558
    %v2598 = vmul.f32 %v562, %v2558
    %v2599 = vmul.f32 %v565, %v2558
    %v2600 = vmul.f32 %v570, %v2558
    %v2601 = vmul.f32 %v573, %v2558
    %v2602 = vmul.f32 %v578, %v2558
    %v2603 = vmul.f32 %v581, %v2558
    %v2604 = vmul.f32 %v586, %v2558
    %v2605 = vmul.f32 %v589, %v2558
    %v2606 = vmul.f32 %v594, %v2558
    %v2607 = vmul.f32 %v597, %v2558
    %v2608 = vmul.f32 %v602, %v2558
    %v2609 = vmul.f32 %v605, %v2558
    %v2610 = vmul.f32 %v610, %v2558
    %v2611 = vmul.f32 %v613, %v2558
    %v2612 = vmul.f32 %v618, %v2558
    %v2613 = vmul.f32 %v621, %v2558
    %v2614 = vmul.f32 %v626, %v2558
    %v2615 = vmul.f32 %v629, %v2558
    %v2616 = vmul.f32 %v634, %v2558
    %v2617 = vmul.f32 %v637, %v2558
    %v2618 = vmul.f32 %v642, %v2558
    %v2619 = vmul.f32 %v645, %v2558
    %v2620 = vmul.f32 %v650, %v2558
    %v2621 = vmul.f32 %v653, %v2558
    %v2622 = vmul.f32 %v658, %v2558
    %v2623 = vmul.f32 %v661, %v2558
    %v2625 = vlaneseq
    %v2626 = vshrl.u32 %v2625, 7
    %v2627 = vsub.s32 0, %v2626
    %v2628 = vrot.slane %v2553, %v2627
    %v2630 = vadd.f32 %v2560, %v2628
    %v2631 = vadd.f32 %v2561, %v2628
    %v2632 = vadd.f32 %v2562, %v2628
    %v2633 = vadd.f32 %v2563, %v2628
    %v2634 = vadd.f32 %v2564, %v2628
    %v2635 = vadd.f32 %v2565, %v2628
    %v2636 = vadd.f32 %v2566, %v2628
    %v2637 = vadd.f32 %v2567, %v2628
    %v2638 = vadd.f32 %v2568, %v2628
    %v2639 = vadd.f32 %v2569, %v2628
    %v2640 = vadd.f32 %v2570, %v2628
    %v2641 = vadd.f32 %v2571, %v2628
    %v2642 = vadd.f32 %v2572, %v2628
    %v2643 = vadd.f32 %v2573, %v2628
    %v2644 = vadd.f32 %v2574, %v2628
    %v2645 = vadd.f32 %v2575, %v2628
    %v2646 = vadd.f32 %v2576, %v2628
    %v2647 = vadd.f32 %v2577, %v2628
    %v2648 = vadd.f32 %v2578, %v2628
    %v2649 = vadd.f32 %v2579, %v2628
    %v2650 = vadd.f32 %v2580, %v2628
    %v2651 = vadd.f32 %v2581, %v2628
    %v2652 = vadd.f32 %v2582, %v2628
    %v2653 = vadd.f32 %v2583, %v2628
    %v2654 = vadd.f32 %v2584, %v2628
    %v2655 = vadd.f32 %v2585, %v2628
    %v2656 = vadd.f32 %v2586, %v2628
    %v2657 = vadd.f32 %v2587, %v2628
    %v2658 = vadd.f32 %v2588, %v2628
    %v2659 = vadd.f32 %v2589, %v2628
    %v2660 = vadd.f32 %v2590, %v2628
    %v2661 = vadd.f32 %v2591, %v2628
    %v2662 = vadd.f32 %v2592, %v2628
    %v2663 = vadd.f32 %v2593, %v2628
    %v2664 = vadd.f32 %v2594, %v2628
    %v2665 = vadd.f32 %v2595, %v2628
    %v2666 = vadd.f32 %v2596, %v2628
    %v2667 = vadd.f32 %v2597, %v2628
    %v2668 = vadd.f32 %v2598, %v2628
    %v2669 = vadd.f32 %v2599, %v2628
    %v2670 = vadd.f32 %v2600, %v2628
    %v2671 = vadd.f32 %v2601, %v2628
    %v2672 = vadd.f32 %v2602, %v2628
    %v2673 = vadd.f32 %v2603, %v2628
    %v2674 = vadd.f32 %v2604, %v2628
    %v2675 = vadd.f32 %v2605, %v2628
    %v2676 = vadd.f32 %v2606, %v2628
    %v2677 = vadd.f32 %v2607, %v2628
    %v2678 = vadd.f32 %v2608, %v2628
    %v2679 = vadd.f32 %v2609, %v2628
    %v2680 = vadd.f32 %v2610, %v2628
    %v2681 = vadd.f32 %v2611, %v2628
    %v2682 = vadd.f32 %v2612, %v2628
    %v2683 = vadd.f32 %v2613, %v2628
    %v2684 = vadd.f32 %v2614, %v2628
    %v2685 = vadd.f32 %v2615, %v2628
    %v2686 = vadd.f32 %v2616, %v2628
    %v2687 = vadd.f32 %v2617, %v2628
    %v2688 = vadd.f32 %v2618, %v2628
    %v2689 = vadd.f32 %v2619, %v2628
    %v2690 = vadd.f32 %v2620, %v2628
    %v2691 = vadd.f32 %v2621, %v2628
    %v2692 = vadd.f32 %v2622, %v2628
    %v2693 = vadd.f32 %v2623, %v2628
    %v2694 = vmax.f32 %v2630, 0.0
    %v2695 = vmax.f32 %v2631, 0.0
    %v2696 = vmax.f32 %v2632, 0.0
    %v2697 = vmax.f32 %v2633, 0.0
    %v2698 = vmax.f32 %v2634, 0.0
    %v2699 = vmax.f32 %v2635, 0.0
    %v2700 = vmax.f32 %v2636, 0.0
    %v2701 = vmax.f32 %v2637, 0.0
    %v2702 = vmax.f32 %v2638, 0.0
    %v2703 = vmax.f32 %v2639, 0.0
    %v2704 = vmax.f32 %v2640, 0.0
    %v2705 = vmax.f32 %v2641, 0.0
    %v2706 = vmax.f32 %v2642, 0.0
    %v2707 = vmax.f32 %v2643, 0.0
    %v2708 = vmax.f32 %v2644, 0.0
    %v2709 = vmax.f32 %v2645, 0.0
    %v2710 = vmax.f32 %v2646, 0.0
    %v2711 = vmax.f32 %v2647, 0.0
    %v2712 = vmax.f32 %v2648, 0.0
    %v2713 = vmax.f32 %v2649, 0.0
    %v2714 = vmax.f32 %v2650, 0.0
    %v2715 = vmax.f32 %v2651, 0.0
    %v2716 = vmax.f32 %v2652, 0.0
    %v2717 = vmax.f32 %v2653, 0.0
    %v2718 = vmax.f32 %v2654, 0.0
    %v2719 = vmax.f32 %v2655, 0.0
    %v2720 = vmax.f32 %v2656, 0.0
    %v2721 = vmax.f32 %v2657, 0.0
    %v2722 = vmax.f32 %v2658, 0.0
    %v2723 = vmax.f32 %v2659, 0.0
    %v2724 = vmax.f32 %v2660, 0.0
    %v2725 = vmax.f32 %v2661, 0.0
    %v2726 = vmax.f32 %v2662, 0.0
    %v2727 = vmax.f32 %v2663, 0.0
    %v2728 = vmax.f32 %v2664, 0.0
    %v2729 = vmax.f32 %v2665, 0.0
    %v2730 = vmax.f32 %v2666, 0.0
    %v2731 = vmax.f32 %v2667, 0.0
    %v2732 = vmax.f32 %v2668, 0.0
    %v2733 = vmax.f32 %v2669, 0.0
    %v2734 = vmax.f32 %v2670, 0.0
    %v2735 = vmax.f32 %v2671, 0.0
    %v2736 = vmax.f32 %v2672, 0.0
    %v2737 = vmax.f32 %v2673, 0.0
    %v2738 = vmax.f32 %v2674, 0.0
    %v2739 = vmax.f32 %v2675, 0.0
    %v2740 = vmax.f32 %v2676, 0.0
    %v2741 = vmax.f32 %v2677, 0.0
    %v2742 = vmax.f32 %v2678, 0.0
    %v2743 = vmax.f32 %v2679, 0.0
    %v2744 = vmax.f32 %v2680, 0.0
    %v2745 = vmax.f32 %v2681, 0.0
    %v2746 = vmax.f32 %v2682, 0.0
    %v2747 = vmax.f32 %v2683, 0.0
    %v2748 = vmax.f32 %v2684, 0.0
    %v2749 = vmax.f32 %v2685, 0.0
    %v2750 = vmax.f32 %v2686, 0.0
    %v2751 = vmax.f32 %v2687, 0.0
    %v2752 = vmax.f32 %v2688, 0.0
    %v2753 = vmax.f32 %v2689, 0.0
    %v2754 = vmax.f32 %v2690, 0.0
    %v2755 = vmax.f32 %v2691, 0.0
    %v2756 = vmax.f32 %v2692, 0.0
    %v2757 = vmax.f32 %v2693, 0.0
    %v2758 = vpack.c.bf16 %v2695, %v2694
    %v2759 = vpack.c.bf16 %v2697, %v2696
    %v2760 = vpack.c.bf16 %v2699, %v2698
    %v2761 = vpack.c.bf16 %v2701, %v2700
    %v2762 = vpack.c.bf16 %v2703, %v2702
    %v2763 = vpack.c.bf16 %v2705, %v2704
    %v2764 = vpack.c.bf16 %v2707, %v2706
    %v2765 = vpack.c.bf16 %v2709, %v2708
    %v2766 = vpack.c.bf16 %v2711, %v2710
    %v2767 = vpack.c.bf16 %v2713, %v2712
    %v2768 = vpack.c.bf16 %v2715, %v2714
    %v2769 = vpack.c.bf16 %v2717, %v2716
    %v2770 = vpack.c.bf16 %v2719, %v2718
    %v2771 = vpack.c.bf16 %v2721, %v2720
    %v2772 = vpack.c.bf16 %v2723, %v2722
    %v2773 = vpack.c.bf16 %v2725, %v2724
    %v2774 = vpack.c.bf16 %v2727, %v2726
    %v2775 = vpack.c.bf16 %v2729, %v2728
    %v2776 = vpack.c.bf16 %v2731, %v2730
    %v2777 = vpack.c.bf16 %v2733, %v2732
    %v2778 = vpack.c.bf16 %v2735, %v2734
    %v2779 = vpack.c.bf16 %v2737, %v2736
    %v2780 = vpack.c.bf16 %v2739, %v2738
    %v2781 = vpack.c.bf16 %v2741, %v2740
    %v2782 = vpack.c.bf16 %v2743, %v2742
    %v2783 = vpack.c.bf16 %v2745, %v2744
    %v2784 = vpack.c.bf16 %v2747, %v2746
    %v2785 = vpack.c.bf16 %v2749, %v2748
    %v2786 = vpack.c.bf16 %v2751, %v2750
    %v2787 = vpack.c.bf16 %v2753, %v2752
    %v2788 = vpack.c.bf16 %v2755, %v2754
    %v2789 = vpack.c.bf16 %v2757, %v2756
    %v2822 = vunpack.c.l.b16 %v2758
    %v2823 = vunpack.c.h.b16 %v2758
    %v2824 = vunpack.c.l.b16 %v2759
    %v2825 = vunpack.c.h.b16 %v2759
    %v2826 = vunpack.c.l.b16 %v2760
    %v2827 = vunpack.c.h.b16 %v2760
    %v2828 = vunpack.c.l.b16 %v2761
    %v2829 = vunpack.c.h.b16 %v2761
    %v2830 = vunpack.c.l.b16 %v2762
    %v2831 = vunpack.c.h.b16 %v2762
    %v2832 = vunpack.c.l.b16 %v2763
    %v2833 = vunpack.c.h.b16 %v2763
    %v2834 = vunpack.c.l.b16 %v2764
    %v2835 = vunpack.c.h.b16 %v2764
    %v2836 = vunpack.c.l.b16 %v2765
    %v2837 = vunpack.c.h.b16 %v2765
    %v2838 = vunpack.c.l.b16 %v2766
    %v2839 = vunpack.c.h.b16 %v2766
    %v2840 = vunpack.c.l.b16 %v2767
    %v2841 = vunpack.c.h.b16 %v2767
    %v2842 = vunpack.c.l.b16 %v2768
    %v2843 = vunpack.c.h.b16 %v2768
    %v2844 = vunpack.c.l.b16 %v2769
    %v2845 = vunpack.c.h.b16 %v2769
    %v2846 = vunpack.c.l.b16 %v2770
    %v2847 = vunpack.c.h.b16 %v2770
    %v2848 = vunpack.c.l.b16 %v2771
    %v2849 = vunpack.c.h.b16 %v2771
    %v2850 = vunpack.c.l.b16 %v2772
    %v2851 = vunpack.c.h.b16 %v2772
    %v2852 = vunpack.c.l.b16 %v2773
    %v2853 = vunpack.c.h.b16 %v2773
    %v2854 = vunpack.c.l.b16 %v2774
    %v2855 = vunpack.c.h.b16 %v2774
    %v2856 = vunpack.c.l.b16 %v2775
    %v2857 = vunpack.c.h.b16 %v2775
    %v2858 = vunpack.c.l.b16 %v2776
    %v2859 = vunpack.c.h.b16 %v2776
    %v2860 = vunpack.c.l.b16 %v2777
    %v2861 = vunpack.c.h.b16 %v2777
    %v2862 = vunpack.c.l.b16 %v2778
    %v2863 = vunpack.c.h.b16 %v2778
    %v2864 = vunpack.c.l.b16 %v2779
    %v2865 = vunpack.c.h.b16 %v2779
    %v2866 = vunpack.c.l.b16 %v2780
    %v2867 = vunpack.c.h.b16 %v2780
    %v2868 = vunpack.c.l.b16 %v2781
    %v2869 = vunpack.c.h.b16 %v2781
    %v2870 = vunpack.c.l.b16 %v2782
    %v2871 = vunpack.c.h.b16 %v2782
    %v2872 = vunpack.c.l.b16 %v2783
    %v2873 = vunpack.c.h.b16 %v2783
    %v2874 = vunpack.c.l.b16 %v2784
    %v2875 = vunpack.c.h.b16 %v2784
    %v2876 = vunpack.c.l.b16 %v2785
    %v2877 = vunpack.c.h.b16 %v2785
    %v2878 = vunpack.c.l.b16 %v2786
    %v2879 = vunpack.c.h.b16 %v2786
    %v2880 = vunpack.c.l.b16 %v2787
    %v2881 = vunpack.c.h.b16 %v2787
    %v2882 = vunpack.c.l.b16 %v2788
    %v2883 = vunpack.c.h.b16 %v2788
    %v2884 = vunpack.c.l.b16 %v2789
    %v2885 = vunpack.c.h.b16 %v2789
    %v2886 = vpack.c.b16 %v2822, %v2822
    %v2887 = vpack.c.b16 %v2823, %v2823
    %v2888 = vpack.c.b16 %v2824, %v2824
    %v2889 = vpack.c.b16 %v2825, %v2825
    %v2890 = vpack.c.b16 %v2826, %v2826
    %v2891 = vpack.c.b16 %v2827, %v2827
    %v2892 = vpack.c.b16 %v2828, %v2828
    %v2893 = vpack.c.b16 %v2829, %v2829
    %v2894 = vpack.c.b16 %v2830, %v2830
    %v2895 = vpack.c.b16 %v2831, %v2831
    %v2896 = vpack.c.b16 %v2832, %v2832
    %v2897 = vpack.c.b16 %v2833, %v2833
    %v2898 = vpack.c.b16 %v2834, %v2834
    %v2899 = vpack.c.b16 %v2835, %v2835
    %v2900 = vpack.c.b16 %v2836, %v2836
    %v2901 = vpack.c.b16 %v2837, %v2837
    %v2902 = vpack.c.b16 %v2838, %v2838
    %v2903 = vpack.c.b16 %v2839, %v2839
    %v2904 = vpack.c.b16 %v2840, %v2840
    %v2905 = vpack.c.b16 %v2841, %v2841
    %v2906 = vpack.c.b16 %v2842, %v2842
    %v2907 = vpack.c.b16 %v2843, %v2843
    %v2908 = vpack.c.b16 %v2844, %v2844
    %v2909 = vpack.c.b16 %v2845, %v2845
    %v2910 = vpack.c.b16 %v2846, %v2846
    %v2911 = vpack.c.b16 %v2847, %v2847
    %v2912 = vpack.c.b16 %v2848, %v2848
    %v2913 = vpack.c.b16 %v2849, %v2849
    %v2914 = vpack.c.b16 %v2850, %v2850
    %v2915 = vpack.c.b16 %v2851, %v2851
    %v2916 = vpack.c.b16 %v2852, %v2852
    %v2917 = vpack.c.b16 %v2853, %v2853
    %v2918 = vpack.c.b16 %v2854, %v2854
    %v2919 = vpack.c.b16 %v2855, %v2855
    %v2920 = vpack.c.b16 %v2856, %v2856
    %v2921 = vpack.c.b16 %v2857, %v2857
    %v2922 = vpack.c.b16 %v2858, %v2858
    %v2923 = vpack.c.b16 %v2859, %v2859
    %v2924 = vpack.c.b16 %v2860, %v2860
    %v2925 = vpack.c.b16 %v2861, %v2861
    %v2926 = vpack.c.b16 %v2862, %v2862
    %v2927 = vpack.c.b16 %v2863, %v2863
    %v2928 = vpack.c.b16 %v2864, %v2864
    %v2929 = vpack.c.b16 %v2865, %v2865
    %v2930 = vpack.c.b16 %v2866, %v2866
    %v2931 = vpack.c.b16 %v2867, %v2867
    %v2932 = vpack.c.b16 %v2868, %v2868
    %v2933 = vpack.c.b16 %v2869, %v2869
    %v2934 = vpack.c.b16 %v2870, %v2870
    %v2935 = vpack.c.b16 %v2871, %v2871
    %v2936 = vpack.c.b16 %v2872, %v2872
    %v2937 = vpack.c.b16 %v2873, %v2873
    %v2938 = vpack.c.b16 %v2874, %v2874
    %v2939 = vpack.c.b16 %v2875, %v2875
    %v2940 = vpack.c.b16 %v2876, %v2876
    %v2941 = vpack.c.b16 %v2877, %v2877
    %v2942 = vpack.c.b16 %v2878, %v2878
    %v2943 = vpack.c.b16 %v2879, %v2879
    %v2944 = vpack.c.b16 %v2880, %v2880
    %v2945 = vpack.c.b16 %v2881, %v2881
    %v2946 = vpack.c.b16 %v2882, %v2882
    %v2947 = vpack.c.b16 %v2883, %v2883
    %v2948 = vpack.c.b16 %v2884, %v2884
    %v2949 = vpack.c.b16 %v2885, %v2885
    %3014 = vst [vmem:[%s4] sm:$0xf] %v2886
    %3015 = vst [vmem:[%s4 + $0x4] sm:$0xf] %v2887
    %3016 = vst [vmem:[%s4 + $0x8] sm:$0xf] %v2888
    %3017 = vst [vmem:[%s4 + $0xc] sm:$0xf] %v2889
    %3018 = vst [vmem:[%s4 + $0x10] sm:$0xf] %v2890
    %3019 = vst [vmem:[%s4 + $0x14] sm:$0xf] %v2891
    %3020 = vst [vmem:[%s4 + $0x18] sm:$0xf] %v2892
    %3021 = vst [vmem:[%s4 + $0x1c] sm:$0xf] %v2893
    %3022 = vst [vmem:[%s4 + $0x20] sm:$0xf] %v2894
    %3023 = vst [vmem:[%s4 + $0x24] sm:$0xf] %v2895
    %3024 = vst [vmem:[%s4 + $0x28] sm:$0xf] %v2896
    %3025 = vst [vmem:[%s4 + $0x2c] sm:$0xf] %v2897
    %3026 = vst [vmem:[%s4 + $0x30] sm:$0xf] %v2898
    %3027 = vst [vmem:[%s4 + $0x34] sm:$0xf] %v2899
    %3028 = vst [vmem:[%s4 + $0x38] sm:$0xf] %v2900
    %3029 = vst [vmem:[%s4 + $0x3c] sm:$0xf] %v2901
    %3030 = vst [vmem:[%s4 + $0x40] sm:$0xf] %v2902
    %3031 = vst [vmem:[%s4 + $0x44] sm:$0xf] %v2903
    %3032 = vst [vmem:[%s4 + $0x48] sm:$0xf] %v2904
    %3033 = vst [vmem:[%s4 + $0x4c] sm:$0xf] %v2905
    %3034 = vst [vmem:[%s4 + $0x50] sm:$0xf] %v2906
    %3035 = vst [vmem:[%s4 + $0x54] sm:$0xf] %v2907
    %3036 = vst [vmem:[%s4 + $0x58] sm:$0xf] %v2908
    %3037 = vst [vmem:[%s4 + $0x5c] sm:$0xf] %v2909
    %3038 = vst [vmem:[%s4 + $0x60] sm:$0xf] %v2910
    %3039 = vst [vmem:[%s4 + $0x64] sm:$0xf] %v2911
    %3040 = vst [vmem:[%s4 + $0x68] sm:$0xf] %v2912
    %3041 = vst [vmem:[%s4 + $0x6c] sm:$0xf] %v2913
    %3042 = vst [vmem:[%s4 + $0x70] sm:$0xf] %v2914
    %3043 = vst [vmem:[%s4 + $0x74] sm:$0xf] %v2915
    %3044 = vst [vmem:[%s4 + $0x78] sm:$0xf] %v2916
    %3045 = vst [vmem:[%s4 + $0x7c] sm:$0xf] %v2917
    %3046 = vst [vmem:[%s4 + $0x80] sm:$0xf] %v2918
    %3047 = vst [vmem:[%s4 + $0x84] sm:$0xf] %v2919
    %3048 = vst [vmem:[%s4 + $0x88] sm:$0xf] %v2920
    %3049 = vst [vmem:[%s4 + $0x8c] sm:$0xf] %v2921
    %3050 = vst [vmem:[%s4 + $0x90] sm:$0xf] %v2922
    %3051 = vst [vmem:[%s4 + $0x94] sm:$0xf] %v2923
    %3052 = vst [vmem:[%s4 + $0x98] sm:$0xf] %v2924
    %3053 = vst [vmem:[%s4 + $0x9c] sm:$0xf] %v2925
    %3054 = vst [vmem:[%s4 + $0xa0] sm:$0xf] %v2926
    %3055 = vst [vmem:[%s4 + $0xa4] sm:$0xf] %v2927
    %3056 = vst [vmem:[%s4 + $0xa8] sm:$0xf] %v2928
    %3057 = vst [vmem:[%s4 + $0xac] sm:$0xf] %v2929
    %3058 = vst [vmem:[%s4 + $0xb0] sm:$0xf] %v2930
    %3059 = vst [vmem:[%s4 + $0xb4] sm:$0xf] %v2931
    %3060 = vst [vmem:[%s4 + $0xb8] sm:$0xf] %v2932
    %3061 = vst [vmem:[%s4 + $0xbc] sm:$0xf] %v2933
    %3062 = vst [vmem:[%s4 + $0xc0] sm:$0xf] %v2934
    %3063 = vst [vmem:[%s4 + $0xc4] sm:$0xf] %v2935
    %3064 = vst [vmem:[%s4 + $0xc8] sm:$0xf] %v2936
    %3065 = vst [vmem:[%s4 + $0xcc] sm:$0xf] %v2937
    %3066 = vst [vmem:[%s4 + $0xd0] sm:$0xf] %v2938
    %3067 = vst [vmem:[%s4 + $0xd4] sm:$0xf] %v2939
    %3068 = vst [vmem:[%s4 + $0xd8] sm:$0xf] %v2940
    %3069 = vst [vmem:[%s4 + $0xdc] sm:$0xf] %v2941
    %3070 = vst [vmem:[%s4 + $0xe0] sm:$0xf] %v2942
    %3071 = vst [vmem:[%s4 + $0xe4] sm:$0xf] %v2943
    %3072 = vst [vmem:[%s4 + $0xe8] sm:$0xf] %v2944
    %3073 = vst [vmem:[%s4 + $0xec] sm:$0xf] %v2945
    %3074 = vst [vmem:[%s4 + $0xf0] sm:$0xf] %v2946
    %3075 = vst [vmem:[%s4 + $0xf4] sm:$0xf] %v2947
    %3076 = vst [vmem:[%s4 + $0xf8] sm:$0xf] %v2948
    %3077 = vst [vmem:[%s4 + $0xfc] sm:$0xf] %v2949
    %v3078 = vmul.f32 %v968, %v2558
    %v3079 = vmul.f32 %v971, %v2558
    %v3080 = vmul.f32 %v976, %v2558
    %v3081 = vmul.f32 %v979, %v2558
    %v3082 = vmul.f32 %v984, %v2558
    %v3083 = vmul.f32 %v987, %v2558
    %v3084 = vmul.f32 %v992, %v2558
    %v3085 = vmul.f32 %v995, %v2558
    %v3086 = vmul.f32 %v1000, %v2558
    %v3087 = vmul.f32 %v1003, %v2558
    %v3088 = vmul.f32 %v1008, %v2558
    %v3089 = vmul.f32 %v1011, %v2558
    %v3090 = vmul.f32 %v1016, %v2558
    %v3091 = vmul.f32 %v1019, %v2558
    %v3092 = vmul.f32 %v1024, %v2558
    %v3093 = vmul.f32 %v1027, %v2558
    %v3094 = vmul.f32 %v1032, %v2558
    %v3095 = vmul.f32 %v1035, %v2558
    %v3096 = vmul.f32 %v1040, %v2558
    %v3097 = vmul.f32 %v1043, %v2558
    %v3098 = vmul.f32 %v1048, %v2558
    %v3099 = vmul.f32 %v1051, %v2558
    %v3100 = vmul.f32 %v1056, %v2558
    %v3101 = vmul.f32 %v1059, %v2558
    %v3102 = vmul.f32 %v1064, %v2558
    %v3103 = vmul.f32 %v1067, %v2558
    %v3104 = vmul.f32 %v1072, %v2558
    %v3105 = vmul.f32 %v1075, %v2558
    %v3106 = vmul.f32 %v1080, %v2558
    %v3107 = vmul.f32 %v1083, %v2558
    %v3108 = vmul.f32 %v1088, %v2558
    %v3109 = vmul.f32 %v1091, %v2558
    %v3110 = vmul.f32 %v1096, %v2558
    %v3111 = vmul.f32 %v1099, %v2558
    %v3112 = vmul.f32 %v1104, %v2558
    %v3113 = vmul.f32 %v1107, %v2558
    %v3114 = vmul.f32 %v1112, %v2558
    %v3115 = vmul.f32 %v1115, %v2558
    %v3116 = vmul.f32 %v1120, %v2558
    %v3117 = vmul.f32 %v1123, %v2558
    %v3118 = vmul.f32 %v1128, %v2558
    %v3119 = vmul.f32 %v1131, %v2558
    %v3120 = vmul.f32 %v1136, %v2558
    %v3121 = vmul.f32 %v1139, %v2558
    %v3122 = vmul.f32 %v1144, %v2558
    %v3123 = vmul.f32 %v1147, %v2558
    %v3124 = vmul.f32 %v1152, %v2558
    %v3125 = vmul.f32 %v1155, %v2558
    %v3126 = vmul.f32 %v1160, %v2558
    %v3127 = vmul.f32 %v1163, %v2558
    %v3128 = vmul.f32 %v1168, %v2558
    %v3129 = vmul.f32 %v1171, %v2558
    %v3130 = vmul.f32 %v1176, %v2558
    %v3131 = vmul.f32 %v1179, %v2558
    %v3132 = vmul.f32 %v1184, %v2558
    %v3133 = vmul.f32 %v1187, %v2558
    %v3134 = vmul.f32 %v1192, %v2558
    %v3135 = vmul.f32 %v1195, %v2558
    %v3136 = vmul.f32 %v1200, %v2558
    %v3137 = vmul.f32 %v1203, %v2558
    %v3138 = vmul.f32 %v1208, %v2558
    %v3139 = vmul.f32 %v1211, %v2558
    %v3140 = vmul.f32 %v1216, %v2558
    %v3141 = vmul.f32 %v1219, %v2558
    %v3142 = vadd.f32 %v3078, %v2628
    %v3143 = vadd.f32 %v3079, %v2628
    %v3144 = vadd.f32 %v3080, %v2628
    %v3145 = vadd.f32 %v3081, %v2628
    %v3146 = vadd.f32 %v3082, %v2628
    %v3147 = vadd.f32 %v3083, %v2628
    %v3148 = vadd.f32 %v3084, %v2628
    %v3149 = vadd.f32 %v3085, %v2628
    %v3150 = vadd.f32 %v3086, %v2628
    %v3151 = vadd.f32 %v3087, %v2628
    %v3152 = vadd.f32 %v3088, %v2628
    %v3153 = vadd.f32 %v3089, %v2628
    %v3154 = vadd.f32 %v3090, %v2628
    %v3155 = vadd.f32 %v3091, %v2628
    %v3156 = vadd.f32 %v3092, %v2628
    %v3157 = vadd.f32 %v3093, %v2628
    %v3158 = vadd.f32 %v3094, %v2628
    %v3159 = vadd.f32 %v3095, %v2628
    %v3160 = vadd.f32 %v3096, %v2628
    %v3161 = vadd.f32 %v3097, %v2628
    %v3162 = vadd.f32 %v3098, %v2628
    %v3163 = vadd.f32 %v3099, %v2628
    %v3164 = vadd.f32 %v3100, %v2628
    %v3165 = vadd.f32 %v3101, %v2628
    %v3166 = vadd.f32 %v3102, %v2628
    %v3167 = vadd.f32 %v3103, %v2628
    %v3168 = vadd.f32 %v3104, %v2628
    %v3169 = vadd.f32 %v3105, %v2628
    %v3170 = vadd.f32 %v3106, %v2628
    %v3171 = vadd.f32 %v3107, %v2628
    %v3172 = vadd.f32 %v3108, %v2628
    %v3173 = vadd.f32 %v3109, %v2628
    %v3174 = vadd.f32 %v3110, %v2628
    %v3175 = vadd.f32 %v3111, %v2628
    %v3176 = vadd.f32 %v3112, %v2628
    %v3177 = vadd.f32 %v3113, %v2628
    %v3178 = vadd.f32 %v3114, %v2628
    %v3179 = vadd.f32 %v3115, %v2628
    %v3180 = vadd.f32 %v3116, %v2628
    %v3181 = vadd.f32 %v3117, %v2628
    %v3182 = vadd.f32 %v3118, %v2628
    %v3183 = vadd.f32 %v3119, %v2628
    %v3184 = vadd.f32 %v3120, %v2628
    %v3185 = vadd.f32 %v3121, %v2628
    %v3186 = vadd.f32 %v3122, %v2628
    %v3187 = vadd.f32 %v3123, %v2628
    %v3188 = vadd.f32 %v3124, %v2628
    %v3189 = vadd.f32 %v3125, %v2628
    %v3190 = vadd.f32 %v3126, %v2628
    %v3191 = vadd.f32 %v3127, %v2628
    %v3192 = vadd.f32 %v3128, %v2628
    %v3193 = vadd.f32 %v3129, %v2628
    %v3194 = vadd.f32 %v3130, %v2628
    %v3195 = vadd.f32 %v3131, %v2628
    %v3196 = vadd.f32 %v3132, %v2628
    %v3197 = vadd.f32 %v3133, %v2628
    %v3198 = vadd.f32 %v3134, %v2628
    %v3199 = vadd.f32 %v3135, %v2628
    %v3200 = vadd.f32 %v3136, %v2628
    %v3201 = vadd.f32 %v3137, %v2628
    %v3202 = vadd.f32 %v3138, %v2628
    %v3203 = vadd.f32 %v3139, %v2628
    %v3204 = vadd.f32 %v3140, %v2628
    %v3205 = vadd.f32 %v3141, %v2628
    %v3206 = vmax.f32 %v3142, 0.0
    %v3207 = vmax.f32 %v3143, 0.0
    %v3208 = vmax.f32 %v3144, 0.0
    %v3209 = vmax.f32 %v3145, 0.0
    %v3210 = vmax.f32 %v3146, 0.0
    %v3211 = vmax.f32 %v3147, 0.0
    %v3212 = vmax.f32 %v3148, 0.0
    %v3213 = vmax.f32 %v3149, 0.0
    %v3214 = vmax.f32 %v3150, 0.0
    %v3215 = vmax.f32 %v3151, 0.0
    %v3216 = vmax.f32 %v3152, 0.0
    %v3217 = vmax.f32 %v3153, 0.0
    %v3218 = vmax.f32 %v3154, 0.0
    %v3219 = vmax.f32 %v3155, 0.0
    %v3220 = vmax.f32 %v3156, 0.0
    %v3221 = vmax.f32 %v3157, 0.0
    %v3222 = vmax.f32 %v3158, 0.0
    %v3223 = vmax.f32 %v3159, 0.0
    %v3224 = vmax.f32 %v3160, 0.0
    %v3225 = vmax.f32 %v3161, 0.0
    %v3226 = vmax.f32 %v3162, 0.0
    %v3227 = vmax.f32 %v3163, 0.0
    %v3228 = vmax.f32 %v3164, 0.0
    %v3229 = vmax.f32 %v3165, 0.0
    %v3230 = vmax.f32 %v3166, 0.0
    %v3231 = vmax.f32 %v3167, 0.0
    %v3232 = vmax.f32 %v3168, 0.0
    %v3233 = vmax.f32 %v3169, 0.0
    %v3234 = vmax.f32 %v3170, 0.0
    %v3235 = vmax.f32 %v3171, 0.0
    %v3236 = vmax.f32 %v3172, 0.0
    %v3237 = vmax.f32 %v3173, 0.0
    %v3238 = vmax.f32 %v3174, 0.0
    %v3239 = vmax.f32 %v3175, 0.0
    %v3240 = vmax.f32 %v3176, 0.0
    %v3241 = vmax.f32 %v3177, 0.0
    %v3242 = vmax.f32 %v3178, 0.0
    %v3243 = vmax.f32 %v3179, 0.0
    %v3244 = vmax.f32 %v3180, 0.0
    %v3245 = vmax.f32 %v3181, 0.0
    %v3246 = vmax.f32 %v3182, 0.0
    %v3247 = vmax.f32 %v3183, 0.0
    %v3248 = vmax.f32 %v3184, 0.0
    %v3249 = vmax.f32 %v3185, 0.0
    %v3250 = vmax.f32 %v3186, 0.0
    %v3251 = vmax.f32 %v3187, 0.0
    %v3252 = vmax.f32 %v3188, 0.0
    %v3253 = vmax.f32 %v3189, 0.0
    %v3254 = vmax.f32 %v3190, 0.0
    %v3255 = vmax.f32 %v3191, 0.0
    %v3256 = vmax.f32 %v3192, 0.0
    %v3257 = vmax.f32 %v3193, 0.0
    %v3258 = vmax.f32 %v3194, 0.0
    %v3259 = vmax.f32 %v3195, 0.0
    %v3260 = vmax.f32 %v3196, 0.0
    %v3261 = vmax.f32 %v3197, 0.0
    %v3262 = vmax.f32 %v3198, 0.0
    %v3263 = vmax.f32 %v3199, 0.0
    %v3264 = vmax.f32 %v3200, 0.0
    %v3265 = vmax.f32 %v3201, 0.0
    %v3266 = vmax.f32 %v3202, 0.0
    %v3267 = vmax.f32 %v3203, 0.0
    %v3268 = vmax.f32 %v3204, 0.0
    %v3269 = vmax.f32 %v3205, 0.0
    %v3270 = vpack.c.bf16 %v3207, %v3206
    %v3271 = vpack.c.bf16 %v3209, %v3208
    %v3272 = vpack.c.bf16 %v3211, %v3210
    %v3273 = vpack.c.bf16 %v3213, %v3212
    %v3274 = vpack.c.bf16 %v3215, %v3214
    %v3275 = vpack.c.bf16 %v3217, %v3216
    %v3276 = vpack.c.bf16 %v3219, %v3218
    %v3277 = vpack.c.bf16 %v3221, %v3220
    %v3278 = vpack.c.bf16 %v3223, %v3222
    %v3279 = vpack.c.bf16 %v3225, %v3224
    %v3280 = vpack.c.bf16 %v3227, %v3226
    %v3281 = vpack.c.bf16 %v3229, %v3228
    %v3282 = vpack.c.bf16 %v3231, %v3230
    %v3283 = vpack.c.bf16 %v3233, %v3232
    %v3284 = vpack.c.bf16 %v3235, %v3234
    %v3285 = vpack.c.bf16 %v3237, %v3236
    %v3286 = vpack.c.bf16 %v3239, %v3238
    %v3287 = vpack.c.bf16 %v3241, %v3240
    %v3288 = vpack.c.bf16 %v3243, %v3242
    %v3289 = vpack.c.bf16 %v3245, %v3244
    %v3290 = vpack.c.bf16 %v3247, %v3246
    %v3291 = vpack.c.bf16 %v3249, %v3248
    %v3292 = vpack.c.bf16 %v3251, %v3250
    %v3293 = vpack.c.bf16 %v3253, %v3252
    %v3294 = vpack.c.bf16 %v3255, %v3254
    %v3295 = vpack.c.bf16 %v3257, %v3256
    %v3296 = vpack.c.bf16 %v3259, %v3258
    %v3297 = vpack.c.bf16 %v3261, %v3260
    %v3298 = vpack.c.bf16 %v3263, %v3262
    %v3299 = vpack.c.bf16 %v3265, %v3264
    %v3300 = vpack.c.bf16 %v3267, %v3266
    %v3301 = vpack.c.bf16 %v3269, %v3268
    %v3334 = vunpack.c.l.b16 %v3270
    %v3335 = vunpack.c.h.b16 %v3270
    %v3336 = vunpack.c.l.b16 %v3271
    %v3337 = vunpack.c.h.b16 %v3271
    %v3338 = vunpack.c.l.b16 %v3272
    %v3339 = vunpack.c.h.b16 %v3272
    %v3340 = vunpack.c.l.b16 %v3273
    %v3341 = vunpack.c.h.b16 %v3273
    %v3342 = vunpack.c.l.b16 %v3274
    %v3343 = vunpack.c.h.b16 %v3274
    %v3344 = vunpack.c.l.b16 %v3275
    %v3345 = vunpack.c.h.b16 %v3275
    %v3346 = vunpack.c.l.b16 %v3276
    %v3347 = vunpack.c.h.b16 %v3276
    %v3348 = vunpack.c.l.b16 %v3277
    %v3349 = vunpack.c.h.b16 %v3277
    %v3350 = vunpack.c.l.b16 %v3278
    %v3351 = vunpack.c.h.b16 %v3278
    %v3352 = vunpack.c.l.b16 %v3279
    %v3353 = vunpack.c.h.b16 %v3279
    %v3354 = vunpack.c.l.b16 %v3280
    %v3355 = vunpack.c.h.b16 %v3280
    %v3356 = vunpack.c.l.b16 %v3281
    %v3357 = vunpack.c.h.b16 %v3281
    %v3358 = vunpack.c.l.b16 %v3282
    %v3359 = vunpack.c.h.b16 %v3282
    %v3360 = vunpack.c.l.b16 %v3283
    %v3361 = vunpack.c.h.b16 %v3283
    %v3362 = vunpack.c.l.b16 %v3284
    %v3363 = vunpack.c.h.b16 %v3284
    %v3364 = vunpack.c.l.b16 %v3285
    %v3365 = vunpack.c.h.b16 %v3285
    %v3366 = vunpack.c.l.b16 %v3286
    %v3367 = vunpack.c.h.b16 %v3286
    %v3368 = vunpack.c.l.b16 %v3287
    %v3369 = vunpack.c.h.b16 %v3287
    %v3370 = vunpack.c.l.b16 %v3288
    %v3371 = vunpack.c.h.b16 %v3288
    %v3372 = vunpack.c.l.b16 %v3289
    %v3373 = vunpack.c.h.b16 %v3289
    %v3374 = vunpack.c.l.b16 %v3290
    %v3375 = vunpack.c.h.b16 %v3290
    %v3376 = vunpack.c.l.b16 %v3291
    %v3377 = vunpack.c.h.b16 %v3291
    %v3378 = vunpack.c.l.b16 %v3292
    %v3379 = vunpack.c.h.b16 %v3292
    %v3380 = vunpack.c.l.b16 %v3293
    %v3381 = vunpack.c.h.b16 %v3293
    %v3382 = vunpack.c.l.b16 %v3294
    %v3383 = vunpack.c.h.b16 %v3294
    %v3384 = vunpack.c.l.b16 %v3295
    %v3385 = vunpack.c.h.b16 %v3295
    %v3386 = vunpack.c.l.b16 %v3296
    %v3387 = vunpack.c.h.b16 %v3296
    %v3388 = vunpack.c.l.b16 %v3297
    %v3389 = vunpack.c.h.b16 %v3297
    %v3390 = vunpack.c.l.b16 %v3298
    %v3391 = vunpack.c.h.b16 %v3298
    %v3392 = vunpack.c.l.b16 %v3299
    %v3393 = vunpack.c.h.b16 %v3299
    %v3394 = vunpack.c.l.b16 %v3300
    %v3395 = vunpack.c.h.b16 %v3300
    %v3396 = vunpack.c.l.b16 %v3301
    %v3397 = vunpack.c.h.b16 %v3301
    %v3398 = vpack.c.b16 %v3334, %v3334
    %v3399 = vpack.c.b16 %v3335, %v3335
    %v3400 = vpack.c.b16 %v3336, %v3336
    %v3401 = vpack.c.b16 %v3337, %v3337
    %v3402 = vpack.c.b16 %v3338, %v3338
    %v3403 = vpack.c.b16 %v3339, %v3339
    %v3404 = vpack.c.b16 %v3340, %v3340
    %v3405 = vpack.c.b16 %v3341, %v3341
    %v3406 = vpack.c.b16 %v3342, %v3342
    %v3407 = vpack.c.b16 %v3343, %v3343
    %v3408 = vpack.c.b16 %v3344, %v3344
    %v3409 = vpack.c.b16 %v3345, %v3345
    %v3410 = vpack.c.b16 %v3346, %v3346
    %v3411 = vpack.c.b16 %v3347, %v3347
    %v3412 = vpack.c.b16 %v3348, %v3348
    %v3413 = vpack.c.b16 %v3349, %v3349
    %v3414 = vpack.c.b16 %v3350, %v3350
    %v3415 = vpack.c.b16 %v3351, %v3351
    %v3416 = vpack.c.b16 %v3352, %v3352
    %v3417 = vpack.c.b16 %v3353, %v3353
    %v3418 = vpack.c.b16 %v3354, %v3354
    %v3419 = vpack.c.b16 %v3355, %v3355
    %v3420 = vpack.c.b16 %v3356, %v3356
    %v3421 = vpack.c.b16 %v3357, %v3357
    %v3422 = vpack.c.b16 %v3358, %v3358
    %v3423 = vpack.c.b16 %v3359, %v3359
    %v3424 = vpack.c.b16 %v3360, %v3360
    %v3425 = vpack.c.b16 %v3361, %v3361
    %v3426 = vpack.c.b16 %v3362, %v3362
    %v3427 = vpack.c.b16 %v3363, %v3363
    %v3428 = vpack.c.b16 %v3364, %v3364
    %v3429 = vpack.c.b16 %v3365, %v3365
    %v3430 = vpack.c.b16 %v3366, %v3366
    %v3431 = vpack.c.b16 %v3367, %v3367
    %v3432 = vpack.c.b16 %v3368, %v3368
    %v3433 = vpack.c.b16 %v3369, %v3369
    %v3434 = vpack.c.b16 %v3370, %v3370
    %v3435 = vpack.c.b16 %v3371, %v3371
    %v3436 = vpack.c.b16 %v3372, %v3372
    %v3437 = vpack.c.b16 %v3373, %v3373
    %v3438 = vpack.c.b16 %v3374, %v3374
    %v3439 = vpack.c.b16 %v3375, %v3375
    %v3440 = vpack.c.b16 %v3376, %v3376
    %v3441 = vpack.c.b16 %v3377, %v3377
    %v3442 = vpack.c.b16 %v3378, %v3378
    %v3443 = vpack.c.b16 %v3379, %v3379
    %v3444 = vpack.c.b16 %v3380, %v3380
    %v3445 = vpack.c.b16 %v3381, %v3381
    %v3446 = vpack.c.b16 %v3382, %v3382
    %v3447 = vpack.c.b16 %v3383, %v3383
    %v3448 = vpack.c.b16 %v3384, %v3384
    %v3449 = vpack.c.b16 %v3385, %v3385
    %v3450 = vpack.c.b16 %v3386, %v3386
    %v3451 = vpack.c.b16 %v3387, %v3387
    %v3452 = vpack.c.b16 %v3388, %v3388
    %v3453 = vpack.c.b16 %v3389, %v3389
    %v3454 = vpack.c.b16 %v3390, %v3390
    %v3455 = vpack.c.b16 %v3391, %v3391
    %v3456 = vpack.c.b16 %v3392, %v3392
    %v3457 = vpack.c.b16 %v3393, %v3393
    %v3458 = vpack.c.b16 %v3394, %v3394
    %v3459 = vpack.c.b16 %v3395, %v3395
    %v3460 = vpack.c.b16 %v3396, %v3396
    %v3461 = vpack.c.b16 %v3397, %v3397
    %s3526 = scalar_lea.vmem %s4, 256
    %3527 = vst [vmem:[%s3526] sm:$0xf] %v3398
    %3528 = vst [vmem:[%s3526 + $0x4] sm:$0xf] %v3399
    %3529 = vst [vmem:[%s3526 + $0x8] sm:$0xf] %v3400
    %3530 = vst [vmem:[%s3526 + $0xc] sm:$0xf] %v3401
    %3531 = vst [vmem:[%s3526 + $0x10] sm:$0xf] %v3402
    %3532 = vst [vmem:[%s3526 + $0x14] sm:$0xf] %v3403
    %3533 = vst [vmem:[%s3526 + $0x18] sm:$0xf] %v3404
    %3534 = vst [vmem:[%s3526 + $0x1c] sm:$0xf] %v3405
    %3535 = vst [vmem:[%s3526 + $0x20] sm:$0xf] %v3406
    %3536 = vst [vmem:[%s3526 + $0x24] sm:$0xf] %v3407
    %3537 = vst [vmem:[%s3526 + $0x28] sm:$0xf] %v3408
    %3538 = vst [vmem:[%s3526 + $0x2c] sm:$0xf] %v3409
    %3539 = vst [vmem:[%s3526 + $0x30] sm:$0xf] %v3410
    %3540 = vst [vmem:[%s3526 + $0x34] sm:$0xf] %v3411
    %3541 = vst [vmem:[%s3526 + $0x38] sm:$0xf] %v3412
    %3542 = vst [vmem:[%s3526 + $0x3c] sm:$0xf] %v3413
    %3543 = vst [vmem:[%s3526 + $0x40] sm:$0xf] %v3414
    %3544 = vst [vmem:[%s3526 + $0x44] sm:$0xf] %v3415
    %3545 = vst [vmem:[%s3526 + $0x48] sm:$0xf] %v3416
    %3546 = vst [vmem:[%s3526 + $0x4c] sm:$0xf] %v3417
    %3547 = vst [vmem:[%s3526 + $0x50] sm:$0xf] %v3418
    %3548 = vst [vmem:[%s3526 + $0x54] sm:$0xf] %v3419
    %3549 = vst [vmem:[%s3526 + $0x58] sm:$0xf] %v3420
    %3550 = vst [vmem:[%s3526 + $0x5c] sm:$0xf] %v3421
    %3551 = vst [vmem:[%s3526 + $0x60] sm:$0xf] %v3422
    %3552 = vst [vmem:[%s3526 + $0x64] sm:$0xf] %v3423
    %3553 = vst [vmem:[%s3526 + $0x68] sm:$0xf] %v3424
    %3554 = vst [vmem:[%s3526 + $0x6c] sm:$0xf] %v3425
    %3555 = vst [vmem:[%s3526 + $0x70] sm:$0xf] %v3426
    %3556 = vst [vmem:[%s3526 + $0x74] sm:$0xf] %v3427
    %3557 = vst [vmem:[%s3526 + $0x78] sm:$0xf] %v3428
    %3558 = vst [vmem:[%s3526 + $0x7c] sm:$0xf] %v3429
    %3559 = vst [vmem:[%s3526 + $0x80] sm:$0xf] %v3430
    %3560 = vst [vmem:[%s3526 + $0x84] sm:$0xf] %v3431
    %3561 = vst [vmem:[%s3526 + $0x88] sm:$0xf] %v3432
    %3562 = vst [vmem:[%s3526 + $0x8c] sm:$0xf] %v3433
    %3563 = vst [vmem:[%s3526 + $0x90] sm:$0xf] %v3434
    %3564 = vst [vmem:[%s3526 + $0x94] sm:$0xf] %v3435
    %3565 = vst [vmem:[%s3526 + $0x98] sm:$0xf] %v3436
    %3566 = vst [vmem:[%s3526 + $0x9c] sm:$0xf] %v3437
    %3567 = vst [vmem:[%s3526 + $0xa0] sm:$0xf] %v3438
    %3568 = vst [vmem:[%s3526 + $0xa4] sm:$0xf] %v3439
    %3569 = vst [vmem:[%s3526 + $0xa8] sm:$0xf] %v3440
    %3570 = vst [vmem:[%s3526 + $0xac] sm:$0xf] %v3441
    %3571 = vst [vmem:[%s3526 + $0xb0] sm:$0xf] %v3442
    %3572 = vst [vmem:[%s3526 + $0xb4] sm:$0xf] %v3443
    %3573 = vst [vmem:[%s3526 + $0xb8] sm:$0xf] %v3444
    %3574 = vst [vmem:[%s3526 + $0xbc] sm:$0xf] %v3445
    %3575 = vst [vmem:[%s3526 + $0xc0] sm:$0xf] %v3446
    %3576 = vst [vmem:[%s3526 + $0xc4] sm:$0xf] %v3447
    %3577 = vst [vmem:[%s3526 + $0xc8] sm:$0xf] %v3448
    %3578 = vst [vmem:[%s3526 + $0xcc] sm:$0xf] %v3449
    %3579 = vst [vmem:[%s3526 + $0xd0] sm:$0xf] %v3450
    %3580 = vst [vmem:[%s3526 + $0xd4] sm:$0xf] %v3451
    %3581 = vst [vmem:[%s3526 + $0xd8] sm:$0xf] %v3452
    %3582 = vst [vmem:[%s3526 + $0xdc] sm:$0xf] %v3453
    %3583 = vst [vmem:[%s3526 + $0xe0] sm:$0xf] %v3454
    %3584 = vst [vmem:[%s3526 + $0xe4] sm:$0xf] %v3455
    %3585 = vst [vmem:[%s3526 + $0xe8] sm:$0xf] %v3456
    %3586 = vst [vmem:[%s3526 + $0xec] sm:$0xf] %v3457
    %3587 = vst [vmem:[%s3526 + $0xf0] sm:$0xf] %v3458
    %3588 = vst [vmem:[%s3526 + $0xf4] sm:$0xf] %v3459
    %3589 = vst [vmem:[%s3526 + $0xf8] sm:$0xf] %v3460
    %3590 = vst [vmem:[%s3526 + $0xfc] sm:$0xf] %v3461
    %v3591 = vmul.f32 %v1526, %v2558
    %v3592 = vmul.f32 %v1529, %v2558
    %v3593 = vmul.f32 %v1534, %v2558
    %v3594 = vmul.f32 %v1537, %v2558
    %v3595 = vmul.f32 %v1542, %v2558
    %v3596 = vmul.f32 %v1545, %v2558
    %v3597 = vmul.f32 %v1550, %v2558
    %v3598 = vmul.f32 %v1553, %v2558
    %v3599 = vmul.f32 %v1558, %v2558
    %v3600 = vmul.f32 %v1561, %v2558
    %v3601 = vmul.f32 %v1566, %v2558
    %v3602 = vmul.f32 %v1569, %v2558
    %v3603 = vmul.f32 %v1574, %v2558
    %v3604 = vmul.f32 %v1577, %v2558
    %v3605 = vmul.f32 %v1582, %v2558
    %v3606 = vmul.f32 %v1585, %v2558
    %v3607 = vmul.f32 %v1590, %v2558
    %v3608 = vmul.f32 %v1593, %v2558
    %v3609 = vmul.f32 %v1598, %v2558
    %v3610 = vmul.f32 %v1601, %v2558
    %v3611 = vmul.f32 %v1606, %v2558
    %v3612 = vmul.f32 %v1609, %v2558
    %v3613 = vmul.f32 %v1614, %v2558
    %v3614 = vmul.f32 %v1617, %v2558
    %v3615 = vmul.f32 %v1622, %v2558
    %v3616 = vmul.f32 %v1625, %v2558
    %v3617 = vmul.f32 %v1630, %v2558
    %v3618 = vmul.f32 %v1633, %v2558
    %v3619 = vmul.f32 %v1638, %v2558
    %v3620 = vmul.f32 %v1641, %v2558
    %v3621 = vmul.f32 %v1646, %v2558
    %v3622 = vmul.f32 %v1649, %v2558
    %v3623 = vmul.f32 %v1654, %v2558
    %v3624 = vmul.f32 %v1657, %v2558
    %v3625 = vmul.f32 %v1662, %v2558
    %v3626 = vmul.f32 %v1665, %v2558
    %v3627 = vmul.f32 %v1670, %v2558
    %v3628 = vmul.f32 %v1673, %v2558
    %v3629 = vmul.f32 %v1678, %v2558
    %v3630 = vmul.f32 %v1681, %v2558
    %v3631 = vmul.f32 %v1686, %v2558
    %v3632 = vmul.f32 %v1689, %v2558
    %v3633 = vmul.f32 %v1694, %v2558
    %v3634 = vmul.f32 %v1697, %v2558
    %v3635 = vmul.f32 %v1702, %v2558
    %v3636 = vmul.f32 %v1705, %v2558
    %v3637 = vmul.f32 %v1710, %v2558
    %v3638 = vmul.f32 %v1713, %v2558
    %v3639 = vmul.f32 %v1718, %v2558
    %v3640 = vmul.f32 %v1721, %v2558
    %v3641 = vmul.f32 %v1726, %v2558
    %v3642 = vmul.f32 %v1729, %v2558
    %v3643 = vmul.f32 %v1734, %v2558
    %v3644 = vmul.f32 %v1737, %v2558
    %v3645 = vmul.f32 %v1742, %v2558
    %v3646 = vmul.f32 %v1745, %v2558
    %v3647 = vmul.f32 %v1750, %v2558
    %v3648 = vmul.f32 %v1753, %v2558
    %v3649 = vmul.f32 %v1758, %v2558
    %v3650 = vmul.f32 %v1761, %v2558
    %v3651 = vmul.f32 %v1766, %v2558
    %v3652 = vmul.f32 %v1769, %v2558
    %v3653 = vmul.f32 %v1774, %v2558
    %v3654 = vmul.f32 %v1777, %v2558
    %v3655 = vadd.f32 %v3591, %v2628
    %v3656 = vadd.f32 %v3592, %v2628
    %v3657 = vadd.f32 %v3593, %v2628
    %v3658 = vadd.f32 %v3594, %v2628
    %v3659 = vadd.f32 %v3595, %v2628
    %v3660 = vadd.f32 %v3596, %v2628
    %v3661 = vadd.f32 %v3597, %v2628
    %v3662 = vadd.f32 %v3598, %v2628
    %v3663 = vadd.f32 %v3599, %v2628
    %v3664 = vadd.f32 %v3600, %v2628
    %v3665 = vadd.f32 %v3601, %v2628
    %v3666 = vadd.f32 %v3602, %v2628
    %v3667 = vadd.f32 %v3603, %v2628
    %v3668 = vadd.f32 %v3604, %v2628
    %v3669 = vadd.f32 %v3605, %v2628
    %v3670 = vadd.f32 %v3606, %v2628
    %v3671 = vadd.f32 %v3607, %v2628
    %v3672 = vadd.f32 %v3608, %v2628
    %v3673 = vadd.f32 %v3609, %v2628
    %v3674 = vadd.f32 %v3610, %v2628
    %v3675 = vadd.f32 %v3611, %v2628
    %v3676 = vadd.f32 %v3612, %v2628
    %v3677 = vadd.f32 %v3613, %v2628
    %v3678 = vadd.f32 %v3614, %v2628
    %v3679 = vadd.f32 %v3615, %v2628
    %v3680 = vadd.f32 %v3616, %v2628
    %v3681 = vadd.f32 %v3617, %v2628
    %v3682 = vadd.f32 %v3618, %v2628
    %v3683 = vadd.f32 %v3619, %v2628
    %v3684 = vadd.f32 %v3620, %v2628
    %v3685 = vadd.f32 %v3621, %v2628
    %v3686 = vadd.f32 %v3622, %v2628
    %v3687 = vadd.f32 %v3623, %v2628
    %v3688 = vadd.f32 %v3624, %v2628
    %v3689 = vadd.f32 %v3625, %v2628
    %v3690 = vadd.f32 %v3626, %v2628
    %v3691 = vadd.f32 %v3627, %v2628
    %v3692 = vadd.f32 %v3628, %v2628
    %v3693 = vadd.f32 %v3629, %v2628
    %v3694 = vadd.f32 %v3630, %v2628
    %v3695 = vadd.f32 %v3631, %v2628
    %v3696 = vadd.f32 %v3632, %v2628
    %v3697 = vadd.f32 %v3633, %v2628
    %v3698 = vadd.f32 %v3634, %v2628
    %v3699 = vadd.f32 %v3635, %v2628
    %v3700 = vadd.f32 %v3636, %v2628
    %v3701 = vadd.f32 %v3637, %v2628
    %v3702 = vadd.f32 %v3638, %v2628
    %v3703 = vadd.f32 %v3639, %v2628
    %v3704 = vadd.f32 %v3640, %v2628
    %v3705 = vadd.f32 %v3641, %v2628
    %v3706 = vadd.f32 %v3642, %v2628
    %v3707 = vadd.f32 %v3643, %v2628
    %v3708 = vadd.f32 %v3644, %v2628
    %v3709 = vadd.f32 %v3645, %v2628
    %v3710 = vadd.f32 %v3646, %v2628
    %v3711 = vadd.f32 %v3647, %v2628
    %v3712 = vadd.f32 %v3648, %v2628
    %v3713 = vadd.f32 %v3649, %v2628
    %v3714 = vadd.f32 %v3650, %v2628
    %v3715 = vadd.f32 %v3651, %v2628
    %v3716 = vadd.f32 %v3652, %v2628
    %v3717 = vadd.f32 %v3653, %v2628
    %v3718 = vadd.f32 %v3654, %v2628
    %v3719 = vmax.f32 %v3655, 0.0
    %v3720 = vmax.f32 %v3656, 0.0
    %v3721 = vmax.f32 %v3657, 0.0
    %v3722 = vmax.f32 %v3658, 0.0
    %v3723 = vmax.f32 %v3659, 0.0
    %v3724 = vmax.f32 %v3660, 0.0
    %v3725 = vmax.f32 %v3661, 0.0
    %v3726 = vmax.f32 %v3662, 0.0
    %v3727 = vmax.f32 %v3663, 0.0
    %v3728 = vmax.f32 %v3664, 0.0
    %v3729 = vmax.f32 %v3665, 0.0
    %v3730 = vmax.f32 %v3666, 0.0
    %v3731 = vmax.f32 %v3667, 0.0
    %v3732 = vmax.f32 %v3668, 0.0
    %v3733 = vmax.f32 %v3669, 0.0
    %v3734 = vmax.f32 %v3670, 0.0
    %v3735 = vmax.f32 %v3671, 0.0
    %v3736 = vmax.f32 %v3672, 0.0
    %v3737 = vmax.f32 %v3673, 0.0
    %v3738 = vmax.f32 %v3674, 0.0
    %v3739 = vmax.f32 %v3675, 0.0
    %v3740 = vmax.f32 %v3676, 0.0
    %v3741 = vmax.f32 %v3677, 0.0
    %v3742 = vmax.f32 %v3678, 0.0
    %v3743 = vmax.f32 %v3679, 0.0
    %v3744 = vmax.f32 %v3680, 0.0
    %v3745 = vmax.f32 %v3681, 0.0
    %v3746 = vmax.f32 %v3682, 0.0
    %v3747 = vmax.f32 %v3683, 0.0
    %v3748 = vmax.f32 %v3684, 0.0
    %v3749 = vmax.f32 %v3685, 0.0
    %v3750 = vmax.f32 %v3686, 0.0
    %v3751 = vmax.f32 %v3687, 0.0
    %v3752 = vmax.f32 %v3688, 0.0
    %v3753 = vmax.f32 %v3689, 0.0
    %v3754 = vmax.f32 %v3690, 0.0
    %v3755 = vmax.f32 %v3691, 0.0
    %v3756 = vmax.f32 %v3692, 0.0
    %v3757 = vmax.f32 %v3693, 0.0
    %v3758 = vmax.f32 %v3694, 0.0
    %v3759 = vmax.f32 %v3695, 0.0
    %v3760 = vmax.f32 %v3696, 0.0
    %v3761 = vmax.f32 %v3697, 0.0
    %v3762 = vmax.f32 %v3698, 0.0
    %v3763 = vmax.f32 %v3699, 0.0
    %v3764 = vmax.f32 %v3700, 0.0
    %v3765 = vmax.f32 %v3701, 0.0
    %v3766 = vmax.f32 %v3702, 0.0
    %v3767 = vmax.f32 %v3703, 0.0
    %v3768 = vmax.f32 %v3704, 0.0
    %v3769 = vmax.f32 %v3705, 0.0
    %v3770 = vmax.f32 %v3706, 0.0
    %v3771 = vmax.f32 %v3707, 0.0
    %v3772 = vmax.f32 %v3708, 0.0
    %v3773 = vmax.f32 %v3709, 0.0
    %v3774 = vmax.f32 %v3710, 0.0
    %v3775 = vmax.f32 %v3711, 0.0
    %v3776 = vmax.f32 %v3712, 0.0
    %v3777 = vmax.f32 %v3713, 0.0
    %v3778 = vmax.f32 %v3714, 0.0
    %v3779 = vmax.f32 %v3715, 0.0
    %v3780 = vmax.f32 %v3716, 0.0
    %v3781 = vmax.f32 %v3717, 0.0
    %v3782 = vmax.f32 %v3718, 0.0
    %v3783 = vpack.c.bf16 %v3720, %v3719
    %v3784 = vpack.c.bf16 %v3722, %v3721
    %v3785 = vpack.c.bf16 %v3724, %v3723
    %v3786 = vpack.c.bf16 %v3726, %v3725
    %v3787 = vpack.c.bf16 %v3728, %v3727
    %v3788 = vpack.c.bf16 %v3730, %v3729
    %v3789 = vpack.c.bf16 %v3732, %v3731
    %v3790 = vpack.c.bf16 %v3734, %v3733
    %v3791 = vpack.c.bf16 %v3736, %v3735
    %v3792 = vpack.c.bf16 %v3738, %v3737
    %v3793 = vpack.c.bf16 %v3740, %v3739
    %v3794 = vpack.c.bf16 %v3742, %v3741
    %v3795 = vpack.c.bf16 %v3744, %v3743
    %v3796 = vpack.c.bf16 %v3746, %v3745
    %v3797 = vpack.c.bf16 %v3748, %v3747
    %v3798 = vpack.c.bf16 %v3750, %v3749
    %v3799 = vpack.c.bf16 %v3752, %v3751
    %v3800 = vpack.c.bf16 %v3754, %v3753
    %v3801 = vpack.c.bf16 %v3756, %v3755
    %v3802 = vpack.c.bf16 %v3758, %v3757
    %v3803 = vpack.c.bf16 %v3760, %v3759
    %v3804 = vpack.c.bf16 %v3762, %v3761
    %v3805 = vpack.c.bf16 %v3764, %v3763
    %v3806 = vpack.c.bf16 %v3766, %v3765
    %v3807 = vpack.c.bf16 %v3768, %v3767
    %v3808 = vpack.c.bf16 %v3770, %v3769
    %v3809 = vpack.c.bf16 %v3772, %v3771
    %v3810 = vpack.c.bf16 %v3774, %v3773
    %v3811 = vpack.c.bf16 %v3776, %v3775
    %v3812 = vpack.c.bf16 %v3778, %v3777
    %v3813 = vpack.c.bf16 %v3780, %v3779
    %v3814 = vpack.c.bf16 %v3782, %v3781
    %v3847 = vunpack.c.l.b16 %v3783
    %v3848 = vunpack.c.h.b16 %v3783
    %v3849 = vunpack.c.l.b16 %v3784
    %v3850 = vunpack.c.h.b16 %v3784
    %v3851 = vunpack.c.l.b16 %v3785
    %v3852 = vunpack.c.h.b16 %v3785
    %v3853 = vunpack.c.l.b16 %v3786
    %v3854 = vunpack.c.h.b16 %v3786
    %v3855 = vunpack.c.l.b16 %v3787
    %v3856 = vunpack.c.h.b16 %v3787
    %v3857 = vunpack.c.l.b16 %v3788
    %v3858 = vunpack.c.h.b16 %v3788
    %v3859 = vunpack.c.l.b16 %v3789
    %v3860 = vunpack.c.h.b16 %v3789
    %v3861 = vunpack.c.l.b16 %v3790
    %v3862 = vunpack.c.h.b16 %v3790
    %v3863 = vunpack.c.l.b16 %v3791
    %v3864 = vunpack.c.h.b16 %v3791
    %v3865 = vunpack.c.l.b16 %v3792
    %v3866 = vunpack.c.h.b16 %v3792
    %v3867 = vunpack.c.l.b16 %v3793
    %v3868 = vunpack.c.h.b16 %v3793
    %v3869 = vunpack.c.l.b16 %v3794
    %v3870 = vunpack.c.h.b16 %v3794
    %v3871 = vunpack.c.l.b16 %v3795
    %v3872 = vunpack.c.h.b16 %v3795
    %v3873 = vunpack.c.l.b16 %v3796
    %v3874 = vunpack.c.h.b16 %v3796
    %v3875 = vunpack.c.l.b16 %v3797
    %v3876 = vunpack.c.h.b16 %v3797
    %v3877 = vunpack.c.l.b16 %v3798
    %v3878 = vunpack.c.h.b16 %v3798
    %v3879 = vunpack.c.l.b16 %v3799
    %v3880 = vunpack.c.h.b16 %v3799
    %v3881 = vunpack.c.l.b16 %v3800
    %v3882 = vunpack.c.h.b16 %v3800
    %v3883 = vunpack.c.l.b16 %v3801
    %v3884 = vunpack.c.h.b16 %v3801
    %v3885 = vunpack.c.l.b16 %v3802
    %v3886 = vunpack.c.h.b16 %v3802
    %v3887 = vunpack.c.l.b16 %v3803
    %v3888 = vunpack.c.h.b16 %v3803
    %v3889 = vunpack.c.l.b16 %v3804
    %v3890 = vunpack.c.h.b16 %v3804
    %v3891 = vunpack.c.l.b16 %v3805
    %v3892 = vunpack.c.h.b16 %v3805
    %v3893 = vunpack.c.l.b16 %v3806
    %v3894 = vunpack.c.h.b16 %v3806
    %v3895 = vunpack.c.l.b16 %v3807
    %v3896 = vunpack.c.h.b16 %v3807
    %v3897 = vunpack.c.l.b16 %v3808
    %v3898 = vunpack.c.h.b16 %v3808
    %v3899 = vunpack.c.l.b16 %v3809
    %v3900 = vunpack.c.h.b16 %v3809
    %v3901 = vunpack.c.l.b16 %v3810
    %v3902 = vunpack.c.h.b16 %v3810
    %v3903 = vunpack.c.l.b16 %v3811
    %v3904 = vunpack.c.h.b16 %v3811
    %v3905 = vunpack.c.l.b16 %v3812
    %v3906 = vunpack.c.h.b16 %v3812
    %v3907 = vunpack.c.l.b16 %v3813
    %v3908 = vunpack.c.h.b16 %v3813
    %v3909 = vunpack.c.l.b16 %v3814
    %v3910 = vunpack.c.h.b16 %v3814
    %v3911 = vpack.c.b16 %v3847, %v3847
    %v3912 = vpack.c.b16 %v3848, %v3848
    %v3913 = vpack.c.b16 %v3849, %v3849
    %v3914 = vpack.c.b16 %v3850, %v3850
    %v3915 = vpack.c.b16 %v3851, %v3851
    %v3916 = vpack.c.b16 %v3852, %v3852
    %v3917 = vpack.c.b16 %v3853, %v3853
    %v3918 = vpack.c.b16 %v3854, %v3854
    %v3919 = vpack.c.b16 %v3855, %v3855
    %v3920 = vpack.c.b16 %v3856, %v3856
    %v3921 = vpack.c.b16 %v3857, %v3857
    %v3922 = vpack.c.b16 %v3858, %v3858
    %v3923 = vpack.c.b16 %v3859, %v3859
    %v3924 = vpack.c.b16 %v3860, %v3860
    %v3925 = vpack.c.b16 %v3861, %v3861
    %v3926 = vpack.c.b16 %v3862, %v3862
    %v3927 = vpack.c.b16 %v3863, %v3863
    %v3928 = vpack.c.b16 %v3864, %v3864
    %v3929 = vpack.c.b16 %v3865, %v3865
    %v3930 = vpack.c.b16 %v3866, %v3866
    %v3931 = vpack.c.b16 %v3867, %v3867
    %v3932 = vpack.c.b16 %v3868, %v3868
    %v3933 = vpack.c.b16 %v3869, %v3869
    %v3934 = vpack.c.b16 %v3870, %v3870
    %v3935 = vpack.c.b16 %v3871, %v3871
    %v3936 = vpack.c.b16 %v3872, %v3872
    %v3937 = vpack.c.b16 %v3873, %v3873
    %v3938 = vpack.c.b16 %v3874, %v3874
    %v3939 = vpack.c.b16 %v3875, %v3875
    %v3940 = vpack.c.b16 %v3876, %v3876
    %v3941 = vpack.c.b16 %v3877, %v3877
    %v3942 = vpack.c.b16 %v3878, %v3878
    %v3943 = vpack.c.b16 %v3879, %v3879
    %v3944 = vpack.c.b16 %v3880, %v3880
    %v3945 = vpack.c.b16 %v3881, %v3881
    %v3946 = vpack.c.b16 %v3882, %v3882
    %v3947 = vpack.c.b16 %v3883, %v3883
    %v3948 = vpack.c.b16 %v3884, %v3884
    %v3949 = vpack.c.b16 %v3885, %v3885
    %v3950 = vpack.c.b16 %v3886, %v3886
    %v3951 = vpack.c.b16 %v3887, %v3887
    %v3952 = vpack.c.b16 %v3888, %v3888
    %v3953 = vpack.c.b16 %v3889, %v3889
    %v3954 = vpack.c.b16 %v3890, %v3890
    %v3955 = vpack.c.b16 %v3891, %v3891
    %v3956 = vpack.c.b16 %v3892, %v3892
    %v3957 = vpack.c.b16 %v3893, %v3893
    %v3958 = vpack.c.b16 %v3894, %v3894
    %v3959 = vpack.c.b16 %v3895, %v3895
    %v3960 = vpack.c.b16 %v3896, %v3896
    %v3961 = vpack.c.b16 %v3897, %v3897
    %v3962 = vpack.c.b16 %v3898, %v3898
    %v3963 = vpack.c.b16 %v3899, %v3899
    %v3964 = vpack.c.b16 %v3900, %v3900
    %v3965 = vpack.c.b16 %v3901, %v3901
    %v3966 = vpack.c.b16 %v3902, %v3902
    %v3967 = vpack.c.b16 %v3903, %v3903
    %v3968 = vpack.c.b16 %v3904, %v3904
    %v3969 = vpack.c.b16 %v3905, %v3905
    %v3970 = vpack.c.b16 %v3906, %v3906
    %v3971 = vpack.c.b16 %v3907, %v3907
    %v3972 = vpack.c.b16 %v3908, %v3908
    %v3973 = vpack.c.b16 %v3909, %v3909
    %v3974 = vpack.c.b16 %v3910, %v3910
    %s4039 = scalar_lea.vmem %s4, 512
    %4040 = vst [vmem:[%s4039] sm:$0xf] %v3911
    %4041 = vst [vmem:[%s4039 + $0x4] sm:$0xf] %v3912
    %4042 = vst [vmem:[%s4039 + $0x8] sm:$0xf] %v3913
    %4043 = vst [vmem:[%s4039 + $0xc] sm:$0xf] %v3914
    %4044 = vst [vmem:[%s4039 + $0x10] sm:$0xf] %v3915
    %4045 = vst [vmem:[%s4039 + $0x14] sm:$0xf] %v3916
    %4046 = vst [vmem:[%s4039 + $0x18] sm:$0xf] %v3917
    %4047 = vst [vmem:[%s4039 + $0x1c] sm:$0xf] %v3918
    %4048 = vst [vmem:[%s4039 + $0x20] sm:$0xf] %v3919
    %4049 = vst [vmem:[%s4039 + $0x24] sm:$0xf] %v3920
    %4050 = vst [vmem:[%s4039 + $0x28] sm:$0xf] %v3921
    %4051 = vst [vmem:[%s4039 + $0x2c] sm:$0xf] %v3922
    %4052 = vst [vmem:[%s4039 + $0x30] sm:$0xf] %v3923
    %4053 = vst [vmem:[%s4039 + $0x34] sm:$0xf] %v3924
    %4054 = vst [vmem:[%s4039 + $0x38] sm:$0xf] %v3925
    %4055 = vst [vmem:[%s4039 + $0x3c] sm:$0xf] %v3926
    %4056 = vst [vmem:[%s4039 + $0x40] sm:$0xf] %v3927
    %4057 = vst [vmem:[%s4039 + $0x44] sm:$0xf] %v3928
    %4058 = vst [vmem:[%s4039 + $0x48] sm:$0xf] %v3929
    %4059 = vst [vmem:[%s4039 + $0x4c] sm:$0xf] %v3930
    %4060 = vst [vmem:[%s4039 + $0x50] sm:$0xf] %v3931
    %4061 = vst [vmem:[%s4039 + $0x54] sm:$0xf] %v3932
    %4062 = vst [vmem:[%s4039 + $0x58] sm:$0xf] %v3933
    %4063 = vst [vmem:[%s4039 + $0x5c] sm:$0xf] %v3934
    %4064 = vst [vmem:[%s4039 + $0x60] sm:$0xf] %v3935
    %4065 = vst [vmem:[%s4039 + $0x64] sm:$0xf] %v3936
    %4066 = vst [vmem:[%s4039 + $0x68] sm:$0xf] %v3937
    %4067 = vst [vmem:[%s4039 + $0x6c] sm:$0xf] %v3938
    %4068 = vst [vmem:[%s4039 + $0x70] sm:$0xf] %v3939
    %4069 = vst [vmem:[%s4039 + $0x74] sm:$0xf] %v3940
    %4070 = vst [vmem:[%s4039 + $0x78] sm:$0xf] %v3941
    %4071 = vst [vmem:[%s4039 + $0x7c] sm:$0xf] %v3942
    %4072 = vst [vmem:[%s4039 + $0x80] sm:$0xf] %v3943
    %4073 = vst [vmem:[%s4039 + $0x84] sm:$0xf] %v3944
    %4074 = vst [vmem:[%s4039 + $0x88] sm:$0xf] %v3945
    %4075 = vst [vmem:[%s4039 + $0x8c] sm:$0xf] %v3946
    %4076 = vst [vmem:[%s4039 + $0x90] sm:$0xf] %v3947
    %4077 = vst [vmem:[%s4039 + $0x94] sm:$0xf] %v3948
    %4078 = vst [vmem:[%s4039 + $0x98] sm:$0xf] %v3949
    %4079 = vst [vmem:[%s4039 + $0x9c] sm:$0xf] %v3950
    %4080 = vst [vmem:[%s4039 + $0xa0] sm:$0xf] %v3951
    %4081 = vst [vmem:[%s4039 + $0xa4] sm:$0xf] %v3952
    %4082 = vst [vmem:[%s4039 + $0xa8] sm:$0xf] %v3953
    %4083 = vst [vmem:[%s4039 + $0xac] sm:$0xf] %v3954
    %4084 = vst [vmem:[%s4039 + $0xb0] sm:$0xf] %v3955
    %4085 = vst [vmem:[%s4039 + $0xb4] sm:$0xf] %v3956
    %4086 = vst [vmem:[%s4039 + $0xb8] sm:$0xf] %v3957
    %4087 = vst [vmem:[%s4039 + $0xbc] sm:$0xf] %v3958
    %4088 = vst [vmem:[%s4039 + $0xc0] sm:$0xf] %v3959
    %4089 = vst [vmem:[%s4039 + $0xc4] sm:$0xf] %v3960
    %4090 = vst [vmem:[%s4039 + $0xc8] sm:$0xf] %v3961
    %4091 = vst [vmem:[%s4039 + $0xcc] sm:$0xf] %v3962
    %4092 = vst [vmem:[%s4039 + $0xd0] sm:$0xf] %v3963
    %4093 = vst [vmem:[%s4039 + $0xd4] sm:$0xf] %v3964
    %4094 = vst [vmem:[%s4039 + $0xd8] sm:$0xf] %v3965
    %4095 = vst [vmem:[%s4039 + $0xdc] sm:$0xf] %v3966
    %4096 = vst [vmem:[%s4039 + $0xe0] sm:$0xf] %v3967
    %4097 = vst [vmem:[%s4039 + $0xe4] sm:$0xf] %v3968
    %4098 = vst [vmem:[%s4039 + $0xe8] sm:$0xf] %v3969
    %4099 = vst [vmem:[%s4039 + $0xec] sm:$0xf] %v3970
    %4100 = vst [vmem:[%s4039 + $0xf0] sm:$0xf] %v3971
    %4101 = vst [vmem:[%s4039 + $0xf4] sm:$0xf] %v3972
    %4102 = vst [vmem:[%s4039 + $0xf8] sm:$0xf] %v3973
    %4103 = vst [vmem:[%s4039 + $0xfc] sm:$0xf] %v3974
    %v4104 = vmul.f32 %v2084, %v2558
    %v4105 = vmul.f32 %v2087, %v2558
    %v4106 = vmul.f32 %v2092, %v2558
    %v4107 = vmul.f32 %v2095, %v2558
    %v4108 = vmul.f32 %v2100, %v2558
    %v4109 = vmul.f32 %v2103, %v2558
    %v4110 = vmul.f32 %v2108, %v2558
    %v4111 = vmul.f32 %v2111, %v2558
    %v4112 = vmul.f32 %v2116, %v2558
    %v4113 = vmul.f32 %v2119, %v2558
    %v4114 = vmul.f32 %v2124, %v2558
    %v4115 = vmul.f32 %v2127, %v2558
    %v4116 = vmul.f32 %v2132, %v2558
    %v4117 = vmul.f32 %v2135, %v2558
    %v4118 = vmul.f32 %v2140, %v2558
    %v4119 = vmul.f32 %v2143, %v2558
    %v4120 = vmul.f32 %v2148, %v2558
    %v4121 = vmul.f32 %v2151, %v2558
    %v4122 = vmul.f32 %v2156, %v2558
    %v4123 = vmul.f32 %v2159, %v2558
    %v4124 = vmul.f32 %v2164, %v2558
    %v4125 = vmul.f32 %v2167, %v2558
    %v4126 = vmul.f32 %v2172, %v2558
    %v4127 = vmul.f32 %v2175, %v2558
    %v4128 = vmul.f32 %v2180, %v2558
    %v4129 = vmul.f32 %v2183, %v2558
    %v4130 = vmul.f32 %v2188, %v2558
    %v4131 = vmul.f32 %v2191, %v2558
    %v4132 = vmul.f32 %v2196, %v2558
    %v4133 = vmul.f32 %v2199, %v2558
    %v4134 = vmul.f32 %v2204, %v2558
    %v4135 = vmul.f32 %v2207, %v2558
    %v4136 = vmul.f32 %v2212, %v2558
    %v4137 = vmul.f32 %v2215, %v2558
    %v4138 = vmul.f32 %v2220, %v2558
    %v4139 = vmul.f32 %v2223, %v2558
    %v4140 = vmul.f32 %v2228, %v2558
    %v4141 = vmul.f32 %v2231, %v2558
    %v4142 = vmul.f32 %v2236, %v2558
    %v4143 = vmul.f32 %v2239, %v2558
    %v4144 = vmul.f32 %v2244, %v2558
    %v4145 = vmul.f32 %v2247, %v2558
    %v4146 = vmul.f32 %v2252, %v2558
    %v4147 = vmul.f32 %v2255, %v2558
    %v4148 = vmul.f32 %v2260, %v2558
    %v4149 = vmul.f32 %v2263, %v2558
    %v4150 = vmul.f32 %v2268, %v2558
    %v4151 = vmul.f32 %v2271, %v2558
    %v4152 = vmul.f32 %v2276, %v2558
    %v4153 = vmul.f32 %v2279, %v2558
    %v4154 = vmul.f32 %v2284, %v2558
    %v4155 = vmul.f32 %v2287, %v2558
    %v4156 = vmul.f32 %v2292, %v2558
    %v4157 = vmul.f32 %v2295, %v2558
    %v4158 = vmul.f32 %v2300, %v2558
    %v4159 = vmul.f32 %v2303, %v2558
    %v4160 = vmul.f32 %v2308, %v2558
    %v4161 = vmul.f32 %v2311, %v2558
    %v4162 = vmul.f32 %v2316, %v2558
    %v4163 = vmul.f32 %v2319, %v2558
    %v4164 = vmul.f32 %v2324, %v2558
    %v4165 = vmul.f32 %v2327, %v2558
    %v4166 = vmul.f32 %v2332, %v2558
    %v4167 = vmul.f32 %v2335, %v2558
    %v4168 = vadd.f32 %v4104, %v2628
    %v4169 = vadd.f32 %v4105, %v2628
    %v4170 = vadd.f32 %v4106, %v2628
    %v4171 = vadd.f32 %v4107, %v2628
    %v4172 = vadd.f32 %v4108, %v2628
    %v4173 = vadd.f32 %v4109, %v2628
    %v4174 = vadd.f32 %v4110, %v2628
    %v4175 = vadd.f32 %v4111, %v2628
    %v4176 = vadd.f32 %v4112, %v2628
    %v4177 = vadd.f32 %v4113, %v2628
    %v4178 = vadd.f32 %v4114, %v2628
    %v4179 = vadd.f32 %v4115, %v2628
    %v4180 = vadd.f32 %v4116, %v2628
    %v4181 = vadd.f32 %v4117, %v2628
    %v4182 = vadd.f32 %v4118, %v2628
    %v4183 = vadd.f32 %v4119, %v2628
    %v4184 = vadd.f32 %v4120, %v2628
    %v4185 = vadd.f32 %v4121, %v2628
    %v4186 = vadd.f32 %v4122, %v2628
    %v4187 = vadd.f32 %v4123, %v2628
    %v4188 = vadd.f32 %v4124, %v2628
    %v4189 = vadd.f32 %v4125, %v2628
    %v4190 = vadd.f32 %v4126, %v2628
    %v4191 = vadd.f32 %v4127, %v2628
    %v4192 = vadd.f32 %v4128, %v2628
    %v4193 = vadd.f32 %v4129, %v2628
    %v4194 = vadd.f32 %v4130, %v2628
    %v4195 = vadd.f32 %v4131, %v2628
    %v4196 = vadd.f32 %v4132, %v2628
    %v4197 = vadd.f32 %v4133, %v2628
    %v4198 = vadd.f32 %v4134, %v2628
    %v4199 = vadd.f32 %v4135, %v2628
    %v4200 = vadd.f32 %v4136, %v2628
    %v4201 = vadd.f32 %v4137, %v2628
    %v4202 = vadd.f32 %v4138, %v2628
    %v4203 = vadd.f32 %v4139, %v2628
    %v4204 = vadd.f32 %v4140, %v2628
    %v4205 = vadd.f32 %v4141, %v2628
    %v4206 = vadd.f32 %v4142, %v2628
    %v4207 = vadd.f32 %v4143, %v2628
    %v4208 = vadd.f32 %v4144, %v2628
    %v4209 = vadd.f32 %v4145, %v2628
    %v4210 = vadd.f32 %v4146, %v2628
    %v4211 = vadd.f32 %v4147, %v2628
    %v4212 = vadd.f32 %v4148, %v2628
    %v4213 = vadd.f32 %v4149, %v2628
    %v4214 = vadd.f32 %v4150, %v2628
    %v4215 = vadd.f32 %v4151, %v2628
    %v4216 = vadd.f32 %v4152, %v2628
    %v4217 = vadd.f32 %v4153, %v2628
    %v4218 = vadd.f32 %v4154, %v2628
    %v4219 = vadd.f32 %v4155, %v2628
    %v4220 = vadd.f32 %v4156, %v2628
    %v4221 = vadd.f32 %v4157, %v2628
    %v4222 = vadd.f32 %v4158, %v2628
    %v4223 = vadd.f32 %v4159, %v2628
    %v4224 = vadd.f32 %v4160, %v2628
    %v4225 = vadd.f32 %v4161, %v2628
    %v4226 = vadd.f32 %v4162, %v2628
    %v4227 = vadd.f32 %v4163, %v2628
    %v4228 = vadd.f32 %v4164, %v2628
    %v4229 = vadd.f32 %v4165, %v2628
    %v4230 = vadd.f32 %v4166, %v2628
    %v4231 = vadd.f32 %v4167, %v2628
    %v4232 = vmax.f32 %v4168, 0.0
    %v4233 = vmax.f32 %v4169, 0.0
    %v4234 = vmax.f32 %v4170, 0.0
    %v4235 = vmax.f32 %v4171, 0.0
    %v4236 = vmax.f32 %v4172, 0.0
    %v4237 = vmax.f32 %v4173, 0.0
    %v4238 = vmax.f32 %v4174, 0.0
    %v4239 = vmax.f32 %v4175, 0.0
    %v4240 = vmax.f32 %v4176, 0.0
    %v4241 = vmax.f32 %v4177, 0.0
    %v4242 = vmax.f32 %v4178, 0.0
    %v4243 = vmax.f32 %v4179, 0.0
    %v4244 = vmax.f32 %v4180, 0.0
    %v4245 = vmax.f32 %v4181, 0.0
    %v4246 = vmax.f32 %v4182, 0.0
    %v4247 = vmax.f32 %v4183, 0.0
    %v4248 = vmax.f32 %v4184, 0.0
    %v4249 = vmax.f32 %v4185, 0.0
    %v4250 = vmax.f32 %v4186, 0.0
    %v4251 = vmax.f32 %v4187, 0.0
    %v4252 = vmax.f32 %v4188, 0.0
    %v4253 = vmax.f32 %v4189, 0.0
    %v4254 = vmax.f32 %v4190, 0.0
    %v4255 = vmax.f32 %v4191, 0.0
    %v4256 = vmax.f32 %v4192, 0.0
    %v4257 = vmax.f32 %v4193, 0.0
    %v4258 = vmax.f32 %v4194, 0.0
    %v4259 = vmax.f32 %v4195, 0.0
    %v4260 = vmax.f32 %v4196, 0.0
    %v4261 = vmax.f32 %v4197, 0.0
    %v4262 = vmax.f32 %v4198, 0.0
    %v4263 = vmax.f32 %v4199, 0.0
    %v4264 = vmax.f32 %v4200, 0.0
    %v4265 = vmax.f32 %v4201, 0.0
    %v4266 = vmax.f32 %v4202, 0.0
    %v4267 = vmax.f32 %v4203, 0.0
    %v4268 = vmax.f32 %v4204, 0.0
    %v4269 = vmax.f32 %v4205, 0.0
    %v4270 = vmax.f32 %v4206, 0.0
    %v4271 = vmax.f32 %v4207, 0.0
    %v4272 = vmax.f32 %v4208, 0.0
    %v4273 = vmax.f32 %v4209, 0.0
    %v4274 = vmax.f32 %v4210, 0.0
    %v4275 = vmax.f32 %v4211, 0.0
    %v4276 = vmax.f32 %v4212, 0.0
    %v4277 = vmax.f32 %v4213, 0.0
    %v4278 = vmax.f32 %v4214, 0.0
    %v4279 = vmax.f32 %v4215, 0.0
    %v4280 = vmax.f32 %v4216, 0.0
    %v4281 = vmax.f32 %v4217, 0.0
    %v4282 = vmax.f32 %v4218, 0.0
    %v4283 = vmax.f32 %v4219, 0.0
    %v4284 = vmax.f32 %v4220, 0.0
    %v4285 = vmax.f32 %v4221, 0.0
    %v4286 = vmax.f32 %v4222, 0.0
    %v4287 = vmax.f32 %v4223, 0.0
    %v4288 = vmax.f32 %v4224, 0.0
    %v4289 = vmax.f32 %v4225, 0.0
    %v4290 = vmax.f32 %v4226, 0.0
    %v4291 = vmax.f32 %v4227, 0.0
    %v4292 = vmax.f32 %v4228, 0.0
    %v4293 = vmax.f32 %v4229, 0.0
    %v4294 = vmax.f32 %v4230, 0.0
    %v4295 = vmax.f32 %v4231, 0.0
    %v4296 = vpack.c.bf16 %v4233, %v4232
    %v4297 = vpack.c.bf16 %v4235, %v4234
    %v4298 = vpack.c.bf16 %v4237, %v4236
    %v4299 = vpack.c.bf16 %v4239, %v4238
    %v4300 = vpack.c.bf16 %v4241, %v4240
    %v4301 = vpack.c.bf16 %v4243, %v4242
    %v4302 = vpack.c.bf16 %v4245, %v4244
    %v4303 = vpack.c.bf16 %v4247, %v4246
    %v4304 = vpack.c.bf16 %v4249, %v4248
    %v4305 = vpack.c.bf16 %v4251, %v4250
    %v4306 = vpack.c.bf16 %v4253, %v4252
    %v4307 = vpack.c.bf16 %v4255, %v4254
    %v4308 = vpack.c.bf16 %v4257, %v4256
    %v4309 = vpack.c.bf16 %v4259, %v4258
    %v4310 = vpack.c.bf16 %v4261, %v4260
    %v4311 = vpack.c.bf16 %v4263, %v4262
    %v4312 = vpack.c.bf16 %v4265, %v4264
    %v4313 = vpack.c.bf16 %v4267, %v4266
    %v4314 = vpack.c.bf16 %v4269, %v4268
    %v4315 = vpack.c.bf16 %v4271, %v4270
    %v4316 = vpack.c.bf16 %v4273, %v4272
    %v4317 = vpack.c.bf16 %v4275, %v4274
    %v4318 = vpack.c.bf16 %v4277, %v4276
    %v4319 = vpack.c.bf16 %v4279, %v4278
    %v4320 = vpack.c.bf16 %v4281, %v4280
    %v4321 = vpack.c.bf16 %v4283, %v4282
    %v4322 = vpack.c.bf16 %v4285, %v4284
    %v4323 = vpack.c.bf16 %v4287, %v4286
    %v4324 = vpack.c.bf16 %v4289, %v4288
    %v4325 = vpack.c.bf16 %v4291, %v4290
    %v4326 = vpack.c.bf16 %v4293, %v4292
    %v4327 = vpack.c.bf16 %v4295, %v4294
    %v4360 = vunpack.c.l.b16 %v4296
    %v4361 = vunpack.c.h.b16 %v4296
    %v4362 = vunpack.c.l.b16 %v4297
    %v4363 = vunpack.c.h.b16 %v4297
    %v4364 = vunpack.c.l.b16 %v4298
    %v4365 = vunpack.c.h.b16 %v4298
    %v4366 = vunpack.c.l.b16 %v4299
    %v4367 = vunpack.c.h.b16 %v4299
    %v4368 = vunpack.c.l.b16 %v4300
    %v4369 = vunpack.c.h.b16 %v4300
    %v4370 = vunpack.c.l.b16 %v4301
    %v4371 = vunpack.c.h.b16 %v4301
    %v4372 = vunpack.c.l.b16 %v4302
    %v4373 = vunpack.c.h.b16 %v4302
    %v4374 = vunpack.c.l.b16 %v4303
    %v4375 = vunpack.c.h.b16 %v4303
    %v4376 = vunpack.c.l.b16 %v4304
    %v4377 = vunpack.c.h.b16 %v4304
    %v4378 = vunpack.c.l.b16 %v4305
    %v4379 = vunpack.c.h.b16 %v4305
    %v4380 = vunpack.c.l.b16 %v4306
    %v4381 = vunpack.c.h.b16 %v4306
    %v4382 = vunpack.c.l.b16 %v4307
    %v4383 = vunpack.c.h.b16 %v4307
    %v4384 = vunpack.c.l.b16 %v4308
    %v4385 = vunpack.c.h.b16 %v4308
    %v4386 = vunpack.c.l.b16 %v4309
    %v4387 = vunpack.c.h.b16 %v4309
    %v4388 = vunpack.c.l.b16 %v4310
    %v4389 = vunpack.c.h.b16 %v4310
    %v4390 = vunpack.c.l.b16 %v4311
    %v4391 = vunpack.c.h.b16 %v4311
    %v4392 = vunpack.c.l.b16 %v4312
    %v4393 = vunpack.c.h.b16 %v4312
    %v4394 = vunpack.c.l.b16 %v4313
    %v4395 = vunpack.c.h.b16 %v4313
    %v4396 = vunpack.c.l.b16 %v4314
    %v4397 = vunpack.c.h.b16 %v4314
    %v4398 = vunpack.c.l.b16 %v4315
    %v4399 = vunpack.c.h.b16 %v4315
    %v4400 = vunpack.c.l.b16 %v4316
    %v4401 = vunpack.c.h.b16 %v4316
    %v4402 = vunpack.c.l.b16 %v4317
    %v4403 = vunpack.c.h.b16 %v4317
    %v4404 = vunpack.c.l.b16 %v4318
    %v4405 = vunpack.c.h.b16 %v4318
    %v4406 = vunpack.c.l.b16 %v4319
    %v4407 = vunpack.c.h.b16 %v4319
    %v4408 = vunpack.c.l.b16 %v4320
    %v4409 = vunpack.c.h.b16 %v4320
    %v4410 = vunpack.c.l.b16 %v4321
    %v4411 = vunpack.c.h.b16 %v4321
    %v4412 = vunpack.c.l.b16 %v4322
    %v4413 = vunpack.c.h.b16 %v4322
    %v4414 = vunpack.c.l.b16 %v4323
    %v4415 = vunpack.c.h.b16 %v4323
    %v4416 = vunpack.c.l.b16 %v4324
    %v4417 = vunpack.c.h.b16 %v4324
    %v4418 = vunpack.c.l.b16 %v4325
    %v4419 = vunpack.c.h.b16 %v4325
    %v4420 = vunpack.c.l.b16 %v4326
    %v4421 = vunpack.c.h.b16 %v4326
    %v4422 = vunpack.c.l.b16 %v4327
    %v4423 = vunpack.c.h.b16 %v4327
    %v4424 = vpack.c.b16 %v4360, %v4360
    %v4425 = vpack.c.b16 %v4361, %v4361
    %v4426 = vpack.c.b16 %v4362, %v4362
    %v4427 = vpack.c.b16 %v4363, %v4363
    %v4428 = vpack.c.b16 %v4364, %v4364
    %v4429 = vpack.c.b16 %v4365, %v4365
    %v4430 = vpack.c.b16 %v4366, %v4366
    %v4431 = vpack.c.b16 %v4367, %v4367
    %v4432 = vpack.c.b16 %v4368, %v4368
    %v4433 = vpack.c.b16 %v4369, %v4369
    %v4434 = vpack.c.b16 %v4370, %v4370
    %v4435 = vpack.c.b16 %v4371, %v4371
    %v4436 = vpack.c.b16 %v4372, %v4372
    %v4437 = vpack.c.b16 %v4373, %v4373
    %v4438 = vpack.c.b16 %v4374, %v4374
    %v4439 = vpack.c.b16 %v4375, %v4375
    %v4440 = vpack.c.b16 %v4376, %v4376
    %v4441 = vpack.c.b16 %v4377, %v4377
    %v4442 = vpack.c.b16 %v4378, %v4378
    %v4443 = vpack.c.b16 %v4379, %v4379
    %v4444 = vpack.c.b16 %v4380, %v4380
    %v4445 = vpack.c.b16 %v4381, %v4381
    %v4446 = vpack.c.b16 %v4382, %v4382
    %v4447 = vpack.c.b16 %v4383, %v4383
    %v4448 = vpack.c.b16 %v4384, %v4384
    %v4449 = vpack.c.b16 %v4385, %v4385
    %v4450 = vpack.c.b16 %v4386, %v4386
    %v4451 = vpack.c.b16 %v4387, %v4387
    %v4452 = vpack.c.b16 %v4388, %v4388
    %v4453 = vpack.c.b16 %v4389, %v4389
    %v4454 = vpack.c.b16 %v4390, %v4390
    %v4455 = vpack.c.b16 %v4391, %v4391
    %v4456 = vpack.c.b16 %v4392, %v4392
    %v4457 = vpack.c.b16 %v4393, %v4393
    %v4458 = vpack.c.b16 %v4394, %v4394
    %v4459 = vpack.c.b16 %v4395, %v4395
    %v4460 = vpack.c.b16 %v4396, %v4396
    %v4461 = vpack.c.b16 %v4397, %v4397
    %v4462 = vpack.c.b16 %v4398, %v4398
    %v4463 = vpack.c.b16 %v4399, %v4399
    %v4464 = vpack.c.b16 %v4400, %v4400
    %v4465 = vpack.c.b16 %v4401, %v4401
    %v4466 = vpack.c.b16 %v4402, %v4402
    %v4467 = vpack.c.b16 %v4403, %v4403
    %v4468 = vpack.c.b16 %v4404, %v4404
    %v4469 = vpack.c.b16 %v4405, %v4405
    %v4470 = vpack.c.b16 %v4406, %v4406
    %v4471 = vpack.c.b16 %v4407, %v4407
    %v4472 = vpack.c.b16 %v4408, %v4408
    %v4473 = vpack.c.b16 %v4409, %v4409
    %v4474 = vpack.c.b16 %v4410, %v4410
    %v4475 = vpack.c.b16 %v4411, %v4411
    %v4476 = vpack.c.b16 %v4412, %v4412
    %v4477 = vpack.c.b16 %v4413, %v4413
    %v4478 = vpack.c.b16 %v4414, %v4414
    %v4479 = vpack.c.b16 %v4415, %v4415
    %v4480 = vpack.c.b16 %v4416, %v4416
    %v4481 = vpack.c.b16 %v4417, %v4417
    %v4482 = vpack.c.b16 %v4418, %v4418
    %v4483 = vpack.c.b16 %v4419, %v4419
    %v4484 = vpack.c.b16 %v4420, %v4420
    %v4485 = vpack.c.b16 %v4421, %v4421
    %v4486 = vpack.c.b16 %v4422, %v4422
    %v4487 = vpack.c.b16 %v4423, %v4423
    %s4552 = scalar_lea.vmem %s4, 768
    %4553 = vst [vmem:[%s4552] sm:$0xf] %v4424
    %4554 = vst [vmem:[%s4552 + $0x4] sm:$0xf] %v4425
    %4555 = vst [vmem:[%s4552 + $0x8] sm:$0xf] %v4426
    %4556 = vst [vmem:[%s4552 + $0xc] sm:$0xf] %v4427
    %4557 = vst [vmem:[%s4552 + $0x10] sm:$0xf] %v4428
    %4558 = vst [vmem:[%s4552 + $0x14] sm:$0xf] %v4429
    %4559 = vst [vmem:[%s4552 + $0x18] sm:$0xf] %v4430
    %4560 = vst [vmem:[%s4552 + $0x1c] sm:$0xf] %v4431
    %4561 = vst [vmem:[%s4552 + $0x20] sm:$0xf] %v4432
    %4562 = vst [vmem:[%s4552 + $0x24] sm:$0xf] %v4433
    %4563 = vst [vmem:[%s4552 + $0x28] sm:$0xf] %v4434
    %4564 = vst [vmem:[%s4552 + $0x2c] sm:$0xf] %v4435
    %4565 = vst [vmem:[%s4552 + $0x30] sm:$0xf] %v4436
    %4566 = vst [vmem:[%s4552 + $0x34] sm:$0xf] %v4437
    %4567 = vst [vmem:[%s4552 + $0x38] sm:$0xf] %v4438
    %4568 = vst [vmem:[%s4552 + $0x3c] sm:$0xf] %v4439
    %4569 = vst [vmem:[%s4552 + $0x40] sm:$0xf] %v4440
    %4570 = vst [vmem:[%s4552 + $0x44] sm:$0xf] %v4441
    %4571 = vst [vmem:[%s4552 + $0x48] sm:$0xf] %v4442
    %4572 = vst [vmem:[%s4552 + $0x4c] sm:$0xf] %v4443
    %4573 = vst [vmem:[%s4552 + $0x50] sm:$0xf] %v4444
    %4574 = vst [vmem:[%s4552 + $0x54] sm:$0xf] %v4445
    %4575 = vst [vmem:[%s4552 + $0x58] sm:$0xf] %v4446
    %4576 = vst [vmem:[%s4552 + $0x5c] sm:$0xf] %v4447
    %4577 = vst [vmem:[%s4552 + $0x60] sm:$0xf] %v4448
    %4578 = vst [vmem:[%s4552 + $0x64] sm:$0xf] %v4449
    %4579 = vst [vmem:[%s4552 + $0x68] sm:$0xf] %v4450
    %4580 = vst [vmem:[%s4552 + $0x6c] sm:$0xf] %v4451
    %4581 = vst [vmem:[%s4552 + $0x70] sm:$0xf] %v4452
    %4582 = vst [vmem:[%s4552 + $0x74] sm:$0xf] %v4453
    %4583 = vst [vmem:[%s4552 + $0x78] sm:$0xf] %v4454
    %4584 = vst [vmem:[%s4552 + $0x7c] sm:$0xf] %v4455
    %4585 = vst [vmem:[%s4552 + $0x80] sm:$0xf] %v4456
    %4586 = vst [vmem:[%s4552 + $0x84] sm:$0xf] %v4457
    %4587 = vst [vmem:[%s4552 + $0x88] sm:$0xf] %v4458
    %4588 = vst [vmem:[%s4552 + $0x8c] sm:$0xf] %v4459
    %4589 = vst [vmem:[%s4552 + $0x90] sm:$0xf] %v4460
    %4590 = vst [vmem:[%s4552 + $0x94] sm:$0xf] %v4461
    %4591 = vst [vmem:[%s4552 + $0x98] sm:$0xf] %v4462
    %4592 = vst [vmem:[%s4552 + $0x9c] sm:$0xf] %v4463
    %4593 = vst [vmem:[%s4552 + $0xa0] sm:$0xf] %v4464
    %4594 = vst [vmem:[%s4552 + $0xa4] sm:$0xf] %v4465
    %4595 = vst [vmem:[%s4552 + $0xa8] sm:$0xf] %v4466
    %4596 = vst [vmem:[%s4552 + $0xac] sm:$0xf] %v4467
    %4597 = vst [vmem:[%s4552 + $0xb0] sm:$0xf] %v4468
    %4598 = vst [vmem:[%s4552 + $0xb4] sm:$0xf] %v4469
    %4599 = vst [vmem:[%s4552 + $0xb8] sm:$0xf] %v4470
    %4600 = vst [vmem:[%s4552 + $0xbc] sm:$0xf] %v4471
    %4601 = vst [vmem:[%s4552 + $0xc0] sm:$0xf] %v4472
    %4602 = vst [vmem:[%s4552 + $0xc4] sm:$0xf] %v4473
    %4603 = vst [vmem:[%s4552 + $0xc8] sm:$0xf] %v4474
    %4604 = vst [vmem:[%s4552 + $0xcc] sm:$0xf] %v4475
    %4605 = vst [vmem:[%s4552 + $0xd0] sm:$0xf] %v4476
    %4606 = vst [vmem:[%s4552 + $0xd4] sm:$0xf] %v4477
    %4607 = vst [vmem:[%s4552 + $0xd8] sm:$0xf] %v4478
    %4608 = vst [vmem:[%s4552 + $0xdc] sm:$0xf] %v4479
    %4609 = vst [vmem:[%s4552 + $0xe0] sm:$0xf] %v4480
    %4610 = vst [vmem:[%s4552 + $0xe4] sm:$0xf] %v4481
    %4611 = vst [vmem:[%s4552 + $0xe8] sm:$0xf] %v4482
    %4612 = vst [vmem:[%s4552 + $0xec] sm:$0xf] %v4483
    %4613 = vst [vmem:[%s4552 + $0xf0] sm:$0xf] %v4484
    %4614 = vst [vmem:[%s4552 + $0xf4] sm:$0xf] %v4485
    %4615 = vst [vmem:[%s4552 + $0xf8] sm:$0xf] %v4486
    %4616 = vst [vmem:[%s4552 + $0xfc] sm:$0xf] %v4487
    // Predicated region
    $region30: #{decoder_forward_pallas.10} parent=1 // pred_check
      _
    $region31: #{decoder_forward_pallas.10} parent=1 // pred_check_branch
      %4618 = sbr.rel (0) target = $region33
    $region32: #{decoder_forward_pallas.10} parent=1 // pred_region
      _
    $region33: #{decoder_forward_pallas.10} parent=1 // pred_fallthru
      _
    // Predicated region
    $region34: #{decoder_forward_pallas.10} parent=1 // pred_check
      _
    $region35: #{decoder_forward_pallas.10} parent=1 // pred_check_branch
      %4620 = sbr.rel (0) target = $region37
    $region36: #{decoder_forward_pallas.10} parent=1 // pred_region
      _
    $region37: #{decoder_forward_pallas.10} parent=1 // pred_fallthru
      _
    %4621 = vsyncpa [#allocation3], 1
    %4622 = vsyncpa [#allocation5], 1

// kernel: decoder_forward_pallas.11
$region0: #{decoder_forward_pallas.11}
  #allocation0 [shape = 'u32[]', space=smem, size = 0x4, offset = 0x4, fixed_abs, tag = 'smem constant byte address 0x4 - core index']
  #allocation1 [shape = 'u32[144,128]{1,0:T(1,128)}', space=vmem, size = 0x12000, scoped, tag = 'internal scratch']
  %s0 = inlined_call_operand.vmem [shape: bf16[2048,128], index: 0, kind: input, shape index: {}]
  %s1 = inlined_call_operand.vmem [shape: bf16[128,128], index: 1, kind: input, shape index: {}]
  %s2 = inlined_call_operand.vmem [shape: f32[1,128], index: 2, kind: input, shape index: {}]
  %s3 = inlined_call_operand.vmem [shape: f32[2048,128], index: 3, kind: output, shape index: {}]
  %s4 = sld [smem:[#allocation0]]
  $region22: #{decoder_forward_pallas.11} parent=0
    _
  %s6 = ssub.s32 1, %s4
  %s7 = scalar_select 0, %s6, %s4
  // Predicated region
  $region2: #{decoder_forward_pallas.11} parent=0 // pred_check
    _
  $region3: #{decoder_forward_pallas.11} parent=0 // pred_check_branch
    %9 = sbr.rel (0) target = $region5
  $region4: #{decoder_forward_pallas.11} parent=0 // pred_region
    _
  $region5: #{decoder_forward_pallas.11} parent=0 // pred_fallthru
    _
  // Predicated region
  $region6: #{decoder_forward_pallas.11} parent=0 // pred_check
    _
  $region7: #{decoder_forward_pallas.11} parent=0 // pred_check_branch
    %11 = sbr.rel (0) target = $region9
  $region8: #{decoder_forward_pallas.11} parent=0 // pred_region
    _
  $region9: #{decoder_forward_pallas.11} parent=0 // pred_fallthru
    _
  // Predicated region
  $region10: #{decoder_forward_pallas.11} parent=0 // pred_check
    _
  $region11: #{decoder_forward_pallas.11} parent=0 // pred_check_branch
    %13 = sbr.rel (0) target = $region13
  $region12: #{decoder_forward_pallas.11} parent=0 // pred_region
    _
  $region13: #{decoder_forward_pallas.11} parent=0 // pred_fallthru
    _
  %v15 = vld [vmem:[%s0] sm:$0xf]
  %v16 = vld [vmem:[%s0 + $0x4] sm:$0xf]
  %v17 = vld [vmem:[%s0 + $0x8] sm:$0xf]
  %v18 = vld [vmem:[%s0 + $0xc] sm:$0xf]
  %v19 = vld [vmem:[%s0 + $0x10] sm:$0xf]
  %v20 = vld [vmem:[%s0 + $0x14] sm:$0xf]
  %v21 = vld [vmem:[%s0 + $0x18] sm:$0xf]
  %v22 = vld [vmem:[%s0 + $0x1c] sm:$0xf]
  %v23 = vld [vmem:[%s0 + $0x20] sm:$0xf]
  %v24 = vld [vmem:[%s0 + $0x24] sm:$0xf]
  %v25 = vld [vmem:[%s0 + $0x28] sm:$0xf]
  %v26 = vld [vmem:[%s0 + $0x2c] sm:$0xf]
  %v27 = vld [vmem:[%s0 + $0x30] sm:$0xf]
  %v28 = vld [vmem:[%s0 + $0x34] sm:$0xf]
  %v29 = vld [vmem:[%s0 + $0x38] sm:$0xf]
  %v30 = vld [vmem:[%s0 + $0x3c] sm:$0xf]
  %v31 = vld [vmem:[%s0 + $0x40] sm:$0xf]
  %v32 = vld [vmem:[%s0 + $0x44] sm:$0xf]
  %v33 = vld [vmem:[%s0 + $0x48] sm:$0xf]
  %v34 = vld [vmem:[%s0 + $0x4c] sm:$0xf]
  %v35 = vld [vmem:[%s0 + $0x50] sm:$0xf]
  %v36 = vld [vmem:[%s0 + $0x54] sm:$0xf]
  %v37 = vld [vmem:[%s0 + $0x58] sm:$0xf]
  %v38 = vld [vmem:[%s0 + $0x5c] sm:$0xf]
  %v39 = vld [vmem:[%s0 + $0x60] sm:$0xf]
  %v40 = vld [vmem:[%s0 + $0x64] sm:$0xf]
  %v41 = vld [vmem:[%s0 + $0x68] sm:$0xf]
  %v42 = vld [vmem:[%s0 + $0x6c] sm:$0xf]
  %v43 = vld [vmem:[%s0 + $0x70] sm:$0xf]
  %v44 = vld [vmem:[%s0 + $0x74] sm:$0xf]
  %v45 = vld [vmem:[%s0 + $0x78] sm:$0xf]
  %v46 = vld [vmem:[%s0 + $0x7c] sm:$0xf]
  %v47 = vld [vmem:[%s0 + $0x80] sm:$0xf]
  %v48 = vld [vmem:[%s0 + $0x84] sm:$0xf]
  %v49 = vld [vmem:[%s0 + $0x88] sm:$0xf]
  %v50 = vld [vmem:[%s0 + $0x8c] sm:$0xf]
  %v51 = vld [vmem:[%s0 + $0x90] sm:$0xf]
  %v52 = vld [vmem:[%s0 + $0x94] sm:$0xf]
  %v53 = vld [vmem:[%s0 + $0x98] sm:$0xf]
  %v54 = vld [vmem:[%s0 + $0x9c] sm:$0xf]
  %v55 = vld [vmem:[%s0 + $0xa0] sm:$0xf]
  %v56 = vld [vmem:[%s0 + $0xa4] sm:$0xf]
  %v57 = vld [vmem:[%s0 + $0xa8] sm:$0xf]
  %v58 = vld [vmem:[%s0 + $0xac] sm:$0xf]
  %v59 = vld [vmem:[%s0 + $0xb0] sm:$0xf]
  %v60 = vld [vmem:[%s0 + $0xb4] sm:$0xf]
  %v61 = vld [vmem:[%s0 + $0xb8] sm:$0xf]
  %v62 = vld [vmem:[%s0 + $0xbc] sm:$0xf]
  %v63 = vld [vmem:[%s0 + $0xc0] sm:$0xf]
  %v64 = vld [vmem:[%s0 + $0xc4] sm:$0xf]
  %v65 = vld [vmem:[%s0 + $0xc8] sm:$0xf]
  %v66 = vld [vmem:[%s0 + $0xcc] sm:$0xf]
  %v67 = vld [vmem:[%s0 + $0xd0] sm:$0xf]
  %v68 = vld [vmem:[%s0 + $0xd4] sm:$0xf]
  %v69 = vld [vmem:[%s0 + $0xd8] sm:$0xf]
  %v70 = vld [vmem:[%s0 + $0xdc] sm:$0xf]
  %v71 = vld [vmem:[%s0 + $0xe0] sm:$0xf]
  %v72 = vld [vmem:[%s0 + $0xe4] sm:$0xf]
  %v73 = vld [vmem:[%s0 + $0xe8] sm:$0xf]
  %v74 = vld [vmem:[%s0 + $0xec] sm:$0xf]
  %v75 = vld [vmem:[%s0 + $0xf0] sm:$0xf]
  %v76 = vld [vmem:[%s0 + $0xf4] sm:$0xf]
  %v77 = vld [vmem:[%s0 + $0xf8] sm:$0xf]
  %v78 = vld [vmem:[%s0 + $0xfc] sm:$0xf]
  %v79 = vld [vmem:[%s0 + $0x100] sm:$0xf]
  %v80 = vld [vmem:[%s0 + $0x104] sm:$0xf]
  %v81 = vld [vmem:[%s0 + $0x108] sm:$0xf]
  %v82 = vld [vmem:[%s0 + $0x10c] sm:$0xf]
  %v83 = vld [vmem:[%s0 + $0x110] sm:$0xf]
  %v84 = vld [vmem:[%s0 + $0x114] sm:$0xf]
  %v85 = vld [vmem:[%s0 + $0x118] sm:$0xf]
  %v86 = vld [vmem:[%s0 + $0x11c] sm:$0xf]
  %v87 = vld [vmem:[%s0 + $0x120] sm:$0xf]
  %v88 = vld [vmem:[%s0 + $0x124] sm:$0xf]
  %v89 = vld [vmem:[%s0 + $0x128] sm:$0xf]
  %v90 = vld [vmem:[%s0 + $0x12c] sm:$0xf]
  %v91 = vld [vmem:[%s0 + $0x130] sm:$0xf]
  %v92 = vld [vmem:[%s0 + $0x134] sm:$0xf]
  %v93 = vld [vmem:[%s0 + $0x138] sm:$0xf]
  %v94 = vld [vmem:[%s0 + $0x13c] sm:$0xf]
  %v95 = vld [vmem:[%s0 + $0x140] sm:$0xf]
  %v96 = vld [vmem:[%s0 + $0x144] sm:$0xf]
  %v97 = vld [vmem:[%s0 + $0x148] sm:$0xf]
  %v98 = vld [vmem:[%s0 + $0x14c] sm:$0xf]
  %v99 = vld [vmem:[%s0 + $0x150] sm:$0xf]
  %v100 = vld [vmem:[%s0 + $0x154] sm:$0xf]
  %v101 = vld [vmem:[%s0 + $0x158] sm:$0xf]
  %v102 = vld [vmem:[%s0 + $0x15c] sm:$0xf]
  %v103 = vld [vmem:[%s0 + $0x160] sm:$0xf]
  %v104 = vld [vmem:[%s0 + $0x164] sm:$0xf]
  %v105 = vld [vmem:[%s0 + $0x168] sm:$0xf]
  %v106 = vld [vmem:[%s0 + $0x16c] sm:$0xf]
  %v107 = vld [vmem:[%s0 + $0x170] sm:$0xf]
  %v108 = vld [vmem:[%s0 + $0x174] sm:$0xf]
  %v109 = vld [vmem:[%s0 + $0x178] sm:$0xf]
  %v110 = vld [vmem:[%s0 + $0x17c] sm:$0xf]
  %v111 = vld [vmem:[%s0 + $0x180] sm:$0xf]
  %v112 = vld [vmem:[%s0 + $0x184] sm:$0xf]
  %v113 = vld [vmem:[%s0 + $0x188] sm:$0xf]
  %v114 = vld [vmem:[%s0 + $0x18c] sm:$0xf]
  %v115 = vld [vmem:[%s0 + $0x190] sm:$0xf]
  %v116 = vld [vmem:[%s0 + $0x194] sm:$0xf]
  %v117 = vld [vmem:[%s0 + $0x198] sm:$0xf]
  %v118 = vld [vmem:[%s0 + $0x19c] sm:$0xf]
  %v119 = vld [vmem:[%s0 + $0x1a0] sm:$0xf]
  %v120 = vld [vmem:[%s0 + $0x1a4] sm:$0xf]
  %v121 = vld [vmem:[%s0 + $0x1a8] sm:$0xf]
  %v122 = vld [vmem:[%s0 + $0x1ac] sm:$0xf]
  %v123 = vld [vmem:[%s0 + $0x1b0] sm:$0xf]
  %v124 = vld [vmem:[%s0 + $0x1b4] sm:$0xf]
  %v125 = vld [vmem:[%s0 + $0x1b8] sm:$0xf]
  %v126 = vld [vmem:[%s0 + $0x1bc] sm:$0xf]
  %v127 = vld [vmem:[%s0 + $0x1c0] sm:$0xf]
  %v128 = vld [vmem:[%s0 + $0x1c4] sm:$0xf]
  %v129 = vld [vmem:[%s0 + $0x1c8] sm:$0xf]
  %v130 = vld [vmem:[%s0 + $0x1cc] sm:$0xf]
  %v131 = vld [vmem:[%s0 + $0x1d0] sm:$0xf]
  %v132 = vld [vmem:[%s0 + $0x1d4] sm:$0xf]
  %v133 = vld [vmem:[%s0 + $0x1d8] sm:$0xf]
  %v134 = vld [vmem:[%s0 + $0x1dc] sm:$0xf]
  %v135 = vld [vmem:[%s0 + $0x1e0] sm:$0xf]
  %v136 = vld [vmem:[%s0 + $0x1e4] sm:$0xf]
  %v137 = vld [vmem:[%s0 + $0x1e8] sm:$0xf]
  %v138 = vld [vmem:[%s0 + $0x1ec] sm:$0xf]
  %v139 = vld [vmem:[%s0 + $0x1f0] sm:$0xf]
  %v140 = vld [vmem:[%s0 + $0x1f4] sm:$0xf]
  %v141 = vld [vmem:[%s0 + $0x1f8] sm:$0xf]
  %v142 = vld [vmem:[%s0 + $0x1fc] sm:$0xf]
  %v143 = vld [vmem:[%s0 + $0x200] sm:$0xf]
  %v144 = vld [vmem:[%s0 + $0x204] sm:$0xf]
  %v145 = vld [vmem:[%s0 + $0x208] sm:$0xf]
  %v146 = vld [vmem:[%s0 + $0x20c] sm:$0xf]
  %v147 = vld [vmem:[%s0 + $0x210] sm:$0xf]
  %v148 = vld [vmem:[%s0 + $0x214] sm:$0xf]
  %v149 = vld [vmem:[%s0 + $0x218] sm:$0xf]
  %v150 = vld [vmem:[%s0 + $0x21c] sm:$0xf]
  %v151 = vld [vmem:[%s0 + $0x220] sm:$0xf]
  %v152 = vld [vmem:[%s0 + $0x224] sm:$0xf]
  %v153 = vld [vmem:[%s0 + $0x228] sm:$0xf]
  %v154 = vld [vmem:[%s0 + $0x22c] sm:$0xf]
  %v155 = vld [vmem:[%s0 + $0x230] sm:$0xf]
  %v156 = vld [vmem:[%s0 + $0x234] sm:$0xf]
  %v157 = vld [vmem:[%s0 + $0x238] sm:$0xf]
  %v158 = vld [vmem:[%s0 + $0x23c] sm:$0xf]
  %v159 = vld [vmem:[%s0 + $0x240] sm:$0xf]
  %v160 = vld [vmem:[%s0 + $0x244] sm:$0xf]
  %v161 = vld [vmem:[%s0 + $0x248] sm:$0xf]
  %v162 = vld [vmem:[%s0 + $0x24c] sm:$0xf]
  %v163 = vld [vmem:[%s0 + $0x250] sm:$0xf]
  %v164 = vld [vmem:[%s0 + $0x254] sm:$0xf]
  %v165 = vld [vmem:[%s0 + $0x258] sm:$0xf]
  %v166 = vld [vmem:[%s0 + $0x25c] sm:$0xf]
  %v167 = vld [vmem:[%s0 + $0x260] sm:$0xf]
  %v168 = vld [vmem:[%s0 + $0x264] sm:$0xf]
  %v169 = vld [vmem:[%s0 + $0x268] sm:$0xf]
  %v170 = vld [vmem:[%s0 + $0x26c] sm:$0xf]
  %v171 = vld [vmem:[%s0 + $0x270] sm:$0xf]
  %v172 = vld [vmem:[%s0 + $0x274] sm:$0xf]
  %v173 = vld [vmem:[%s0 + $0x278] sm:$0xf]
  %v174 = vld [vmem:[%s0 + $0x27c] sm:$0xf]
  %v175 = vld [vmem:[%s0 + $0x280] sm:$0xf]
  %v176 = vld [vmem:[%s0 + $0x284] sm:$0xf]
  %v177 = vld [vmem:[%s0 + $0x288] sm:$0xf]
  %v178 = vld [vmem:[%s0 + $0x28c] sm:$0xf]
  %v179 = vld [vmem:[%s0 + $0x290] sm:$0xf]
  %v180 = vld [vmem:[%s0 + $0x294] sm:$0xf]
  %v181 = vld [vmem:[%s0 + $0x298] sm:$0xf]
  %v182 = vld [vmem:[%s0 + $0x29c] sm:$0xf]
  %v183 = vld [vmem:[%s0 + $0x2a0] sm:$0xf]
  %v184 = vld [vmem:[%s0 + $0x2a4] sm:$0xf]
  %v185 = vld [vmem:[%s0 + $0x2a8] sm:$0xf]
  %v186 = vld [vmem:[%s0 + $0x2ac] sm:$0xf]
  %v187 = vld [vmem:[%s0 + $0x2b0] sm:$0xf]
  %v188 = vld [vmem:[%s0 + $0x2b4] sm:$0xf]
  %v189 = vld [vmem:[%s0 + $0x2b8] sm:$0xf]
  %v190 = vld [vmem:[%s0 + $0x2bc] sm:$0xf]
  %v191 = vld [vmem:[%s0 + $0x2c0] sm:$0xf]
  %v192 = vld [vmem:[%s0 + $0x2c4] sm:$0xf]
  %v193 = vld [vmem:[%s0 + $0x2c8] sm:$0xf]
  %v194 = vld [vmem:[%s0 + $0x2cc] sm:$0xf]
  %v195 = vld [vmem:[%s0 + $0x2d0] sm:$0xf]
  %v196 = vld [vmem:[%s0 + $0x2d4] sm:$0xf]
  %v197 = vld [vmem:[%s0 + $0x2d8] sm:$0xf]
  %v198 = vld [vmem:[%s0 + $0x2dc] sm:$0xf]
  %v199 = vld [vmem:[%s0 + $0x2e0] sm:$0xf]
  %v200 = vld [vmem:[%s0 + $0x2e4] sm:$0xf]
  %v201 = vld [vmem:[%s0 + $0x2e8] sm:$0xf]
  %v202 = vld [vmem:[%s0 + $0x2ec] sm:$0xf]
  %v203 = vld [vmem:[%s0 + $0x2f0] sm:$0xf]
  %v204 = vld [vmem:[%s0 + $0x2f4] sm:$0xf]
  %v205 = vld [vmem:[%s0 + $0x2f8] sm:$0xf]
  %v206 = vld [vmem:[%s0 + $0x2fc] sm:$0xf]
  %v207 = vld [vmem:[%s0 + $0x300] sm:$0xf]
  %v208 = vld [vmem:[%s0 + $0x304] sm:$0xf]
  %v209 = vld [vmem:[%s0 + $0x308] sm:$0xf]
  %v210 = vld [vmem:[%s0 + $0x30c] sm:$0xf]
  %v211 = vld [vmem:[%s0 + $0x310] sm:$0xf]
  %v212 = vld [vmem:[%s0 + $0x314] sm:$0xf]
  %v213 = vld [vmem:[%s0 + $0x318] sm:$0xf]
  %v214 = vld [vmem:[%s0 + $0x31c] sm:$0xf]
  %v215 = vld [vmem:[%s0 + $0x320] sm:$0xf]
  %v216 = vld [vmem:[%s0 + $0x324] sm:$0xf]
  %v217 = vld [vmem:[%s0 + $0x328] sm:$0xf]
  %v218 = vld [vmem:[%s0 + $0x32c] sm:$0xf]
  %v219 = vld [vmem:[%s0 + $0x330] sm:$0xf]
  %v220 = vld [vmem:[%s0 + $0x334] sm:$0xf]
  %v221 = vld [vmem:[%s0 + $0x338] sm:$0xf]
  %v222 = vld [vmem:[%s0 + $0x33c] sm:$0xf]
  %v223 = vld [vmem:[%s0 + $0x340] sm:$0xf]
  %v224 = vld [vmem:[%s0 + $0x344] sm:$0xf]
  %v225 = vld [vmem:[%s0 + $0x348] sm:$0xf]
  %v226 = vld [vmem:[%s0 + $0x34c] sm:$0xf]
  %v227 = vld [vmem:[%s0 + $0x350] sm:$0xf]
  %v228 = vld [vmem:[%s0 + $0x354] sm:$0xf]
  %v229 = vld [vmem:[%s0 + $0x358] sm:$0xf]
  %v230 = vld [vmem:[%s0 + $0x35c] sm:$0xf]
  %v231 = vld [vmem:[%s0 + $0x360] sm:$0xf]
  %v232 = vld [vmem:[%s0 + $0x364] sm:$0xf]
  %v233 = vld [vmem:[%s0 + $0x368] sm:$0xf]
  %v234 = vld [vmem:[%s0 + $0x36c] sm:$0xf]
  %v235 = vld [vmem:[%s0 + $0x370] sm:$0xf]
  %v236 = vld [vmem:[%s0 + $0x374] sm:$0xf]
  %v237 = vld [vmem:[%s0 + $0x378] sm:$0xf]
  %v238 = vld [vmem:[%s0 + $0x37c] sm:$0xf]
  %v239 = vld [vmem:[%s0 + $0x380] sm:$0xf]
  %v240 = vld [vmem:[%s0 + $0x384] sm:$0xf]
  %v241 = vld [vmem:[%s0 + $0x388] sm:$0xf]
  %v242 = vld [vmem:[%s0 + $0x38c] sm:$0xf]
  %v243 = vld [vmem:[%s0 + $0x390] sm:$0xf]
  %v244 = vld [vmem:[%s0 + $0x394] sm:$0xf]
  %v245 = vld [vmem:[%s0 + $0x398] sm:$0xf]
  %v246 = vld [vmem:[%s0 + $0x39c] sm:$0xf]
  %v247 = vld [vmem:[%s0 + $0x3a0] sm:$0xf]
  %v248 = vld [vmem:[%s0 + $0x3a4] sm:$0xf]
  %v249 = vld [vmem:[%s0 + $0x3a8] sm:$0xf]
  %v250 = vld [vmem:[%s0 + $0x3ac] sm:$0xf]
  %v251 = vld [vmem:[%s0 + $0x3b0] sm:$0xf]
  %v252 = vld [vmem:[%s0 + $0x3b4] sm:$0xf]
  %v253 = vld [vmem:[%s0 + $0x3b8] sm:$0xf]
  %v254 = vld [vmem:[%s0 + $0x3bc] sm:$0xf]
  %v255 = vld [vmem:[%s0 + $0x3c0] sm:$0xf]
  %v256 = vld [vmem:[%s0 + $0x3c4] sm:$0xf]
  %v257 = vld [vmem:[%s0 + $0x3c8] sm:$0xf]
  %v258 = vld [vmem:[%s0 + $0x3cc] sm:$0xf]
  %v259 = vld [vmem:[%s0 + $0x3d0] sm:$0xf]
  %v260 = vld [vmem:[%s0 + $0x3d4] sm:$0xf]
  %v261 = vld [vmem:[%s0 + $0x3d8] sm:$0xf]
  %v262 = vld [vmem:[%s0 + $0x3dc] sm:$0xf]
  %v263 = vld [vmem:[%s0 + $0x3e0] sm:$0xf]
  %v264 = vld [vmem:[%s0 + $0x3e4] sm:$0xf]
  %v265 = vld [vmem:[%s0 + $0x3e8] sm:$0xf]
  %v266 = vld [vmem:[%s0 + $0x3ec] sm:$0xf]
  %v267 = vld [vmem:[%s0 + $0x3f0] sm:$0xf]
  %v268 = vld [vmem:[%s0 + $0x3f4] sm:$0xf]
  %v269 = vld [vmem:[%s0 + $0x3f8] sm:$0xf]
  %v270 = vld [vmem:[%s0 + $0x3fc] sm:$0xf]
  %v271 = vld [vmem:[%s1] sm:$0xf]
  %v272 = vld [vmem:[%s1 + $0x4] sm:$0xf]
  %v273 = vld [vmem:[%s1 + $0x8] sm:$0xf]
  %v274 = vld [vmem:[%s1 + $0xc] sm:$0xf]
  %v275 = vld [vmem:[%s1 + $0x10] sm:$0xf]
  %v276 = vld [vmem:[%s1 + $0x14] sm:$0xf]
  %v277 = vld [vmem:[%s1 + $0x18] sm:$0xf]
  %v278 = vld [vmem:[%s1 + $0x1c] sm:$0xf]
  %v279 = vld [vmem:[%s1 + $0x20] sm:$0xf]
  %v280 = vld [vmem:[%s1 + $0x24] sm:$0xf]
  %v281 = vld [vmem:[%s1 + $0x28] sm:$0xf]
  %v282 = vld [vmem:[%s1 + $0x2c] sm:$0xf]
  %v283 = vld [vmem:[%s1 + $0x30] sm:$0xf]
  %v284 = vld [vmem:[%s1 + $0x34] sm:$0xf]
  %v285 = vld [vmem:[%s1 + $0x38] sm:$0xf]
  %v286 = vld [vmem:[%s1 + $0x3c] sm:$0xf]
  %v287 = vld [vmem:[%s2] sm:$0x1]
  %v289 = vlaneseq
  %v290 = vshrl.u32 %v289, 7
  %v291 = vsub.s32 0, %v290
  %v292 = vrot.slane %v287, %v291
  %v550 = vunpack.c.l.b16 %v15
  %v551 = vunpack.c.l.b16 %v16
  %v552 = vunpack.c.l.b16 %v17
  %v553 = vunpack.c.l.b16 %v18
  %v554 = vunpack.c.l.b16 %v19
  %v555 = vunpack.c.l.b16 %v20
  %v556 = vunpack.c.l.b16 %v21
  %v557 = vunpack.c.l.b16 %v22
  %v558 = vunpack.c.l.b16 %v23
  %v559 = vunpack.c.l.b16 %v24
  %v560 = vunpack.c.l.b16 %v25
  %v561 = vunpack.c.l.b16 %v26
  %v562 = vunpack.c.l.b16 %v27
  %v563 = vunpack.c.l.b16 %v28
  %v564 = vunpack.c.l.b16 %v29
  %v565 = vunpack.c.l.b16 %v30
  %v566 = vunpack.c.l.b16 %v31
  %v567 = vunpack.c.l.b16 %v32
  %v568 = vunpack.c.l.b16 %v33
  %v569 = vunpack.c.l.b16 %v34
  %v570 = vunpack.c.l.b16 %v35
  %v571 = vunpack.c.l.b16 %v36
  %v572 = vunpack.c.l.b16 %v37
  %v573 = vunpack.c.l.b16 %v38
  %v574 = vunpack.c.l.b16 %v39
  %v575 = vunpack.c.l.b16 %v40
  %v576 = vunpack.c.l.b16 %v41
  %v577 = vunpack.c.l.b16 %v42
  %v578 = vunpack.c.l.b16 %v43
  %v579 = vunpack.c.l.b16 %v44
  %v580 = vunpack.c.l.b16 %v45
  %v581 = vunpack.c.l.b16 %v46
  %v582 = vunpack.c.l.b16 %v47
  %v583 = vunpack.c.l.b16 %v48
  %v584 = vunpack.c.l.b16 %v49
  %v585 = vunpack.c.l.b16 %v50
  %v586 = vunpack.c.l.b16 %v51
  %v587 = vunpack.c.l.b16 %v52
  %v588 = vunpack.c.l.b16 %v53
  %v589 = vunpack.c.l.b16 %v54
  %v590 = vunpack.c.l.b16 %v55
  %v591 = vunpack.c.l.b16 %v56
  %v592 = vunpack.c.l.b16 %v57
  %v593 = vunpack.c.l.b16 %v58
  %v594 = vunpack.c.l.b16 %v59
  %v595 = vunpack.c.l.b16 %v60
  %v596 = vunpack.c.l.b16 %v61
  %v597 = vunpack.c.l.b16 %v62
  %v598 = vunpack.c.l.b16 %v63
  %v599 = vunpack.c.l.b16 %v64
  %v600 = vunpack.c.l.b16 %v65
  %v601 = vunpack.c.l.b16 %v66
  %v602 = vunpack.c.l.b16 %v67
  %v603 = vunpack.c.l.b16 %v68
  %v604 = vunpack.c.l.b16 %v69
  %v605 = vunpack.c.l.b16 %v70
  %v606 = vunpack.c.l.b16 %v71
  %v607 = vunpack.c.l.b16 %v72
  %v608 = vunpack.c.l.b16 %v73
  %v609 = vunpack.c.l.b16 %v74
  %v610 = vunpack.c.l.b16 %v75
  %v611 = vunpack.c.l.b16 %v76
  %v612 = vunpack.c.l.b16 %v77
  %v613 = vunpack.c.l.b16 %v78
  %v614 = vunpack.c.l.b16 %v79
  %v615 = vunpack.c.l.b16 %v80
  %v616 = vunpack.c.l.b16 %v81
  %v617 = vunpack.c.l.b16 %v82
  %v618 = vunpack.c.l.b16 %v83
  %v619 = vunpack.c.l.b16 %v84
  %v620 = vunpack.c.l.b16 %v85
  %v621 = vunpack.c.l.b16 %v86
  %v622 = vunpack.c.l.b16 %v87
  %v623 = vunpack.c.l.b16 %v88
  %v624 = vunpack.c.l.b16 %v89
  %v625 = vunpack.c.l.b16 %v90
  %v626 = vunpack.c.l.b16 %v91
  %v627 = vunpack.c.l.b16 %v92
  %v628 = vunpack.c.l.b16 %v93
  %v629 = vunpack.c.l.b16 %v94
  %v630 = vunpack.c.l.b16 %v95
  %v631 = vunpack.c.l.b16 %v96
  %v632 = vunpack.c.l.b16 %v97
  %v633 = vunpack.c.l.b16 %v98
  %v634 = vunpack.c.l.b16 %v99
  %v635 = vunpack.c.l.b16 %v100
  %v636 = vunpack.c.l.b16 %v101
  %v637 = vunpack.c.l.b16 %v102
  %v638 = vunpack.c.l.b16 %v103
  %v639 = vunpack.c.l.b16 %v104
  %v640 = vunpack.c.l.b16 %v105
  %v641 = vunpack.c.l.b16 %v106
  %v642 = vunpack.c.l.b16 %v107
  %v643 = vunpack.c.l.b16 %v108
  %v644 = vunpack.c.l.b16 %v109
  %v645 = vunpack.c.l.b16 %v110
  %v646 = vunpack.c.l.b16 %v111
  %v647 = vunpack.c.l.b16 %v112
  %v648 = vunpack.c.l.b16 %v113
  %v649 = vunpack.c.l.b16 %v114
  %v650 = vunpack.c.l.b16 %v115
  %v651 = vunpack.c.l.b16 %v116
  %v652 = vunpack.c.l.b16 %v117
  %v653 = vunpack.c.l.b16 %v118
  %v654 = vunpack.c.l.b16 %v119
  %v655 = vunpack.c.l.b16 %v120
  %v656 = vunpack.c.l.b16 %v121
  %v657 = vunpack.c.l.b16 %v122
  %v658 = vunpack.c.l.b16 %v123
  %v659 = vunpack.c.l.b16 %v124
  %v660 = vunpack.c.l.b16 %v125
  %v661 = vunpack.c.l.b16 %v126
  %v662 = vunpack.c.l.b16 %v127
  %v663 = vunpack.c.l.b16 %v128
  %v664 = vunpack.c.l.b16 %v129
  %v665 = vunpack.c.l.b16 %v130
  %v666 = vunpack.c.l.b16 %v131
  %v667 = vunpack.c.l.b16 %v132
  %v668 = vunpack.c.l.b16 %v133
  %v669 = vunpack.c.l.b16 %v134
  %v670 = vunpack.c.l.b16 %v135
  %v671 = vunpack.c.l.b16 %v136
  %v672 = vunpack.c.l.b16 %v137
  %v673 = vunpack.c.l.b16 %v138
  %v674 = vunpack.c.l.b16 %v139
  %v675 = vunpack.c.l.b16 %v140
  %v676 = vunpack.c.l.b16 %v141
  %v677 = vunpack.c.l.b16 %v142
  %v678 = vunpack.c.l.b16 %v143
  %v679 = vunpack.c.l.b16 %v144
  %v680 = vunpack.c.l.b16 %v145
  %v681 = vunpack.c.l.b16 %v146
  %v682 = vunpack.c.l.b16 %v147
  %v683 = vunpack.c.l.b16 %v148
  %v684 = vunpack.c.l.b16 %v149
  %v685 = vunpack.c.l.b16 %v150
  %v686 = vunpack.c.l.b16 %v151
  %v687 = vunpack.c.l.b16 %v152
  %v688 = vunpack.c.l.b16 %v153
  %v689 = vunpack.c.l.b16 %v154
  %v690 = vunpack.c.l.b16 %v155
  %v691 = vunpack.c.l.b16 %v156
  %v692 = vunpack.c.l.b16 %v157
  %v693 = vunpack.c.l.b16 %v158
  %v694 = vunpack.c.l.b16 %v159
  %v695 = vunpack.c.l.b16 %v160
  %v696 = vunpack.c.l.b16 %v161
  %v697 = vunpack.c.l.b16 %v162
  %v698 = vunpack.c.l.b16 %v163
  %v699 = vunpack.c.l.b16 %v164
  %v700 = vunpack.c.l.b16 %v165
  %v701 = vunpack.c.l.b16 %v166
  %v702 = vunpack.c.l.b16 %v167
  %v703 = vunpack.c.l.b16 %v168
  %v704 = vunpack.c.l.b16 %v169
  %v705 = vunpack.c.l.b16 %v170
  %v706 = vunpack.c.l.b16 %v171
  %v707 = vunpack.c.l.b16 %v172
  %v708 = vunpack.c.l.b16 %v173
  %v709 = vunpack.c.l.b16 %v174
  %v710 = vunpack.c.l.b16 %v175
  %v711 = vunpack.c.l.b16 %v176
  %v712 = vunpack.c.l.b16 %v177
  %v713 = vunpack.c.l.b16 %v178
  %v714 = vunpack.c.l.b16 %v179
  %v715 = vunpack.c.l.b16 %v180
  %v716 = vunpack.c.l.b16 %v181
  %v717 = vunpack.c.l.b16 %v182
  %v718 = vunpack.c.l.b16 %v183
  %v719 = vunpack.c.l.b16 %v184
  %v720 = vunpack.c.l.b16 %v185
  %v721 = vunpack.c.l.b16 %v186
  %v722 = vunpack.c.l.b16 %v187
  %v723 = vunpack.c.l.b16 %v188
  %v724 = vunpack.c.l.b16 %v189
  %v725 = vunpack.c.l.b16 %v190
  %v726 = vunpack.c.l.b16 %v191
  %v727 = vunpack.c.l.b16 %v192
  %v728 = vunpack.c.l.b16 %v193
  %v729 = vunpack.c.l.b16 %v194
  %v730 = vunpack.c.l.b16 %v195
  %v731 = vunpack.c.l.b16 %v196
  %v732 = vunpack.c.l.b16 %v197
  %v733 = vunpack.c.l.b16 %v198
  %v734 = vunpack.c.l.b16 %v199
  %v735 = vunpack.c.l.b16 %v200
  %v736 = vunpack.c.l.b16 %v201
  %v737 = vunpack.c.l.b16 %v202
  %v738 = vunpack.c.l.b16 %v203
  %v739 = vunpack.c.l.b16 %v204
  %v740 = vunpack.c.l.b16 %v205
  %v741 = vunpack.c.l.b16 %v206
  %v742 = vunpack.c.l.b16 %v207
  %v743 = vunpack.c.l.b16 %v208
  %v744 = vunpack.c.l.b16 %v209
  %v745 = vunpack.c.l.b16 %v210
  %v746 = vunpack.c.l.b16 %v211
  %v747 = vunpack.c.l.b16 %v212
  %v748 = vunpack.c.l.b16 %v213
  %v749 = vunpack.c.l.b16 %v214
  %v750 = vunpack.c.l.b16 %v215
  %v751 = vunpack.c.l.b16 %v216
  %v752 = vunpack.c.l.b16 %v217
  %v753 = vunpack.c.l.b16 %v218
  %v754 = vunpack.c.l.b16 %v219
  %v755 = vunpack.c.l.b16 %v220
  %v756 = vunpack.c.l.b16 %v221
  %v757 = vunpack.c.l.b16 %v222
  %v758 = vunpack.c.l.b16 %v223
  %v759 = vunpack.c.l.b16 %v224
  %v760 = vunpack.c.l.b16 %v225
  %v761 = vunpack.c.l.b16 %v226
  %v762 = vunpack.c.l.b16 %v227
  %v763 = vunpack.c.l.b16 %v228
  %v764 = vunpack.c.l.b16 %v229
  %v765 = vunpack.c.l.b16 %v230
  %v766 = vunpack.c.l.b16 %v231
  %v767 = vunpack.c.l.b16 %v232
  %v768 = vunpack.c.l.b16 %v233
  %v769 = vunpack.c.l.b16 %v234
  %v770 = vunpack.c.l.b16 %v235
  %v771 = vunpack.c.l.b16 %v236
  %v772 = vunpack.c.l.b16 %v237
  %v773 = vunpack.c.l.b16 %v238
  %v774 = vunpack.c.l.b16 %v239
  %v775 = vunpack.c.l.b16 %v240
  %v776 = vunpack.c.l.b16 %v241
  %v777 = vunpack.c.l.b16 %v242
  %v778 = vunpack.c.l.b16 %v243
  %v779 = vunpack.c.l.b16 %v244
  %v780 = vunpack.c.l.b16 %v245
  %v781 = vunpack.c.l.b16 %v246
  %v782 = vunpack.c.l.b16 %v247
  %v783 = vunpack.c.l.b16 %v248
  %v784 = vunpack.c.l.b16 %v249
  %v785 = vunpack.c.l.b16 %v250
  %v786 = vunpack.c.l.b16 %v251
  %v787 = vunpack.c.l.b16 %v252
  %v788 = vunpack.c.l.b16 %v253
  %v789 = vunpack.c.l.b16 %v254
  %v790 = vunpack.c.l.b16 %v255
  %v791 = vunpack.c.l.b16 %v256
  %v792 = vunpack.c.l.b16 %v257
  %v793 = vunpack.c.l.b16 %v258
  %v794 = vunpack.c.l.b16 %v259
  %v795 = vunpack.c.l.b16 %v260
  %v796 = vunpack.c.l.b16 %v261
  %v797 = vunpack.c.l.b16 %v262
  %v798 = vunpack.c.l.b16 %v263
  %v799 = vunpack.c.l.b16 %v264
  %v800 = vunpack.c.l.b16 %v265
  %v801 = vunpack.c.l.b16 %v266
  %v802 = vunpack.c.l.b16 %v267
  %v803 = vunpack.c.l.b16 %v268
  %v804 = vunpack.c.l.b16 %v269
  %v805 = vunpack.c.l.b16 %v270
  %v806 = vpack.c.b16 %v551, %v550
  %v807 = vpack.c.b16 %v553, %v552
  %v808 = vpack.c.b16 %v555, %v554
  %v809 = vpack.c.b16 %v557, %v556
  %v810 = vpack.c.b16 %v559, %v558
  %v811 = vpack.c.b16 %v561, %v560
  %v812 = vpack.c.b16 %v563, %v562
  %v813 = vpack.c.b16 %v565, %v564
  %v814 = vpack.c.b16 %v567, %v566
  %v815 = vpack.c.b16 %v569, %v568
  %v816 = vpack.c.b16 %v571, %v570
  %v817 = vpack.c.b16 %v573, %v572
  %v818 = vpack.c.b16 %v575, %v574
  %v819 = vpack.c.b16 %v577, %v576
  %v820 = vpack.c.b16 %v579, %v578
  %v821 = vpack.c.b16 %v581, %v580
  %v822 = vpack.c.b16 %v583, %v582
  %v823 = vpack.c.b16 %v585, %v584
  %v824 = vpack.c.b16 %v587, %v586
  %v825 = vpack.c.b16 %v589, %v588
  %v826 = vpack.c.b16 %v591, %v590
  %v827 = vpack.c.b16 %v593, %v592
  %v828 = vpack.c.b16 %v595, %v594
  %v829 = vpack.c.b16 %v597, %v596
  %v830 = vpack.c.b16 %v599, %v598
  %v831 = vpack.c.b16 %v601, %v600
  %v832 = vpack.c.b16 %v603, %v602
  %v833 = vpack.c.b16 %v605, %v604
  %v834 = vpack.c.b16 %v607, %v606
  %v835 = vpack.c.b16 %v609, %v608
  %v836 = vpack.c.b16 %v611, %v610
  %v837 = vpack.c.b16 %v613, %v612
  %v838 = vpack.c.b16 %v615, %v614
  %v839 = vpack.c.b16 %v617, %v616
  %v840 = vpack.c.b16 %v619, %v618
  %v841 = vpack.c.b16 %v621, %v620
  %v842 = vpack.c.b16 %v623, %v622
  %v843 = vpack.c.b16 %v625, %v624
  %v844 = vpack.c.b16 %v627, %v626
  %v845 = vpack.c.b16 %v629, %v628
  %v846 = vpack.c.b16 %v631, %v630
  %v847 = vpack.c.b16 %v633, %v632
  %v848 = vpack.c.b16 %v635, %v634
  %v849 = vpack.c.b16 %v637, %v636
  %v850 = vpack.c.b16 %v639, %v638
  %v851 = vpack.c.b16 %v641, %v640
  %v852 = vpack.c.b16 %v643, %v642
  %v853 = vpack.c.b16 %v645, %v644
  %v854 = vpack.c.b16 %v647, %v646
  %v855 = vpack.c.b16 %v649, %v648
  %v856 = vpack.c.b16 %v651, %v650
  %v857 = vpack.c.b16 %v653, %v652
  %v858 = vpack.c.b16 %v655, %v654
  %v859 = vpack.c.b16 %v657, %v656
  %v860 = vpack.c.b16 %v659, %v658
  %v861 = vpack.c.b16 %v661, %v660
  %v862 = vpack.c.b16 %v663, %v662
  %v863 = vpack.c.b16 %v665, %v664
  %v864 = vpack.c.b16 %v667, %v666
  %v865 = vpack.c.b16 %v669, %v668
  %v866 = vpack.c.b16 %v671, %v670
  %v867 = vpack.c.b16 %v673, %v672
  %v868 = vpack.c.b16 %v675, %v674
  %v869 = vpack.c.b16 %v677, %v676
  %v870 = vpack.c.b16 %v679, %v678
  %v871 = vpack.c.b16 %v681, %v680
  %v872 = vpack.c.b16 %v683, %v682
  %v873 = vpack.c.b16 %v685, %v684
  %v874 = vpack.c.b16 %v687, %v686
  %v875 = vpack.c.b16 %v689, %v688
  %v876 = vpack.c.b16 %v691, %v690
  %v877 = vpack.c.b16 %v693, %v692
  %v878 = vpack.c.b16 %v695, %v694
  %v879 = vpack.c.b16 %v697, %v696
  %v880 = vpack.c.b16 %v699, %v698
  %v881 = vpack.c.b16 %v701, %v700
  %v882 = vpack.c.b16 %v703, %v702
  %v883 = vpack.c.b16 %v705, %v704
  %v884 = vpack.c.b16 %v707, %v706
  %v885 = vpack.c.b16 %v709, %v708
  %v886 = vpack.c.b16 %v711, %v710
  %v887 = vpack.c.b16 %v713, %v712
  %v888 = vpack.c.b16 %v715, %v714
  %v889 = vpack.c.b16 %v717, %v716
  %v890 = vpack.c.b16 %v719, %v718
  %v891 = vpack.c.b16 %v721, %v720
  %v892 = vpack.c.b16 %v723, %v722
  %v893 = vpack.c.b16 %v725, %v724
  %v894 = vpack.c.b16 %v727, %v726
  %v895 = vpack.c.b16 %v729, %v728
  %v896 = vpack.c.b16 %v731, %v730
  %v897 = vpack.c.b16 %v733, %v732
  %v898 = vpack.c.b16 %v735, %v734
  %v899 = vpack.c.b16 %v737, %v736
  %v900 = vpack.c.b16 %v739, %v738
  %v901 = vpack.c.b16 %v741, %v740
  %v902 = vpack.c.b16 %v743, %v742
  %v903 = vpack.c.b16 %v745, %v744
  %v904 = vpack.c.b16 %v747, %v746
  %v905 = vpack.c.b16 %v749, %v748
  %v906 = vpack.c.b16 %v751, %v750
  %v907 = vpack.c.b16 %v753, %v752
  %v908 = vpack.c.b16 %v755, %v754
  %v909 = vpack.c.b16 %v757, %v756
  %v910 = vpack.c.b16 %v759, %v758
  %v911 = vpack.c.b16 %v761, %v760
  %v912 = vpack.c.b16 %v763, %v762
  %v913 = vpack.c.b16 %v765, %v764
  %v914 = vpack.c.b16 %v767, %v766
  %v915 = vpack.c.b16 %v769, %v768
  %v916 = vpack.c.b16 %v771, %v770
  %v917 = vpack.c.b16 %v773, %v772
  %v918 = vpack.c.b16 %v775, %v774
  %v919 = vpack.c.b16 %v777, %v776
  %v920 = vpack.c.b16 %v779, %v778
  %v921 = vpack.c.b16 %v781, %v780
  %v922 = vpack.c.b16 %v783, %v782
  %v923 = vpack.c.b16 %v785, %v784
  %v924 = vpack.c.b16 %v787, %v786
  %v925 = vpack.c.b16 %v789, %v788
  %v926 = vpack.c.b16 %v791, %v790
  %v927 = vpack.c.b16 %v793, %v792
  %v928 = vpack.c.b16 %v795, %v794
  %v929 = vpack.c.b16 %v797, %v796
  %v930 = vpack.c.b16 %v799, %v798
  %v931 = vpack.c.b16 %v801, %v800
  %v932 = vpack.c.b16 %v803, %v802
  %v933 = vpack.c.b16 %v805, %v804
  %v1078 = vunpack.c.l.b16 %v271
  %v1079 = vunpack.c.l.b16 %v272
  %v1080 = vunpack.c.l.b16 %v273
  %v1081 = vunpack.c.l.b16 %v274
  %v1082 = vunpack.c.l.b16 %v275
  %v1083 = vunpack.c.l.b16 %v276
  %v1084 = vunpack.c.l.b16 %v277
  %v1085 = vunpack.c.l.b16 %v278
  %v1086 = vunpack.c.l.b16 %v279
  %v1087 = vunpack.c.l.b16 %v280
  %v1088 = vunpack.c.l.b16 %v281
  %v1089 = vunpack.c.l.b16 %v282
  %v1090 = vunpack.c.l.b16 %v283
  %v1091 = vunpack.c.l.b16 %v284
  %v1092 = vunpack.c.l.b16 %v285
  %v1093 = vunpack.c.l.b16 %v286
  %v1094 = vpack.c.b16 %v1079, %v1078
  %v1095 = vpack.c.b16 %v1081, %v1080
  %v1096 = vpack.c.b16 %v1083, %v1082
  %v1097 = vpack.c.b16 %v1085, %v1084
  %v1098 = vpack.c.b16 %v1087, %v1086
  %v1099 = vpack.c.b16 %v1089, %v1088
  %v1100 = vpack.c.b16 %v1091, %v1090
  %v1101 = vpack.c.b16 %v1093, %v1092
  %1110 = vmatprep.subr.bf16.mxu0 0
  %1111 = vmatpush1.bf16.msra.mxu0 %v1094
  %1112 = vmatprep.subr.bf16.mxu0 0
  %1113 = vmatpush1.bf16.msra.mxu0 %v1095
  %1114 = vmatprep.subr.bf16.mxu0 0
  %1115 = vmatpush1.bf16.msra.mxu0 %v1096
  %1116 = vmatprep.subr.bf16.mxu0 0
  %1117 = vmatpush1.bf16.msra.mxu0 %v1097
  %1118 = vmatprep.subr.bf16.mxu0 0
  %1119 = vmatpush1.bf16.msra.mxu0 %v1098
  %1120 = vmatprep.subr.bf16.mxu0 0
  %1121 = vmatpush1.bf16.msra.mxu0 %v1099
  %1122 = vmatprep.subr.bf16.mxu0 0
  %1123 = vmatpush1.bf16.msra.mxu0 %v1100
  %1124 = vmatprep.subr.bf16.mxu0 0
  %1125 = vmatpush1.bf16.msra.mxu0 %v1101
  %1126 = vmatprep.subr.bf16.mxu0 0
  %1127 = vmatpush1.bf16.msra.mxu0 0
  %1128 = vmatprep.subr.bf16.mxu0 0
  %1129 = vmatpush1.bf16.msra.mxu0 0
  %1130 = vmatprep.subr.bf16.mxu0 0
  %1131 = vmatpush1.bf16.msra.mxu0 0
  %1132 = vmatprep.subr.bf16.mxu0 0
  %1133 = vmatpush1.bf16.msra.mxu0 0
  %1134 = vmatprep.subr.bf16.mxu0 0
  %1135 = vmatpush1.bf16.msra.mxu0 0
  %1136 = vmatprep.subr.bf16.mxu0 0
  %1137 = vmatpush1.bf16.msra.mxu0 0
  %1138 = vmatprep.subr.bf16.mxu0 0
  %1139 = vmatpush1.bf16.msra.mxu0 0
  %1140 = vmatprep.subr.bf16.mxu0 0
  %1141 = vmatpush1.bf16.msra.mxu0 0
  %1142 = vmatprep.mubr.bf16.mxu0 0
  %1143 = vmatmul.mubr.bf16.gmra.mrb[0].mxu0 %v806
  %v1144 = vpop.f32.mrb[0].mxu0
  %v1145 = vadd.f32 %v292, %v1144
  %v1146 = vpop.f32.mrb[0].mxu0
  %v1147 = vpop.f32.mrb[0].mxu0
  %v1148 = vadd.f32 %v292, %v1147
  %v1149 = vpop.f32.mrb[0].mxu0
  %1150 = vmatprep.mubr.bf16.mxu0 0
  %1151 = vmatmul.mubr.bf16.gmra.mrb[0].mxu0 %v807
  %v1152 = vpop.f32.mrb[0].mxu0
  %v1153 = vadd.f32 %v292, %v1152
  %v1154 = vpop.f32.mrb[0].mxu0
  %v1155 = vpop.f32.mrb[0].mxu0
  %v1156 = vadd.f32 %v292, %v1155
  %v1157 = vpop.f32.mrb[0].mxu0
  %1158 = vmatprep.mubr.bf16.mxu0 0
  %1159 = vmatmul.mubr.bf16.gmra.mrb[0].mxu0 %v808
  %v1160 = vpop.f32.mrb[0].mxu0
  %v1161 = vadd.f32 %v292, %v1160
  %v1162 = vpop.f32.mrb[0].mxu0
  %v1163 = vpop.f32.mrb[0].mxu0
  %v1164 = vadd.f32 %v292, %v1163
  %v1165 = vpop.f32.mrb[0].mxu0
  %1166 = vmatprep.mubr.bf16.mxu0 0
  %1167 = vmatmul.mubr.bf16.gmra.mrb[0].mxu0 %v809
  %v1168 = vpop.f32.mrb[0].mxu0
  %v1169 = vadd.f32 %v292, %v1168
  %v1170 = vpop.f32.mrb[0].mxu0
  %v1171 = vpop.f32.mrb[0].mxu0
  %v1172 = vadd.f32 %v292, %v1171
  %v1173 = vpop.f32.mrb[0].mxu0
  %1174 = vmatprep.mubr.bf16.mxu0 0
  %1175 = vmatmul.mubr.bf16.gmra.mrb[0].mxu0 %v810
  %v1176 = vpop.f32.mrb[0].mxu0
  %v1177 = vadd.f32 %v292, %v1176
  %v1178 = vpop.f32.mrb[0].mxu0
  %v1179 = vpop.f32.mrb[0].mxu0
  %v1180 = vadd.f32 %v292, %v1179
  %v1181 = vpop.f32.mrb[0].mxu0
  %1182 = vmatprep.mubr.bf16.mxu0 0
  %1183 = vmatmul.mubr.bf16.gmra.mrb[0].mxu0 %v811
  %v1184 = vpop.f32.mrb[0].mxu0
  %v1185 = vadd.f32 %v292, %v1184
  %v1186 = vpop.f32.mrb[0].mxu0
  %v1187 = vpop.f32.mrb[0].mxu0
  %v1188 = vadd.f32 %v292, %v1187
  %v1189 = vpop.f32.mrb[0].mxu0
  %1190 = vmatprep.mubr.bf16.mxu0 0
  %1191 = vmatmul.mubr.bf16.gmra.mrb[0].mxu0 %v812
  %v1192 = vpop.f32.mrb[0].mxu0
  %v1193 = vadd.f32 %v292, %v1192
  %v1194 = vpop.f32.mrb[0].mxu0
  %v1195 = vpop.f32.mrb[0].mxu0
  %v1196 = vadd.f32 %v292, %v1195
  %v1197 = vpop.f32.mrb[0].mxu0
  %1198 = vmatprep.mubr.bf16.mxu0 0
  %1199 = vmatmul.mubr.bf16.gmra.mrb[0].mxu0 %v813
  %v1200 = vpop.f32.mrb[0].mxu0
  %v1201 = vadd.f32 %v292, %v1200
  %v1202 = vpop.f32.mrb[0].mxu0
  %v1203 = vpop.f32.mrb[0].mxu0
  %v1204 = vadd.f32 %v292, %v1203
  %v1205 = vpop.f32.mrb[0].mxu0
  %1206 = vmatprep.mubr.bf16.mxu0 0
  %1207 = vmatmul.mubr.bf16.gmra.mrb[0].mxu0 %v814
  %v1208 = vpop.f32.mrb[0].mxu0
  %v1209 = vadd.f32 %v292, %v1208
  %v1210 = vpop.f32.mrb[0].mxu0
  %v1211 = vpop.f32.mrb[0].mxu0
  %v1212 = vadd.f32 %v292, %v1211
  %v1213 = vpop.f32.mrb[0].mxu0
  %1214 = vmatprep.mubr.bf16.mxu0 0
  %1215 = vmatmul.mubr.bf16.gmra.mrb[0].mxu0 %v815
  %v1216 = vpop.f32.mrb[0].mxu0
  %v1217 = vadd.f32 %v292, %v1216
  %v1218 = vpop.f32.mrb[0].mxu0
  %v1219 = vpop.f32.mrb[0].mxu0
  %v1220 = vadd.f32 %v292, %v1219
  %v1221 = vpop.f32.mrb[0].mxu0
  %1222 = vmatprep.mubr.bf16.mxu0 0
  %1223 = vmatmul.mubr.bf16.gmra.mrb[0].mxu0 %v816
  %v1224 = vpop.f32.mrb[0].mxu0
  %v1225 = vadd.f32 %v292, %v1224
  %v1226 = vpop.f32.mrb[0].mxu0
  %v1227 = vpop.f32.mrb[0].mxu0
  %v1228 = vadd.f32 %v292, %v1227
  %v1229 = vpop.f32.mrb[0].mxu0
  %1230 = vmatprep.mubr.bf16.mxu0 0
  %1231 = vmatmul.mubr.bf16.gmra.mrb[0].mxu0 %v817
  %v1232 = vpop.f32.mrb[0].mxu0
  %v1233 = vadd.f32 %v292, %v1232
  %v1234 = vpop.f32.mrb[0].mxu0
  %v1235 = vpop.f32.mrb[0].mxu0
  %v1236 = vadd.f32 %v292, %v1235
  %v1237 = vpop.f32.mrb[0].mxu0
  %1238 = vmatprep.mubr.bf16.mxu0 0
  %1239 = vmatmul.mubr.bf16.gmra.mrb[0].mxu0 %v818
  %v1240 = vpop.f32.mrb[0].mxu0
  %v1241 = vadd.f32 %v292, %v1240
  %v1242 = vpop.f32.mrb[0].mxu0
  %v1243 = vpop.f32.mrb[0].mxu0
  %v1244 = vadd.f32 %v292, %v1243
  %v1245 = vpop.f32.mrb[0].mxu0
  %1246 = vmatprep.mubr.bf16.mxu0 0
  %1247 = vmatmul.mubr.bf16.gmra.mrb[0].mxu0 %v819
  %v1248 = vpop.f32.mrb[0].mxu0
  %v1249 = vadd.f32 %v292, %v1248
  %v1250 = vpop.f32.mrb[0].mxu0
  %v1251 = vpop.f32.mrb[0].mxu0
  %v1252 = vadd.f32 %v292, %v1251
  %v1253 = vpop.f32.mrb[0].mxu0
  %1254 = vmatprep.mubr.bf16.mxu0 0
  %1255 = vmatmul.mubr.bf16.gmra.mrb[0].mxu0 %v820
  %v1256 = vpop.f32.mrb[0].mxu0
  %v1257 = vadd.f32 %v292, %v1256
  %v1258 = vpop.f32.mrb[0].mxu0
  %v1259 = vpop.f32.mrb[0].mxu0
  %v1260 = vadd.f32 %v292, %v1259
  %v1261 = vpop.f32.mrb[0].mxu0
  %1262 = vmatprep.mubr.bf16.mxu0 0
  %1263 = vmatmul.mubr.bf16.gmra.mrb[0].mxu0 %v821
  %v1264 = vpop.f32.mrb[0].mxu0
  %v1265 = vadd.f32 %v292, %v1264
  %v1266 = vpop.f32.mrb[0].mxu0
  %v1267 = vpop.f32.mrb[0].mxu0
  %v1268 = vadd.f32 %v292, %v1267
  %v1269 = vpop.f32.mrb[0].mxu0
  %1270 = vmatprep.mubr.bf16.mxu0 0
  %1271 = vmatmul.mubr.bf16.gmra.mrb[0].mxu0 %v822
  %v1272 = vpop.f32.mrb[0].mxu0
  %v1273 = vadd.f32 %v292, %v1272
  %v1274 = vpop.f32.mrb[0].mxu0
  %v1275 = vpop.f32.mrb[0].mxu0
  %v1276 = vadd.f32 %v292, %v1275
  %v1277 = vpop.f32.mrb[0].mxu0
  %1278 = vmatprep.mubr.bf16.mxu0 0
  %1279 = vmatmul.mubr.bf16.gmra.mrb[0].mxu0 %v823
  %v1280 = vpop.f32.mrb[0].mxu0
  %v1281 = vadd.f32 %v292, %v1280
  %v1282 = vpop.f32.mrb[0].mxu0
  %v1283 = vpop.f32.mrb[0].mxu0
  %v1284 = vadd.f32 %v292, %v1283
  %v1285 = vpop.f32.mrb[0].mxu0
  %1286 = vmatprep.mubr.bf16.mxu0 0
  %1287 = vmatmul.mubr.bf16.gmra.mrb[0].mxu0 %v824
  %v1288 = vpop.f32.mrb[0].mxu0
  %v1289 = vadd.f32 %v292, %v1288
  %v1290 = vpop.f32.mrb[0].mxu0
  %v1291 = vpop.f32.mrb[0].mxu0
  %v1292 = vadd.f32 %v292, %v1291
  %v1293 = vpop.f32.mrb[0].mxu0
  %1294 = vmatprep.mubr.bf16.mxu0 0
  %1295 = vmatmul.mubr.bf16.gmra.mrb[0].mxu0 %v825
  %v1296 = vpop.f32.mrb[0].mxu0
  %v1297 = vadd.f32 %v292, %v1296
  %v1298 = vpop.f32.mrb[0].mxu0
  %v1299 = vpop.f32.mrb[0].mxu0
  %v1300 = vadd.f32 %v292, %v1299
  %v1301 = vpop.f32.mrb[0].mxu0
  %1302 = vmatprep.mubr.bf16.mxu0 0
  %1303 = vmatmul.mubr.bf16.gmra.mrb[0].mxu0 %v826
  %v1304 = vpop.f32.mrb[0].mxu0
  %v1305 = vadd.f32 %v292, %v1304
  %v1306 = vpop.f32.mrb[0].mxu0
  %v1307 = vpop.f32.mrb[0].mxu0
  %v1308 = vadd.f32 %v292, %v1307
  %v1309 = vpop.f32.mrb[0].mxu0
  %1310 = vmatprep.mubr.bf16.mxu0 0
  %1311 = vmatmul.mubr.bf16.gmra.mrb[0].mxu0 %v827
  %v1312 = vpop.f32.mrb[0].mxu0
  %v1313 = vadd.f32 %v292, %v1312
  %v1314 = vpop.f32.mrb[0].mxu0
  %v1315 = vpop.f32.mrb[0].mxu0
  %v1316 = vadd.f32 %v292, %v1315
  %v1317 = vpop.f32.mrb[0].mxu0
  %1318 = vmatprep.mubr.bf16.mxu0 0
  %1319 = vmatmul.mubr.bf16.gmra.mrb[0].mxu0 %v828
  %v1320 = vpop.f32.mrb[0].mxu0
  %v1321 = vadd.f32 %v292, %v1320
  %v1322 = vpop.f32.mrb[0].mxu0
  %v1323 = vpop.f32.mrb[0].mxu0
  %v1324 = vadd.f32 %v292, %v1323
  %v1325 = vpop.f32.mrb[0].mxu0
  %1326 = vmatprep.mubr.bf16.mxu0 0
  %1327 = vmatmul.mubr.bf16.gmra.mrb[0].mxu0 %v829
  %v1328 = vpop.f32.mrb[0].mxu0
  %v1329 = vadd.f32 %v292, %v1328
  %v1330 = vpop.f32.mrb[0].mxu0
  %v1331 = vpop.f32.mrb[0].mxu0
  %v1332 = vadd.f32 %v292, %v1331
  %v1333 = vpop.f32.mrb[0].mxu0
  %1334 = vmatprep.mubr.bf16.mxu0 0
  %1335 = vmatmul.mubr.bf16.gmra.mrb[0].mxu0 %v830
  %v1336 = vpop.f32.mrb[0].mxu0
  %v1337 = vadd.f32 %v292, %v1336
  %v1338 = vpop.f32.mrb[0].mxu0
  %v1339 = vpop.f32.mrb[0].mxu0
  %v1340 = vadd.f32 %v292, %v1339
  %v1341 = vpop.f32.mrb[0].mxu0
  %1342 = vmatprep.mubr.bf16.mxu0 0
  %1343 = vmatmul.mubr.bf16.gmra.mrb[0].mxu0 %v831
  %v1344 = vpop.f32.mrb[0].mxu0
  %v1345 = vadd.f32 %v292, %v1344
  %v1346 = vpop.f32.mrb[0].mxu0
  %v1347 = vpop.f32.mrb[0].mxu0
  %v1348 = vadd.f32 %v292, %v1347
  %v1349 = vpop.f32.mrb[0].mxu0
  %1350 = vmatprep.mubr.bf16.mxu0 0
  %1351 = vmatmul.mubr.bf16.gmra.mrb[0].mxu0 %v832
  %v1352 = vpop.f32.mrb[0].mxu0
  %v1353 = vadd.f32 %v292, %v1352
  %v1354 = vpop.f32.mrb[0].mxu0
  %v1355 = vpop.f32.mrb[0].mxu0
  %v1356 = vadd.f32 %v292, %v1355
  %v1357 = vpop.f32.mrb[0].mxu0
  %1358 = vmatprep.mubr.bf16.mxu0 0
  %1359 = vmatmul.mubr.bf16.gmra.mrb[0].mxu0 %v833
  %v1360 = vpop.f32.mrb[0].mxu0
  %v1361 = vadd.f32 %v292, %v1360
  %v1362 = vpop.f32.mrb[0].mxu0
  %v1363 = vpop.f32.mrb[0].mxu0
  %v1364 = vadd.f32 %v292, %v1363
  %v1365 = vpop.f32.mrb[0].mxu0
  %1366 = vmatprep.mubr.bf16.mxu0 0
  %1367 = vmatmul.mubr.bf16.gmra.mrb[0].mxu0 %v834
  %v1368 = vpop.f32.mrb[0].mxu0
  %v1369 = vadd.f32 %v292, %v1368
  %v1370 = vpop.f32.mrb[0].mxu0
  %v1371 = vpop.f32.mrb[0].mxu0
  %v1372 = vadd.f32 %v292, %v1371
  %v1373 = vpop.f32.mrb[0].mxu0
  %1374 = vmatprep.mubr.bf16.mxu0 0
  %1375 = vmatmul.mubr.bf16.gmra.mrb[0].mxu0 %v835
  %v1376 = vpop.f32.mrb[0].mxu0
  %v1377 = vadd.f32 %v292, %v1376
  %v1378 = vpop.f32.mrb[0].mxu0
  %v1379 = vpop.f32.mrb[0].mxu0
  %v1380 = vadd.f32 %v292, %v1379
  %v1381 = vpop.f32.mrb[0].mxu0
  %1382 = vmatprep.mubr.bf16.mxu0 0
  %1383 = vmatmul.mubr.bf16.gmra.mrb[0].mxu0 %v836
  %v1384 = vpop.f32.mrb[0].mxu0
  %v1385 = vadd.f32 %v292, %v1384
  %v1386 = vpop.f32.mrb[0].mxu0
  %v1387 = vpop.f32.mrb[0].mxu0
  %v1388 = vadd.f32 %v292, %v1387
  %v1389 = vpop.f32.mrb[0].mxu0
  %1390 = vmatprep.mubr.bf16.mxu0 0
  %1391 = vmatmul.mubr.bf16.gmra.mrb[0].mxu0 %v837
  %v1392 = vpop.f32.mrb[0].mxu0
  %v1393 = vadd.f32 %v292, %v1392
  %v1394 = vpop.f32.mrb[0].mxu0
  %v1395 = vpop.f32.mrb[0].mxu0
  %v1396 = vadd.f32 %v292, %v1395
  %v1397 = vpop.f32.mrb[0].mxu0
  %1398 = vmatprep.mubr.bf16.mxu0 0
  %1399 = vmatmul.mubr.bf16.gmra.mrb[0].mxu0 %v838
  %v1400 = vpop.f32.mrb[0].mxu0
  %v1401 = vadd.f32 %v292, %v1400
  %v1402 = vpop.f32.mrb[0].mxu0
  %v1403 = vpop.f32.mrb[0].mxu0
  %v1404 = vadd.f32 %v292, %v1403
  %v1405 = vpop.f32.mrb[0].mxu0
  %1406 = vmatprep.mubr.bf16.mxu0 0
  %1407 = vmatmul.mubr.bf16.gmra.mrb[0].mxu0 %v839
  %v1408 = vpop.f32.mrb[0].mxu0
  %v1409 = vadd.f32 %v292, %v1408
  %v1410 = vpop.f32.mrb[0].mxu0
  %v1411 = vpop.f32.mrb[0].mxu0
  %v1412 = vadd.f32 %v292, %v1411
  %v1413 = vpop.f32.mrb[0].mxu0
  %1414 = vmatprep.mubr.bf16.mxu0 0
  %1415 = vmatmul.mubr.bf16.gmra.mrb[0].mxu0 %v840
  %v1416 = vpop.f32.mrb[0].mxu0
  %v1417 = vadd.f32 %v292, %v1416
  %v1418 = vpop.f32.mrb[0].mxu0
  %v1419 = vpop.f32.mrb[0].mxu0
  %v1420 = vadd.f32 %v292, %v1419
  %v1421 = vpop.f32.mrb[0].mxu0
  %1422 = vmatprep.mubr.bf16.mxu0 0
  %1423 = vmatmul.mubr.bf16.gmra.mrb[0].mxu0 %v841
  %v1424 = vpop.f32.mrb[0].mxu0
  %v1425 = vadd.f32 %v292, %v1424
  %v1426 = vpop.f32.mrb[0].mxu0
  %v1427 = vpop.f32.mrb[0].mxu0
  %v1428 = vadd.f32 %v292, %v1427
  %v1429 = vpop.f32.mrb[0].mxu0
  %1430 = vmatprep.mubr.bf16.mxu0 0
  %1431 = vmatmul.mubr.bf16.gmra.mrb[0].mxu0 %v842
  %v1432 = vpop.f32.mrb[0].mxu0
  %v1433 = vadd.f32 %v292, %v1432
  %v1434 = vpop.f32.mrb[0].mxu0
  %v1435 = vpop.f32.mrb[0].mxu0
  %v1436 = vadd.f32 %v292, %v1435
  %v1437 = vpop.f32.mrb[0].mxu0
  %1438 = vmatprep.mubr.bf16.mxu0 0
  %1439 = vmatmul.mubr.bf16.gmra.mrb[0].mxu0 %v843
  %v1440 = vpop.f32.mrb[0].mxu0
  %v1441 = vadd.f32 %v292, %v1440
  %v1442 = vpop.f32.mrb[0].mxu0
  %v1443 = vpop.f32.mrb[0].mxu0
  %v1444 = vadd.f32 %v292, %v1443
  %v1445 = vpop.f32.mrb[0].mxu0
  %1446 = vmatprep.mubr.bf16.mxu0 0
  %1447 = vmatmul.mubr.bf16.gmra.mrb[0].mxu0 %v844
  %v1448 = vpop.f32.mrb[0].mxu0
  %v1449 = vadd.f32 %v292, %v1448
  %v1450 = vpop.f32.mrb[0].mxu0
  %v1451 = vpop.f32.mrb[0].mxu0
  %v1452 = vadd.f32 %v292, %v1451
  %v1453 = vpop.f32.mrb[0].mxu0
  %1454 = vmatprep.mubr.bf16.mxu0 0
  %1455 = vmatmul.mubr.bf16.gmra.mrb[0].mxu0 %v845
  %v1456 = vpop.f32.mrb[0].mxu0
  %v1457 = vadd.f32 %v292, %v1456
  %v1458 = vpop.f32.mrb[0].mxu0
  %v1459 = vpop.f32.mrb[0].mxu0
  %v1460 = vadd.f32 %v292, %v1459
  %v1461 = vpop.f32.mrb[0].mxu0
  %1462 = vmatprep.mubr.bf16.mxu0 0
  %1463 = vmatmul.mubr.bf16.gmra.mrb[0].mxu0 %v846
  %v1464 = vpop.f32.mrb[0].mxu0
  %v1465 = vadd.f32 %v292, %v1464
  %v1466 = vpop.f32.mrb[0].mxu0
  %v1467 = vpop.f32.mrb[0].mxu0
  %v1468 = vadd.f32 %v292, %v1467
  %v1469 = vpop.f32.mrb[0].mxu0
  %1470 = vmatprep.mubr.bf16.mxu0 0
  %1471 = vmatmul.mubr.bf16.gmra.mrb[0].mxu0 %v847
  %v1472 = vpop.f32.mrb[0].mxu0
  %v1473 = vadd.f32 %v292, %v1472
  %v1474 = vpop.f32.mrb[0].mxu0
  %v1475 = vpop.f32.mrb[0].mxu0
  %v1476 = vadd.f32 %v292, %v1475
  %v1477 = vpop.f32.mrb[0].mxu0
  %1478 = vmatprep.mubr.bf16.mxu0 0
  %1479 = vmatmul.mubr.bf16.gmra.mrb[0].mxu0 %v848
  %v1480 = vpop.f32.mrb[0].mxu0
  %v1481 = vadd.f32 %v292, %v1480
  %v1482 = vpop.f32.mrb[0].mxu0
  %v1483 = vpop.f32.mrb[0].mxu0
  %v1484 = vadd.f32 %v292, %v1483
  %v1485 = vpop.f32.mrb[0].mxu0
  %1486 = vmatprep.mubr.bf16.mxu0 0
  %1487 = vmatmul.mubr.bf16.gmra.mrb[0].mxu0 %v849
  %v1488 = vpop.f32.mrb[0].mxu0
  %v1489 = vadd.f32 %v292, %v1488
  %v1490 = vpop.f32.mrb[0].mxu0
  %v1491 = vpop.f32.mrb[0].mxu0
  %v1492 = vadd.f32 %v292, %v1491
  %v1493 = vpop.f32.mrb[0].mxu0
  %1494 = vmatprep.mubr.bf16.mxu0 0
  %1495 = vmatmul.mubr.bf16.gmra.mrb[0].mxu0 %v850
  %v1496 = vpop.f32.mrb[0].mxu0
  %v1497 = vadd.f32 %v292, %v1496
  %v1498 = vpop.f32.mrb[0].mxu0
  %v1499 = vpop.f32.mrb[0].mxu0
  %v1500 = vadd.f32 %v292, %v1499
  %v1501 = vpop.f32.mrb[0].mxu0
  %1502 = vmatprep.mubr.bf16.mxu0 0
  %1503 = vmatmul.mubr.bf16.gmra.mrb[0].mxu0 %v851
  %v1504 = vpop.f32.mrb[0].mxu0
  %v1505 = vadd.f32 %v292, %v1504
  %v1506 = vpop.f32.mrb[0].mxu0
  %v1507 = vpop.f32.mrb[0].mxu0
  %v1508 = vadd.f32 %v292, %v1507
  %v1509 = vpop.f32.mrb[0].mxu0
  %1510 = vmatprep.mubr.bf16.mxu0 0
  %1511 = vmatmul.mubr.bf16.gmra.mrb[0].mxu0 %v852
  %v1512 = vpop.f32.mrb[0].mxu0
  %v1513 = vadd.f32 %v292, %v1512
  %v1514 = vpop.f32.mrb[0].mxu0
  %v1515 = vpop.f32.mrb[0].mxu0
  %v1516 = vadd.f32 %v292, %v1515
  %v1517 = vpop.f32.mrb[0].mxu0
  %1518 = vmatprep.mubr.bf16.mxu0 0
  %1519 = vmatmul.mubr.bf16.gmra.mrb[0].mxu0 %v853
  %v1520 = vpop.f32.mrb[0].mxu0
  %v1521 = vadd.f32 %v292, %v1520
  %v1522 = vpop.f32.mrb[0].mxu0
  %v1523 = vpop.f32.mrb[0].mxu0
  %v1524 = vadd.f32 %v292, %v1523
  %v1525 = vpop.f32.mrb[0].mxu0
  %1526 = vmatprep.mubr.bf16.mxu0 0
  %1527 = vmatmul.mubr.bf16.gmra.mrb[0].mxu0 %v854
  %v1528 = vpop.f32.mrb[0].mxu0
  %v1529 = vadd.f32 %v292, %v1528
  %v1530 = vpop.f32.mrb[0].mxu0
  %v1531 = vpop.f32.mrb[0].mxu0
  %v1532 = vadd.f32 %v292, %v1531
  %v1533 = vpop.f32.mrb[0].mxu0
  %1534 = vmatprep.mubr.bf16.mxu0 0
  %1535 = vmatmul.mubr.bf16.gmra.mrb[0].mxu0 %v855
  %v1536 = vpop.f32.mrb[0].mxu0
  %v1537 = vadd.f32 %v292, %v1536
  %v1538 = vpop.f32.mrb[0].mxu0
  %v1539 = vpop.f32.mrb[0].mxu0
  %v1540 = vadd.f32 %v292, %v1539
  %v1541 = vpop.f32.mrb[0].mxu0
  %1542 = vmatprep.mubr.bf16.mxu0 0
  %1543 = vmatmul.mubr.bf16.gmra.mrb[0].mxu0 %v856
  %v1544 = vpop.f32.mrb[0].mxu0
  %v1545 = vadd.f32 %v292, %v1544
  %v1546 = vpop.f32.mrb[0].mxu0
  %v1547 = vpop.f32.mrb[0].mxu0
  %v1548 = vadd.f32 %v292, %v1547
  %v1549 = vpop.f32.mrb[0].mxu0
  %1550 = vmatprep.mubr.bf16.mxu0 0
  %1551 = vmatmul.mubr.bf16.gmra.mrb[0].mxu0 %v857
  %v1552 = vpop.f32.mrb[0].mxu0
  %v1553 = vadd.f32 %v292, %v1552
  %v1554 = vpop.f32.mrb[0].mxu0
  %v1555 = vpop.f32.mrb[0].mxu0
  %v1556 = vadd.f32 %v292, %v1555
  %v1557 = vpop.f32.mrb[0].mxu0
  %1558 = vmatprep.mubr.bf16.mxu0 0
  %1559 = vmatmul.mubr.bf16.gmra.mrb[0].mxu0 %v858
  %v1560 = vpop.f32.mrb[0].mxu0
  %v1561 = vadd.f32 %v292, %v1560
  %v1562 = vpop.f32.mrb[0].mxu0
  %v1563 = vpop.f32.mrb[0].mxu0
  %v1564 = vadd.f32 %v292, %v1563
  %v1565 = vpop.f32.mrb[0].mxu0
  %1566 = vmatprep.mubr.bf16.mxu0 0
  %1567 = vmatmul.mubr.bf16.gmra.mrb[0].mxu0 %v859
  %v1568 = vpop.f32.mrb[0].mxu0
  %v1569 = vadd.f32 %v292, %v1568
  %v1570 = vpop.f32.mrb[0].mxu0
  %v1571 = vpop.f32.mrb[0].mxu0
  %v1572 = vadd.f32 %v292, %v1571
  %v1573 = vpop.f32.mrb[0].mxu0
  %1574 = vmatprep.mubr.bf16.mxu0 0
  %1575 = vmatmul.mubr.bf16.gmra.mrb[0].mxu0 %v860
  %v1576 = vpop.f32.mrb[0].mxu0
  %v1577 = vadd.f32 %v292, %v1576
  %v1578 = vpop.f32.mrb[0].mxu0
  %v1579 = vpop.f32.mrb[0].mxu0
  %v1580 = vadd.f32 %v292, %v1579
  %v1581 = vpop.f32.mrb[0].mxu0
  %1582 = vmatprep.mubr.bf16.mxu0 0
  %1583 = vmatmul.mubr.bf16.gmra.mrb[0].mxu0 %v861
  %v1584 = vpop.f32.mrb[0].mxu0
  %v1585 = vadd.f32 %v292, %v1584
  %v1586 = vpop.f32.mrb[0].mxu0
  %v1587 = vpop.f32.mrb[0].mxu0
  %v1588 = vadd.f32 %v292, %v1587
  %v1589 = vpop.f32.mrb[0].mxu0
  %1590 = vmatprep.mubr.bf16.mxu0 0
  %1591 = vmatmul.mubr.bf16.gmra.mrb[0].mxu0 %v862
  %v1592 = vpop.f32.mrb[0].mxu0
  %v1593 = vadd.f32 %v292, %v1592
  %v1594 = vpop.f32.mrb[0].mxu0
  %v1595 = vpop.f32.mrb[0].mxu0
  %v1596 = vadd.f32 %v292, %v1595
  %v1597 = vpop.f32.mrb[0].mxu0
  %1598 = vmatprep.mubr.bf16.mxu0 0
  %1599 = vmatmul.mubr.bf16.gmra.mrb[0].mxu0 %v863
  %v1600 = vpop.f32.mrb[0].mxu0
  %v1601 = vadd.f32 %v292, %v1600
  %v1602 = vpop.f32.mrb[0].mxu0
  %v1603 = vpop.f32.mrb[0].mxu0
  %v1604 = vadd.f32 %v292, %v1603
  %v1605 = vpop.f32.mrb[0].mxu0
  %1606 = vmatprep.mubr.bf16.mxu0 0
  %1607 = vmatmul.mubr.bf16.gmra.mrb[0].mxu0 %v864
  %v1608 = vpop.f32.mrb[0].mxu0
  %v1609 = vadd.f32 %v292, %v1608
  %v1610 = vpop.f32.mrb[0].mxu0
  %v1611 = vpop.f32.mrb[0].mxu0
  %v1612 = vadd.f32 %v292, %v1611
  %v1613 = vpop.f32.mrb[0].mxu0
  %1614 = vmatprep.mubr.bf16.mxu0 0
  %1615 = vmatmul.mubr.bf16.gmra.mrb[0].mxu0 %v865
  %v1616 = vpop.f32.mrb[0].mxu0
  %v1617 = vadd.f32 %v292, %v1616
  %v1618 = vpop.f32.mrb[0].mxu0
  %v1619 = vpop.f32.mrb[0].mxu0
  %v1620 = vadd.f32 %v292, %v1619
  %v1621 = vpop.f32.mrb[0].mxu0
  %1622 = vmatprep.mubr.bf16.mxu0 0
  %1623 = vmatmul.mubr.bf16.gmra.mrb[0].mxu0 %v866
  %v1624 = vpop.f32.mrb[0].mxu0
  %v1625 = vadd.f32 %v292, %v1624
  %v1626 = vpop.f32.mrb[0].mxu0
  %v1627 = vpop.f32.mrb[0].mxu0
  %v1628 = vadd.f32 %v292, %v1627
  %v1629 = vpop.f32.mrb[0].mxu0
  %1630 = vmatprep.mubr.bf16.mxu0 0
  %1631 = vmatmul.mubr.bf16.gmra.mrb[0].mxu0 %v867
  %v1632 = vpop.f32.mrb[0].mxu0
  %v1633 = vadd.f32 %v292, %v1632
  %v1634 = vpop.f32.mrb[0].mxu0
  %v1635 = vpop.f32.mrb[0].mxu0
  %v1636 = vadd.f32 %v292, %v1635
  %v1637 = vpop.f32.mrb[0].mxu0
  %1638 = vmatprep.mubr.bf16.mxu0 0
  %1639 = vmatmul.mubr.bf16.gmra.mrb[0].mxu0 %v868
  %v1640 = vpop.f32.mrb[0].mxu0
  %v1641 = vadd.f32 %v292, %v1640
  %v1642 = vpop.f32.mrb[0].mxu0
  %v1643 = vpop.f32.mrb[0].mxu0
  %v1644 = vadd.f32 %v292, %v1643
  %v1645 = vpop.f32.mrb[0].mxu0
  %1646 = vmatprep.mubr.bf16.mxu0 0
  %1647 = vmatmul.mubr.bf16.gmra.mrb[0].mxu0 %v869
  %v1648 = vpop.f32.mrb[0].mxu0
  %v1649 = vadd.f32 %v292, %v1648
  %v1650 = vpop.f32.mrb[0].mxu0
  %v1651 = vpop.f32.mrb[0].mxu0
  %v1652 = vadd.f32 %v292, %v1651
  %v1653 = vpop.f32.mrb[0].mxu0
  %1654 = vmatprep.mubr.bf16.mxu0 0
  %1655 = vmatmul.mubr.bf16.gmra.mrb[0].mxu0 %v870
  %v1656 = vpop.f32.mrb[0].mxu0
  %v1657 = vadd.f32 %v292, %v1656
  %v1658 = vpop.f32.mrb[0].mxu0
  %v1659 = vpop.f32.mrb[0].mxu0
  %v1660 = vadd.f32 %v292, %v1659
  %v1661 = vpop.f32.mrb[0].mxu0
  %1662 = vmatprep.mubr.bf16.mxu0 0
  %1663 = vmatmul.mubr.bf16.gmra.mrb[0].mxu0 %v871
  %v1664 = vpop.f32.mrb[0].mxu0
  %v1665 = vadd.f32 %v292, %v1664
  %v1666 = vpop.f32.mrb[0].mxu0
  %v1667 = vpop.f32.mrb[0].mxu0
  %v1668 = vadd.f32 %v292, %v1667
  %v1669 = vpop.f32.mrb[0].mxu0
  %1670 = vmatprep.mubr.bf16.mxu0 0
  %1671 = vmatmul.mubr.bf16.gmra.mrb[0].mxu0 %v872
  %v1672 = vpop.f32.mrb[0].mxu0
  %v1673 = vadd.f32 %v292, %v1672
  %v1674 = vpop.f32.mrb[0].mxu0
  %v1675 = vpop.f32.mrb[0].mxu0
  %v1676 = vadd.f32 %v292, %v1675
  %v1677 = vpop.f32.mrb[0].mxu0
  %1678 = vmatprep.mubr.bf16.mxu0 0
  %1679 = vmatmul.mubr.bf16.gmra.mrb[0].mxu0 %v873
  %v1680 = vpop.f32.mrb[0].mxu0
  %v1681 = vadd.f32 %v292, %v1680
  %v1682 = vpop.f32.mrb[0].mxu0
  %v1683 = vpop.f32.mrb[0].mxu0
  %v1684 = vadd.f32 %v292, %v1683
  %v1685 = vpop.f32.mrb[0].mxu0
  %1686 = vmatprep.mubr.bf16.mxu0 0
  %1687 = vmatmul.mubr.bf16.gmra.mrb[0].mxu0 %v874
  %v1688 = vpop.f32.mrb[0].mxu0
  %v1689 = vadd.f32 %v292, %v1688
  %v1690 = vpop.f32.mrb[0].mxu0
  %v1691 = vpop.f32.mrb[0].mxu0
  %v1692 = vadd.f32 %v292, %v1691
  %v1693 = vpop.f32.mrb[0].mxu0
  %1694 = vmatprep.mubr.bf16.mxu0 0
  %1695 = vmatmul.mubr.bf16.gmra.mrb[0].mxu0 %v875
  %v1696 = vpop.f32.mrb[0].mxu0
  %v1697 = vadd.f32 %v292, %v1696
  %v1698 = vpop.f32.mrb[0].mxu0
  %v1699 = vpop.f32.mrb[0].mxu0
  %v1700 = vadd.f32 %v292, %v1699
  %v1701 = vpop.f32.mrb[0].mxu0
  %1702 = vmatprep.mubr.bf16.mxu0 0
  %1703 = vmatmul.mubr.bf16.gmra.mrb[0].mxu0 %v876
  %v1704 = vpop.f32.mrb[0].mxu0
  %v1705 = vadd.f32 %v292, %v1704
  %v1706 = vpop.f32.mrb[0].mxu0
  %v1707 = vpop.f32.mrb[0].mxu0
  %v1708 = vadd.f32 %v292, %v1707
  %v1709 = vpop.f32.mrb[0].mxu0
  %1710 = vmatprep.mubr.bf16.mxu0 0
  %1711 = vmatmul.mubr.bf16.gmra.mrb[0].mxu0 %v877
  %v1712 = vpop.f32.mrb[0].mxu0
  %v1713 = vadd.f32 %v292, %v1712
  %v1714 = vpop.f32.mrb[0].mxu0
  %v1715 = vpop.f32.mrb[0].mxu0
  %v1716 = vadd.f32 %v292, %v1715
  %v1717 = vpop.f32.mrb[0].mxu0
  %1718 = vmatprep.mubr.bf16.mxu0 0
  %1719 = vmatmul.mubr.bf16.gmra.mrb[0].mxu0 %v878
  %v1720 = vpop.f32.mrb[0].mxu0
  %v1721 = vadd.f32 %v292, %v1720
  %v1722 = vpop.f32.mrb[0].mxu0
  %v1723 = vpop.f32.mrb[0].mxu0
  %v1724 = vadd.f32 %v292, %v1723
  %v1725 = vpop.f32.mrb[0].mxu0
  %1726 = vmatprep.mubr.bf16.mxu0 0
  %1727 = vmatmul.mubr.bf16.gmra.mrb[0].mxu0 %v879
  %v1728 = vpop.f32.mrb[0].mxu0
  %v1729 = vadd.f32 %v292, %v1728
  %v1730 = vpop.f32.mrb[0].mxu0
  %v1731 = vpop.f32.mrb[0].mxu0
  %v1732 = vadd.f32 %v292, %v1731
  %v1733 = vpop.f32.mrb[0].mxu0
  %1734 = vmatprep.mubr.bf16.mxu0 0
  %1735 = vmatmul.mubr.bf16.gmra.mrb[0].mxu0 %v880
  %v1736 = vpop.f32.mrb[0].mxu0
  %v1737 = vadd.f32 %v292, %v1736
  %v1738 = vpop.f32.mrb[0].mxu0
  %v1739 = vpop.f32.mrb[0].mxu0
  %v1740 = vadd.f32 %v292, %v1739
  %v1741 = vpop.f32.mrb[0].mxu0
  %1742 = vmatprep.mubr.bf16.mxu0 0
  %1743 = vmatmul.mubr.bf16.gmra.mrb[0].mxu0 %v881
  %v1744 = vpop.f32.mrb[0].mxu0
  %v1745 = vadd.f32 %v292, %v1744
  %v1746 = vpop.f32.mrb[0].mxu0
  %v1747 = vpop.f32.mrb[0].mxu0
  %v1748 = vadd.f32 %v292, %v1747
  %v1749 = vpop.f32.mrb[0].mxu0
  %1750 = vmatprep.mubr.bf16.mxu0 0
  %1751 = vmatmul.mubr.bf16.gmra.mrb[0].mxu0 %v882
  %v1752 = vpop.f32.mrb[0].mxu0
  %v1753 = vadd.f32 %v292, %v1752
  %v1754 = vpop.f32.mrb[0].mxu0
  %v1755 = vpop.f32.mrb[0].mxu0
  %v1756 = vadd.f32 %v292, %v1755
  %v1757 = vpop.f32.mrb[0].mxu0
  %1758 = vmatprep.mubr.bf16.mxu0 0
  %1759 = vmatmul.mubr.bf16.gmra.mrb[0].mxu0 %v883
  %v1760 = vpop.f32.mrb[0].mxu0
  %v1761 = vadd.f32 %v292, %v1760
  %v1762 = vpop.f32.mrb[0].mxu0
  %v1763 = vpop.f32.mrb[0].mxu0
  %v1764 = vadd.f32 %v292, %v1763
  %v1765 = vpop.f32.mrb[0].mxu0
  %1766 = vmatprep.mubr.bf16.mxu0 0
  %1767 = vmatmul.mubr.bf16.gmra.mrb[0].mxu0 %v884
  %v1768 = vpop.f32.mrb[0].mxu0
  %v1769 = vadd.f32 %v292, %v1768
  %v1770 = vpop.f32.mrb[0].mxu0
  %v1771 = vpop.f32.mrb[0].mxu0
  %v1772 = vadd.f32 %v292, %v1771
  %v1773 = vpop.f32.mrb[0].mxu0
  %1774 = vmatprep.mubr.bf16.mxu0 0
  %1775 = vmatmul.mubr.bf16.gmra.mrb[0].mxu0 %v885
  %v1776 = vpop.f32.mrb[0].mxu0
  %v1777 = vadd.f32 %v292, %v1776
  %v1778 = vpop.f32.mrb[0].mxu0
  %v1779 = vpop.f32.mrb[0].mxu0
  %v1780 = vadd.f32 %v292, %v1779
  %v1781 = vpop.f32.mrb[0].mxu0
  %1782 = vmatprep.mubr.bf16.mxu0 0
  %1783 = vmatmul.mubr.bf16.gmra.mrb[0].mxu0 %v886
  %v1784 = vpop.f32.mrb[0].mxu0
  %v1785 = vadd.f32 %v292, %v1784
  %v1786 = vpop.f32.mrb[0].mxu0
  %v1787 = vpop.f32.mrb[0].mxu0
  %v1788 = vadd.f32 %v292, %v1787
  %v1789 = vpop.f32.mrb[0].mxu0
  %1790 = vmatprep.mubr.bf16.mxu0 0
  %1791 = vmatmul.mubr.bf16.gmra.mrb[0].mxu0 %v887
  %v1792 = vpop.f32.mrb[0].mxu0
  %v1793 = vadd.f32 %v292, %v1792
  %v1794 = vpop.f32.mrb[0].mxu0
  %v1795 = vpop.f32.mrb[0].mxu0
  %v1796 = vadd.f32 %v292, %v1795
  %v1797 = vpop.f32.mrb[0].mxu0
  %1798 = vmatprep.mubr.bf16.mxu0 0
  %1799 = vmatmul.mubr.bf16.gmra.mrb[0].mxu0 %v888
  %v1800 = vpop.f32.mrb[0].mxu0
  %v1801 = vadd.f32 %v292, %v1800
  %v1802 = vpop.f32.mrb[0].mxu0
  %v1803 = vpop.f32.mrb[0].mxu0
  %v1804 = vadd.f32 %v292, %v1803
  %v1805 = vpop.f32.mrb[0].mxu0
  %1806 = vmatprep.mubr.bf16.mxu0 0
  %1807 = vmatmul.mubr.bf16.gmra.mrb[0].mxu0 %v889
  %v1808 = vpop.f32.mrb[0].mxu0
  %v1809 = vadd.f32 %v292, %v1808
  %v1810 = vpop.f32.mrb[0].mxu0
  %v1811 = vpop.f32.mrb[0].mxu0
  %v1812 = vadd.f32 %v292, %v1811
  %v1813 = vpop.f32.mrb[0].mxu0
  %1814 = vmatprep.mubr.bf16.mxu0 0
  %1815 = vmatmul.mubr.bf16.gmra.mrb[0].mxu0 %v890
  %v1816 = vpop.f32.mrb[0].mxu0
  %v1817 = vadd.f32 %v292, %v1816
  %v1818 = vpop.f32.mrb[0].mxu0
  %v1819 = vpop.f32.mrb[0].mxu0
  %v1820 = vadd.f32 %v292, %v1819
  %v1821 = vpop.f32.mrb[0].mxu0
  %1822 = vmatprep.mubr.bf16.mxu0 0
  %1823 = vmatmul.mubr.bf16.gmra.mrb[0].mxu0 %v891
  %v1824 = vpop.f32.mrb[0].mxu0
  %v1825 = vadd.f32 %v292, %v1824
  %v1826 = vpop.f32.mrb[0].mxu0
  %v1827 = vpop.f32.mrb[0].mxu0
  %v1828 = vadd.f32 %v292, %v1827
  %v1829 = vpop.f32.mrb[0].mxu0
  %1830 = vmatprep.mubr.bf16.mxu0 0
  %1831 = vmatmul.mubr.bf16.gmra.mrb[0].mxu0 %v892
  %v1832 = vpop.f32.mrb[0].mxu0
  %v1833 = vadd.f32 %v292, %v1832
  %v1834 = vpop.f32.mrb[0].mxu0
  %v1835 = vpop.f32.mrb[0].mxu0
  %v1836 = vadd.f32 %v292, %v1835
  %v1837 = vpop.f32.mrb[0].mxu0
  %1838 = vmatprep.mubr.bf16.mxu0 0
  %1839 = vmatmul.mubr.bf16.gmra.mrb[0].mxu0 %v893
  %v1840 = vpop.f32.mrb[0].mxu0
  %v1841 = vadd.f32 %v292, %v1840
  %v1842 = vpop.f32.mrb[0].mxu0
  %v1843 = vpop.f32.mrb[0].mxu0
  %v1844 = vadd.f32 %v292, %v1843
  %v1845 = vpop.f32.mrb[0].mxu0
  %1846 = vmatprep.mubr.bf16.mxu0 0
  %1847 = vmatmul.mubr.bf16.gmra.mrb[0].mxu0 %v894
  %v1848 = vpop.f32.mrb[0].mxu0
  %v1849 = vadd.f32 %v292, %v1848
  %v1850 = vpop.f32.mrb[0].mxu0
  %v1851 = vpop.f32.mrb[0].mxu0
  %v1852 = vadd.f32 %v292, %v1851
  %v1853 = vpop.f32.mrb[0].mxu0
  %1854 = vmatprep.mubr.bf16.mxu0 0
  %1855 = vmatmul.mubr.bf16.gmra.mrb[0].mxu0 %v895
  %v1856 = vpop.f32.mrb[0].mxu0
  %v1857 = vadd.f32 %v292, %v1856
  %v1858 = vpop.f32.mrb[0].mxu0
  %v1859 = vpop.f32.mrb[0].mxu0
  %v1860 = vadd.f32 %v292, %v1859
  %v1861 = vpop.f32.mrb[0].mxu0
  %1862 = vmatprep.mubr.bf16.mxu0 0
  %1863 = vmatmul.mubr.bf16.gmra.mrb[0].mxu0 %v896
  %v1864 = vpop.f32.mrb[0].mxu0
  %v1865 = vadd.f32 %v292, %v1864
  %v1866 = vpop.f32.mrb[0].mxu0
  %v1867 = vpop.f32.mrb[0].mxu0
  %v1868 = vadd.f32 %v292, %v1867
  %v1869 = vpop.f32.mrb[0].mxu0
  %1870 = vmatprep.mubr.bf16.mxu0 0
  %1871 = vmatmul.mubr.bf16.gmra.mrb[0].mxu0 %v897
  %v1872 = vpop.f32.mrb[0].mxu0
  %v1873 = vadd.f32 %v292, %v1872
  %v1874 = vpop.f32.mrb[0].mxu0
  %v1875 = vpop.f32.mrb[0].mxu0
  %v1876 = vadd.f32 %v292, %v1875
  %v1877 = vpop.f32.mrb[0].mxu0
  %1878 = vmatprep.mubr.bf16.mxu0 0
  %1879 = vmatmul.mubr.bf16.gmra.mrb[0].mxu0 %v898
  %v1880 = vpop.f32.mrb[0].mxu0
  %v1881 = vadd.f32 %v292, %v1880
  %v1882 = vpop.f32.mrb[0].mxu0
  %v1883 = vpop.f32.mrb[0].mxu0
  %v1884 = vadd.f32 %v292, %v1883
  %v1885 = vpop.f32.mrb[0].mxu0
  %1886 = vmatprep.mubr.bf16.mxu0 0
  %1887 = vmatmul.mubr.bf16.gmra.mrb[0].mxu0 %v899
  %v1888 = vpop.f32.mrb[0].mxu0
  %v1889 = vadd.f32 %v292, %v1888
  %v1890 = vpop.f32.mrb[0].mxu0
  %v1891 = vpop.f32.mrb[0].mxu0
  %v1892 = vadd.f32 %v292, %v1891
  %v1893 = vpop.f32.mrb[0].mxu0
  %1894 = vmatprep.mubr.bf16.mxu0 0
  %1895 = vmatmul.mubr.bf16.gmra.mrb[0].mxu0 %v900
  %v1896 = vpop.f32.mrb[0].mxu0
  %v1897 = vadd.f32 %v292, %v1896
  %v1898 = vpop.f32.mrb[0].mxu0
  %v1899 = vpop.f32.mrb[0].mxu0
  %v1900 = vadd.f32 %v292, %v1899
  %v1901 = vpop.f32.mrb[0].mxu0
  %1902 = vmatprep.mubr.bf16.mxu0 0
  %1903 = vmatmul.mubr.bf16.gmra.mrb[0].mxu0 %v901
  %v1904 = vpop.f32.mrb[0].mxu0
  %v1905 = vadd.f32 %v292, %v1904
  %v1906 = vpop.f32.mrb[0].mxu0
  %v1907 = vpop.f32.mrb[0].mxu0
  %v1908 = vadd.f32 %v292, %v1907
  %v1909 = vpop.f32.mrb[0].mxu0
  %1910 = vmatprep.mubr.bf16.mxu0 0
  %1911 = vmatmul.mubr.bf16.gmra.mrb[0].mxu0 %v902
  %v1912 = vpop.f32.mrb[0].mxu0
  %v1913 = vadd.f32 %v292, %v1912
  %v1914 = vpop.f32.mrb[0].mxu0
  %v1915 = vpop.f32.mrb[0].mxu0
  %v1916 = vadd.f32 %v292, %v1915
  %v1917 = vpop.f32.mrb[0].mxu0
  %1918 = vmatprep.mubr.bf16.mxu0 0
  %1919 = vmatmul.mubr.bf16.gmra.mrb[0].mxu0 %v903
  %v1920 = vpop.f32.mrb[0].mxu0
  %v1921 = vadd.f32 %v292, %v1920
  %v1922 = vpop.f32.mrb[0].mxu0
  %v1923 = vpop.f32.mrb[0].mxu0
  %v1924 = vadd.f32 %v292, %v1923
  %v1925 = vpop.f32.mrb[0].mxu0
  %1926 = vmatprep.mubr.bf16.mxu0 0
  %1927 = vmatmul.mubr.bf16.gmra.mrb[0].mxu0 %v904
  %v1928 = vpop.f32.mrb[0].mxu0
  %v1929 = vadd.f32 %v292, %v1928
  %v1930 = vpop.f32.mrb[0].mxu0
  %v1931 = vpop.f32.mrb[0].mxu0
  %v1932 = vadd.f32 %v292, %v1931
  %v1933 = vpop.f32.mrb[0].mxu0
  %1934 = vmatprep.mubr.bf16.mxu0 0
  %1935 = vmatmul.mubr.bf16.gmra.mrb[0].mxu0 %v905
  %v1936 = vpop.f32.mrb[0].mxu0
  %v1937 = vadd.f32 %v292, %v1936
  %v1938 = vpop.f32.mrb[0].mxu0
  %v1939 = vpop.f32.mrb[0].mxu0
  %v1940 = vadd.f32 %v292, %v1939
  %v1941 = vpop.f32.mrb[0].mxu0
  %1942 = vmatprep.mubr.bf16.mxu0 0
  %1943 = vmatmul.mubr.bf16.gmra.mrb[0].mxu0 %v906
  %v1944 = vpop.f32.mrb[0].mxu0
  %v1945 = vadd.f32 %v292, %v1944
  %v1946 = vpop.f32.mrb[0].mxu0
  %v1947 = vpop.f32.mrb[0].mxu0
  %v1948 = vadd.f32 %v292, %v1947
  %v1949 = vpop.f32.mrb[0].mxu0
  %1950 = vmatprep.mubr.bf16.mxu0 0
  %1951 = vmatmul.mubr.bf16.gmra.mrb[0].mxu0 %v907
  %v1952 = vpop.f32.mrb[0].mxu0
  %v1953 = vadd.f32 %v292, %v1952
  %v1954 = vpop.f32.mrb[0].mxu0
  %v1955 = vpop.f32.mrb[0].mxu0
  %v1956 = vadd.f32 %v292, %v1955
  %v1957 = vpop.f32.mrb[0].mxu0
  %1958 = vmatprep.mubr.bf16.mxu0 0
  %1959 = vmatmul.mubr.bf16.gmra.mrb[0].mxu0 %v908
  %v1960 = vpop.f32.mrb[0].mxu0
  %v1961 = vadd.f32 %v292, %v1960
  %v1962 = vpop.f32.mrb[0].mxu0
  %v1963 = vpop.f32.mrb[0].mxu0
  %v1964 = vadd.f32 %v292, %v1963
  %v1965 = vpop.f32.mrb[0].mxu0
  %1966 = vmatprep.mubr.bf16.mxu0 0
  %1967 = vmatmul.mubr.bf16.gmra.mrb[0].mxu0 %v909
  %v1968 = vpop.f32.mrb[0].mxu0
  %v1969 = vadd.f32 %v292, %v1968
  %v1970 = vpop.f32.mrb[0].mxu0
  %v1971 = vpop.f32.mrb[0].mxu0
  %v1972 = vadd.f32 %v292, %v1971
  %v1973 = vpop.f32.mrb[0].mxu0
  %1974 = vmatprep.mubr.bf16.mxu0 0
  %1975 = vmatmul.mubr.bf16.gmra.mrb[0].mxu0 %v910
  %v1976 = vpop.f32.mrb[0].mxu0
  %v1977 = vadd.f32 %v292, %v1976
  %v1978 = vpop.f32.mrb[0].mxu0
  %v1979 = vpop.f32.mrb[0].mxu0
  %v1980 = vadd.f32 %v292, %v1979
  %v1981 = vpop.f32.mrb[0].mxu0
  %1982 = vmatprep.mubr.bf16.mxu0 0
  %1983 = vmatmul.mubr.bf16.gmra.mrb[0].mxu0 %v911
  %v1984 = vpop.f32.mrb[0].mxu0
  %v1985 = vadd.f32 %v292, %v1984
  %v1986 = vpop.f32.mrb[0].mxu0
  %v1987 = vpop.f32.mrb[0].mxu0
  %v1988 = vadd.f32 %v292, %v1987
  %v1989 = vpop.f32.mrb[0].mxu0
  %1990 = vmatprep.mubr.bf16.mxu0 0
  %1991 = vmatmul.mubr.bf16.gmra.mrb[0].mxu0 %v912
  %v1992 = vpop.f32.mrb[0].mxu0
  %v1993 = vadd.f32 %v292, %v1992
  %v1994 = vpop.f32.mrb[0].mxu0
  %v1995 = vpop.f32.mrb[0].mxu0
  %v1996 = vadd.f32 %v292, %v1995
  %v1997 = vpop.f32.mrb[0].mxu0
  %1998 = vmatprep.mubr.bf16.mxu0 0
  %1999 = vmatmul.mubr.bf16.gmra.mrb[0].mxu0 %v913
  %v2000 = vpop.f32.mrb[0].mxu0
  %v2001 = vadd.f32 %v292, %v2000
  %v2002 = vpop.f32.mrb[0].mxu0
  %v2003 = vpop.f32.mrb[0].mxu0
  %v2004 = vadd.f32 %v292, %v2003
  %v2005 = vpop.f32.mrb[0].mxu0
  %2006 = vmatprep.mubr.bf16.mxu0 0
  %2007 = vmatmul.mubr.bf16.gmra.mrb[0].mxu0 %v914
  %v2008 = vpop.f32.mrb[0].mxu0
  %v2009 = vadd.f32 %v292, %v2008
  %v2010 = vpop.f32.mrb[0].mxu0
  %v2011 = vpop.f32.mrb[0].mxu0
  %v2012 = vadd.f32 %v292, %v2011
  %v2013 = vpop.f32.mrb[0].mxu0
  %2014 = vmatprep.mubr.bf16.mxu0 0
  %2015 = vmatmul.mubr.bf16.gmra.mrb[0].mxu0 %v915
  %v2016 = vpop.f32.mrb[0].mxu0
  %v2017 = vadd.f32 %v292, %v2016
  %v2018 = vpop.f32.mrb[0].mxu0
  %v2019 = vpop.f32.mrb[0].mxu0
  %v2020 = vadd.f32 %v292, %v2019
  %v2021 = vpop.f32.mrb[0].mxu0
  %2022 = vmatprep.mubr.bf16.mxu0 0
  %2023 = vmatmul.mubr.bf16.gmra.mrb[0].mxu0 %v916
  %v2024 = vpop.f32.mrb[0].mxu0
  %v2025 = vadd.f32 %v292, %v2024
  %v2026 = vpop.f32.mrb[0].mxu0
  %v2027 = vpop.f32.mrb[0].mxu0
  %v2028 = vadd.f32 %v292, %v2027
  %v2029 = vpop.f32.mrb[0].mxu0
  %2030 = vmatprep.mubr.bf16.mxu0 0
  %2031 = vmatmul.mubr.bf16.gmra.mrb[0].mxu0 %v917
  %v2032 = vpop.f32.mrb[0].mxu0
  %v2033 = vadd.f32 %v292, %v2032
  %v2034 = vpop.f32.mrb[0].mxu0
  %v2035 = vpop.f32.mrb[0].mxu0
  %v2036 = vadd.f32 %v292, %v2035
  %v2037 = vpop.f32.mrb[0].mxu0
  %2038 = vmatprep.mubr.bf16.mxu0 0
  %2039 = vmatmul.mubr.bf16.gmra.mrb[0].mxu0 %v918
  %v2040 = vpop.f32.mrb[0].mxu0
  %v2041 = vadd.f32 %v292, %v2040
  %v2042 = vpop.f32.mrb[0].mxu0
  %v2043 = vpop.f32.mrb[0].mxu0
  %v2044 = vadd.f32 %v292, %v2043
  %v2045 = vpop.f32.mrb[0].mxu0
  %2046 = vmatprep.mubr.bf16.mxu0 0
  %2047 = vmatmul.mubr.bf16.gmra.mrb[0].mxu0 %v919
  %v2048 = vpop.f32.mrb[0].mxu0
  %v2049 = vadd.f32 %v292, %v2048
  %v2050 = vpop.f32.mrb[0].mxu0
  %v2051 = vpop.f32.mrb[0].mxu0
  %v2052 = vadd.f32 %v292, %v2051
  %v2053 = vpop.f32.mrb[0].mxu0
  %2054 = vmatprep.mubr.bf16.mxu0 0
  %2055 = vmatmul.mubr.bf16.gmra.mrb[0].mxu0 %v920
  %v2056 = vpop.f32.mrb[0].mxu0
  %v2057 = vadd.f32 %v292, %v2056
  %v2058 = vpop.f32.mrb[0].mxu0
  %v2059 = vpop.f32.mrb[0].mxu0
  %v2060 = vadd.f32 %v292, %v2059
  %v2061 = vpop.f32.mrb[0].mxu0
  %2062 = vmatprep.mubr.bf16.mxu0 0
  %2063 = vmatmul.mubr.bf16.gmra.mrb[0].mxu0 %v921
  %v2064 = vpop.f32.mrb[0].mxu0
  %v2065 = vadd.f32 %v292, %v2064
  %v2066 = vpop.f32.mrb[0].mxu0
  %v2067 = vpop.f32.mrb[0].mxu0
  %v2068 = vadd.f32 %v292, %v2067
  %v2069 = vpop.f32.mrb[0].mxu0
  %2070 = vmatprep.mubr.bf16.mxu0 0
  %2071 = vmatmul.mubr.bf16.gmra.mrb[0].mxu0 %v922
  %v2072 = vpop.f32.mrb[0].mxu0
  %v2073 = vadd.f32 %v292, %v2072
  %v2074 = vpop.f32.mrb[0].mxu0
  %v2075 = vpop.f32.mrb[0].mxu0
  %v2076 = vadd.f32 %v292, %v2075
  %v2077 = vpop.f32.mrb[0].mxu0
  %2078 = vmatprep.mubr.bf16.mxu0 0
  %2079 = vmatmul.mubr.bf16.gmra.mrb[0].mxu0 %v923
  %v2080 = vpop.f32.mrb[0].mxu0
  %v2081 = vadd.f32 %v292, %v2080
  %v2082 = vpop.f32.mrb[0].mxu0
  %v2083 = vpop.f32.mrb[0].mxu0
  %v2084 = vadd.f32 %v292, %v2083
  %v2085 = vpop.f32.mrb[0].mxu0
  %2086 = vmatprep.mubr.bf16.mxu0 0
  %2087 = vmatmul.mubr.bf16.gmra.mrb[0].mxu0 %v924
  %v2088 = vpop.f32.mrb[0].mxu0
  %v2089 = vadd.f32 %v292, %v2088
  %v2090 = vpop.f32.mrb[0].mxu0
  %v2091 = vpop.f32.mrb[0].mxu0
  %v2092 = vadd.f32 %v292, %v2091
  %v2093 = vpop.f32.mrb[0].mxu0
  %2094 = vmatprep.mubr.bf16.mxu0 0
  %2095 = vmatmul.mubr.bf16.gmra.mrb[0].mxu0 %v925
  %v2096 = vpop.f32.mrb[0].mxu0
  %v2097 = vadd.f32 %v292, %v2096
  %v2098 = vpop.f32.mrb[0].mxu0
  %v2099 = vpop.f32.mrb[0].mxu0
  %v2100 = vadd.f32 %v292, %v2099
  %v2101 = vpop.f32.mrb[0].mxu0
  %2102 = vmatprep.mubr.bf16.mxu0 0
  %2103 = vmatmul.mubr.bf16.gmra.mrb[0].mxu0 %v926
  %v2104 = vpop.f32.mrb[0].mxu0
  %v2105 = vadd.f32 %v292, %v2104
  %v2106 = vpop.f32.mrb[0].mxu0
  %v2107 = vpop.f32.mrb[0].mxu0
  %v2108 = vadd.f32 %v292, %v2107
  %v2109 = vpop.f32.mrb[0].mxu0
  %2110 = vmatprep.mubr.bf16.mxu0 0
  %2111 = vmatmul.mubr.bf16.gmra.mrb[0].mxu0 %v927
  %v2112 = vpop.f32.mrb[0].mxu0
  %v2113 = vadd.f32 %v292, %v2112
  %v2114 = vpop.f32.mrb[0].mxu0
  %v2115 = vpop.f32.mrb[0].mxu0
  %v2116 = vadd.f32 %v292, %v2115
  %v2117 = vpop.f32.mrb[0].mxu0
  %2118 = vmatprep.mubr.bf16.mxu0 0
  %2119 = vmatmul.mubr.bf16.gmra.mrb[0].mxu0 %v928
  %v2120 = vpop.f32.mrb[0].mxu0
  %v2121 = vadd.f32 %v292, %v2120
  %v2122 = vpop.f32.mrb[0].mxu0
  %v2123 = vpop.f32.mrb[0].mxu0
  %v2124 = vadd.f32 %v292, %v2123
  %v2125 = vpop.f32.mrb[0].mxu0
  %2126 = vmatprep.mubr.bf16.mxu0 0
  %2127 = vmatmul.mubr.bf16.gmra.mrb[0].mxu0 %v929
  %v2128 = vpop.f32.mrb[0].mxu0
  %v2129 = vadd.f32 %v292, %v2128
  %v2130 = vpop.f32.mrb[0].mxu0
  %v2131 = vpop.f32.mrb[0].mxu0
  %v2132 = vadd.f32 %v292, %v2131
  %v2133 = vpop.f32.mrb[0].mxu0
  %2134 = vmatprep.mubr.bf16.mxu0 0
  %2135 = vmatmul.mubr.bf16.gmra.mrb[0].mxu0 %v930
  %v2136 = vpop.f32.mrb[0].mxu0
  %v2137 = vadd.f32 %v292, %v2136
  %v2138 = vpop.f32.mrb[0].mxu0
  %v2139 = vpop.f32.mrb[0].mxu0
  %v2140 = vadd.f32 %v292, %v2139
  %v2141 = vpop.f32.mrb[0].mxu0
  %2142 = vmatprep.mubr.bf16.mxu0 0
  %2143 = vmatmul.mubr.bf16.gmra.mrb[0].mxu0 %v931
  %v2144 = vpop.f32.mrb[0].mxu0
  %v2145 = vadd.f32 %v292, %v2144
  %v2146 = vpop.f32.mrb[0].mxu0
  %v2147 = vpop.f32.mrb[0].mxu0
  %v2148 = vadd.f32 %v292, %v2147
  %v2149 = vpop.f32.mrb[0].mxu0
  %2150 = vmatprep.mubr.bf16.mxu0 0
  %2151 = vmatmul.mubr.bf16.gmra.mrb[0].mxu0 %v932
  %v2152 = vpop.f32.mrb[0].mxu0
  %v2153 = vadd.f32 %v292, %v2152
  %v2154 = vpop.f32.mrb[0].mxu0
  %v2155 = vpop.f32.mrb[0].mxu0
  %v2156 = vadd.f32 %v292, %v2155
  %v2157 = vpop.f32.mrb[0].mxu0
  %2158 = vmatprep.mubr.bf16.mxu0 0
  %2159 = vmatmul.mubr.bf16.gmra.mrb[0].mxu0 %v933
  %v2160 = vpop.f32.mrb[0].mxu0
  %v2161 = vadd.f32 %v292, %v2160
  %v2162 = vpop.f32.mrb[0].mxu0
  %v2163 = vpop.f32.mrb[0].mxu0
  %v2164 = vadd.f32 %v292, %v2163
  %v2165 = vpop.f32.mrb[0].mxu0
  %2166 = vdwg.mxu0
  %v2167 = vtanh.pop %v1145
  %v2168 = vtanh.pop %v1148
  %v2169 = vtanh.pop %v1153
  %v2170 = vtanh.pop %v1156
  %v2171 = vtanh.pop %v1161
  %v2172 = vtanh.pop %v1164
  %v2173 = vtanh.pop %v1169
  %v2174 = vtanh.pop %v1172
  %v2175 = vtanh.pop %v1177
  %v2176 = vtanh.pop %v1180
  %v2177 = vtanh.pop %v1185
  %v2178 = vtanh.pop %v1188
  %v2179 = vtanh.pop %v1193
  %v2180 = vtanh.pop %v1196
  %v2181 = vtanh.pop %v1201
  %v2182 = vtanh.pop %v1204
  %v2183 = vtanh.pop %v1209
  %v2184 = vtanh.pop %v1212
  %v2185 = vtanh.pop %v1217
  %v2186 = vtanh.pop %v1220
  %v2187 = vtanh.pop %v1225
  %v2188 = vtanh.pop %v1228
  %v2189 = vtanh.pop %v1233
  %v2190 = vtanh.pop %v1236
  %v2191 = vtanh.pop %v1241
  %v2192 = vtanh.pop %v1244
  %v2193 = vtanh.pop %v1249
  %v2194 = vtanh.pop %v1252
  %v2195 = vtanh.pop %v1257
  %v2196 = vtanh.pop %v1260
  %v2197 = vtanh.pop %v1265
  %v2198 = vtanh.pop %v1268
  %v2199 = vtanh.pop %v1273
  %v2200 = vtanh.pop %v1276
  %v2201 = vtanh.pop %v1281
  %v2202 = vtanh.pop %v1284
  %v2203 = vtanh.pop %v1289
  %v2204 = vtanh.pop %v1292
  %v2205 = vtanh.pop %v1297
  %v2206 = vtanh.pop %v1300
  %v2207 = vtanh.pop %v1305
  %v2208 = vtanh.pop %v1308
  %v2209 = vtanh.pop %v1313
  %v2210 = vtanh.pop %v1316
  %v2211 = vtanh.pop %v1321
  %v2212 = vtanh.pop %v1324
  %v2213 = vtanh.pop %v1329
  %v2214 = vtanh.pop %v1332
  %v2215 = vtanh.pop %v1337
  %v2216 = vtanh.pop %v1340
  %v2217 = vtanh.pop %v1345
  %v2218 = vtanh.pop %v1348
  %v2219 = vtanh.pop %v1353
  %v2220 = vtanh.pop %v1356
  %v2221 = vtanh.pop %v1361
  %v2222 = vtanh.pop %v1364
  %v2223 = vtanh.pop %v1369
  %v2224 = vtanh.pop %v1372
  %v2225 = vtanh.pop %v1377
  %v2226 = vtanh.pop %v1380
  %v2227 = vtanh.pop %v1385
  %v2228 = vtanh.pop %v1388
  %v2229 = vtanh.pop %v1393
  %v2230 = vtanh.pop %v1396
  %v2231 = vtanh.pop %v1401
  %v2232 = vtanh.pop %v1404
  %v2233 = vtanh.pop %v1409
  %v2234 = vtanh.pop %v1412
  %v2235 = vtanh.pop %v1417
  %v2236 = vtanh.pop %v1420
  %v2237 = vtanh.pop %v1425
  %v2238 = vtanh.pop %v1428
  %v2239 = vtanh.pop %v1433
  %v2240 = vtanh.pop %v1436
  %v2241 = vtanh.pop %v1441
  %v2242 = vtanh.pop %v1444
  %v2243 = vtanh.pop %v1449
  %v2244 = vtanh.pop %v1452
  %v2245 = vtanh.pop %v1457
  %v2246 = vtanh.pop %v1460
  %v2247 = vtanh.pop %v1465
  %v2248 = vtanh.pop %v1468
  %v2249 = vtanh.pop %v1473
  %v2250 = vtanh.pop %v1476
  %v2251 = vtanh.pop %v1481
  %v2252 = vtanh.pop %v1484
  %v2253 = vtanh.pop %v1489
  %v2254 = vtanh.pop %v1492
  %v2255 = vtanh.pop %v1497
  %v2256 = vtanh.pop %v1500
  %v2257 = vtanh.pop %v1505
  %v2258 = vtanh.pop %v1508
  %v2259 = vtanh.pop %v1513
  %v2260 = vtanh.pop %v1516
  %v2261 = vtanh.pop %v1521
  %v2262 = vtanh.pop %v1524
  %v2263 = vtanh.pop %v1529
  %v2264 = vtanh.pop %v1532
  %v2265 = vtanh.pop %v1537
  %v2266 = vtanh.pop %v1540
  %v2267 = vtanh.pop %v1545
  %v2268 = vtanh.pop %v1548
  %v2269 = vtanh.pop %v1553
  %v2270 = vtanh.pop %v1556
  %v2271 = vtanh.pop %v1561
  %v2272 = vtanh.pop %v1564
  %v2273 = vtanh.pop %v1569
  %v2274 = vtanh.pop %v1572
  %v2275 = vtanh.pop %v1577
  %v2276 = vtanh.pop %v1580
  %v2277 = vtanh.pop %v1585
  %v2278 = vtanh.pop %v1588
  %v2279 = vtanh.pop %v1593
  %v2280 = vtanh.pop %v1596
  %v2281 = vtanh.pop %v1601
  %v2282 = vtanh.pop %v1604
  %v2283 = vtanh.pop %v1609
  %v2284 = vtanh.pop %v1612
  %v2285 = vtanh.pop %v1617
  %v2286 = vtanh.pop %v1620
  %v2287 = vtanh.pop %v1625
  %v2288 = vtanh.pop %v1628
  %v2289 = vtanh.pop %v1633
  %v2290 = vtanh.pop %v1636
  %v2291 = vtanh.pop %v1641
  %v2292 = vtanh.pop %v1644
  %v2293 = vtanh.pop %v1649
  %v2294 = vtanh.pop %v1652
  %v2295 = vtanh.pop %v1657
  %v2296 = vtanh.pop %v1660
  %v2297 = vtanh.pop %v1665
  %v2298 = vtanh.pop %v1668
  %v2299 = vtanh.pop %v1673
  %v2300 = vtanh.pop %v1676
  %v2301 = vtanh.pop %v1681
  %v2302 = vtanh.pop %v1684
  %v2303 = vtanh.pop %v1689
  %v2304 = vtanh.pop %v1692
  %v2305 = vtanh.pop %v1697
  %v2306 = vtanh.pop %v1700
  %v2307 = vtanh.pop %v1705
  %v2308 = vtanh.pop %v1708
  %v2309 = vtanh.pop %v1713
  %v2310 = vtanh.pop %v1716
  %v2311 = vtanh.pop %v1721
  %v2312 = vtanh.pop %v1724
  %v2313 = vtanh.pop %v1729
  %v2314 = vtanh.pop %v1732
  %v2315 = vtanh.pop %v1737
  %v2316 = vtanh.pop %v1740
  %v2317 = vtanh.pop %v1745
  %v2318 = vtanh.pop %v1748
  %v2319 = vtanh.pop %v1753
  %v2320 = vtanh.pop %v1756
  %v2321 = vtanh.pop %v1761
  %v2322 = vtanh.pop %v1764
  %v2323 = vtanh.pop %v1769
  %v2324 = vtanh.pop %v1772
  %v2325 = vtanh.pop %v1777
  %v2326 = vtanh.pop %v1780
  %v2327 = vtanh.pop %v1785
  %v2328 = vtanh.pop %v1788
  %v2329 = vtanh.pop %v1793
  %v2330 = vtanh.pop %v1796
  %v2331 = vtanh.pop %v1801
  %v2332 = vtanh.pop %v1804
  %v2333 = vtanh.pop %v1809
  %v2334 = vtanh.pop %v1812
  %v2335 = vtanh.pop %v1817
  %v2336 = vtanh.pop %v1820
  %v2337 = vtanh.pop %v1825
  %v2338 = vtanh.pop %v1828
  %v2339 = vtanh.pop %v1833
  %v2340 = vtanh.pop %v1836
  %v2341 = vtanh.pop %v1841
  %v2342 = vtanh.pop %v1844
  %v2343 = vtanh.pop %v1849
  %v2344 = vtanh.pop %v1852
  %v2345 = vtanh.pop %v1857
  %v2346 = vtanh.pop %v1860
  %v2347 = vtanh.pop %v1865
  %v2348 = vtanh.pop %v1868
  %v2349 = vtanh.pop %v1873
  %v2350 = vtanh.pop %v1876
  %v2351 = vtanh.pop %v1881
  %v2352 = vtanh.pop %v1884
  %v2353 = vtanh.pop %v1889
  %v2354 = vtanh.pop %v1892
  %v2355 = vtanh.pop %v1897
  %v2356 = vtanh.pop %v1900
  %v2357 = vtanh.pop %v1905
  %v2358 = vtanh.pop %v1908
  %v2359 = vtanh.pop %v1913
  %v2360 = vtanh.pop %v1916
  %v2361 = vtanh.pop %v1921
  %v2362 = vtanh.pop %v1924
  %v2363 = vtanh.pop %v1929
  %v2364 = vtanh.pop %v1932
  %v2365 = vtanh.pop %v1937
  %v2366 = vtanh.pop %v1940
  %v2367 = vtanh.pop %v1945
  %v2368 = vtanh.pop %v1948
  %v2369 = vtanh.pop %v1953
  %v2370 = vtanh.pop %v1956
  %v2371 = vtanh.pop %v1961
  %v2372 = vtanh.pop %v1964
  %v2373 = vtanh.pop %v1969
  %v2374 = vtanh.pop %v1972
  %v2375 = vtanh.pop %v1977
  %v2376 = vtanh.pop %v1980
  %v2377 = vtanh.pop %v1985
  %v2378 = vtanh.pop %v1988
  %v2379 = vtanh.pop %v1993
  %v2380 = vtanh.pop %v1996
  %v2381 = vtanh.pop %v2001
  %v2382 = vtanh.pop %v2004
  %v2383 = vtanh.pop %v2009
  %v2384 = vtanh.pop %v2012
  %v2385 = vtanh.pop %v2017
  %v2386 = vtanh.pop %v2020
  %v2387 = vtanh.pop %v2025
  %v2388 = vtanh.pop %v2028
  %v2389 = vtanh.pop %v2033
  %v2390 = vtanh.pop %v2036
  %v2391 = vtanh.pop %v2041
  %v2392 = vtanh.pop %v2044
  %v2393 = vtanh.pop %v2049
  %v2394 = vtanh.pop %v2052
  %v2395 = vtanh.pop %v2057
  %v2396 = vtanh.pop %v2060
  %v2397 = vtanh.pop %v2065
  %v2398 = vtanh.pop %v2068
  %v2399 = vtanh.pop %v2073
  %v2400 = vtanh.pop %v2076
  %v2401 = vtanh.pop %v2081
  %v2402 = vtanh.pop %v2084
  %v2403 = vtanh.pop %v2089
  %v2404 = vtanh.pop %v2092
  %v2405 = vtanh.pop %v2097
  %v2406 = vtanh.pop %v2100
  %v2407 = vtanh.pop %v2105
  %v2408 = vtanh.pop %v2108
  %v2409 = vtanh.pop %v2113
  %v2410 = vtanh.pop %v2116
  %v2411 = vtanh.pop %v2121
  %v2412 = vtanh.pop %v2124
  %v2413 = vtanh.pop %v2129
  %v2414 = vtanh.pop %v2132
  %v2415 = vtanh.pop %v2137
  %v2416 = vtanh.pop %v2140
  %v2417 = vtanh.pop %v2145
  %v2418 = vtanh.pop %v2148
  %v2419 = vtanh.pop %v2153
  %v2420 = vtanh.pop %v2156
  %v2421 = vtanh.pop %v2161
  %v2422 = vtanh.pop %v2164
  %2423 = vst [vmem:[%s3] sm:$0xff] %v2167
  %2424 = vst [vmem:[%s3 + $0x8] sm:$0xff] %v2168
  %2425 = vst [vmem:[%s3 + $0x10] sm:$0xff] %v2169
  %2426 = vst [vmem:[%s3 + $0x18] sm:$0xff] %v2170
  %2427 = vst [vmem:[%s3 + $0x20] sm:$0xff] %v2171
  %2428 = vst [vmem:[%s3 + $0x28] sm:$0xff] %v2172
  %2429 = vst [vmem:[%s3 + $0x30] sm:$0xff] %v2173
  %2430 = vst [vmem:[%s3 + $0x38] sm:$0xff] %v2174
  %2431 = vst [vmem:[%s3 + $0x40] sm:$0xff] %v2175
  %2432 = vst [vmem:[%s3 + $0x48] sm:$0xff] %v2176
  %2433 = vst [vmem:[%s3 + $0x50] sm:$0xff] %v2177
  %2434 = vst [vmem:[%s3 + $0x58] sm:$0xff] %v2178
  %2435 = vst [vmem:[%s3 + $0x60] sm:$0xff] %v2179
  %2436 = vst [vmem:[%s3 + $0x68] sm:$0xff] %v2180
  %2437 = vst [vmem:[%s3 + $0x70] sm:$0xff] %v2181
  %2438 = vst [vmem:[%s3 + $0x78] sm:$0xff] %v2182
  %2439 = vst [vmem:[%s3 + $0x80] sm:$0xff] %v2183
  %2440 = vst [vmem:[%s3 + $0x88] sm:$0xff] %v2184
  %2441 = vst [vmem:[%s3 + $0x90] sm:$0xff] %v2185
  %2442 = vst [vmem:[%s3 + $0x98] sm:$0xff] %v2186
  %2443 = vst [vmem:[%s3 + $0xa0] sm:$0xff] %v2187
  %2444 = vst [vmem:[%s3 + $0xa8] sm:$0xff] %v2188
  %2445 = vst [vmem:[%s3 + $0xb0] sm:$0xff] %v2189
  %2446 = vst [vmem:[%s3 + $0xb8] sm:$0xff] %v2190
  %2447 = vst [vmem:[%s3 + $0xc0] sm:$0xff] %v2191
  %2448 = vst [vmem:[%s3 + $0xc8] sm:$0xff] %v2192
  %2449 = vst [vmem:[%s3 + $0xd0] sm:$0xff] %v2193
  %2450 = vst [vmem:[%s3 + $0xd8] sm:$0xff] %v2194
  %2451 = vst [vmem:[%s3 + $0xe0] sm:$0xff] %v2195
  %2452 = vst [vmem:[%s3 + $0xe8] sm:$0xff] %v2196
  %2453 = vst [vmem:[%s3 + $0xf0] sm:$0xff] %v2197
  %2454 = vst [vmem:[%s3 + $0xf8] sm:$0xff] %v2198
  %2455 = vst [vmem:[%s3 + $0x100] sm:$0xff] %v2199
  %2456 = vst [vmem:[%s3 + $0x108] sm:$0xff] %v2200
  %2457 = vst [vmem:[%s3 + $0x110] sm:$0xff] %v2201
  %2458 = vst [vmem:[%s3 + $0x118] sm:$0xff] %v2202
  %2459 = vst [vmem:[%s3 + $0x120] sm:$0xff] %v2203
  %2460 = vst [vmem:[%s3 + $0x128] sm:$0xff] %v2204
  %2461 = vst [vmem:[%s3 + $0x130] sm:$0xff] %v2205
  %2462 = vst [vmem:[%s3 + $0x138] sm:$0xff] %v2206
  %2463 = vst [vmem:[%s3 + $0x140] sm:$0xff] %v2207
  %2464 = vst [vmem:[%s3 + $0x148] sm:$0xff] %v2208
  %2465 = vst [vmem:[%s3 + $0x150] sm:$0xff] %v2209
  %2466 = vst [vmem:[%s3 + $0x158] sm:$0xff] %v2210
  %2467 = vst [vmem:[%s3 + $0x160] sm:$0xff] %v2211
  %2468 = vst [vmem:[%s3 + $0x168] sm:$0xff] %v2212
  %2469 = vst [vmem:[%s3 + $0x170] sm:$0xff] %v2213
  %2470 = vst [vmem:[%s3 + $0x178] sm:$0xff] %v2214
  %2471 = vst [vmem:[%s3 + $0x180] sm:$0xff] %v2215
  %2472 = vst [vmem:[%s3 + $0x188] sm:$0xff] %v2216
  %2473 = vst [vmem:[%s3 + $0x190] sm:$0xff] %v2217
  %2474 = vst [vmem:[%s3 + $0x198] sm:$0xff] %v2218
  %2475 = vst [vmem:[%s3 + $0x1a0] sm:$0xff] %v2219
  %2476 = vst [vmem:[%s3 + $0x1a8] sm:$0xff] %v2220
  %2477 = vst [vmem:[%s3 + $0x1b0] sm:$0xff] %v2221
  %2478 = vst [vmem:[%s3 + $0x1b8] sm:$0xff] %v2222
  %2479 = vst [vmem:[%s3 + $0x1c0] sm:$0xff] %v2223
  %2480 = vst [vmem:[%s3 + $0x1c8] sm:$0xff] %v2224
  %2481 = vst [vmem:[%s3 + $0x1d0] sm:$0xff] %v2225
  %2482 = vst [vmem:[%s3 + $0x1d8] sm:$0xff] %v2226
  %2483 = vst [vmem:[%s3 + $0x1e0] sm:$0xff] %v2227
  %2484 = vst [vmem:[%s3 + $0x1e8] sm:$0xff] %v2228
  %2485 = vst [vmem:[%s3 + $0x1f0] sm:$0xff] %v2229
  %2486 = vst [vmem:[%s3 + $0x1f8] sm:$0xff] %v2230
  %2487 = vst [vmem:[%s3 + $0x200] sm:$0xff] %v2231
  %2488 = vst [vmem:[%s3 + $0x208] sm:$0xff] %v2232
  %2489 = vst [vmem:[%s3 + $0x210] sm:$0xff] %v2233
  %2490 = vst [vmem:[%s3 + $0x218] sm:$0xff] %v2234
  %2491 = vst [vmem:[%s3 + $0x220] sm:$0xff] %v2235
  %2492 = vst [vmem:[%s3 + $0x228] sm:$0xff] %v2236
  %2493 = vst [vmem:[%s3 + $0x230] sm:$0xff] %v2237
  %2494 = vst [vmem:[%s3 + $0x238] sm:$0xff] %v2238
  %2495 = vst [vmem:[%s3 + $0x240] sm:$0xff] %v2239
  %2496 = vst [vmem:[%s3 + $0x248] sm:$0xff] %v2240
  %2497 = vst [vmem:[%s3 + $0x250] sm:$0xff] %v2241
  %2498 = vst [vmem:[%s3 + $0x258] sm:$0xff] %v2242
  %2499 = vst [vmem:[%s3 + $0x260] sm:$0xff] %v2243
  %2500 = vst [vmem:[%s3 + $0x268] sm:$0xff] %v2244
  %2501 = vst [vmem:[%s3 + $0x270] sm:$0xff] %v2245
  %2502 = vst [vmem:[%s3 + $0x278] sm:$0xff] %v2246
  %2503 = vst [vmem:[%s3 + $0x280] sm:$0xff] %v2247
  %2504 = vst [vmem:[%s3 + $0x288] sm:$0xff] %v2248
  %2505 = vst [vmem:[%s3 + $0x290] sm:$0xff] %v2249
  %2506 = vst [vmem:[%s3 + $0x298] sm:$0xff] %v2250
  %2507 = vst [vmem:[%s3 + $0x2a0] sm:$0xff] %v2251
  %2508 = vst [vmem:[%s3 + $0x2a8] sm:$0xff] %v2252
  %2509 = vst [vmem:[%s3 + $0x2b0] sm:$0xff] %v2253
  %2510 = vst [vmem:[%s3 + $0x2b8] sm:$0xff] %v2254
  %2511 = vst [vmem:[%s3 + $0x2c0] sm:$0xff] %v2255
  %2512 = vst [vmem:[%s3 + $0x2c8] sm:$0xff] %v2256
  %2513 = vst [vmem:[%s3 + $0x2d0] sm:$0xff] %v2257
  %2514 = vst [vmem:[%s3 + $0x2d8] sm:$0xff] %v2258
  %2515 = vst [vmem:[%s3 + $0x2e0] sm:$0xff] %v2259
  %2516 = vst [vmem:[%s3 + $0x2e8] sm:$0xff] %v2260
  %2517 = vst [vmem:[%s3 + $0x2f0] sm:$0xff] %v2261
  %2518 = vst [vmem:[%s3 + $0x2f8] sm:$0xff] %v2262
  %2519 = vst [vmem:[%s3 + $0x300] sm:$0xff] %v2263
  %2520 = vst [vmem:[%s3 + $0x308] sm:$0xff] %v2264
  %2521 = vst [vmem:[%s3 + $0x310] sm:$0xff] %v2265
  %2522 = vst [vmem:[%s3 + $0x318] sm:$0xff] %v2266
  %2523 = vst [vmem:[%s3 + $0x320] sm:$0xff] %v2267
  %2524 = vst [vmem:[%s3 + $0x328] sm:$0xff] %v2268
  %2525 = vst [vmem:[%s3 + $0x330] sm:$0xff] %v2269
  %2526 = vst [vmem:[%s3 + $0x338] sm:$0xff] %v2270
  %2527 = vst [vmem:[%s3 + $0x340] sm:$0xff] %v2271
  %2528 = vst [vmem:[%s3 + $0x348] sm:$0xff] %v2272
  %2529 = vst [vmem:[%s3 + $0x350] sm:$0xff] %v2273
  %2530 = vst [vmem:[%s3 + $0x358] sm:$0xff] %v2274
  %2531 = vst [vmem:[%s3 + $0x360] sm:$0xff] %v2275
  %2532 = vst [vmem:[%s3 + $0x368] sm:$0xff] %v2276
  %2533 = vst [vmem:[%s3 + $0x370] sm:$0xff] %v2277
  %2534 = vst [vmem:[%s3 + $0x378] sm:$0xff] %v2278
  %2535 = vst [vmem:[%s3 + $0x380] sm:$0xff] %v2279
  %2536 = vst [vmem:[%s3 + $0x388] sm:$0xff] %v2280
  %2537 = vst [vmem:[%s3 + $0x390] sm:$0xff] %v2281
  %2538 = vst [vmem:[%s3 + $0x398] sm:$0xff] %v2282
  %2539 = vst [vmem:[%s3 + $0x3a0] sm:$0xff] %v2283
  %2540 = vst [vmem:[%s3 + $0x3a8] sm:$0xff] %v2284
  %2541 = vst [vmem:[%s3 + $0x3b0] sm:$0xff] %v2285
  %2542 = vst [vmem:[%s3 + $0x3b8] sm:$0xff] %v2286
  %2543 = vst [vmem:[%s3 + $0x3c0] sm:$0xff] %v2287
  %2544 = vst [vmem:[%s3 + $0x3c8] sm:$0xff] %v2288
  %2545 = vst [vmem:[%s3 + $0x3d0] sm:$0xff] %v2289
  %2546 = vst [vmem:[%s3 + $0x3d8] sm:$0xff] %v2290
  %2547 = vst [vmem:[%s3 + $0x3e0] sm:$0xff] %v2291
  %2548 = vst [vmem:[%s3 + $0x3e8] sm:$0xff] %v2292
  %2549 = vst [vmem:[%s3 + $0x3f0] sm:$0xff] %v2293
  %2550 = vst [vmem:[%s3 + $0x3f8] sm:$0xff] %v2294
  %2551 = vst [vmem:[%s3 + $0x400] sm:$0xff] %v2295
  %2552 = vst [vmem:[%s3 + $0x408] sm:$0xff] %v2296
  %2553 = vst [vmem:[%s3 + $0x410] sm:$0xff] %v2297
  %2554 = vst [vmem:[%s3 + $0x418] sm:$0xff] %v2298
  %2555 = vst [vmem:[%s3 + $0x420] sm:$0xff] %v2299
  %2556 = vst [vmem:[%s3 + $0x428] sm:$0xff] %v2300
  %2557 = vst [vmem:[%s3 + $0x430] sm:$0xff] %v2301
  %2558 = vst [vmem:[%s3 + $0x438] sm:$0xff] %v2302
  %2559 = vst [vmem:[%s3 + $0x440] sm:$0xff] %v2303
  %2560 = vst [vmem:[%s3 + $0x448] sm:$0xff] %v2304
  %2561 = vst [vmem:[%s3 + $0x450] sm:$0xff] %v2305
  %2562 = vst [vmem:[%s3 + $0x458] sm:$0xff] %v2306
  %2563 = vst [vmem:[%s3 + $0x460] sm:$0xff] %v2307
  %2564 = vst [vmem:[%s3 + $0x468] sm:$0xff] %v2308
  %2565 = vst [vmem:[%s3 + $0x470] sm:$0xff] %v2309
  %2566 = vst [vmem:[%s3 + $0x478] sm:$0xff] %v2310
  %2567 = vst [vmem:[%s3 + $0x480] sm:$0xff] %v2311
  %2568 = vst [vmem:[%s3 + $0x488] sm:$0xff] %v2312
  %2569 = vst [vmem:[%s3 + $0x490] sm:$0xff] %v2313
  %2570 = vst [vmem:[%s3 + $0x498] sm:$0xff] %v2314
  %2571 = vst [vmem:[%s3 + $0x4a0] sm:$0xff] %v2315
  %2572 = vst [vmem:[%s3 + $0x4a8] sm:$0xff] %v2316
  %2573 = vst [vmem:[%s3 + $0x4b0] sm:$0xff] %v2317
  %2574 = vst [vmem:[%s3 + $0x4b8] sm:$0xff] %v2318
  %2575 = vst [vmem:[%s3 + $0x4c0] sm:$0xff] %v2319
  %2576 = vst [vmem:[%s3 + $0x4c8] sm:$0xff] %v2320
  %2577 = vst [vmem:[%s3 + $0x4d0] sm:$0xff] %v2321
  %2578 = vst [vmem:[%s3 + $0x4d8] sm:$0xff] %v2322
  %2579 = vst [vmem:[%s3 + $0x4e0] sm:$0xff] %v2323
  %2580 = vst [vmem:[%s3 + $0x4e8] sm:$0xff] %v2324
  %2581 = vst [vmem:[%s3 + $0x4f0] sm:$0xff] %v2325
  %2582 = vst [vmem:[%s3 + $0x4f8] sm:$0xff] %v2326
  %2583 = vst [vmem:[%s3 + $0x500] sm:$0xff] %v2327
  %2584 = vst [vmem:[%s3 + $0x508] sm:$0xff] %v2328
  %2585 = vst [vmem:[%s3 + $0x510] sm:$0xff] %v2329
  %2586 = vst [vmem:[%s3 + $0x518] sm:$0xff] %v2330
  %2587 = vst [vmem:[%s3 + $0x520] sm:$0xff] %v2331
  %2588 = vst [vmem:[%s3 + $0x528] sm:$0xff] %v2332
  %2589 = vst [vmem:[%s3 + $0x530] sm:$0xff] %v2333
  %2590 = vst [vmem:[%s3 + $0x538] sm:$0xff] %v2334
  %2591 = vst [vmem:[%s3 + $0x540] sm:$0xff] %v2335
  %2592 = vst [vmem:[%s3 + $0x548] sm:$0xff] %v2336
  %2593 = vst [vmem:[%s3 + $0x550] sm:$0xff] %v2337
  %2594 = vst [vmem:[%s3 + $0x558] sm:$0xff] %v2338
  %2595 = vst [vmem:[%s3 + $0x560] sm:$0xff] %v2339
  %2596 = vst [vmem:[%s3 + $0x568] sm:$0xff] %v2340
  %2597 = vst [vmem:[%s3 + $0x570] sm:$0xff] %v2341
  %2598 = vst [vmem:[%s3 + $0x578] sm:$0xff] %v2342
  %2599 = vst [vmem:[%s3 + $0x580] sm:$0xff] %v2343
  %2600 = vst [vmem:[%s3 + $0x588] sm:$0xff] %v2344
  %2601 = vst [vmem:[%s3 + $0x590] sm:$0xff] %v2345
  %2602 = vst [vmem:[%s3 + $0x598] sm:$0xff] %v2346
  %2603 = vst [vmem:[%s3 + $0x5a0] sm:$0xff] %v2347
  %2604 = vst [vmem:[%s3 + $0x5a8] sm:$0xff] %v2348
  %2605 = vst [vmem:[%s3 + $0x5b0] sm:$0xff] %v2349
  %2606 = vst [vmem:[%s3 + $0x5b8] sm:$0xff] %v2350
  %2607 = vst [vmem:[%s3 + $0x5c0] sm:$0xff] %v2351
  %2608 = vst [vmem:[%s3 + $0x5c8] sm:$0xff] %v2352
  %2609 = vst [vmem:[%s3 + $0x5d0] sm:$0xff] %v2353
  %2610 = vst [vmem:[%s3 + $0x5d8] sm:$0xff] %v2354
  %2611 = vst [vmem:[%s3 + $0x5e0] sm:$0xff] %v2355
  %2612 = vst [vmem:[%s3 + $0x5e8] sm:$0xff] %v2356
  %2613 = vst [vmem:[%s3 + $0x5f0] sm:$0xff] %v2357
  %2614 = vst [vmem:[%s3 + $0x5f8] sm:$0xff] %v2358
  %2615 = vst [vmem:[%s3 + $0x600] sm:$0xff] %v2359
  %2616 = vst [vmem:[%s3 + $0x608] sm:$0xff] %v2360
  %2617 = vst [vmem:[%s3 + $0x610] sm:$0xff] %v2361
  %2618 = vst [vmem:[%s3 + $0x618] sm:$0xff] %v2362
  %2619 = vst [vmem:[%s3 + $0x620] sm:$0xff] %v2363
  %2620 = vst [vmem:[%s3 + $0x628] sm:$0xff] %v2364
  %2621 = vst [vmem:[%s3 + $0x630] sm:$0xff] %v2365
  %2622 = vst [vmem:[%s3 + $0x638] sm:$0xff] %v2366
  %2623 = vst [vmem:[%s3 + $0x640] sm:$0xff] %v2367
  %2624 = vst [vmem:[%s3 + $0x648] sm:$0xff] %v2368
  %2625 = vst [vmem:[%s3 + $0x650] sm:$0xff] %v2369
  %2626 = vst [vmem:[%s3 + $0x658] sm:$0xff] %v2370
  %2627 = vst [vmem:[%s3 + $0x660] sm:$0xff] %v2371
  %2628 = vst [vmem:[%s3 + $0x668] sm:$0xff] %v2372
  %2629 = vst [vmem:[%s3 + $0x670] sm:$0xff] %v2373
  %2630 = vst [vmem:[%s3 + $0x678] sm:$0xff] %v2374
  %2631 = vst [vmem:[%s3 + $0x680] sm:$0xff] %v2375
  %2632 = vst [vmem:[%s3 + $0x688] sm:$0xff] %v2376
  %2633 = vst [vmem:[%s3 + $0x690] sm:$0xff] %v2377
  %2634 = vst [vmem:[%s3 + $0x698] sm:$0xff] %v2378
  %2635 = vst [vmem:[%s3 + $0x6a0] sm:$0xff] %v2379
  %2636 = vst [vmem:[%s3 + $0x6a8] sm:$0xff] %v2380
  %2637 = vst [vmem:[%s3 + $0x6b0] sm:$0xff] %v2381
  %2638 = vst [vmem:[%s3 + $0x6b8] sm:$0xff] %v2382
  %2639 = vst [vmem:[%s3 + $0x6c0] sm:$0xff] %v2383
  %2640 = vst [vmem:[%s3 + $0x6c8] sm:$0xff] %v2384
  %2641 = vst [vmem:[%s3 + $0x6d0] sm:$0xff] %v2385
  %2642 = vst [vmem:[%s3 + $0x6d8] sm:$0xff] %v2386
  %2643 = vst [vmem:[%s3 + $0x6e0] sm:$0xff] %v2387
  %2644 = vst [vmem:[%s3 + $0x6e8] sm:$0xff] %v2388
  %2645 = vst [vmem:[%s3 + $0x6f0] sm:$0xff] %v2389
  %2646 = vst [vmem:[%s3 + $0x6f8] sm:$0xff] %v2390
  %2647 = vst [vmem:[%s3 + $0x700] sm:$0xff] %v2391
  %2648 = vst [vmem:[%s3 + $0x708] sm:$0xff] %v2392
  %2649 = vst [vmem:[%s3 + $0x710] sm:$0xff] %v2393
  %2650 = vst [vmem:[%s3 + $0x718] sm:$0xff] %v2394
  %2651 = vst [vmem:[%s3 + $0x720] sm:$0xff] %v2395
  %2652 = vst [vmem:[%s3 + $0x728] sm:$0xff] %v2396
  %2653 = vst [vmem:[%s3 + $0x730] sm:$0xff] %v2397
  %2654 = vst [vmem:[%s3 + $0x738] sm:$0xff] %v2398
  %2655 = vst [vmem:[%s3 + $0x740] sm:$0xff] %v2399
  %2656 = vst [vmem:[%s3 + $0x748] sm:$0xff] %v2400
  %2657 = vst [vmem:[%s3 + $0x750] sm:$0xff] %v2401
  %2658 = vst [vmem:[%s3 + $0x758] sm:$0xff] %v2402
  %2659 = vst [vmem:[%s3 + $0x760] sm:$0xff] %v2403
  %2660 = vst [vmem:[%s3 + $0x768] sm:$0xff] %v2404
  %2661 = vst [vmem:[%s3 + $0x770] sm:$0xff] %v2405
  %2662 = vst [vmem:[%s3 + $0x778] sm:$0xff] %v2406
  %2663 = vst [vmem:[%s3 + $0x780] sm:$0xff] %v2407
  %2664 = vst [vmem:[%s3 + $0x788] sm:$0xff] %v2408
  %2665 = vst [vmem:[%s3 + $0x790] sm:$0xff] %v2409
  %2666 = vst [vmem:[%s3 + $0x798] sm:$0xff] %v2410
  %2667 = vst [vmem:[%s3 + $0x7a0] sm:$0xff] %v2411
  %2668 = vst [vmem:[%s3 + $0x7a8] sm:$0xff] %v2412
  %2669 = vst [vmem:[%s3 + $0x7b0] sm:$0xff] %v2413
  %2670 = vst [vmem:[%s3 + $0x7b8] sm:$0xff] %v2414
  %2671 = vst [vmem:[%s3 + $0x7c0] sm:$0xff] %v2415
  %2672 = vst [vmem:[%s3 + $0x7c8] sm:$0xff] %v2416
  %2673 = vst [vmem:[%s3 + $0x7d0] sm:$0xff] %v2417
  %2674 = vst [vmem:[%s3 + $0x7d8] sm:$0xff] %v2418
  %2675 = vst [vmem:[%s3 + $0x7e0] sm:$0xff] %v2419
  %2676 = vst [vmem:[%s3 + $0x7e8] sm:$0xff] %v2420
  %2677 = vst [vmem:[%s3 + $0x7f0] sm:$0xff] %v2421
  %2678 = vst [vmem:[%s3 + $0x7f8] sm:$0xff] %v2422
  // Predicated region
  $region14: #{decoder_forward_pallas.11} parent=0 // pred_check
    _
  $region15: #{decoder_forward_pallas.11} parent=0 // pred_check_branch
    %2680 = sbr.rel (0) target = $region17
  $region16: #{decoder_forward_pallas.11} parent=0 // pred_region
    _
  $region17: #{decoder_forward_pallas.11} parent=0 // pred_fallthru
    _
  // Predicated region
  $region18: #{decoder_forward_pallas.11} parent=0 // pred_check
    _
  $region19: #{decoder_forward_pallas.11} parent=0 // pred_check_branch
    %2682 = sbr.rel (0) target = $region21
  $region20: #{decoder_forward_pallas.11} parent=0 // pred_region
    _
  $region21: #{decoder_forward_pallas.11} parent=0 // pred_fallthru
    _

</llo_original>
